<compile_context>
chip_gen: v7x
topology: tpu7x:2x2x1
jax: 0.10.0
libtpu: 0.0.40
codegen_flags: <defaults>
</compile_context>

<pallas_src>
import functools
import math

import jax
import jax.numpy as jnp
from jax.experimental import pallas as pl
from jax.experimental.pallas import tpu as pltpu


# ----------------------------------------------------------------------------
# In-kernel helpers
# ----------------------------------------------------------------------------

def _split_heads(x2d, num_heads, head_dim):
    """[L, D] f32 -> [H, L, dh] using one 2-D transpose, a trivial leading-dim
    reshape and a minor-dims swap (no lane-misaligned slices)."""
    seq = x2d.shape[0]
    xt = x2d.T                                     # [D, L]
    xt = xt.reshape(num_heads, head_dim, seq)      # [H, dh, L] (leading split)
    return jnp.swapaxes(xt, 1, 2)                  # [H, L, dh]


def _merge_heads(ctx):
    """[H, L, dh] -> [L, H*dh]."""
    num_heads, seq, head_dim = ctx.shape
    return jnp.swapaxes(ctx, 1, 2).reshape(num_heads * head_dim, seq).T


def _attention_core(q, k, v, bias_ref, *, batch, len_q, len_k, num_heads):
    """q: [batch*len_q, D] (scale already folded in), k/v: [batch*len_k, D].
    Returns the per-position context [batch*len_q, D] (before W_o)."""
    d_model = q.shape[-1]
    dh = d_model // num_heads
    outs = []
    for b in range(batch):                         # short static loop; heads batched
        qb = q[b * len_q:(b + 1) * len_q, :]       # sublane-aligned row slices
        kb = k[b * len_k:(b + 1) * len_k, :]
        vb = v[b * len_k:(b + 1) * len_k, :]
        q3 = _split_heads(qb, num_heads, dh).astype(jnp.bfloat16)   # [H, Lq, dh]
        k3 = _split_heads(kb, num_heads, dh).astype(jnp.bfloat16)   # [H, Lk, dh]
        v3 = _split_heads(vb, num_heads, dh).astype(jnp.bfloat16)   # [H, Lk, dh]
        # one batched score matmul for all heads (bf16 in, f32 accumulate)
        s = jnp.einsum('hqd,hkd->hqk', q3, k3,
                       preferred_element_type=jnp.float32)          # [H, Lq, Lk]
        s = s + bias_ref[b]                        # additive -1e9 mask, bcast over H
        # one softmax across all heads
        s = s - jnp.max(s, axis=-1, keepdims=True)
        p = jnp.exp(s)
        p = p * pl.reciprocal(jnp.sum(p, axis=-1, keepdims=True), approx=True)
        ctx = jnp.einsum('hqk,hkd->hqd', p.astype(jnp.bfloat16), v3,
                         preferred_element_type=jnp.float32)        # [H, Lq, dh]
        outs.append(_merge_heads(ctx))             # [Lq, D]
    return jnp.concatenate(outs, axis=0)           # [batch*len_q, D]


# ----------------------------------------------------------------------------
# Fused decoder-layer kernel (one batch BLOCK per grid step)
# ----------------------------------------------------------------------------

def decoder_layer_kernel(dec_ref, enc_ref, sbias_ref, cbias_ref,
                         wqkv_s_ref, wo_s_ref, wq_c_ref, wkv_c_ref, wo_c_ref,
                         ffn_w1_ref, ffn_w2_ref, ffn_b1_ref, ffn_b2_ref, ln_ref,
                         o_ref, *, num_heads_self, num_heads_cross, eps):
    Bb, Lq, D = dec_ref.shape
    Lk = enc_ref.shape[1]
    R = Bb * Lq
    bf16 = jnp.bfloat16

    def layer_norm(y, g, b):
        mean = jnp.mean(y, axis=-1, keepdims=True)
        c = y - mean
        var = jnp.mean(c * c, axis=-1, keepdims=True)
        return c * jax.lax.rsqrt(var + eps) * g + b

    x = dec_ref[...].reshape(R, D)                          # [R, D] f32
    enc = enc_ref[...].reshape(Bb * Lk, D).astype(bf16)     # [Rk, D] bf16 (cast once)

    # --- self attention + (dropout=identity) + add & LayerNorm ---
    scale_s = 1.0 / math.sqrt(D // num_heads_self)
    qkv = jnp.dot(x.astype(bf16), wqkv_s_ref[...],
                  preferred_element_type=jnp.float32)       # [R, 3D], N=3D fills MXU
    ctx = _attention_core(qkv[:, :D] * scale_s,             # 128-aligned lane slices
                          qkv[:, D:2 * D], qkv[:, 2 * D:],
                          sbias_ref, batch=Bb, len_q=Lq, len_k=Lq,
                          num_heads=num_heads_self)
    y = jnp.dot(ctx.astype(bf16), wo_s_ref[...],
                preferred_element_type=jnp.float32)         # single W_o matmul
    x = layer_norm(y + x, ln_ref[0:1, :], ln_ref[1:2, :])

    # --- encoder-decoder (cross) attention + add & LayerNorm ---
    scale_c = 1.0 / math.sqrt(D // num_heads_cross)
    q = jnp.dot(x.astype(bf16), wq_c_ref[...],
                preferred_element_type=jnp.float32) * scale_c        # [R, D]
    kv = jnp.dot(enc, wkv_c_ref[...],
                 preferred_element_type=jnp.float32)                 # [Rk, 2D]
    ctx = _attention_core(q, kv[:, :D], kv[:, D:], cbias_ref,
                          batch=Bb, len_q=Lq, len_k=Lk,
                          num_heads=num_heads_cross)
    y = jnp.dot(ctx.astype(bf16), wo_c_ref[...],
                preferred_element_type=jnp.float32)
    x = layer_norm(y + x, ln_ref[2:3, :], ln_ref[3:4, :])

    # --- position-wise FFN + add & LayerNorm ---
    h = jnp.dot(x.astype(bf16), ffn_w1_ref[...],
                preferred_element_type=jnp.float32) + ffn_b1_ref[...]
    h = jnp.maximum(h, 0.0)
    y = jnp.dot(h.astype(bf16), ffn_w2_ref[...],
                preferred_element_type=jnp.float32) + ffn_b2_ref[...]
    x = layer_norm(y + x, ln_ref[4:5, :], ln_ref[5:6, :])

    o_ref[...] = x.reshape(Bb, Lq, D).astype(o_ref.dtype)


# ----------------------------------------------------------------------------
# Wrapper
# ----------------------------------------------------------------------------

def _pick_batch_block(batch, seq_len, target_rows=256):
    """Largest divisor of `batch` with Bb*L <= target_rows, preferring >=2 grid steps."""
    cap = max(1, target_rows // max(seq_len, 1))
    bb = 1
    for cand in range(1, min(batch, cap) + 1):
        if batch % cand == 0:
            bb = cand
    if batch // bb < 2 and batch >= 2:
        for cand in range(bb - 1, 0, -1):
            if batch % cand == 0 and batch // cand >= 2:
                bb = cand
                break
    return bb


def transformer_decoder_layer(decoder_input, encoder_output,
                              decoder_self_mask, decoder_encoder_mask, p):
    """decoder_input [B, Lq, D] f32, encoder_output [B, Lk, D] f32,
    masks are boolean [B, Lq, Lq] / [B, Lq, Lk] with True = masked."""
    B, L, D = decoder_input.shape
    Lk = encoder_output.shape[1]
    Dff = p["ffn_w1"].shape[1]
    Hs, Hc = p["num_heads_self"], p["num_heads_cross"]
    assert D % Hs == 0 and D % Hc == 0, "d_model must be divisible by num_heads"

    neg = jnp.float32(-1e9)
    self_bias = decoder_self_mask.astype(jnp.float32) * neg       # [B, L, L]
    cross_bias = decoder_encoder_mask.astype(jnp.float32) * neg   # [B, L, Lk]

    bf = jnp.bfloat16
    # Packed projection weights (stored as [in, out]).
    wqkv_s = jnp.concatenate([p["sa_wq"], p["sa_wk"], p["sa_wv"]], axis=1).astype(bf)  # [D, 3D]
    wo_s = p["sa_wo"].astype(bf)                                                       # [D, D]
    wq_c = p["ca_wq"].astype(bf)                                                       # [D, D]
    wkv_c = jnp.concatenate([p["ca_wk"], p["ca_wv"]], axis=1).astype(bf)               # [D, 2D]
    wo_c = p["ca_wo"].astype(bf)                                                       # [D, D]
    ffn_w1 = p["ffn_w1"].astype(bf)
    ffn_w2 = p["ffn_w2"].astype(bf)
    ffn_b1 = p["ffn_b1"].reshape(1, Dff).astype(jnp.float32)
    ffn_b2 = p["ffn_b2"].reshape(1, D).astype(jnp.float32)
    ln_p = jnp.stack([p["ln1_g"], p["ln1_b"], p["ln2_g"], p["ln2_b"],
                      p["ln3_g"], p["ln3_b"]]).astype(jnp.float32)                     # [6, D]

    Bb = _pick_batch_block(B, L)
    grid = (B // Bb,)

    kernel = functools.partial(
        decoder_layer_kernel,
        num_heads_self=Hs, num_heads_cross=Hc,
        eps=1e-6,   # the module explicitly uses nn.LayerNorm(..., eps=1e-06)
    )

    c2 = lambda i: (0, 0)

    return pl.pallas_call(
        kernel,
        out_shape=jax.ShapeDtypeStruct((B, L, D), jnp.float32),
        grid_spec=pltpu.PrefetchScalarGridSpec(
            num_scalar_prefetch=0,
            grid=grid,
            in_specs=[
                pl.BlockSpec((Bb, L, D), lambda i: (i, 0, 0)),    # decoder input block
                pl.BlockSpec((Bb, Lk, D), lambda i: (i, 0, 0)),   # encoder output block
                pl.BlockSpec((Bb, L, L), lambda i: (i, 0, 0)),    # self-attn bias
                pl.BlockSpec((Bb, L, Lk), lambda i: (i, 0, 0)),   # cross-attn bias
                pl.BlockSpec((D, 3 * D), c2),                     # self QKV (resident)
                pl.BlockSpec((D, D), c2),                         # self W_o (resident)
                pl.BlockSpec((D, D), c2),                         # cross W_q (resident)
                pl.BlockSpec((D, 2 * D), c2),                     # cross K|V (resident)
                pl.BlockSpec((D, D), c2),                         # cross W_o (resident)
                pl.BlockSpec((D, Dff), c2),                       # FFN W1 (resident)
                pl.BlockSpec((Dff, D), c2),                       # FFN W2 (resident)
                pl.BlockSpec((1, Dff), c2),                       # FFN b1
                pl.BlockSpec((1, D), c2),                         # FFN b2
                pl.BlockSpec((6, D), c2),                         # LayerNorm params
            ],
            out_specs=pl.BlockSpec((Bb, L, D), lambda i: (i, 0, 0)),
        ),
        compiler_params=pltpu.CompilerParams(
            dimension_semantics=("parallel",),       # batch blocks split across v7x TCs
            vmem_limit_bytes=32 * 1024 * 1024,
        ),
    )(decoder_input, encoder_output, self_bias, cross_bias,
      wqkv_s, wo_s, wq_c, wkv_c, wo_c, ffn_w1, ffn_w2, ffn_b1, ffn_b2, ln_p)


# ----------------------------------------------------------------------------
# Deterministic parameter initialization (mirrors the PyTorch module)
# ----------------------------------------------------------------------------

def xavier_uniform(key, fan_in, fan_out):
    limit = math.sqrt(6.0 / (fan_in + fan_out))
    return jax.random.uniform(key, (fan_in, fan_out), jnp.float32, -limit, limit)


def init_params(key, d_model, dim_feedforward, num_heads):
    ks = jax.random.split(key, 10)
    return {
        "num_heads_self": num_heads,
        "num_heads_cross": 8,   # the PyTorch module builds cross-MHA with default num_heads=8
        # attention projections (bias=False in the module); stored as [in, out]
        "sa_wq": xavier_uniform(ks[0], d_model, d_model),
        "sa_wk": xavier_uniform(ks[1], d_model, d_model),
        "sa_wv": xavier_uniform(ks[2], d_model, d_model),
        "sa_wo": xavier_uniform(ks[3], d_model, d_model),
        "ca_wq": xavier_uniform(ks[4], d_model, d_model),
        "ca_wk": xavier_uniform(ks[5], d_model, d_model),
        "ca_wv": xavier_uniform(ks[6], d_model, d_model),
        "ca_wo": xavier_uniform(ks[7], d_model, d_model),
        # FFN (xavier weights, zero bias — mirrors initialize_weight)
        "ffn_w1": xavier_uniform(ks[8], d_model, dim_feedforward),
        "ffn_b1": jnp.zeros((dim_feedforward,), jnp.float32),
        "ffn_w2": xavier_uniform(ks[9], dim_feedforward, d_model),
        "ffn_b2": jnp.zeros((d_model,), jnp.float32),
        # LayerNorms (weight=1, bias=0; eps=1e-6 applied in the kernel)
        "ln1_g": jnp.ones((d_model,), jnp.float32),
        "ln1_b": jnp.zeros((d_model,), jnp.float32),
        "ln2_g": jnp.ones((d_model,), jnp.float32),
        "ln2_b": jnp.zeros((d_model,), jnp.float32),
        "ln3_g": jnp.ones((d_model,), jnp.float32),
        "ln3_b": jnp.zeros((d_model,), jnp.float32),
    }


# ----------------------------------------------------------------------------
# Demo
# ----------------------------------------------------------------------------

if __name__ == "__main__":
    B, L_DEC, L_ENC = 4, 8, 8
    D_MODEL, D_FF, N_HEADS = 128, 256, 8   # head_dim = 16; lane-dense feature dims

    root = jax.random.PRNGKey(0)
    k_in, k_enc, k_par = jax.random.split(root, 3)

    decoder_input = jax.random.normal(k_in, (B, L_DEC, D_MODEL), jnp.float32)
    encoder_output = jax.random.normal(k_enc, (B, L_ENC, D_MODEL), jnp.float32)

    # Boolean masks (True = masked). Causal self-mask; no cross masking.
    causal = jnp.triu(jnp.ones((L_DEC, L_DEC), dtype=bool), k=1)
    decoder_self_mask = jnp.broadcast_to(causal[None], (B, L_DEC, L_DEC))
    decoder_encoder_mask = jnp.zeros((B, L_DEC, L_ENC), dtype=bool)

    params = init_params(k_par, D_MODEL, D_FF, N_HEADS)

    out = transformer_decoder_layer(decoder_input, encoder_output,
                                    decoder_self_mask, decoder_encoder_mask, params)
    jax.block_until_ready(out)
    assert out.shape == (B, L_DEC, D_MODEL)
    assert bool(jnp.all(jnp.isfinite(out)))
    print("KERNEL_OK")
</pallas_src>

<mosaic_0001>
module attributes {stable_mosaic.version = 11 : i64} {
  func.func @decoder_layer_kernel(%arg0: i32, %arg1: memref<2x8x128xf32, #tpu.memory_space<vmem>>, %arg2: memref<2x8x128xf32, #tpu.memory_space<vmem>>, %arg3: memref<2x8x8xf32, #tpu.memory_space<vmem>>, %arg4: memref<2x8x8xf32, #tpu.memory_space<vmem>>, %arg5: memref<128x384xbf16, #tpu.memory_space<vmem>>, %arg6: memref<128x128xbf16, #tpu.memory_space<vmem>>, %arg7: memref<128x128xbf16, #tpu.memory_space<vmem>>, %arg8: memref<128x256xbf16, #tpu.memory_space<vmem>>, %arg9: memref<128x128xbf16, #tpu.memory_space<vmem>>, %arg10: memref<128x256xbf16, #tpu.memory_space<vmem>>, %arg11: memref<256x128xbf16, #tpu.memory_space<vmem>>, %arg12: memref<1x256xf32, #tpu.memory_space<vmem>>, %arg13: memref<1x128xf32, #tpu.memory_space<vmem>>, %arg14: memref<6x128xf32, #tpu.memory_space<vmem>>, %arg15: memref<2x8x128xf32, #tpu.memory_space<vmem>>) attributes {dimension_semantics = [#tpu.dimension_semantics<parallel>], iteration_bounds = array<i64: 2>, scalar_prefetch = 0 : i64, scratch_operands = 0 : i64, tpu.core_type = #tpu.core_type<tc>, window_params = [{transform_indices = @transform_0, window_bounds = array<i64: 2, 8, 128>}, {transform_indices = @transform_1, window_bounds = array<i64: 2, 8, 128>}, {transform_indices = @transform_2, window_bounds = array<i64: 2, 8, 8>}, {transform_indices = @transform_3, window_bounds = array<i64: 2, 8, 8>}, {pipeline_mode = #tpu.pipeline_mode<synchronous>, transform_indices = @transform_4, window_bounds = array<i64: 128, 384>}, {pipeline_mode = #tpu.pipeline_mode<synchronous>, transform_indices = @transform_5, window_bounds = array<i64: 128, 128>}, {pipeline_mode = #tpu.pipeline_mode<synchronous>, transform_indices = @transform_6, window_bounds = array<i64: 128, 128>}, {pipeline_mode = #tpu.pipeline_mode<synchronous>, transform_indices = @transform_7, window_bounds = array<i64: 128, 256>}, {pipeline_mode = #tpu.pipeline_mode<synchronous>, transform_indices = @transform_8, window_bounds = array<i64: 128, 128>}, {pipeline_mode = #tpu.pipeline_mode<synchronous>, transform_indices = @transform_9, window_bounds = array<i64: 128, 256>}, {pipeline_mode = #tpu.pipeline_mode<synchronous>, transform_indices = @transform_10, window_bounds = array<i64: 256, 128>}, {pipeline_mode = #tpu.pipeline_mode<synchronous>, transform_indices = @transform_11, window_bounds = array<i64: 1, 256>}, {pipeline_mode = #tpu.pipeline_mode<synchronous>, transform_indices = @transform_12, window_bounds = array<i64: 1, 128>}, {pipeline_mode = #tpu.pipeline_mode<synchronous>, transform_indices = @transform_13, window_bounds = array<i64: 6, 128>}, {transform_indices = @transform_14, window_bounds = array<i64: 2, 8, 128>}]} {
    %c0 = arith.constant 0 : index
    %c0_0 = arith.constant 0 : index
    %c0_1 = arith.constant 0 : index
    %0 = vector.load %arg1[%c0, %c0_0, %c0_1] : memref<2x8x128xf32, #tpu.memory_space<vmem>>, vector<2x8x128xf32>
    %1 = vector.shape_cast %0 : vector<2x8x128xf32> to vector<16x128xf32>
    %c0_2 = arith.constant 0 : index
    %c0_3 = arith.constant 0 : index
    %c0_4 = arith.constant 0 : index
    %2 = vector.load %arg2[%c0_2, %c0_3, %c0_4] : memref<2x8x128xf32, #tpu.memory_space<vmem>>, vector<2x8x128xf32>
    %3 = vector.shape_cast %2 : vector<2x8x128xf32> to vector<16x128xf32>
    %4 = arith.truncf %3 : vector<16x128xf32> to vector<16x128xbf16>
    %5 = arith.truncf %1 : vector<16x128xf32> to vector<16x128xbf16>
    %c0_5 = arith.constant 0 : index
    %c0_6 = arith.constant 0 : index
    %6 = vector.load %arg5[%c0_5, %c0_6] : memref<128x384xbf16, #tpu.memory_space<vmem>>, vector<128x384xbf16>
    %cst = arith.constant dense<0.000000e+00> : vector<16x384xf32>
    %7 = tpu.matmul %5, %6, %cst {dimension_numbers = #tpu.dot_dimension_numbers<[1], [0], [0], [1], [0, 0, 1, 1], [], []>} : vector<16x128xbf16>, vector<128x384xbf16>, vector<16x384xf32> -> vector<16x384xf32>
    %8 = vector.extract_strided_slice %7 {offsets = [0, 0], sizes = [16, 128], strides = [1, 1]} : vector<16x384xf32> to vector<16x128xf32>
    %cst_7 = arith.constant 2.500000e-01 : f32
    %9 = vector.broadcast %cst_7 : f32 to vector<16x128xf32>
    %10 = arith.mulf %8, %9 : vector<16x128xf32>
    %11 = vector.extract_strided_slice %7 {offsets = [0, 128], sizes = [16, 128], strides = [1, 1]} : vector<16x384xf32> to vector<16x128xf32>
    %12 = vector.extract_strided_slice %7 {offsets = [0, 256], sizes = [16, 128], strides = [1, 1]} : vector<16x384xf32> to vector<16x128xf32>
    %13 = vector.extract_strided_slice %10 {offsets = [0, 0], sizes = [8, 128], strides = [1, 1]} : vector<16x128xf32> to vector<8x128xf32>
    %14 = vector.extract_strided_slice %11 {offsets = [0, 0], sizes = [8, 128], strides = [1, 1]} : vector<16x128xf32> to vector<8x128xf32>
    %15 = vector.extract_strided_slice %12 {offsets = [0, 0], sizes = [8, 128], strides = [1, 1]} : vector<16x128xf32> to vector<8x128xf32>
    %16 = tpu.transpose %13, [1, 0] : vector<8x128xf32> -> vector<128x8xf32>
    %17 = vector.shape_cast %16 : vector<128x8xf32> to vector<8x16x8xf32>
    %18 = tpu.transpose %17, [0, 2, 1] : vector<8x16x8xf32> -> vector<8x8x16xf32>
    %19 = arith.truncf %18 : vector<8x8x16xf32> to vector<8x8x16xbf16>
    %20 = tpu.transpose %14, [1, 0] : vector<8x128xf32> -> vector<128x8xf32>
    %21 = vector.shape_cast %20 : vector<128x8xf32> to vector<8x16x8xf32>
    %22 = tpu.transpose %21, [0, 2, 1] : vector<8x16x8xf32> -> vector<8x8x16xf32>
    %23 = arith.truncf %22 : vector<8x8x16xf32> to vector<8x8x16xbf16>
    %24 = tpu.transpose %15, [1, 0] : vector<8x128xf32> -> vector<128x8xf32>
    %25 = vector.shape_cast %24 : vector<128x8xf32> to vector<8x16x8xf32>
    %26 = tpu.transpose %25, [0, 2, 1] : vector<8x16x8xf32> -> vector<8x8x16xf32>
    %27 = arith.truncf %26 : vector<8x8x16xf32> to vector<8x8x16xbf16>
    "tpu.trace_start"() <{level = 10 : i32, message = "hqd,hkd->hqk"}> : () -> ()
    %cst_8 = arith.constant dense<0.000000e+00> : vector<8x8x8xf32>
    %28 = tpu.matmul %19, %23, %cst_8 {dimension_numbers = #tpu.dot_dimension_numbers<[2], [2], [1], [1], [0, 0, 0, 1, 1, 1], [0], [0]>} : vector<8x8x16xbf16>, vector<8x8x16xbf16>, vector<8x8x8xf32> -> vector<8x8x8xf32>
    "tpu.trace_stop"() : () -> ()
    %c0_9 = arith.constant 0 : index
    %c0_10 = arith.constant 0 : index
    %c0_11 = arith.constant 0 : index
    %29 = vector.load %arg3[%c0_9, %c0_10, %c0_11] : memref<2x8x8xf32, #tpu.memory_space<vmem>>, vector<1x8x8xf32>
    %30 = vector.shape_cast %29 : vector<1x8x8xf32> to vector<8x8xf32>
    %31 = vector.shape_cast %30 : vector<8x8xf32> to vector<1x8x8xf32>
    %32 = vector.broadcast %31 : vector<1x8x8xf32> to vector<8x8x8xf32>
    %33 = arith.addf %28, %32 : vector<8x8x8xf32>
    %cst_12 = arith.constant dense<0xFF800000> : vector<8x8xf32>
    %34 = vector.multi_reduction <maximumf>, %33, %cst_12 [2] : vector<8x8x8xf32> to vector<8x8xf32>
    %35 = vector.shape_cast %34 : vector<8x8xf32> to vector<8x8x1xf32>
    %36 = vector.broadcast %35 : vector<8x8x1xf32> to vector<8x8x8xf32>
    %37 = arith.subf %33, %36 : vector<8x8x8xf32>
    %38 = math.exp %37 : vector<8x8x8xf32>
    %cst_13 = arith.constant dense<0.000000e+00> : vector<8x8xf32>
    %39 = vector.multi_reduction <add>, %38, %cst_13 [2] : vector<8x8x8xf32> to vector<8x8xf32>
    %40 = vector.shape_cast %39 : vector<8x8xf32> to vector<8x8x1xf32>
    %41 = tpu.reciprocal %40 {approx = true} : vector<8x8x1xf32> -> vector<8x8x1xf32>
    %42 = vector.broadcast %41 : vector<8x8x1xf32> to vector<8x8x8xf32>
    %43 = arith.mulf %38, %42 : vector<8x8x8xf32>
    %44 = arith.truncf %43 : vector<8x8x8xf32> to vector<8x8x8xbf16>
    "tpu.trace_start"() <{level = 10 : i32, message = "hqk,hkd->hqd"}> : () -> ()
    %cst_14 = arith.constant dense<0.000000e+00> : vector<8x8x16xf32>
    %45 = tpu.matmul %44, %27, %cst_14 {dimension_numbers = #tpu.dot_dimension_numbers<[2], [1], [1], [2], [0, 0, 0, 1, 1, 2], [0], [0]>} : vector<8x8x8xbf16>, vector<8x8x16xbf16>, vector<8x8x16xf32> -> vector<8x8x16xf32>
    "tpu.trace_stop"() : () -> ()
    %46 = tpu.transpose %45, [0, 2, 1] : vector<8x8x16xf32> -> vector<8x16x8xf32>
    %47 = vector.shape_cast %46 : vector<8x16x8xf32> to vector<128x8xf32>
    %48 = tpu.transpose %47, [1, 0] : vector<128x8xf32> -> vector<8x128xf32>
    %49 = vector.extract_strided_slice %10 {offsets = [8, 0], sizes = [8, 128], strides = [1, 1]} : vector<16x128xf32> to vector<8x128xf32>
    %50 = vector.extract_strided_slice %11 {offsets = [8, 0], sizes = [8, 128], strides = [1, 1]} : vector<16x128xf32> to vector<8x128xf32>
    %51 = vector.extract_strided_slice %12 {offsets = [8, 0], sizes = [8, 128], strides = [1, 1]} : vector<16x128xf32> to vector<8x128xf32>
    %52 = tpu.transpose %49, [1, 0] : vector<8x128xf32> -> vector<128x8xf32>
    %53 = vector.shape_cast %52 : vector<128x8xf32> to vector<8x16x8xf32>
    %54 = tpu.transpose %53, [0, 2, 1] : vector<8x16x8xf32> -> vector<8x8x16xf32>
    %55 = arith.truncf %54 : vector<8x8x16xf32> to vector<8x8x16xbf16>
    %56 = tpu.transpose %50, [1, 0] : vector<8x128xf32> -> vector<128x8xf32>
    %57 = vector.shape_cast %56 : vector<128x8xf32> to vector<8x16x8xf32>
    %58 = tpu.transpose %57, [0, 2, 1] : vector<8x16x8xf32> -> vector<8x8x16xf32>
    %59 = arith.truncf %58 : vector<8x8x16xf32> to vector<8x8x16xbf16>
    %60 = tpu.transpose %51, [1, 0] : vector<8x128xf32> -> vector<128x8xf32>
    %61 = vector.shape_cast %60 : vector<128x8xf32> to vector<8x16x8xf32>
    %62 = tpu.transpose %61, [0, 2, 1] : vector<8x16x8xf32> -> vector<8x8x16xf32>
    %63 = arith.truncf %62 : vector<8x8x16xf32> to vector<8x8x16xbf16>
    "tpu.trace_start"() <{level = 10 : i32, message = "hqd,hkd->hqk"}> : () -> ()
    %cst_15 = arith.constant dense<0.000000e+00> : vector<8x8x8xf32>
    %64 = tpu.matmul %55, %59, %cst_15 {dimension_numbers = #tpu.dot_dimension_numbers<[2], [2], [1], [1], [0, 0, 0, 1, 1, 1], [0], [0]>} : vector<8x8x16xbf16>, vector<8x8x16xbf16>, vector<8x8x8xf32> -> vector<8x8x8xf32>
    "tpu.trace_stop"() : () -> ()
    %c1 = arith.constant 1 : index
    %c0_16 = arith.constant 0 : index
    %c0_17 = arith.constant 0 : index
    %65 = vector.load %arg3[%c1, %c0_16, %c0_17] : memref<2x8x8xf32, #tpu.memory_space<vmem>>, vector<1x8x8xf32>
    %66 = vector.shape_cast %65 : vector<1x8x8xf32> to vector<8x8xf32>
    %67 = vector.shape_cast %66 : vector<8x8xf32> to vector<1x8x8xf32>
    %68 = vector.broadcast %67 : vector<1x8x8xf32> to vector<8x8x8xf32>
    %69 = arith.addf %64, %68 : vector<8x8x8xf32>
    %cst_18 = arith.constant dense<0xFF800000> : vector<8x8xf32>
    %70 = vector.multi_reduction <maximumf>, %69, %cst_18 [2] : vector<8x8x8xf32> to vector<8x8xf32>
    %71 = vector.shape_cast %70 : vector<8x8xf32> to vector<8x8x1xf32>
    %72 = vector.broadcast %71 : vector<8x8x1xf32> to vector<8x8x8xf32>
    %73 = arith.subf %69, %72 : vector<8x8x8xf32>
    %74 = math.exp %73 : vector<8x8x8xf32>
    %cst_19 = arith.constant dense<0.000000e+00> : vector<8x8xf32>
    %75 = vector.multi_reduction <add>, %74, %cst_19 [2] : vector<8x8x8xf32> to vector<8x8xf32>
    %76 = vector.shape_cast %75 : vector<8x8xf32> to vector<8x8x1xf32>
    %77 = tpu.reciprocal %76 {approx = true} : vector<8x8x1xf32> -> vector<8x8x1xf32>
    %78 = vector.broadcast %77 : vector<8x8x1xf32> to vector<8x8x8xf32>
    %79 = arith.mulf %74, %78 : vector<8x8x8xf32>
    %80 = arith.truncf %79 : vector<8x8x8xf32> to vector<8x8x8xbf16>
    "tpu.trace_start"() <{level = 10 : i32, message = "hqk,hkd->hqd"}> : () -> ()
    %cst_20 = arith.constant dense<0.000000e+00> : vector<8x8x16xf32>
    %81 = tpu.matmul %80, %63, %cst_20 {dimension_numbers = #tpu.dot_dimension_numbers<[2], [1], [1], [2], [0, 0, 0, 1, 1, 2], [0], [0]>} : vector<8x8x8xbf16>, vector<8x8x16xbf16>, vector<8x8x16xf32> -> vector<8x8x16xf32>
    "tpu.trace_stop"() : () -> ()
    %82 = tpu.transpose %81, [0, 2, 1] : vector<8x8x16xf32> -> vector<8x16x8xf32>
    %83 = vector.shape_cast %82 : vector<8x16x8xf32> to vector<128x8xf32>
    %84 = tpu.transpose %83, [1, 0] : vector<128x8xf32> -> vector<8x128xf32>
    %85 = tpu.concatenate %48, %84 in 0 : vector<8x128xf32>, vector<8x128xf32> -> vector<16x128xf32>
    %86 = arith.truncf %85 : vector<16x128xf32> to vector<16x128xbf16>
    %c0_21 = arith.constant 0 : index
    %c0_22 = arith.constant 0 : index
    %87 = vector.load %arg6[%c0_21, %c0_22] : memref<128x128xbf16, #tpu.memory_space<vmem>>, vector<128x128xbf16>
    %cst_23 = arith.constant dense<0.000000e+00> : vector<16x128xf32>
    %88 = tpu.matmul %86, %87, %cst_23 {dimension_numbers = #tpu.dot_dimension_numbers<[1], [0], [0], [1], [0, 0, 1, 1], [], []>} : vector<16x128xbf16>, vector<128x128xbf16>, vector<16x128xf32> -> vector<16x128xf32>
    %89 = arith.addf %88, %1 : vector<16x128xf32>
    %c0_24 = arith.constant 0 : index
    %c0_25 = arith.constant 0 : index
    %90 = vector.load %arg14[%c0_24, %c0_25] : memref<6x128xf32, #tpu.memory_space<vmem>>, vector<1x128xf32>
    %c1_26 = arith.constant 1 : index
    %c0_27 = arith.constant 0 : index
    %91 = vector.load %arg14[%c1_26, %c0_27] : memref<6x128xf32, #tpu.memory_space<vmem>>, vector<1x128xf32>
    %cst_28 = arith.constant dense<0.000000e+00> : vector<16xf32>
    %92 = vector.multi_reduction <add>, %89, %cst_28 [1] : vector<16x128xf32> to vector<16xf32>
    %93 = vector.shape_cast %92 : vector<16xf32> to vector<16x1xf32>
    %cst_29 = arith.constant 1.280000e+02 : f32
    %94 = vector.broadcast %cst_29 : f32 to vector<16x1xf32>
    %95 = arith.divf %93, %94 : vector<16x1xf32>
    %96 = vector.broadcast %95 : vector<16x1xf32> to vector<16x128xf32>
    %97 = arith.subf %89, %96 : vector<16x128xf32>
    %98 = arith.mulf %97, %97 : vector<16x128xf32>
    %cst_30 = arith.constant dense<0.000000e+00> : vector<16xf32>
    %99 = vector.multi_reduction <add>, %98, %cst_30 [1] : vector<16x128xf32> to vector<16xf32>
    %100 = vector.shape_cast %99 : vector<16xf32> to vector<16x1xf32>
    %cst_31 = arith.constant 1.280000e+02 : f32
    %101 = vector.broadcast %cst_31 : f32 to vector<16x1xf32>
    %102 = arith.divf %100, %101 : vector<16x1xf32>
    %cst_32 = arith.constant 9.99999997E-7 : f32
    %103 = vector.broadcast %cst_32 : f32 to vector<16x1xf32>
    %104 = arith.addf %102, %103 : vector<16x1xf32>
    %105 = math.rsqrt %104 : vector<16x1xf32>
    %106 = vector.broadcast %105 : vector<16x1xf32> to vector<16x128xf32>
    %107 = arith.mulf %97, %106 : vector<16x128xf32>
    %108 = vector.broadcast %90 : vector<1x128xf32> to vector<16x128xf32>
    %109 = arith.mulf %107, %108 : vector<16x128xf32>
    %110 = vector.broadcast %91 : vector<1x128xf32> to vector<16x128xf32>
    %111 = arith.addf %109, %110 : vector<16x128xf32>
    %112 = arith.truncf %111 : vector<16x128xf32> to vector<16x128xbf16>
    %c0_33 = arith.constant 0 : index
    %c0_34 = arith.constant 0 : index
    %113 = vector.load %arg7[%c0_33, %c0_34] : memref<128x128xbf16, #tpu.memory_space<vmem>>, vector<128x128xbf16>
    %cst_35 = arith.constant dense<0.000000e+00> : vector<16x128xf32>
    %114 = tpu.matmul %112, %113, %cst_35 {dimension_numbers = #tpu.dot_dimension_numbers<[1], [0], [0], [1], [0, 0, 1, 1], [], []>} : vector<16x128xbf16>, vector<128x128xbf16>, vector<16x128xf32> -> vector<16x128xf32>
    %cst_36 = arith.constant 2.500000e-01 : f32
    %115 = vector.broadcast %cst_36 : f32 to vector<16x128xf32>
    %116 = arith.mulf %114, %115 : vector<16x128xf32>
    %c0_37 = arith.constant 0 : index
    %c0_38 = arith.constant 0 : index
    %117 = vector.load %arg8[%c0_37, %c0_38] : memref<128x256xbf16, #tpu.memory_space<vmem>>, vector<128x256xbf16>
    %cst_39 = arith.constant dense<0.000000e+00> : vector<16x256xf32>
    %118 = tpu.matmul %4, %117, %cst_39 {dimension_numbers = #tpu.dot_dimension_numbers<[1], [0], [0], [1], [0, 0, 1, 1], [], []>} : vector<16x128xbf16>, vector<128x256xbf16>, vector<16x256xf32> -> vector<16x256xf32>
    %119 = vector.extract_strided_slice %118 {offsets = [0, 0], sizes = [16, 128], strides = [1, 1]} : vector<16x256xf32> to vector<16x128xf32>
    %120 = vector.extract_strided_slice %118 {offsets = [0, 128], sizes = [16, 128], strides = [1, 1]} : vector<16x256xf32> to vector<16x128xf32>
    %121 = vector.extract_strided_slice %116 {offsets = [0, 0], sizes = [8, 128], strides = [1, 1]} : vector<16x128xf32> to vector<8x128xf32>
    %122 = vector.extract_strided_slice %119 {offsets = [0, 0], sizes = [8, 128], strides = [1, 1]} : vector<16x128xf32> to vector<8x128xf32>
    %123 = vector.extract_strided_slice %120 {offsets = [0, 0], sizes = [8, 128], strides = [1, 1]} : vector<16x128xf32> to vector<8x128xf32>
    %124 = tpu.transpose %121, [1, 0] : vector<8x128xf32> -> vector<128x8xf32>
    %125 = vector.shape_cast %124 : vector<128x8xf32> to vector<8x16x8xf32>
    %126 = tpu.transpose %125, [0, 2, 1] : vector<8x16x8xf32> -> vector<8x8x16xf32>
    %127 = arith.truncf %126 : vector<8x8x16xf32> to vector<8x8x16xbf16>
    %128 = tpu.transpose %122, [1, 0] : vector<8x128xf32> -> vector<128x8xf32>
    %129 = vector.shape_cast %128 : vector<128x8xf32> to vector<8x16x8xf32>
    %130 = tpu.transpose %129, [0, 2, 1] : vector<8x16x8xf32> -> vector<8x8x16xf32>
    %131 = arith.truncf %130 : vector<8x8x16xf32> to vector<8x8x16xbf16>
    %132 = tpu.transpose %123, [1, 0] : vector<8x128xf32> -> vector<128x8xf32>
    %133 = vector.shape_cast %132 : vector<128x8xf32> to vector<8x16x8xf32>
    %134 = tpu.transpose %133, [0, 2, 1] : vector<8x16x8xf32> -> vector<8x8x16xf32>
    %135 = arith.truncf %134 : vector<8x8x16xf32> to vector<8x8x16xbf16>
    "tpu.trace_start"() <{level = 10 : i32, message = "hqd,hkd->hqk"}> : () -> ()
    %cst_40 = arith.constant dense<0.000000e+00> : vector<8x8x8xf32>
    %136 = tpu.matmul %127, %131, %cst_40 {dimension_numbers = #tpu.dot_dimension_numbers<[2], [2], [1], [1], [0, 0, 0, 1, 1, 1], [0], [0]>} : vector<8x8x16xbf16>, vector<8x8x16xbf16>, vector<8x8x8xf32> -> vector<8x8x8xf32>
    "tpu.trace_stop"() : () -> ()
    %c0_41 = arith.constant 0 : index
    %c0_42 = arith.constant 0 : index
    %c0_43 = arith.constant 0 : index
    %137 = vector.load %arg4[%c0_41, %c0_42, %c0_43] : memref<2x8x8xf32, #tpu.memory_space<vmem>>, vector<1x8x8xf32>
    %138 = vector.shape_cast %137 : vector<1x8x8xf32> to vector<8x8xf32>
    %139 = vector.shape_cast %138 : vector<8x8xf32> to vector<1x8x8xf32>
    %140 = vector.broadcast %139 : vector<1x8x8xf32> to vector<8x8x8xf32>
    %141 = arith.addf %136, %140 : vector<8x8x8xf32>
    %cst_44 = arith.constant dense<0xFF800000> : vector<8x8xf32>
    %142 = vector.multi_reduction <maximumf>, %141, %cst_44 [2] : vector<8x8x8xf32> to vector<8x8xf32>
    %143 = vector.shape_cast %142 : vector<8x8xf32> to vector<8x8x1xf32>
    %144 = vector.broadcast %143 : vector<8x8x1xf32> to vector<8x8x8xf32>
    %145 = arith.subf %141, %144 : vector<8x8x8xf32>
    %146 = math.exp %145 : vector<8x8x8xf32>
    %cst_45 = arith.constant dense<0.000000e+00> : vector<8x8xf32>
    %147 = vector.multi_reduction <add>, %146, %cst_45 [2] : vector<8x8x8xf32> to vector<8x8xf32>
    %148 = vector.shape_cast %147 : vector<8x8xf32> to vector<8x8x1xf32>
    %149 = tpu.reciprocal %148 {approx = true} : vector<8x8x1xf32> -> vector<8x8x1xf32>
    %150 = vector.broadcast %149 : vector<8x8x1xf32> to vector<8x8x8xf32>
    %151 = arith.mulf %146, %150 : vector<8x8x8xf32>
    %152 = arith.truncf %151 : vector<8x8x8xf32> to vector<8x8x8xbf16>
    "tpu.trace_start"() <{level = 10 : i32, message = "hqk,hkd->hqd"}> : () -> ()
    %cst_46 = arith.constant dense<0.000000e+00> : vector<8x8x16xf32>
    %153 = tpu.matmul %152, %135, %cst_46 {dimension_numbers = #tpu.dot_dimension_numbers<[2], [1], [1], [2], [0, 0, 0, 1, 1, 2], [0], [0]>} : vector<8x8x8xbf16>, vector<8x8x16xbf16>, vector<8x8x16xf32> -> vector<8x8x16xf32>
    "tpu.trace_stop"() : () -> ()
    %154 = tpu.transpose %153, [0, 2, 1] : vector<8x8x16xf32> -> vector<8x16x8xf32>
    %155 = vector.shape_cast %154 : vector<8x16x8xf32> to vector<128x8xf32>
    %156 = tpu.transpose %155, [1, 0] : vector<128x8xf32> -> vector<8x128xf32>
    %157 = vector.extract_strided_slice %116 {offsets = [8, 0], sizes = [8, 128], strides = [1, 1]} : vector<16x128xf32> to vector<8x128xf32>
    %158 = vector.extract_strided_slice %119 {offsets = [8, 0], sizes = [8, 128], strides = [1, 1]} : vector<16x128xf32> to vector<8x128xf32>
    %159 = vector.extract_strided_slice %120 {offsets = [8, 0], sizes = [8, 128], strides = [1, 1]} : vector<16x128xf32> to vector<8x128xf32>
    %160 = tpu.transpose %157, [1, 0] : vector<8x128xf32> -> vector<128x8xf32>
    %161 = vector.shape_cast %160 : vector<128x8xf32> to vector<8x16x8xf32>
    %162 = tpu.transpose %161, [0, 2, 1] : vector<8x16x8xf32> -> vector<8x8x16xf32>
    %163 = arith.truncf %162 : vector<8x8x16xf32> to vector<8x8x16xbf16>
    %164 = tpu.transpose %158, [1, 0] : vector<8x128xf32> -> vector<128x8xf32>
    %165 = vector.shape_cast %164 : vector<128x8xf32> to vector<8x16x8xf32>
    %166 = tpu.transpose %165, [0, 2, 1] : vector<8x16x8xf32> -> vector<8x8x16xf32>
    %167 = arith.truncf %166 : vector<8x8x16xf32> to vector<8x8x16xbf16>
    %168 = tpu.transpose %159, [1, 0] : vector<8x128xf32> -> vector<128x8xf32>
    %169 = vector.shape_cast %168 : vector<128x8xf32> to vector<8x16x8xf32>
    %170 = tpu.transpose %169, [0, 2, 1] : vector<8x16x8xf32> -> vector<8x8x16xf32>
    %171 = arith.truncf %170 : vector<8x8x16xf32> to vector<8x8x16xbf16>
    "tpu.trace_start"() <{level = 10 : i32, message = "hqd,hkd->hqk"}> : () -> ()
    %cst_47 = arith.constant dense<0.000000e+00> : vector<8x8x8xf32>
    %172 = tpu.matmul %163, %167, %cst_47 {dimension_numbers = #tpu.dot_dimension_numbers<[2], [2], [1], [1], [0, 0, 0, 1, 1, 1], [0], [0]>} : vector<8x8x16xbf16>, vector<8x8x16xbf16>, vector<8x8x8xf32> -> vector<8x8x8xf32>
    "tpu.trace_stop"() : () -> ()
    %c1_48 = arith.constant 1 : index
    %c0_49 = arith.constant 0 : index
    %c0_50 = arith.constant 0 : index
    %173 = vector.load %arg4[%c1_48, %c0_49, %c0_50] : memref<2x8x8xf32, #tpu.memory_space<vmem>>, vector<1x8x8xf32>
    %174 = vector.shape_cast %173 : vector<1x8x8xf32> to vector<8x8xf32>
    %175 = vector.shape_cast %174 : vector<8x8xf32> to vector<1x8x8xf32>
    %176 = vector.broadcast %175 : vector<1x8x8xf32> to vector<8x8x8xf32>
    %177 = arith.addf %172, %176 : vector<8x8x8xf32>
    %cst_51 = arith.constant dense<0xFF800000> : vector<8x8xf32>
    %178 = vector.multi_reduction <maximumf>, %177, %cst_51 [2] : vector<8x8x8xf32> to vector<8x8xf32>
    %179 = vector.shape_cast %178 : vector<8x8xf32> to vector<8x8x1xf32>
    %180 = vector.broadcast %179 : vector<8x8x1xf32> to vector<8x8x8xf32>
    %181 = arith.subf %177, %180 : vector<8x8x8xf32>
    %182 = math.exp %181 : vector<8x8x8xf32>
    %cst_52 = arith.constant dense<0.000000e+00> : vector<8x8xf32>
    %183 = vector.multi_reduction <add>, %182, %cst_52 [2] : vector<8x8x8xf32> to vector<8x8xf32>
    %184 = vector.shape_cast %183 : vector<8x8xf32> to vector<8x8x1xf32>
    %185 = tpu.reciprocal %184 {approx = true} : vector<8x8x1xf32> -> vector<8x8x1xf32>
    %186 = vector.broadcast %185 : vector<8x8x1xf32> to vector<8x8x8xf32>
    %187 = arith.mulf %182, %186 : vector<8x8x8xf32>
    %188 = arith.truncf %187 : vector<8x8x8xf32> to vector<8x8x8xbf16>
    "tpu.trace_start"() <{level = 10 : i32, message = "hqk,hkd->hqd"}> : () -> ()
    %cst_53 = arith.constant dense<0.000000e+00> : vector<8x8x16xf32>
    %189 = tpu.matmul %188, %171, %cst_53 {dimension_numbers = #tpu.dot_dimension_numbers<[2], [1], [1], [2], [0, 0, 0, 1, 1, 2], [0], [0]>} : vector<8x8x8xbf16>, vector<8x8x16xbf16>, vector<8x8x16xf32> -> vector<8x8x16xf32>
    "tpu.trace_stop"() : () -> ()
    %190 = tpu.transpose %189, [0, 2, 1] : vector<8x8x16xf32> -> vector<8x16x8xf32>
    %191 = vector.shape_cast %190 : vector<8x16x8xf32> to vector<128x8xf32>
    %192 = tpu.transpose %191, [1, 0] : vector<128x8xf32> -> vector<8x128xf32>
    %193 = tpu.concatenate %156, %192 in 0 : vector<8x128xf32>, vector<8x128xf32> -> vector<16x128xf32>
    %194 = arith.truncf %193 : vector<16x128xf32> to vector<16x128xbf16>
    %c0_54 = arith.constant 0 : index
    %c0_55 = arith.constant 0 : index
    %195 = vector.load %arg9[%c0_54, %c0_55] : memref<128x128xbf16, #tpu.memory_space<vmem>>, vector<128x128xbf16>
    %cst_56 = arith.constant dense<0.000000e+00> : vector<16x128xf32>
    %196 = tpu.matmul %194, %195, %cst_56 {dimension_numbers = #tpu.dot_dimension_numbers<[1], [0], [0], [1], [0, 0, 1, 1], [], []>} : vector<16x128xbf16>, vector<128x128xbf16>, vector<16x128xf32> -> vector<16x128xf32>
    %197 = arith.addf %196, %111 : vector<16x128xf32>
    %c2 = arith.constant 2 : index
    %c0_57 = arith.constant 0 : index
    %198 = vector.load %arg14[%c2, %c0_57] : memref<6x128xf32, #tpu.memory_space<vmem>>, vector<1x128xf32>
    %c3 = arith.constant 3 : index
    %c0_58 = arith.constant 0 : index
    %199 = vector.load %arg14[%c3, %c0_58] : memref<6x128xf32, #tpu.memory_space<vmem>>, vector<1x128xf32>
    %cst_59 = arith.constant dense<0.000000e+00> : vector<16xf32>
    %200 = vector.multi_reduction <add>, %197, %cst_59 [1] : vector<16x128xf32> to vector<16xf32>
    %201 = vector.shape_cast %200 : vector<16xf32> to vector<16x1xf32>
    %cst_60 = arith.constant 1.280000e+02 : f32
    %202 = vector.broadcast %cst_60 : f32 to vector<16x1xf32>
    %203 = arith.divf %201, %202 : vector<16x1xf32>
    %204 = vector.broadcast %203 : vector<16x1xf32> to vector<16x128xf32>
    %205 = arith.subf %197, %204 : vector<16x128xf32>
    %206 = arith.mulf %205, %205 : vector<16x128xf32>
    %cst_61 = arith.constant dense<0.000000e+00> : vector<16xf32>
    %207 = vector.multi_reduction <add>, %206, %cst_61 [1] : vector<16x128xf32> to vector<16xf32>
    %208 = vector.shape_cast %207 : vector<16xf32> to vector<16x1xf32>
    %cst_62 = arith.constant 1.280000e+02 : f32
    %209 = vector.broadcast %cst_62 : f32 to vector<16x1xf32>
    %210 = arith.divf %208, %209 : vector<16x1xf32>
    %cst_63 = arith.constant 9.99999997E-7 : f32
    %211 = vector.broadcast %cst_63 : f32 to vector<16x1xf32>
    %212 = arith.addf %210, %211 : vector<16x1xf32>
    %213 = math.rsqrt %212 : vector<16x1xf32>
    %214 = vector.broadcast %213 : vector<16x1xf32> to vector<16x128xf32>
    %215 = arith.mulf %205, %214 : vector<16x128xf32>
    %216 = vector.broadcast %198 : vector<1x128xf32> to vector<16x128xf32>
    %217 = arith.mulf %215, %216 : vector<16x128xf32>
    %218 = vector.broadcast %199 : vector<1x128xf32> to vector<16x128xf32>
    %219 = arith.addf %217, %218 : vector<16x128xf32>
    %220 = arith.truncf %219 : vector<16x128xf32> to vector<16x128xbf16>
    %c0_64 = arith.constant 0 : index
    %c0_65 = arith.constant 0 : index
    %221 = vector.load %arg10[%c0_64, %c0_65] : memref<128x256xbf16, #tpu.memory_space<vmem>>, vector<128x256xbf16>
    %cst_66 = arith.constant dense<0.000000e+00> : vector<16x256xf32>
    %222 = tpu.matmul %220, %221, %cst_66 {dimension_numbers = #tpu.dot_dimension_numbers<[1], [0], [0], [1], [0, 0, 1, 1], [], []>} : vector<16x128xbf16>, vector<128x256xbf16>, vector<16x256xf32> -> vector<16x256xf32>
    %c0_67 = arith.constant 0 : index
    %c0_68 = arith.constant 0 : index
    %223 = vector.load %arg12[%c0_67, %c0_68] : memref<1x256xf32, #tpu.memory_space<vmem>>, vector<1x256xf32>
    %224 = vector.broadcast %223 : vector<1x256xf32> to vector<16x256xf32>
    %225 = arith.addf %222, %224 : vector<16x256xf32>
    %cst_69 = arith.constant 0.000000e+00 : f32
    %226 = vector.broadcast %cst_69 : f32 to vector<16x256xf32>
    %227 = arith.maximumf %225, %226 : vector<16x256xf32>
    %228 = arith.truncf %227 : vector<16x256xf32> to vector<16x256xbf16>
    %c0_70 = arith.constant 0 : index
    %c0_71 = arith.constant 0 : index
    %229 = vector.load %arg11[%c0_70, %c0_71] : memref<256x128xbf16, #tpu.memory_space<vmem>>, vector<256x128xbf16>
    %cst_72 = arith.constant dense<0.000000e+00> : vector<16x128xf32>
    %230 = tpu.matmul %228, %229, %cst_72 {dimension_numbers = #tpu.dot_dimension_numbers<[1], [0], [0], [1], [0, 0, 1, 1], [], []>} : vector<16x256xbf16>, vector<256x128xbf16>, vector<16x128xf32> -> vector<16x128xf32>
    %c0_73 = arith.constant 0 : index
    %c0_74 = arith.constant 0 : index
    %231 = vector.load %arg13[%c0_73, %c0_74] : memref<1x128xf32, #tpu.memory_space<vmem>>, vector<1x128xf32>
    %232 = vector.broadcast %231 : vector<1x128xf32> to vector<16x128xf32>
    %233 = arith.addf %230, %232 : vector<16x128xf32>
    %234 = arith.addf %233, %219 : vector<16x128xf32>
    %c4 = arith.constant 4 : index
    %c0_75 = arith.constant 0 : index
    %235 = vector.load %arg14[%c4, %c0_75] : memref<6x128xf32, #tpu.memory_space<vmem>>, vector<1x128xf32>
    %c5 = arith.constant 5 : index
    %c0_76 = arith.constant 0 : index
    %236 = vector.load %arg14[%c5, %c0_76] : memref<6x128xf32, #tpu.memory_space<vmem>>, vector<1x128xf32>
    %cst_77 = arith.constant dense<0.000000e+00> : vector<16xf32>
    %237 = vector.multi_reduction <add>, %234, %cst_77 [1] : vector<16x128xf32> to vector<16xf32>
    %238 = vector.shape_cast %237 : vector<16xf32> to vector<16x1xf32>
    %cst_78 = arith.constant 1.280000e+02 : f32
    %239 = vector.broadcast %cst_78 : f32 to vector<16x1xf32>
    %240 = arith.divf %238, %239 : vector<16x1xf32>
    %241 = vector.broadcast %240 : vector<16x1xf32> to vector<16x128xf32>
    %242 = arith.subf %234, %241 : vector<16x128xf32>
    %243 = arith.mulf %242, %242 : vector<16x128xf32>
    %cst_79 = arith.constant dense<0.000000e+00> : vector<16xf32>
    %244 = vector.multi_reduction <add>, %243, %cst_79 [1] : vector<16x128xf32> to vector<16xf32>
    %245 = vector.shape_cast %244 : vector<16xf32> to vector<16x1xf32>
    %cst_80 = arith.constant 1.280000e+02 : f32
    %246 = vector.broadcast %cst_80 : f32 to vector<16x1xf32>
    %247 = arith.divf %245, %246 : vector<16x1xf32>
    %cst_81 = arith.constant 9.99999997E-7 : f32
    %248 = vector.broadcast %cst_81 : f32 to vector<16x1xf32>
    %249 = arith.addf %247, %248 : vector<16x1xf32>
    %250 = math.rsqrt %249 : vector<16x1xf32>
    %251 = vector.broadcast %250 : vector<16x1xf32> to vector<16x128xf32>
    %252 = arith.mulf %242, %251 : vector<16x128xf32>
    %253 = vector.broadcast %235 : vector<1x128xf32> to vector<16x128xf32>
    %254 = arith.mulf %252, %253 : vector<16x128xf32>
    %255 = vector.broadcast %236 : vector<1x128xf32> to vector<16x128xf32>
    %256 = arith.addf %254, %255 : vector<16x128xf32>
    %257 = vector.shape_cast %256 : vector<16x128xf32> to vector<2x8x128xf32>
    %c0_82 = arith.constant 0 : index
    %c0_83 = arith.constant 0 : index
    %c0_84 = arith.constant 0 : index
    %258 = vector.load %arg15[%c0_82, %c0_83, %c0_84] : memref<2x8x128xf32, #tpu.memory_space<vmem>>, vector<2x8x128xf32>
    tpu.vector_store %arg15[%c0_82, %c0_83, %c0_84], %257 {strides = array<i32>} : memref<2x8x128xf32, #tpu.memory_space<vmem>>, vector<2x8x128xf32>,
    return
  }
  func.func @transform_0(%arg0: i32) -> (i32, i32, i32) {
    %c0_i32 = arith.constant 0 : i32
    %c0_i32_0 = arith.constant 0 : i32
    %c0_i32_1 = arith.constant 0 : i32
    return %arg0, %c0_i32, %c0_i32_0 : i32, i32, i32
  }
  func.func @transform_1(%arg0: i32) -> (i32, i32, i32) {
    %c0_i32 = arith.constant 0 : i32
    %c0_i32_0 = arith.constant 0 : i32
    %c0_i32_1 = arith.constant 0 : i32
    return %arg0, %c0_i32, %c0_i32_0 : i32, i32, i32
  }
  func.func @transform_2(%arg0: i32) -> (i32, i32, i32) {
    %c0_i32 = arith.constant 0 : i32
    %c0_i32_0 = arith.constant 0 : i32
    %c0_i32_1 = arith.constant 0 : i32
    return %arg0, %c0_i32, %c0_i32_0 : i32, i32, i32
  }
  func.func @transform_3(%arg0: i32) -> (i32, i32, i32) {
    %c0_i32 = arith.constant 0 : i32
    %c0_i32_0 = arith.constant 0 : i32
    %c0_i32_1 = arith.constant 0 : i32
    return %arg0, %c0_i32, %c0_i32_0 : i32, i32, i32
  }
  func.func @transform_4(%arg0: i32) -> (i32, i32) {
    %c0_i32 = arith.constant 0 : i32
    %c0_i32_0 = arith.constant 0 : i32
    %c0_i32_1 = arith.constant 0 : i32
    return %c0_i32, %c0_i32_0 : i32, i32
  }
  func.func @transform_5(%arg0: i32) -> (i32, i32) {
    %c0_i32 = arith.constant 0 : i32
    %c0_i32_0 = arith.constant 0 : i32
    %c0_i32_1 = arith.constant 0 : i32
    return %c0_i32, %c0_i32_0 : i32, i32
  }
  func.func @transform_6(%arg0: i32) -> (i32, i32) {
    %c0_i32 = arith.constant 0 : i32
    %c0_i32_0 = arith.constant 0 : i32
    %c0_i32_1 = arith.constant 0 : i32
    return %c0_i32, %c0_i32_0 : i32, i32
  }
  func.func @transform_7(%arg0: i32) -> (i32, i32) {
    %c0_i32 = arith.constant 0 : i32
    %c0_i32_0 = arith.constant 0 : i32
    %c0_i32_1 = arith.constant 0 : i32
    return %c0_i32, %c0_i32_0 : i32, i32
  }
  func.func @transform_8(%arg0: i32) -> (i32, i32) {
    %c0_i32 = arith.constant 0 : i32
    %c0_i32_0 = arith.constant 0 : i32
    %c0_i32_1 = arith.constant 0 : i32
    return %c0_i32, %c0_i32_0 : i32, i32
  }
  func.func @transform_9(%arg0: i32) -> (i32, i32) {
    %c0_i32 = arith.constant 0 : i32
    %c0_i32_0 = arith.constant 0 : i32
    %c0_i32_1 = arith.constant 0 : i32
    return %c0_i32, %c0_i32_0 : i32, i32
  }
  func.func @transform_10(%arg0: i32) -> (i32, i32) {
    %c0_i32 = arith.constant 0 : i32
    %c0_i32_0 = arith.constant 0 : i32
    %c0_i32_1 = arith.constant 0 : i32
    return %c0_i32, %c0_i32_0 : i32, i32
  }
  func.func @transform_11(%arg0: i32) -> (i32, i32) {
    %c0_i32 = arith.constant 0 : i32
    %c0_i32_0 = arith.constant 0 : i32
    %c0_i32_1 = arith.constant 0 : i32
    return %c0_i32, %c0_i32_0 : i32, i32
  }
  func.func @transform_12(%arg0: i32) -> (i32, i32) {
    %c0_i32 = arith.constant 0 : i32
    %c0_i32_0 = arith.constant 0 : i32
    %c0_i32_1 = arith.constant 0 : i32
    return %c0_i32, %c0_i32_0 : i32, i32
  }
  func.func @transform_13(%arg0: i32) -> (i32, i32) {
    %c0_i32 = arith.constant 0 : i32
    %c0_i32_0 = arith.constant 0 : i32
    %c0_i32_1 = arith.constant 0 : i32
    return %c0_i32, %c0_i32_0 : i32, i32
  }
  func.func @transform_14(%arg0: i32) -> (i32, i32, i32) {
    %c0_i32 = arith.constant 0 : i32
    %c0_i32_0 = arith.constant 0 : i32
    %c0_i32_1 = arith.constant 0 : i32
    return %arg0, %c0_i32, %c0_i32_0 : i32, i32, i32
  }
}

</mosaic_0001>

<llo_original>
// kernel: tpu_custom_call.1
$region0: #{tpu_custom_call.1}
  #allocation0 [shape = 'u32[]', space=smem, size = 0x4, offset = 0x4, fixed_abs, tag = 'smem constant byte address 0x4 - core index']
  #allocation1 [shape = 'u32[144,128]{1,0:T(1,128)}', space=vmem, size = 0x12000, scoped, tag = 'internal scratch']
  %s0 = inlined_call_operand.hbm [shape: f32[4,8,128], index: 0, kind: input, shape index: {}]
  %s1 = inlined_call_operand.hbm [shape: f32[4,8,128], index: 1, kind: input, shape index: {}]
  %s2 = inlined_call_operand.hbm [shape: f32[4,8,8], index: 2, kind: input, shape index: {}]
  %s3 = inlined_call_operand.hbm [shape: f32[4,8,8], index: 3, kind: input, shape index: {}]
  %s4 = inlined_call_operand.hbm [shape: bf16[128,384], index: 4, kind: input, shape index: {}]
  %s5 = inlined_call_operand.hbm [shape: bf16[128,128], index: 5, kind: input, shape index: {}]
  %s6 = inlined_call_operand.hbm [shape: bf16[128,128], index: 6, kind: input, shape index: {}]
  %s7 = inlined_call_operand.hbm [shape: bf16[128,256], index: 7, kind: input, shape index: {}]
  %s8 = inlined_call_operand.hbm [shape: bf16[128,128], index: 8, kind: input, shape index: {}]
  %s9 = inlined_call_operand.hbm [shape: bf16[128,256], index: 9, kind: input, shape index: {}]
  %s10 = inlined_call_operand.hbm [shape: bf16[256,128], index: 10, kind: input, shape index: {}]
  %s11 = inlined_call_operand.vmem [shape: f32[1,256], index: 11, kind: input, shape index: {}]
  %s12 = inlined_call_operand.vmem [shape: f32[1,128], index: 12, kind: input, shape index: {}]
  %s13 = inlined_call_operand.vmem [shape: f32[6,128], index: 13, kind: input, shape index: {}]
  %s14 = inlined_call_operand.hbm [shape: f32[4,8,128], index: 14, kind: output, shape index: {}]
  %s15 = sld [smem:[#allocation0]]
  $region133: #{tpu_custom_call.1} parent=0
    _
  %s17 = ssub.s32 1, %s15
  %s18 = scalar_select 0, %s17, %s15
  $region1: #{tpu_custom_call.1} parent=0
    #allocation2 [shape = 'u8[16384]{0}', space=vmem, size = 0x4000, scoped, tag = 'input window, operand 0']
    #allocation3 [shape = 's32[2]{0}', space=sflag, size = 0x8, scoped, tag = 'scoped memory for tpu_custom_call.1']
    #allocation4 [shape = 's32[2]{0}', space=sflag, size = 0x8, scoped, tag = 'scoped memory for tpu_custom_call.1']
    #allocation5 [shape = 'u8[16384]{0}', space=vmem, size = 0x4000, scoped, tag = 'input window, operand 1']
    #allocation6 [shape = 's32[2]{0}', space=sflag, size = 0x8, scoped, tag = 'scoped memory for tpu_custom_call.1']
    #allocation7 [shape = 'u8[16384]{0}', space=vmem, size = 0x4000, scoped, tag = 'input window, operand 2']
    #allocation8 [shape = 'u8[16384]{0}', space=vmem, size = 0x4000, scoped, tag = 'input window, operand 3']
    #allocation9 [shape = 's32[2]{0}', space=sflag, size = 0x8, scoped, tag = 'scoped memory for tpu_custom_call.1']
    #allocation10 [shape = 'u8[98304]{0}', space=vmem, size = 0x18000, scoped, tag = 'input window, operand 4, single buffered']
    #allocation11 [shape = 'u8[32768]{0}', space=vmem, size = 0x8000, scoped, tag = 'input window, operand 5, single buffered']
    #allocation12 [shape = 's32[1]{0}', space=sflag, size = 0x4, scoped, tag = 'scoped memory for tpu_custom_call.1']
    #allocation13 [shape = 'u8[32768]{0}', space=vmem, size = 0x8000, scoped, tag = 'input window, operand 6, single buffered']
    #allocation14 [shape = 'u8[65536]{0}', space=vmem, size = 0x10000, scoped, tag = 'input window, operand 7, single buffered']
    #allocation15 [shape = 's32[1]{0}', space=sflag, size = 0x4, scoped, tag = 'scoped memory for tpu_custom_call.1']
    #allocation16 [shape = 'u8[32768]{0}', space=vmem, size = 0x8000, scoped, tag = 'input window, operand 8, single buffered']
    #allocation17 [shape = 'u8[65536]{0}', space=vmem, size = 0x10000, scoped, tag = 'input window, operand 9, single buffered']
    #allocation18 [shape = 's32[1]{0}', space=sflag, size = 0x4, scoped, tag = 'scoped memory for tpu_custom_call.1']
    #allocation19 [shape = 'u8[65536]{0}', space=vmem, size = 0x10000, scoped, tag = 'input window, operand 10, single buffered']
    #allocation20 [shape = 'u8[16384]{0}', space=vmem, size = 0x4000, scoped, tag = 'output window, operand 0']
    %19 = vsyncpa [#allocation3], 0
    %s20 = scalar_lea.sflag [#allocation3], 1
    %21 = vsyncpa %s20, 0
    %22 = vsyncpa [#allocation6], 0
    %s23 = scalar_lea.sflag [#allocation6], 1
    %24 = vsyncpa %s23, 0
    %25 = vsyncpa [#allocation9], 0
    %s26 = scalar_lea.sflag [#allocation9], 1
    %27 = vsyncpa %s26, 0
    %28 = vsyncpa [#allocation12], 0
    %29 = vsyncpa [#allocation15], 0
    %30 = vsyncpa [#allocation18], 0
    %31 = vsyncpa [#allocation4], 0
    %s32 = scalar_lea.sflag [#allocation4], 1
    %33 = vsyncpa %s32, 0
    loop: start=0, step=1, limit=4
    $region2: #{tpu_custom_call.1} parent=1 // loop_pre_header
      _
    $region3: #{tpu_custom_call.1} parent=1 // loop_header
      %s35 = sphi 0, %s39
      %p36 = scmp.ge.s32.totalorder %s35, 4
      %s45 = sphi 0, %s47
      %s48 = sphi 0, %s45
      %s49 = sphi 0, %s48
      %s65 = sphi 0, %s49
      %s71 = sphi 0, %s73
      %s74 = sphi 0, %s71
      %s75 = sphi 0, %s74
      %s91 = sphi 0, %s75
      %s97 = sphi 0, %s99
      %s100 = sphi 0, %s97
      %s101 = sphi 0, %s100
      %s117 = sphi 0, %s101
      %s123 = sphi 0, %s125
      %s126 = sphi 0, %s123
      %s127 = sphi 0, %s126
      %s143 = sphi 0, %s127
      %s147 = sphi 0, %s147
      %s149 = sphi 0, %s147
      %s150 = sphi 0, %s149
      %s164 = sphi 0, %s150
      %s168 = sphi 0, %s168
      %s170 = sphi 0, %s168
      %s171 = sphi 0, %s170
      %s185 = sphi 0, %s171
      %s189 = sphi 0, %s189
      %s191 = sphi 0, %s189
      %s192 = sphi 0, %s191
      %s206 = sphi 0, %s192
      %s210 = sphi 0, %s210
      %s212 = sphi 0, %s210
      %s213 = sphi 0, %s212
      %s227 = sphi 0, %s213
      %s231 = sphi 0, %s231
      %s233 = sphi 0, %s231
      %s234 = sphi 0, %s233
      %s248 = sphi 0, %s234
      %s252 = sphi 0, %s252
      %s254 = sphi 0, %s252
      %s255 = sphi 0, %s254
      %s269 = sphi 0, %s255
      %s273 = sphi 0, %s273
      %s275 = sphi 0, %s273
      %s276 = sphi 0, %s275
      %s290 = sphi 0, %s276
      %s294 = sphi 0, %s294
      %s296 = sphi 0, %s294
      %s297 = sphi 0, %s296
      %s311 = sphi 0, %s297
      %s315 = sphi 0, %s315
      %s317 = sphi 0, %s315
      %s318 = sphi 0, %s317
      %s332 = sphi 0, %s318
      %s336 = sphi 0, %s336
      %s338 = sphi 0, %s336
      %s339 = sphi 0, %s338
      %s353 = sphi 0, %s339
      %s359 = sphi 0, %s361
      %s362 = sphi 0, %s359
      %s363 = sphi 0, %s362
      %s379 = sphi 0, %s363
    $region4: #{tpu_custom_call.1} parent=1 // loop_header_branch
      %38 = sbr.rel (%p36) target = $region8
    $region5: #{tpu_custom_call.1} parent=1 // loop_body
      %s40 = ssub.s32 %s35, 1
      %s41 = ssub.s32 %s35, 2
      %s42 = sadd.s32 %s35, 1
      %s43 = ssub.s32 %s35, %s42
      %p44 = scmp.eq.s32.totalorder %s43, 0
      %s46 = sadd.s32 %s45, 1
      %s47 = scalar_select %p44, %s45, %s46
      %p50 = pneg %p44
      %p51 = scmp.eq.s32.totalorder %s35, 1
      %p52 = por %p50, %p51
      %p53 = scmp.ne.s32.totalorder %s45, %s48
      %p54 = scmp.eq.s32.totalorder %s35, 0
      %p55 = por %p53, %p54
      %p56 = scmp.ne.s32.totalorder %s45, %s48
      %p57 = scmp.eq.s32.totalorder %s40, 1
      %p58 = por %p56, %p57
      %p59 = scmp.ne.s32.totalorder %s48, %s49
      %p60 = scmp.eq.s32.totalorder %s40, 0
      %p61 = por %p59, %p60
      %p62 = scmp.ne.s32.totalorder %s48, %s49
      %p63 = scmp.eq.s32.totalorder %s41, 1
      %p64 = por %p62, %p63
      %p66 = scmp.ne.s32.totalorder %s49, %s65
      %p67 = scmp.eq.s32.totalorder %s41, 0
      %p68 = por %p66, %p67
      %s69 = ssub.s32 %s35, %s42
      %p70 = scmp.eq.s32.totalorder %s69, 0
      %s72 = sadd.s32 %s71, 1
      %s73 = scalar_select %p70, %s71, %s72
      %p76 = pneg %p70
      %p77 = scmp.eq.s32.totalorder %s35, 1
      %p78 = por %p76, %p77
      %p79 = scmp.ne.s32.totalorder %s71, %s74
      %p80 = scmp.eq.s32.totalorder %s35, 0
      %p81 = por %p79, %p80
      %p82 = scmp.ne.s32.totalorder %s71, %s74
      %p83 = scmp.eq.s32.totalorder %s40, 1
      %p84 = por %p82, %p83
      %p85 = scmp.ne.s32.totalorder %s74, %s75
      %p86 = scmp.eq.s32.totalorder %s40, 0
      %p87 = por %p85, %p86
      %p88 = scmp.ne.s32.totalorder %s74, %s75
      %p89 = scmp.eq.s32.totalorder %s41, 1
      %p90 = por %p88, %p89
      %p92 = scmp.ne.s32.totalorder %s75, %s91
      %p93 = scmp.eq.s32.totalorder %s41, 0
      %p94 = por %p92, %p93
      %s95 = ssub.s32 %s35, %s42
      %p96 = scmp.eq.s32.totalorder %s95, 0
      %s98 = sadd.s32 %s97, 1
      %s99 = scalar_select %p96, %s97, %s98
      %p102 = pneg %p96
      %p103 = scmp.eq.s32.totalorder %s35, 1
      %p104 = por %p102, %p103
      %p105 = scmp.ne.s32.totalorder %s97, %s100
      %p106 = scmp.eq.s32.totalorder %s35, 0
      %p107 = por %p105, %p106
      %p108 = scmp.ne.s32.totalorder %s97, %s100
      %p109 = scmp.eq.s32.totalorder %s40, 1
      %p110 = por %p108, %p109
      %p111 = scmp.ne.s32.totalorder %s100, %s101
      %p112 = scmp.eq.s32.totalorder %s40, 0
      %p113 = por %p111, %p112
      %p114 = scmp.ne.s32.totalorder %s100, %s101
      %p115 = scmp.eq.s32.totalorder %s41, 1
      %p116 = por %p114, %p115
      %p118 = scmp.ne.s32.totalorder %s101, %s117
      %p119 = scmp.eq.s32.totalorder %s41, 0
      %p120 = por %p118, %p119
      %s121 = ssub.s32 %s35, %s42
      %p122 = scmp.eq.s32.totalorder %s121, 0
      %s124 = sadd.s32 %s123, 1
      %s125 = scalar_select %p122, %s123, %s124
      %p128 = pneg %p122
      %p129 = scmp.eq.s32.totalorder %s35, 1
      %p130 = por %p128, %p129
      %p131 = scmp.ne.s32.totalorder %s123, %s126
      %p132 = scmp.eq.s32.totalorder %s35, 0
      %p133 = por %p131, %p132
      %p134 = scmp.ne.s32.totalorder %s123, %s126
      %p135 = scmp.eq.s32.totalorder %s40, 1
      %p136 = por %p134, %p135
      %p137 = scmp.ne.s32.totalorder %s126, %s127
      %p138 = scmp.eq.s32.totalorder %s40, 0
      %p139 = por %p137, %p138
      %p140 = scmp.ne.s32.totalorder %s126, %s127
      %p141 = scmp.eq.s32.totalorder %s41, 1
      %p142 = por %p140, %p141
      %p144 = scmp.ne.s32.totalorder %s127, %s143
      %p145 = scmp.eq.s32.totalorder %s41, 0
      %p146 = por %p144, %p145
      %s148 = sadd.s32 %s147, 1
      %p151 = scmp.eq.s32.totalorder %s35, 1
      %p152 = scmp.ne.s32.totalorder %s147, %s149
      %p153 = scmp.eq.s32.totalorder %s35, 0
      %p154 = por %p152, %p153
      %p155 = scmp.ne.s32.totalorder %s147, %s149
      %p156 = scmp.eq.s32.totalorder %s40, 1
      %p157 = por %p155, %p156
      %p158 = scmp.ne.s32.totalorder %s149, %s150
      %p159 = scmp.eq.s32.totalorder %s40, 0
      %p160 = por %p158, %p159
      %p161 = scmp.ne.s32.totalorder %s149, %s150
      %p162 = scmp.eq.s32.totalorder %s41, 1
      %p163 = por %p161, %p162
      %p165 = scmp.ne.s32.totalorder %s150, %s164
      %p166 = scmp.eq.s32.totalorder %s41, 0
      %p167 = por %p165, %p166
      %s169 = sadd.s32 %s168, 1
      %p172 = scmp.eq.s32.totalorder %s35, 1
      %p173 = scmp.ne.s32.totalorder %s168, %s170
      %p174 = scmp.eq.s32.totalorder %s35, 0
      %p175 = por %p173, %p174
      %p176 = scmp.ne.s32.totalorder %s168, %s170
      %p177 = scmp.eq.s32.totalorder %s40, 1
      %p178 = por %p176, %p177
      %p179 = scmp.ne.s32.totalorder %s170, %s171
      %p180 = scmp.eq.s32.totalorder %s40, 0
      %p181 = por %p179, %p180
      %p182 = scmp.ne.s32.totalorder %s170, %s171
      %p183 = scmp.eq.s32.totalorder %s41, 1
      %p184 = por %p182, %p183
      %p186 = scmp.ne.s32.totalorder %s171, %s185
      %p187 = scmp.eq.s32.totalorder %s41, 0
      %p188 = por %p186, %p187
      %s190 = sadd.s32 %s189, 1
      %p193 = scmp.eq.s32.totalorder %s35, 1
      %p194 = scmp.ne.s32.totalorder %s189, %s191
      %p195 = scmp.eq.s32.totalorder %s35, 0
      %p196 = por %p194, %p195
      %p197 = scmp.ne.s32.totalorder %s189, %s191
      %p198 = scmp.eq.s32.totalorder %s40, 1
      %p199 = por %p197, %p198
      %p200 = scmp.ne.s32.totalorder %s191, %s192
      %p201 = scmp.eq.s32.totalorder %s40, 0
      %p202 = por %p200, %p201
      %p203 = scmp.ne.s32.totalorder %s191, %s192
      %p204 = scmp.eq.s32.totalorder %s41, 1
      %p205 = por %p203, %p204
      %p207 = scmp.ne.s32.totalorder %s192, %s206
      %p208 = scmp.eq.s32.totalorder %s41, 0
      %p209 = por %p207, %p208
      %s211 = sadd.s32 %s210, 1
      %p214 = scmp.eq.s32.totalorder %s35, 1
      %p215 = scmp.ne.s32.totalorder %s210, %s212
      %p216 = scmp.eq.s32.totalorder %s35, 0
      %p217 = por %p215, %p216
      %p218 = scmp.ne.s32.totalorder %s210, %s212
      %p219 = scmp.eq.s32.totalorder %s40, 1
      %p220 = por %p218, %p219
      %p221 = scmp.ne.s32.totalorder %s212, %s213
      %p222 = scmp.eq.s32.totalorder %s40, 0
      %p223 = por %p221, %p222
      %p224 = scmp.ne.s32.totalorder %s212, %s213
      %p225 = scmp.eq.s32.totalorder %s41, 1
      %p226 = por %p224, %p225
      %p228 = scmp.ne.s32.totalorder %s213, %s227
      %p229 = scmp.eq.s32.totalorder %s41, 0
      %p230 = por %p228, %p229
      %s232 = sadd.s32 %s231, 1
      %p235 = scmp.eq.s32.totalorder %s35, 1
      %p236 = scmp.ne.s32.totalorder %s231, %s233
      %p237 = scmp.eq.s32.totalorder %s35, 0
      %p238 = por %p236, %p237
      %p239 = scmp.ne.s32.totalorder %s231, %s233
      %p240 = scmp.eq.s32.totalorder %s40, 1
      %p241 = por %p239, %p240
      %p242 = scmp.ne.s32.totalorder %s233, %s234
      %p243 = scmp.eq.s32.totalorder %s40, 0
      %p244 = por %p242, %p243
      %p245 = scmp.ne.s32.totalorder %s233, %s234
      %p246 = scmp.eq.s32.totalorder %s41, 1
      %p247 = por %p245, %p246
      %p249 = scmp.ne.s32.totalorder %s234, %s248
      %p250 = scmp.eq.s32.totalorder %s41, 0
      %p251 = por %p249, %p250
      %s253 = sadd.s32 %s252, 1
      %p256 = scmp.eq.s32.totalorder %s35, 1
      %p257 = scmp.ne.s32.totalorder %s252, %s254
      %p258 = scmp.eq.s32.totalorder %s35, 0
      %p259 = por %p257, %p258
      %p260 = scmp.ne.s32.totalorder %s252, %s254
      %p261 = scmp.eq.s32.totalorder %s40, 1
      %p262 = por %p260, %p261
      %p263 = scmp.ne.s32.totalorder %s254, %s255
      %p264 = scmp.eq.s32.totalorder %s40, 0
      %p265 = por %p263, %p264
      %p266 = scmp.ne.s32.totalorder %s254, %s255
      %p267 = scmp.eq.s32.totalorder %s41, 1
      %p268 = por %p266, %p267
      %p270 = scmp.ne.s32.totalorder %s255, %s269
      %p271 = scmp.eq.s32.totalorder %s41, 0
      %p272 = por %p270, %p271
      %s274 = sadd.s32 %s273, 1
      %p277 = scmp.eq.s32.totalorder %s35, 1
      %p278 = scmp.ne.s32.totalorder %s273, %s275
      %p279 = scmp.eq.s32.totalorder %s35, 0
      %p280 = por %p278, %p279
      %p281 = scmp.ne.s32.totalorder %s273, %s275
      %p282 = scmp.eq.s32.totalorder %s40, 1
      %p283 = por %p281, %p282
      %p284 = scmp.ne.s32.totalorder %s275, %s276
      %p285 = scmp.eq.s32.totalorder %s40, 0
      %p286 = por %p284, %p285
      %p287 = scmp.ne.s32.totalorder %s275, %s276
      %p288 = scmp.eq.s32.totalorder %s41, 1
      %p289 = por %p287, %p288
      %p291 = scmp.ne.s32.totalorder %s276, %s290
      %p292 = scmp.eq.s32.totalorder %s41, 0
      %p293 = por %p291, %p292
      %s295 = sadd.s32 %s294, 1
      %p298 = scmp.eq.s32.totalorder %s35, 1
      %p299 = scmp.ne.s32.totalorder %s294, %s296
      %p300 = scmp.eq.s32.totalorder %s35, 0
      %p301 = por %p299, %p300
      %p302 = scmp.ne.s32.totalorder %s294, %s296
      %p303 = scmp.eq.s32.totalorder %s40, 1
      %p304 = por %p302, %p303
      %p305 = scmp.ne.s32.totalorder %s296, %s297
      %p306 = scmp.eq.s32.totalorder %s40, 0
      %p307 = por %p305, %p306
      %p308 = scmp.ne.s32.totalorder %s296, %s297
      %p309 = scmp.eq.s32.totalorder %s41, 1
      %p310 = por %p308, %p309
      %p312 = scmp.ne.s32.totalorder %s297, %s311
      %p313 = scmp.eq.s32.totalorder %s41, 0
      %p314 = por %p312, %p313
      %s316 = sadd.s32 %s315, 1
      %p319 = scmp.eq.s32.totalorder %s35, 1
      %p320 = scmp.ne.s32.totalorder %s315, %s317
      %p321 = scmp.eq.s32.totalorder %s35, 0
      %p322 = por %p320, %p321
      %p323 = scmp.ne.s32.totalorder %s315, %s317
      %p324 = scmp.eq.s32.totalorder %s40, 1
      %p325 = por %p323, %p324
      %p326 = scmp.ne.s32.totalorder %s317, %s318
      %p327 = scmp.eq.s32.totalorder %s40, 0
      %p328 = por %p326, %p327
      %p329 = scmp.ne.s32.totalorder %s317, %s318
      %p330 = scmp.eq.s32.totalorder %s41, 1
      %p331 = por %p329, %p330
      %p333 = scmp.ne.s32.totalorder %s318, %s332
      %p334 = scmp.eq.s32.totalorder %s41, 0
      %p335 = por %p333, %p334
      %s337 = sadd.s32 %s336, 1
      %p340 = scmp.eq.s32.totalorder %s35, 1
      %p341 = scmp.ne.s32.totalorder %s336, %s338
      %p342 = scmp.eq.s32.totalorder %s35, 0
      %p343 = por %p341, %p342
      %p344 = scmp.ne.s32.totalorder %s336, %s338
      %p345 = scmp.eq.s32.totalorder %s40, 1
      %p346 = por %p344, %p345
      %p347 = scmp.ne.s32.totalorder %s338, %s339
      %p348 = scmp.eq.s32.totalorder %s40, 0
      %p349 = por %p347, %p348
      %p350 = scmp.ne.s32.totalorder %s338, %s339
      %p351 = scmp.eq.s32.totalorder %s41, 1
      %p352 = por %p350, %p351
      %p354 = scmp.ne.s32.totalorder %s339, %s353
      %p355 = scmp.eq.s32.totalorder %s41, 0
      %p356 = por %p354, %p355
      %s357 = ssub.s32 %s35, %s42
      %p358 = scmp.eq.s32.totalorder %s357, 0
      %s360 = sadd.s32 %s359, 1
      %s361 = scalar_select %p358, %s359, %s360
      %p364 = pneg %p358
      %p365 = scmp.eq.s32.totalorder %s35, 1
      %p366 = por %p364, %p365
      %p367 = scmp.ne.s32.totalorder %s359, %s362
      %p368 = scmp.eq.s32.totalorder %s35, 0
      %p369 = por %p367, %p368
      %p370 = scmp.ne.s32.totalorder %s359, %s362
      %p371 = scmp.eq.s32.totalorder %s40, 1
      %p372 = por %p370, %p371
      %p373 = scmp.ne.s32.totalorder %s362, %s363
      %p374 = scmp.eq.s32.totalorder %s40, 0
      %p375 = por %p373, %p374
      %p376 = scmp.ne.s32.totalorder %s362, %s363
      %p377 = scmp.eq.s32.totalorder %s41, 1
      %p378 = por %p376, %p377
      %p380 = scmp.ne.s32.totalorder %s363, %s379
      %p381 = scmp.eq.s32.totalorder %s41, 0
      %p382 = por %p380, %p381
      %p383 = scmp.le.s32.totalorder 1, %s35
      %p384 = scmp.lt.s32.totalorder %s35, 3
      %p385 = pnand %p383, %p384
      %p386 = pneg %p385
      // Predicated region
      $region9: #{tpu_custom_call.1} parent=5 // pred_check
        _
      $region10: #{tpu_custom_call.1} parent=5 // pred_check_branch
        %388 = sbr.rel (%p385) target = $region12
      $region11: #{tpu_custom_call.1} parent=5 // pred_region
        %s389 = ssub.s32 %s35, 1
        // Predicated region
        $region13: #{tpu_custom_call.1} parent=11 // pred_check
          %p390 = pneg %p160
        $region14: #{tpu_custom_call.1} parent=11 // pred_check_branch
          %392 = sbr.rel (%p390) target = $region16
        $region15: #{tpu_custom_call.1} parent=11 // pred_region
          %s394 = ssub.s32 3072, 3072
          %395 = vsyncadd [#allocation9], %s394
          %s396 = sshll.u32 [#allocation10], 4
          %s397 = int_to_ptr.vmem [resolvable:$true] %s396
          %402 = dma.hbm_to_vmem [thread:$0]  %s4, 3072, %s397, [#allocation9], 192, 192, 12
        $region16: #{tpu_custom_call.1} parent=11 // pred_fallthru
          _
        // Predicated region
        $region17: #{tpu_custom_call.1} parent=11 // pred_check
          %p403 = pneg %p181
        $region18: #{tpu_custom_call.1} parent=11 // pred_check_branch
          %405 = sbr.rel (%p403) target = $region20
        $region19: #{tpu_custom_call.1} parent=11 // pred_region
          %s407 = ssub.s32 1024, 1024
          %408 = vsyncadd [#allocation12], %s407
          %s409 = sshll.u32 [#allocation11], 4
          %s410 = int_to_ptr.vmem [resolvable:$true] %s409
          %415 = dma.hbm_to_vmem [thread:$0]  %s5, 1024, %s410, [#allocation12], 64, 64, 4
        $region20: #{tpu_custom_call.1} parent=11 // pred_fallthru
          _
        // Predicated region
        $region21: #{tpu_custom_call.1} parent=11 // pred_check
          %p416 = pneg %p202
        $region22: #{tpu_custom_call.1} parent=11 // pred_check_branch
          %418 = sbr.rel (%p416) target = $region24
        $region23: #{tpu_custom_call.1} parent=11 // pred_region
          %s420 = ssub.s32 1024, 1024
          %421 = vsyncadd [#allocation12], %s420
          %s422 = sshll.u32 [#allocation13], 4
          %s423 = int_to_ptr.vmem [resolvable:$true] %s422
          %428 = dma.hbm_to_vmem [thread:$0]  %s6, 1024, %s423, [#allocation12], 64, 64, 4
        $region24: #{tpu_custom_call.1} parent=11 // pred_fallthru
          _
        // Predicated region
        $region25: #{tpu_custom_call.1} parent=11 // pred_check
          %p429 = pneg %p223
        $region26: #{tpu_custom_call.1} parent=11 // pred_check_branch
          %431 = sbr.rel (%p429) target = $region28
        $region27: #{tpu_custom_call.1} parent=11 // pred_region
          %s433 = ssub.s32 2048, 2048
          %434 = vsyncadd [#allocation15], %s433
          %s435 = sshll.u32 [#allocation14], 4
          %s436 = int_to_ptr.vmem [resolvable:$true] %s435
          %441 = dma.hbm_to_vmem [thread:$0]  %s7, 2048, %s436, [#allocation15], 128, 128, 8
        $region28: #{tpu_custom_call.1} parent=11 // pred_fallthru
          _
        // Predicated region
        $region29: #{tpu_custom_call.1} parent=11 // pred_check
          %p442 = pneg %p244
        $region30: #{tpu_custom_call.1} parent=11 // pred_check_branch
          %444 = sbr.rel (%p442) target = $region32
        $region31: #{tpu_custom_call.1} parent=11 // pred_region
          %s446 = ssub.s32 1024, 1024
          %447 = vsyncadd [#allocation15], %s446
          %s448 = sshll.u32 [#allocation16], 4
          %s449 = int_to_ptr.vmem [resolvable:$true] %s448
          %454 = dma.hbm_to_vmem [thread:$0]  %s8, 1024, %s449, [#allocation15], 64, 64, 4
        $region32: #{tpu_custom_call.1} parent=11 // pred_fallthru
          _
        // Predicated region
        $region33: #{tpu_custom_call.1} parent=11 // pred_check
          %p455 = pneg %p265
        $region34: #{tpu_custom_call.1} parent=11 // pred_check_branch
          %457 = sbr.rel (%p455) target = $region36
        $region35: #{tpu_custom_call.1} parent=11 // pred_region
          %s459 = ssub.s32 2048, 2048
          %460 = vsyncadd [#allocation18], %s459
          %s461 = sshll.u32 [#allocation17], 4
          %s462 = int_to_ptr.vmem [resolvable:$true] %s461
          %467 = dma.hbm_to_vmem [thread:$0]  %s9, 2048, %s462, [#allocation18], 128, 128, 8
        $region36: #{tpu_custom_call.1} parent=11 // pred_fallthru
          _
        // Predicated region
        $region37: #{tpu_custom_call.1} parent=11 // pred_check
          %p468 = pneg %p286
        $region38: #{tpu_custom_call.1} parent=11 // pred_check_branch
          %470 = sbr.rel (%p468) target = $region40
        $region39: #{tpu_custom_call.1} parent=11 // pred_region
          %s472 = ssub.s32 2048, 2048
          %473 = vsyncadd [#allocation18], %s472
          %s474 = sshll.u32 [#allocation19], 4
          %s475 = int_to_ptr.vmem [resolvable:$true] %s474
          %480 = dma.hbm_to_vmem [thread:$0]  %s10, 2048, %s475, [#allocation18], 64, 64, 4
        $region40: #{tpu_custom_call.1} parent=11 // pred_fallthru
          _
        // Predicated region
        $region41: #{tpu_custom_call.1} parent=11 // pred_check
          %p481 = pneg %p307
        $region42: #{tpu_custom_call.1} parent=11 // pred_check_branch
          %483 = sbr.rel (%p481) target = $region44
        $region43: #{tpu_custom_call.1} parent=11 // pred_region
          _
        $region44: #{tpu_custom_call.1} parent=11 // pred_fallthru
          _
        // Predicated region
        $region45: #{tpu_custom_call.1} parent=11 // pred_check
          %p484 = pneg %p328
        $region46: #{tpu_custom_call.1} parent=11 // pred_check_branch
          %486 = sbr.rel (%p484) target = $region48
        $region47: #{tpu_custom_call.1} parent=11 // pred_region
          _
        $region48: #{tpu_custom_call.1} parent=11 // pred_fallthru
          _
        // Predicated region
        $region49: #{tpu_custom_call.1} parent=11 // pred_check
          %p487 = pneg %p349
        $region50: #{tpu_custom_call.1} parent=11 // pred_check_branch
          %489 = sbr.rel (%p487) target = $region52
        $region51: #{tpu_custom_call.1} parent=11 // pred_region
          _
        $region52: #{tpu_custom_call.1} parent=11 // pred_fallthru
          _
      $region12: #{tpu_custom_call.1} parent=5 // pred_fallthru
        _
      %p490 = scmp.lt.s32.totalorder %s35, 2
      // Predicated region
      $region53: #{tpu_custom_call.1} parent=5 // pred_check
        %p491 = pneg %p490
      $region54: #{tpu_custom_call.1} parent=5 // pred_check_branch
        %493 = sbr.rel (%p491) target = $region56
      $region55: #{tpu_custom_call.1} parent=5 // pred_region
        // Predicated region
        $region57: #{tpu_custom_call.1} parent=55 // pred_check
          %p494 = pneg %p55
        $region58: #{tpu_custom_call.1} parent=55 // pred_check_branch
          %496 = sbr.rel (%p494) target = $region60
        $region59: #{tpu_custom_call.1} parent=55 // pred_region
          %s497 = sand.u32 %s45, 1
          %s498 = scalar_lea.sflag [#allocation3], %s497
          %s499 = sand.u32 %s45, 1
          %s500 = smul.addr %s499, 16
          %s501 = scalar_lea.vmem [#allocation2], %s500
          %s502 = smul.u32 2, %s35
          %s504 = ssub.s32 256, 256
          %505 = vsyncadd %s498, %s504
          %s506 = smul.addr %s502, 128
          %s507 = scalar_lea.hbm %s0, %s506
          %s508 = sshll.u32 %s501, 4
          %s509 = int_to_ptr.vmem [resolvable:$true] %s508
          %514 = dma.hbm_to_vmem [thread:$0]  %s507, 256, %s509, %s498, 128, 128, 8
        $region60: #{tpu_custom_call.1} parent=55 // pred_fallthru
          _
        // Predicated region
        $region61: #{tpu_custom_call.1} parent=55 // pred_check
          %p515 = pneg %p81
        $region62: #{tpu_custom_call.1} parent=55 // pred_check_branch
          %517 = sbr.rel (%p515) target = $region64
        $region63: #{tpu_custom_call.1} parent=55 // pred_region
          %s518 = sand.u32 %s35, 1
          %s519 = scalar_lea.sflag [#allocation6], %s518
          %s520 = sand.u32 %s71, 1
          %s521 = smul.addr %s520, 16
          %s522 = scalar_lea.vmem [#allocation5], %s521
          %s523 = smul.u32 2, %s35
          %s525 = ssub.s32 256, 256
          %526 = vsyncadd %s519, %s525
          %s527 = smul.addr %s523, 128
          %s528 = scalar_lea.hbm %s1, %s527
          %s529 = sshll.u32 %s522, 4
          %s530 = int_to_ptr.vmem [resolvable:$true] %s529
          %535 = dma.hbm_to_vmem [thread:$0]  %s528, 256, %s530, %s519, 128, 128, 8
        $region64: #{tpu_custom_call.1} parent=55 // pred_fallthru
          _
        // Predicated region
        $region65: #{tpu_custom_call.1} parent=55 // pred_check
          %p536 = pneg %p107
        $region66: #{tpu_custom_call.1} parent=55 // pred_check_branch
          %538 = sbr.rel (%p536) target = $region68
        $region67: #{tpu_custom_call.1} parent=55 // pred_region
          %s539 = sand.u32 %s35, 1
          %s540 = scalar_lea.sflag [#allocation6], %s539
          %s541 = sand.u32 %s97, 1
          %s542 = smul.addr %s541, 16
          %s543 = scalar_lea.vmem [#allocation7], %s542
          %s544 = smul.u32 2, %s35
          %s546 = ssub.s32 256, 256
          %547 = vsyncadd %s540, %s546
          %s548 = smul.addr %s544, 128
          %s549 = scalar_lea.hbm %s2, %s548
          %s550 = sshll.u32 %s543, 4
          %s551 = int_to_ptr.vmem [resolvable:$true] %s550
          %556 = dma.hbm_to_vmem [thread:$0]  %s549, 256, %s551, %s540, 128, 128, 8
        $region68: #{tpu_custom_call.1} parent=55 // pred_fallthru
          _
        // Predicated region
        $region69: #{tpu_custom_call.1} parent=55 // pred_check
          %p557 = pneg %p133
        $region70: #{tpu_custom_call.1} parent=55 // pred_check_branch
          %559 = sbr.rel (%p557) target = $region72
        $region71: #{tpu_custom_call.1} parent=55 // pred_region
          %s560 = sand.u32 %s35, 1
          %s561 = scalar_lea.sflag [#allocation9], %s560
          %s562 = sand.u32 %s123, 1
          %s563 = smul.addr %s562, 16
          %s564 = scalar_lea.vmem [#allocation8], %s563
          %s565 = smul.u32 2, %s35
          %s567 = ssub.s32 256, 256
          %568 = vsyncadd %s561, %s567
          %s569 = smul.addr %s565, 128
          %s570 = scalar_lea.hbm %s3, %s569
          %s571 = sshll.u32 %s564, 4
          %s572 = int_to_ptr.vmem [resolvable:$true] %s571
          %577 = dma.hbm_to_vmem [thread:$0]  %s570, 256, %s572, %s561, 128, 128, 8
        $region72: #{tpu_custom_call.1} parent=55 // pred_fallthru
          _
      $region56: #{tpu_custom_call.1} parent=5 // pred_fallthru
        _
      %p578 = scmp.le.s32.totalorder 1, %s35
      %p579 = scmp.lt.s32.totalorder %s35, 3
      %p580 = pnand %p578, %p579
      %p581 = pneg %p580
      // Predicated region
      $region73: #{tpu_custom_call.1} parent=5 // pred_check
        _
      $region74: #{tpu_custom_call.1} parent=5 // pred_check_branch
        %583 = sbr.rel (%p580) target = $region76
      $region75: #{tpu_custom_call.1} parent=5 // pred_region
        %s584 = ssub.s32 %s35, 1
        %s585 = sand.u32 %s48, 1
        %s586 = scalar_lea.sflag [#allocation3], %s585
        %s587 = sand.u32 %s48, 1
        %s588 = smul.addr %s587, 16
        %s589 = scalar_lea.vmem [#allocation2], %s588
        // Predicated region
        $region77: #{tpu_custom_call.1} parent=75 // pred_check
          %p590 = pneg %p61
        $region78: #{tpu_custom_call.1} parent=75 // pred_check_branch
          %592 = sbr.rel (%p590) target = $region80
        $region79: #{tpu_custom_call.1} parent=75 // pred_region
          %593 = dma.done %s586, 256
        $region80: #{tpu_custom_call.1} parent=75 // pred_fallthru
          _
        %s594 = sand.u32 %s40, 1
        %s595 = scalar_lea.sflag [#allocation6], %s594
        %s596 = sand.u32 %s74, 1
        %s597 = smul.addr %s596, 16
        %s598 = scalar_lea.vmem [#allocation5], %s597
        // Predicated region
        $region81: #{tpu_custom_call.1} parent=75 // pred_check
          %p599 = pneg %p87
        $region82: #{tpu_custom_call.1} parent=75 // pred_check_branch
          %601 = sbr.rel (%p599) target = $region84
        $region83: #{tpu_custom_call.1} parent=75 // pred_region
          %602 = dma.done %s595, 256
        $region84: #{tpu_custom_call.1} parent=75 // pred_fallthru
          _
        %s603 = sand.u32 %s40, 1
        %s604 = scalar_lea.sflag [#allocation6], %s603
        %s605 = sand.u32 %s100, 1
        %s606 = smul.addr %s605, 16
        %s607 = scalar_lea.vmem [#allocation7], %s606
        // Predicated region
        $region85: #{tpu_custom_call.1} parent=75 // pred_check
          %p608 = pneg %p113
        $region86: #{tpu_custom_call.1} parent=75 // pred_check_branch
          %610 = sbr.rel (%p608) target = $region88
        $region87: #{tpu_custom_call.1} parent=75 // pred_region
          %611 = dma.done %s604, 256
        $region88: #{tpu_custom_call.1} parent=75 // pred_fallthru
          _
        %s612 = sand.u32 %s40, 1
        %s613 = scalar_lea.sflag [#allocation9], %s612
        %s614 = sand.u32 %s126, 1
        %s615 = smul.addr %s614, 16
        %s616 = scalar_lea.vmem [#allocation8], %s615
        // Predicated region
        $region89: #{tpu_custom_call.1} parent=75 // pred_check
          %p617 = pneg %p139
        $region90: #{tpu_custom_call.1} parent=75 // pred_check_branch
          %619 = sbr.rel (%p617) target = $region92
        $region91: #{tpu_custom_call.1} parent=75 // pred_region
          %620 = dma.done %s613, 256
        $region92: #{tpu_custom_call.1} parent=75 // pred_fallthru
          _
        // Predicated region
        $region93: #{tpu_custom_call.1} parent=75 // pred_check
          %p621 = pneg %p160
        $region94: #{tpu_custom_call.1} parent=75 // pred_check_branch
          %623 = sbr.rel (%p621) target = $region96
        $region95: #{tpu_custom_call.1} parent=75 // pred_region
          %624 = dma.done [#allocation9], 3072
        $region96: #{tpu_custom_call.1} parent=75 // pred_fallthru
          _
        // Predicated region
        $region97: #{tpu_custom_call.1} parent=75 // pred_check
          %p625 = pneg %p181
        $region98: #{tpu_custom_call.1} parent=75 // pred_check_branch
          %627 = sbr.rel (%p625) target = $region100
        $region99: #{tpu_custom_call.1} parent=75 // pred_region
          %628 = dma.done [#allocation12], 1024
        $region100: #{tpu_custom_call.1} parent=75 // pred_fallthru
          _
        // Predicated region
        $region101: #{tpu_custom_call.1} parent=75 // pred_check
          %p629 = pneg %p202
        $region102: #{tpu_custom_call.1} parent=75 // pred_check_branch
          %631 = sbr.rel (%p629) target = $region104
        $region103: #{tpu_custom_call.1} parent=75 // pred_region
          %632 = dma.done [#allocation12], 1024
        $region104: #{tpu_custom_call.1} parent=75 // pred_fallthru
          _
        // Predicated region
        $region105: #{tpu_custom_call.1} parent=75 // pred_check
          %p633 = pneg %p223
        $region106: #{tpu_custom_call.1} parent=75 // pred_check_branch
          %635 = sbr.rel (%p633) target = $region108
        $region107: #{tpu_custom_call.1} parent=75 // pred_region
          %636 = dma.done [#allocation15], 2048
        $region108: #{tpu_custom_call.1} parent=75 // pred_fallthru
          _
        // Predicated region
        $region109: #{tpu_custom_call.1} parent=75 // pred_check
          %p637 = pneg %p244
        $region110: #{tpu_custom_call.1} parent=75 // pred_check_branch
          %639 = sbr.rel (%p637) target = $region112
        $region111: #{tpu_custom_call.1} parent=75 // pred_region
          %640 = dma.done [#allocation15], 1024
        $region112: #{tpu_custom_call.1} parent=75 // pred_fallthru
          _
        // Predicated region
        $region113: #{tpu_custom_call.1} parent=75 // pred_check
          %p641 = pneg %p265
        $region114: #{tpu_custom_call.1} parent=75 // pred_check_branch
          %643 = sbr.rel (%p641) target = $region116
        $region115: #{tpu_custom_call.1} parent=75 // pred_region
          %644 = dma.done [#allocation18], 2048
        $region116: #{tpu_custom_call.1} parent=75 // pred_fallthru
          _
        // Predicated region
        $region117: #{tpu_custom_call.1} parent=75 // pred_check
          %p645 = pneg %p286
        $region118: #{tpu_custom_call.1} parent=75 // pred_check_branch
          %647 = sbr.rel (%p645) target = $region120
        $region119: #{tpu_custom_call.1} parent=75 // pred_region
          %648 = dma.done [#allocation18], 2048
        $region120: #{tpu_custom_call.1} parent=75 // pred_fallthru
          _
        %s649 = sand.u32 %s48, 1
        %s650 = scalar_lea.sflag [#allocation3], %s649
        %s651 = sand.u32 %s48, 1
        %s652 = smul.addr %s651, 16
        %s653 = scalar_lea.vmem [#allocation2], %s652
        %p654 = pneg %p61
        %p655 = pneg %p58
        %s656 = sand.u32 %s40, 1
        %s657 = scalar_lea.sflag [#allocation6], %s656
        %s658 = sand.u32 %s74, 1
        %s659 = smul.addr %s658, 16
        %s660 = scalar_lea.vmem [#allocation5], %s659
        %p661 = pneg %p87
        %p662 = pneg %p84
        %s663 = sand.u32 %s40, 1
        %s664 = scalar_lea.sflag [#allocation6], %s663
        %s665 = sand.u32 %s100, 1
        %s666 = smul.addr %s665, 16
        %s667 = scalar_lea.vmem [#allocation7], %s666
        %p668 = pneg %p113
        %p669 = pneg %p110
        %s670 = sand.u32 %s40, 1
        %s671 = scalar_lea.sflag [#allocation9], %s670
        %s672 = sand.u32 %s126, 1
        %s673 = smul.addr %s672, 16
        %s674 = scalar_lea.vmem [#allocation8], %s673
        %p675 = pneg %p139
        %p676 = pneg %p136
        %p677 = pneg %p160
        %p678 = pneg %p157
        %p679 = pneg %p181
        %p680 = pneg %p178
        %p681 = pneg %p202
        %p682 = pneg %p199
        %p683 = pneg %p223
        %p684 = pneg %p220
        %p685 = pneg %p244
        %p686 = pneg %p241
        %p687 = pneg %p265
        %p688 = pneg %p262
        %p689 = pneg %p286
        %p690 = pneg %p283
        %p691 = pneg %p307
        %p692 = pneg %p304
        %p693 = pneg %p328
        %p694 = pneg %p325
        %p695 = pneg %p349
        %p696 = pneg %p346
        %p697 = pneg %p375
        %p698 = pneg %p372
        %s699 = sand.u32 %s362, 1
        %s700 = scalar_lea.sflag [#allocation4], %s699
        %s701 = sand.u32 %s362, 1
        %s702 = smul.addr %s701, 16
        %s703 = scalar_lea.vmem [#allocation20], %s702
        %s704 = smul.u32 2, %s40
        %s705 = smul.u32 2, %s40
        %s706 = smul.u32 2, %s40
        %s707 = smul.u32 2, %s40
        %s708 = smul.u32 2, %s40
        %v710 = vld [vmem:[%s589] sm:$0xff]
        %v711 = vld [vmem:[%s589 + $0x8] sm:$0xff]
        %v712 = vld [vmem:[%s598] sm:$0xff]
        %v713 = vld [vmem:[%s598 + $0x8] sm:$0xff]
        %v714 = vpack.c.bf16 %v713, %v712
        %v715 = vpack.c.bf16 %v711, %v710
        %v716 = vld [vmem:[#allocation10] sm:$0xff]
        %v717 = vld [vmem:[#allocation10 + $0x8] sm:$0xf]
        %v718 = vld [vmem:[#allocation10 + $0xc] sm:$0xff]
        %v719 = vld [vmem:[#allocation10 + $0x14] sm:$0xf]
        %v720 = vld [vmem:[#allocation10 + $0x18] sm:$0xff]
        %v721 = vld [vmem:[#allocation10 + $0x20] sm:$0xf]
        %v722 = vld [vmem:[#allocation10 + $0x24] sm:$0xff]
        %v723 = vld [vmem:[#allocation10 + $0x2c] sm:$0xf]
        %v724 = vld [vmem:[#allocation10 + $0x30] sm:$0xff]
        %v725 = vld [vmem:[#allocation10 + $0x38] sm:$0xf]
        %v726 = vld [vmem:[#allocation10 + $0x3c] sm:$0xff]
        %v727 = vld [vmem:[#allocation10 + $0x44] sm:$0xf]
        %v728 = vld [vmem:[#allocation10 + $0x48] sm:$0xff]
        %v729 = vld [vmem:[#allocation10 + $0x50] sm:$0xf]
        %v730 = vld [vmem:[#allocation10 + $0x54] sm:$0xff]
        %v731 = vld [vmem:[#allocation10 + $0x5c] sm:$0xf]
        %v732 = vld [vmem:[#allocation10 + $0x60] sm:$0xff]
        %v733 = vld [vmem:[#allocation10 + $0x68] sm:$0xf]
        %v734 = vld [vmem:[#allocation10 + $0x6c] sm:$0xff]
        %v735 = vld [vmem:[#allocation10 + $0x74] sm:$0xf]
        %v736 = vld [vmem:[#allocation10 + $0x78] sm:$0xff]
        %v737 = vld [vmem:[#allocation10 + $0x80] sm:$0xf]
        %v738 = vld [vmem:[#allocation10 + $0x84] sm:$0xff]
        %v739 = vld [vmem:[#allocation10 + $0x8c] sm:$0xf]
        %v740 = vld [vmem:[#allocation10 + $0x90] sm:$0xff]
        %v741 = vld [vmem:[#allocation10 + $0x98] sm:$0xf]
        %v742 = vld [vmem:[#allocation10 + $0x9c] sm:$0xff]
        %v743 = vld [vmem:[#allocation10 + $0xa4] sm:$0xf]
        %v744 = vld [vmem:[#allocation10 + $0xa8] sm:$0xff]
        %v745 = vld [vmem:[#allocation10 + $0xb0] sm:$0xf]
        %v746 = vld [vmem:[#allocation10 + $0xb4] sm:$0xff]
        %v747 = vld [vmem:[#allocation10 + $0xbc] sm:$0xf]
        %v780 = vunpack.c.l.b16 %v716
        %v781 = vunpack.c.h.b16 %v716
        %v782 = vunpack.c.l.b16 %v717
        %v783 = vunpack.c.l.b16 %v718
        %v784 = vunpack.c.h.b16 %v718
        %v785 = vunpack.c.l.b16 %v719
        %v786 = vunpack.c.l.b16 %v720
        %v787 = vunpack.c.h.b16 %v720
        %v788 = vunpack.c.l.b16 %v721
        %v789 = vunpack.c.l.b16 %v722
        %v790 = vunpack.c.h.b16 %v722
        %v791 = vunpack.c.l.b16 %v723
        %v792 = vunpack.c.l.b16 %v724
        %v793 = vunpack.c.h.b16 %v724
        %v794 = vunpack.c.l.b16 %v725
        %v795 = vunpack.c.l.b16 %v726
        %v796 = vunpack.c.h.b16 %v726
        %v797 = vunpack.c.l.b16 %v727
        %v798 = vunpack.c.l.b16 %v728
        %v799 = vunpack.c.h.b16 %v728
        %v800 = vunpack.c.l.b16 %v729
        %v801 = vunpack.c.l.b16 %v730
        %v802 = vunpack.c.h.b16 %v730
        %v803 = vunpack.c.l.b16 %v731
        %v804 = vunpack.c.l.b16 %v732
        %v805 = vunpack.c.h.b16 %v732
        %v806 = vunpack.c.l.b16 %v733
        %v807 = vunpack.c.l.b16 %v734
        %v808 = vunpack.c.h.b16 %v734
        %v809 = vunpack.c.l.b16 %v735
        %v810 = vunpack.c.l.b16 %v736
        %v811 = vunpack.c.h.b16 %v736
        %v812 = vunpack.c.l.b16 %v737
        %v813 = vunpack.c.l.b16 %v738
        %v814 = vunpack.c.h.b16 %v738
        %v815 = vunpack.c.l.b16 %v739
        %v816 = vunpack.c.l.b16 %v740
        %v817 = vunpack.c.h.b16 %v740
        %v818 = vunpack.c.l.b16 %v741
        %v819 = vunpack.c.l.b16 %v742
        %v820 = vunpack.c.h.b16 %v742
        %v821 = vunpack.c.l.b16 %v743
        %v822 = vunpack.c.l.b16 %v744
        %v823 = vunpack.c.h.b16 %v744
        %v824 = vunpack.c.l.b16 %v745
        %v825 = vunpack.c.l.b16 %v746
        %v826 = vunpack.c.h.b16 %v746
        %v827 = vunpack.c.l.b16 %v747
        %v828 = vpack.c.b16 %v783, %v780
        %v829 = vpack.c.b16 %v784, %v781
        %v830 = vpack.c.b16 %v785, %v782
        %v831 = vpack.c.b16 %v789, %v786
        %v832 = vpack.c.b16 %v790, %v787
        %v833 = vpack.c.b16 %v791, %v788
        %v834 = vpack.c.b16 %v795, %v792
        %v835 = vpack.c.b16 %v796, %v793
        %v836 = vpack.c.b16 %v797, %v794
        %v837 = vpack.c.b16 %v801, %v798
        %v838 = vpack.c.b16 %v802, %v799
        %v839 = vpack.c.b16 %v803, %v800
        %v840 = vpack.c.b16 %v807, %v804
        %v841 = vpack.c.b16 %v808, %v805
        %v842 = vpack.c.b16 %v809, %v806
        %v843 = vpack.c.b16 %v813, %v810
        %v844 = vpack.c.b16 %v814, %v811
        %v845 = vpack.c.b16 %v815, %v812
        %v846 = vpack.c.b16 %v819, %v816
        %v847 = vpack.c.b16 %v820, %v817
        %v848 = vpack.c.b16 %v821, %v818
        %v849 = vpack.c.b16 %v825, %v822
        %v850 = vpack.c.b16 %v826, %v823
        %v851 = vpack.c.b16 %v827, %v824
        %876 = vmatprep.subr.bf16.mxu0 %v829
        %877 = vmatpush1.bf16.msra.mxu0 %v828
        %878 = vmatprep.subr.bf16.mxu0 %v832
        %879 = vmatpush1.bf16.msra.mxu0 %v831
        %880 = vmatprep.subr.bf16.mxu0 %v835
        %881 = vmatpush1.bf16.msra.mxu0 %v834
        %882 = vmatprep.subr.bf16.mxu0 %v838
        %883 = vmatpush1.bf16.msra.mxu0 %v837
        %884 = vmatprep.subr.bf16.mxu0 %v841
        %885 = vmatpush1.bf16.msra.mxu0 %v840
        %886 = vmatprep.subr.bf16.mxu0 %v844
        %887 = vmatpush1.bf16.msra.mxu0 %v843
        %888 = vmatprep.subr.bf16.mxu0 %v847
        %889 = vmatpush1.bf16.msra.mxu0 %v846
        %890 = vmatprep.subr.bf16.mxu0 %v850
        %891 = vmatpush1.bf16.msra.mxu0 %v849
        %892 = vmatprep.subr.bf16.mxu0 0
        %893 = vmatpush1.bf16.msra.mxu0 0
        %894 = vmatprep.subr.bf16.mxu0 0
        %895 = vmatpush1.bf16.msra.mxu0 0
        %896 = vmatprep.subr.bf16.mxu0 0
        %897 = vmatpush1.bf16.msra.mxu0 0
        %898 = vmatprep.subr.bf16.mxu0 0
        %899 = vmatpush1.bf16.msra.mxu0 0
        %900 = vmatprep.subr.bf16.mxu0 0
        %901 = vmatpush1.bf16.msra.mxu0 0
        %902 = vmatprep.subr.bf16.mxu0 0
        %903 = vmatpush1.bf16.msra.mxu0 0
        %904 = vmatprep.subr.bf16.mxu0 0
        %905 = vmatpush1.bf16.msra.mxu0 0
        %906 = vmatprep.subr.bf16.mxu0 0
        %907 = vmatpush1.bf16.msra.mxu0 0
        %908 = vmatprep.mubr.bf16.mxu0 0
        %909 = vmatmul.mubr.bf16.gmra.mrb[0].mxu0 %v715
        %v910 = vpop.f32.mrb[0].mxu0
        %v911 = vadd.f32 0.0, %v910
        %v912 = vpop.f32.mrb[0].mxu0
        %v913 = vadd.f32 0.0, %v912
        %v914 = vpop.f32.mrb[0].mxu0
        %v915 = vadd.f32 0.0, %v914
        %v916 = vpop.f32.mrb[0].mxu0
        %v917 = vadd.f32 0.0, %v916
        %918 = vdwg.mxu0
        %919 = vmatprep.subr.bf16.mxu0 0
        %920 = vmatpush1.bf16.msra.mxu0 %v830
        %921 = vmatprep.subr.bf16.mxu0 0
        %922 = vmatpush1.bf16.msra.mxu0 %v833
        %923 = vmatprep.subr.bf16.mxu0 0
        %924 = vmatpush1.bf16.msra.mxu0 %v836
        %925 = vmatprep.subr.bf16.mxu0 0
        %926 = vmatpush1.bf16.msra.mxu0 %v839
        %927 = vmatprep.subr.bf16.mxu0 0
        %928 = vmatpush1.bf16.msra.mxu0 %v842
        %929 = vmatprep.subr.bf16.mxu0 0
        %930 = vmatpush1.bf16.msra.mxu0 %v845
        %931 = vmatprep.subr.bf16.mxu0 0
        %932 = vmatpush1.bf16.msra.mxu0 %v848
        %933 = vmatprep.subr.bf16.mxu0 0
        %934 = vmatpush1.bf16.msra.mxu0 %v851
        %935 = vmatprep.subr.bf16.mxu0 0
        %936 = vmatpush1.bf16.msra.mxu0 0
        %937 = vmatprep.subr.bf16.mxu0 0
        %938 = vmatpush1.bf16.msra.mxu0 0
        %939 = vmatprep.subr.bf16.mxu0 0
        %940 = vmatpush1.bf16.msra.mxu0 0
        %941 = vmatprep.subr.bf16.mxu0 0
        %942 = vmatpush1.bf16.msra.mxu0 0
        %943 = vmatprep.subr.bf16.mxu0 0
        %944 = vmatpush1.bf16.msra.mxu0 0
        %945 = vmatprep.subr.bf16.mxu0 0
        %946 = vmatpush1.bf16.msra.mxu0 0
        %947 = vmatprep.subr.bf16.mxu0 0
        %948 = vmatpush1.bf16.msra.mxu0 0
        %949 = vmatprep.subr.bf16.mxu0 0
        %950 = vmatpush1.bf16.msra.mxu0 0
        %951 = vmatprep.mubr.bf16.mxu0 0
        %952 = vmatmul.mubr.bf16.gmra.mrb[0].mxu0 %v715
        %v953 = vpop.f32.mrb[0].mxu0
        %v954 = vadd.f32 0.0, %v953
        %v955 = vpop.f32.mrb[0].mxu0
        %v956 = vpop.f32.mrb[0].mxu0
        %v957 = vadd.f32 0.0, %v956
        %v958 = vpop.f32.mrb[0].mxu0
        %959 = vdwg.mxu0
        %v960 = vmul.f32 %v911, 0.25
        %v961 = vmul.f32 %v915, 0.25
        %962 = vxpose.xlu0.b32.start [1/16] %v960, 128
        %963 = vxpose.xlu0.b32.cont [2/16] 0.0, 128
        %964 = vxpose.xlu0.b32.cont [3/16] 0.0, 128
        %965 = vxpose.xlu0.b32.cont [4/16] 0.0, 128
        %966 = vxpose.xlu0.b32.cont [5/16] 0.0, 128
        %967 = vxpose.xlu0.b32.cont [6/16] 0.0, 128
        %968 = vxpose.xlu0.b32.cont [7/16] 0.0, 128
        %969 = vxpose.xlu0.b32.cont [8/16] 0.0, 128
        %970 = vxpose.xlu0.b32.cont [9/16] 0.0, 128
        %971 = vxpose.xlu0.b32.cont [10/16] 0.0, 128
        %972 = vxpose.xlu0.b32.cont [11/16] 0.0, 128
        %973 = vxpose.xlu0.b32.cont [12/16] 0.0, 128
        %974 = vxpose.xlu0.b32.cont [13/16] 0.0, 128
        %975 = vxpose.xlu0.b32.cont [14/16] 0.0, 128
        %976 = vxpose.xlu0.b32.cont [15/16] 0.0, 128
        %977 = vxpose.xlu0.b32.end [16/16] 0.0, 128
        %v978 = vpop.trf.xlu0
        %v979 = vpop.trf.xlu0
        %v980 = vpop.trf.xlu0
        %v981 = vpop.trf.xlu0
        %v982 = vpop.trf.xlu0
        %v983 = vpop.trf.xlu0
        %v984 = vpop.trf.xlu0
        %v985 = vpop.trf.xlu0
        %v986 = vpop.trf.xlu0
        %v987 = vpop.trf.xlu0
        %v988 = vpop.trf.xlu0
        %v989 = vpop.trf.xlu0
        %v990 = vpop.trf.xlu0
        %v991 = vpop.trf.xlu0
        %v992 = vpop.trf.xlu0
        %v993 = vpop.trf.xlu0
        %994 = vxpose.xlu0.b32.start [1/16] %v978, 128
        %995 = vxpose.xlu0.b32.cont [2/16] %v979, 128
        %996 = vxpose.xlu0.b32.cont [3/16] 0.0, 128
        %997 = vxpose.xlu0.b32.cont [4/16] 0.0, 128
        %998 = vxpose.xlu0.b32.cont [5/16] 0.0, 128
        %999 = vxpose.xlu0.b32.cont [6/16] 0.0, 128
        %1000 = vxpose.xlu0.b32.cont [7/16] 0.0, 128
        %1001 = vxpose.xlu0.b32.cont [8/16] 0.0, 128
        %1002 = vxpose.xlu0.b32.cont [9/16] 0.0, 128
        %1003 = vxpose.xlu0.b32.cont [10/16] 0.0, 128
        %1004 = vxpose.xlu0.b32.cont [11/16] 0.0, 128
        %1005 = vxpose.xlu0.b32.cont [12/16] 0.0, 128
        %1006 = vxpose.xlu0.b32.cont [13/16] 0.0, 128
        %1007 = vxpose.xlu0.b32.cont [14/16] 0.0, 128
        %1008 = vxpose.xlu0.b32.cont [15/16] 0.0, 128
        %1009 = vxpose.xlu0.b32.end [16/16] 0.0, 128
        %v1010 = vpop.trf.xlu0
        %v1011 = vpop.trf.xlu0
        %v1012 = vpop.trf.xlu0
        %v1013 = vpop.trf.xlu0
        %v1014 = vpop.trf.xlu0
        %v1015 = vpop.trf.xlu0
        %v1016 = vpop.trf.xlu0
        %v1017 = vpop.trf.xlu0
        %v1018 = vpop.trf.xlu0
        %v1019 = vpop.trf.xlu0
        %v1020 = vpop.trf.xlu0
        %v1021 = vpop.trf.xlu0
        %v1022 = vpop.trf.xlu0
        %v1023 = vpop.trf.xlu0
        %v1024 = vpop.trf.xlu0
        %v1025 = vpop.trf.xlu0
        %1026 = vxpose.xlu0.b32.start [1/16] %v980, 128
        %1027 = vxpose.xlu0.b32.cont [2/16] %v981, 128
        %1028 = vxpose.xlu0.b32.cont [3/16] 0.0, 128
        %1029 = vxpose.xlu0.b32.cont [4/16] 0.0, 128
        %1030 = vxpose.xlu0.b32.cont [5/16] 0.0, 128
        %1031 = vxpose.xlu0.b32.cont [6/16] 0.0, 128
        %1032 = vxpose.xlu0.b32.cont [7/16] 0.0, 128
        %1033 = vxpose.xlu0.b32.cont [8/16] 0.0, 128
        %1034 = vxpose.xlu0.b32.cont [9/16] 0.0, 128
        %1035 = vxpose.xlu0.b32.cont [10/16] 0.0, 128
        %1036 = vxpose.xlu0.b32.cont [11/16] 0.0, 128
        %1037 = vxpose.xlu0.b32.cont [12/16] 0.0, 128
        %1038 = vxpose.xlu0.b32.cont [13/16] 0.0, 128
        %1039 = vxpose.xlu0.b32.cont [14/16] 0.0, 128
        %1040 = vxpose.xlu0.b32.cont [15/16] 0.0, 128
        %1041 = vxpose.xlu0.b32.end [16/16] 0.0, 128
        %v1042 = vpop.trf.xlu0
        %v1043 = vpop.trf.xlu0
        %v1044 = vpop.trf.xlu0
        %v1045 = vpop.trf.xlu0
        %v1046 = vpop.trf.xlu0
        %v1047 = vpop.trf.xlu0
        %v1048 = vpop.trf.xlu0
        %v1049 = vpop.trf.xlu0
        %v1050 = vpop.trf.xlu0
        %v1051 = vpop.trf.xlu0
        %v1052 = vpop.trf.xlu0
        %v1053 = vpop.trf.xlu0
        %v1054 = vpop.trf.xlu0
        %v1055 = vpop.trf.xlu0
        %v1056 = vpop.trf.xlu0
        %v1057 = vpop.trf.xlu0
        %1058 = vxpose.xlu0.b32.start [1/16] %v982, 128
        %1059 = vxpose.xlu0.b32.cont [2/16] %v983, 128
        %1060 = vxpose.xlu0.b32.cont [3/16] 0.0, 128
        %1061 = vxpose.xlu0.b32.cont [4/16] 0.0, 128
        %1062 = vxpose.xlu0.b32.cont [5/16] 0.0, 128
        %1063 = vxpose.xlu0.b32.cont [6/16] 0.0, 128
        %1064 = vxpose.xlu0.b32.cont [7/16] 0.0, 128
        %1065 = vxpose.xlu0.b32.cont [8/16] 0.0, 128
        %1066 = vxpose.xlu0.b32.cont [9/16] 0.0, 128
        %1067 = vxpose.xlu0.b32.cont [10/16] 0.0, 128
        %1068 = vxpose.xlu0.b32.cont [11/16] 0.0, 128
        %1069 = vxpose.xlu0.b32.cont [12/16] 0.0, 128
        %1070 = vxpose.xlu0.b32.cont [13/16] 0.0, 128
        %1071 = vxpose.xlu0.b32.cont [14/16] 0.0, 128
        %1072 = vxpose.xlu0.b32.cont [15/16] 0.0, 128
        %1073 = vxpose.xlu0.b32.end [16/16] 0.0, 128
        %v1074 = vpop.trf.xlu0
        %v1075 = vpop.trf.xlu0
        %v1076 = vpop.trf.xlu0
        %v1077 = vpop.trf.xlu0
        %v1078 = vpop.trf.xlu0
        %v1079 = vpop.trf.xlu0
        %v1080 = vpop.trf.xlu0
        %v1081 = vpop.trf.xlu0
        %v1082 = vpop.trf.xlu0
        %v1083 = vpop.trf.xlu0
        %v1084 = vpop.trf.xlu0
        %v1085 = vpop.trf.xlu0
        %v1086 = vpop.trf.xlu0
        %v1087 = vpop.trf.xlu0
        %v1088 = vpop.trf.xlu0
        %v1089 = vpop.trf.xlu0
        %1090 = vxpose.xlu0.b32.start [1/16] %v984, 128
        %1091 = vxpose.xlu0.b32.cont [2/16] %v985, 128
        %1092 = vxpose.xlu0.b32.cont [3/16] 0.0, 128
        %1093 = vxpose.xlu0.b32.cont [4/16] 0.0, 128
        %1094 = vxpose.xlu0.b32.cont [5/16] 0.0, 128
        %1095 = vxpose.xlu0.b32.cont [6/16] 0.0, 128
        %1096 = vxpose.xlu0.b32.cont [7/16] 0.0, 128
        %1097 = vxpose.xlu0.b32.cont [8/16] 0.0, 128
        %1098 = vxpose.xlu0.b32.cont [9/16] 0.0, 128
        %1099 = vxpose.xlu0.b32.cont [10/16] 0.0, 128
        %1100 = vxpose.xlu0.b32.cont [11/16] 0.0, 128
        %1101 = vxpose.xlu0.b32.cont [12/16] 0.0, 128
        %1102 = vxpose.xlu0.b32.cont [13/16] 0.0, 128
        %1103 = vxpose.xlu0.b32.cont [14/16] 0.0, 128
        %1104 = vxpose.xlu0.b32.cont [15/16] 0.0, 128
        %1105 = vxpose.xlu0.b32.end [16/16] 0.0, 128
        %v1106 = vpop.trf.xlu0
        %v1107 = vpop.trf.xlu0
        %v1108 = vpop.trf.xlu0
        %v1109 = vpop.trf.xlu0
        %v1110 = vpop.trf.xlu0
        %v1111 = vpop.trf.xlu0
        %v1112 = vpop.trf.xlu0
        %v1113 = vpop.trf.xlu0
        %v1114 = vpop.trf.xlu0
        %v1115 = vpop.trf.xlu0
        %v1116 = vpop.trf.xlu0
        %v1117 = vpop.trf.xlu0
        %v1118 = vpop.trf.xlu0
        %v1119 = vpop.trf.xlu0
        %v1120 = vpop.trf.xlu0
        %v1121 = vpop.trf.xlu0
        %1122 = vxpose.xlu0.b32.start [1/16] %v986, 128
        %1123 = vxpose.xlu0.b32.cont [2/16] %v987, 128
        %1124 = vxpose.xlu0.b32.cont [3/16] 0.0, 128
        %1125 = vxpose.xlu0.b32.cont [4/16] 0.0, 128
        %1126 = vxpose.xlu0.b32.cont [5/16] 0.0, 128
        %1127 = vxpose.xlu0.b32.cont [6/16] 0.0, 128
        %1128 = vxpose.xlu0.b32.cont [7/16] 0.0, 128
        %1129 = vxpose.xlu0.b32.cont [8/16] 0.0, 128
        %1130 = vxpose.xlu0.b32.cont [9/16] 0.0, 128
        %1131 = vxpose.xlu0.b32.cont [10/16] 0.0, 128
        %1132 = vxpose.xlu0.b32.cont [11/16] 0.0, 128
        %1133 = vxpose.xlu0.b32.cont [12/16] 0.0, 128
        %1134 = vxpose.xlu0.b32.cont [13/16] 0.0, 128
        %1135 = vxpose.xlu0.b32.cont [14/16] 0.0, 128
        %1136 = vxpose.xlu0.b32.cont [15/16] 0.0, 128
        %1137 = vxpose.xlu0.b32.end [16/16] 0.0, 128
        %v1138 = vpop.trf.xlu0
        %v1139 = vpop.trf.xlu0
        %v1140 = vpop.trf.xlu0
        %v1141 = vpop.trf.xlu0
        %v1142 = vpop.trf.xlu0
        %v1143 = vpop.trf.xlu0
        %v1144 = vpop.trf.xlu0
        %v1145 = vpop.trf.xlu0
        %v1146 = vpop.trf.xlu0
        %v1147 = vpop.trf.xlu0
        %v1148 = vpop.trf.xlu0
        %v1149 = vpop.trf.xlu0
        %v1150 = vpop.trf.xlu0
        %v1151 = vpop.trf.xlu0
        %v1152 = vpop.trf.xlu0
        %v1153 = vpop.trf.xlu0
        %1154 = vxpose.xlu0.b32.start [1/16] %v988, 128
        %1155 = vxpose.xlu0.b32.cont [2/16] %v989, 128
        %1156 = vxpose.xlu0.b32.cont [3/16] 0.0, 128
        %1157 = vxpose.xlu0.b32.cont [4/16] 0.0, 128
        %1158 = vxpose.xlu0.b32.cont [5/16] 0.0, 128
        %1159 = vxpose.xlu0.b32.cont [6/16] 0.0, 128
        %1160 = vxpose.xlu0.b32.cont [7/16] 0.0, 128
        %1161 = vxpose.xlu0.b32.cont [8/16] 0.0, 128
        %1162 = vxpose.xlu0.b32.cont [9/16] 0.0, 128
        %1163 = vxpose.xlu0.b32.cont [10/16] 0.0, 128
        %1164 = vxpose.xlu0.b32.cont [11/16] 0.0, 128
        %1165 = vxpose.xlu0.b32.cont [12/16] 0.0, 128
        %1166 = vxpose.xlu0.b32.cont [13/16] 0.0, 128
        %1167 = vxpose.xlu0.b32.cont [14/16] 0.0, 128
        %1168 = vxpose.xlu0.b32.cont [15/16] 0.0, 128
        %1169 = vxpose.xlu0.b32.end [16/16] 0.0, 128
        %v1170 = vpop.trf.xlu0
        %v1171 = vpop.trf.xlu0
        %v1172 = vpop.trf.xlu0
        %v1173 = vpop.trf.xlu0
        %v1174 = vpop.trf.xlu0
        %v1175 = vpop.trf.xlu0
        %v1176 = vpop.trf.xlu0
        %v1177 = vpop.trf.xlu0
        %v1178 = vpop.trf.xlu0
        %v1179 = vpop.trf.xlu0
        %v1180 = vpop.trf.xlu0
        %v1181 = vpop.trf.xlu0
        %v1182 = vpop.trf.xlu0
        %v1183 = vpop.trf.xlu0
        %v1184 = vpop.trf.xlu0
        %v1185 = vpop.trf.xlu0
        %1186 = vxpose.xlu0.b32.start [1/16] %v990, 128
        %1187 = vxpose.xlu0.b32.cont [2/16] %v991, 128
        %1188 = vxpose.xlu0.b32.cont [3/16] 0.0, 128
        %1189 = vxpose.xlu0.b32.cont [4/16] 0.0, 128
        %1190 = vxpose.xlu0.b32.cont [5/16] 0.0, 128
        %1191 = vxpose.xlu0.b32.cont [6/16] 0.0, 128
        %1192 = vxpose.xlu0.b32.cont [7/16] 0.0, 128
        %1193 = vxpose.xlu0.b32.cont [8/16] 0.0, 128
        %1194 = vxpose.xlu0.b32.cont [9/16] 0.0, 128
        %1195 = vxpose.xlu0.b32.cont [10/16] 0.0, 128
        %1196 = vxpose.xlu0.b32.cont [11/16] 0.0, 128
        %1197 = vxpose.xlu0.b32.cont [12/16] 0.0, 128
        %1198 = vxpose.xlu0.b32.cont [13/16] 0.0, 128
        %1199 = vxpose.xlu0.b32.cont [14/16] 0.0, 128
        %1200 = vxpose.xlu0.b32.cont [15/16] 0.0, 128
        %1201 = vxpose.xlu0.b32.end [16/16] 0.0, 128
        %v1202 = vpop.trf.xlu0
        %v1203 = vpop.trf.xlu0
        %v1204 = vpop.trf.xlu0
        %v1205 = vpop.trf.xlu0
        %v1206 = vpop.trf.xlu0
        %v1207 = vpop.trf.xlu0
        %v1208 = vpop.trf.xlu0
        %v1209 = vpop.trf.xlu0
        %v1210 = vpop.trf.xlu0
        %v1211 = vpop.trf.xlu0
        %v1212 = vpop.trf.xlu0
        %v1213 = vpop.trf.xlu0
        %v1214 = vpop.trf.xlu0
        %v1215 = vpop.trf.xlu0
        %v1216 = vpop.trf.xlu0
        %v1217 = vpop.trf.xlu0
        %1218 = vxpose.xlu0.b32.start [1/16] %v992, 128
        %1219 = vxpose.xlu0.b32.cont [2/16] %v993, 128
        %1220 = vxpose.xlu0.b32.cont [3/16] 0.0, 128
        %1221 = vxpose.xlu0.b32.cont [4/16] 0.0, 128
        %1222 = vxpose.xlu0.b32.cont [5/16] 0.0, 128
        %1223 = vxpose.xlu0.b32.cont [6/16] 0.0, 128
        %1224 = vxpose.xlu0.b32.cont [7/16] 0.0, 128
        %1225 = vxpose.xlu0.b32.cont [8/16] 0.0, 128
        %1226 = vxpose.xlu0.b32.cont [9/16] 0.0, 128
        %1227 = vxpose.xlu0.b32.cont [10/16] 0.0, 128
        %1228 = vxpose.xlu0.b32.cont [11/16] 0.0, 128
        %1229 = vxpose.xlu0.b32.cont [12/16] 0.0, 128
        %1230 = vxpose.xlu0.b32.cont [13/16] 0.0, 128
        %1231 = vxpose.xlu0.b32.cont [14/16] 0.0, 128
        %1232 = vxpose.xlu0.b32.cont [15/16] 0.0, 128
        %1233 = vxpose.xlu0.b32.end [16/16] 0.0, 128
        %v1234 = vpop.trf.xlu0
        %v1235 = vpop.trf.xlu0
        %v1236 = vpop.trf.xlu0
        %v1237 = vpop.trf.xlu0
        %v1238 = vpop.trf.xlu0
        %v1239 = vpop.trf.xlu0
        %v1240 = vpop.trf.xlu0
        %v1241 = vpop.trf.xlu0
        %v1242 = vpop.trf.xlu0
        %v1243 = vpop.trf.xlu0
        %v1244 = vpop.trf.xlu0
        %v1245 = vpop.trf.xlu0
        %v1246 = vpop.trf.xlu0
        %v1247 = vpop.trf.xlu0
        %v1248 = vpop.trf.xlu0
        %v1249 = vpop.trf.xlu0
        %v1250 = vpack.c.bf16 %v1010, %v1010
        %v1251 = vpack.c.bf16 %v1042, %v1042
        %v1252 = vpack.c.bf16 %v1074, %v1074
        %v1253 = vpack.c.bf16 %v1106, %v1106
        %v1254 = vpack.c.bf16 %v1138, %v1138
        %v1255 = vpack.c.bf16 %v1170, %v1170
        %v1256 = vpack.c.bf16 %v1202, %v1202
        %v1257 = vpack.c.bf16 %v1234, %v1234
        %1258 = vxpose.xlu0.b32.start [1/16] %v913, 128
        %1259 = vxpose.xlu0.b32.cont [2/16] 0.0, 128
        %1260 = vxpose.xlu0.b32.cont [3/16] 0.0, 128
        %1261 = vxpose.xlu0.b32.cont [4/16] 0.0, 128
        %1262 = vxpose.xlu0.b32.cont [5/16] 0.0, 128
        %1263 = vxpose.xlu0.b32.cont [6/16] 0.0, 128
        %1264 = vxpose.xlu0.b32.cont [7/16] 0.0, 128
        %1265 = vxpose.xlu0.b32.cont [8/16] 0.0, 128
        %1266 = vxpose.xlu0.b32.cont [9/16] 0.0, 128
        %1267 = vxpose.xlu0.b32.cont [10/16] 0.0, 128
        %1268 = vxpose.xlu0.b32.cont [11/16] 0.0, 128
        %1269 = vxpose.xlu0.b32.cont [12/16] 0.0, 128
        %1270 = vxpose.xlu0.b32.cont [13/16] 0.0, 128
        %1271 = vxpose.xlu0.b32.cont [14/16] 0.0, 128
        %1272 = vxpose.xlu0.b32.cont [15/16] 0.0, 128
        %1273 = vxpose.xlu0.b32.end [16/16] 0.0, 128
        %v1274 = vpop.trf.xlu0
        %v1275 = vpop.trf.xlu0
        %v1276 = vpop.trf.xlu0
        %v1277 = vpop.trf.xlu0
        %v1278 = vpop.trf.xlu0
        %v1279 = vpop.trf.xlu0
        %v1280 = vpop.trf.xlu0
        %v1281 = vpop.trf.xlu0
        %v1282 = vpop.trf.xlu0
        %v1283 = vpop.trf.xlu0
        %v1284 = vpop.trf.xlu0
        %v1285 = vpop.trf.xlu0
        %v1286 = vpop.trf.xlu0
        %v1287 = vpop.trf.xlu0
        %v1288 = vpop.trf.xlu0
        %v1289 = vpop.trf.xlu0
        %1290 = vxpose.xlu0.b32.start [1/16] %v1274, 128
        %1291 = vxpose.xlu0.b32.cont [2/16] %v1275, 128
        %1292 = vxpose.xlu0.b32.cont [3/16] 0.0, 128
        %1293 = vxpose.xlu0.b32.cont [4/16] 0.0, 128
        %1294 = vxpose.xlu0.b32.cont [5/16] 0.0, 128
        %1295 = vxpose.xlu0.b32.cont [6/16] 0.0, 128
        %1296 = vxpose.xlu0.b32.cont [7/16] 0.0, 128
        %1297 = vxpose.xlu0.b32.cont [8/16] 0.0, 128
        %1298 = vxpose.xlu0.b32.cont [9/16] 0.0, 128
        %1299 = vxpose.xlu0.b32.cont [10/16] 0.0, 128
        %1300 = vxpose.xlu0.b32.cont [11/16] 0.0, 128
        %1301 = vxpose.xlu0.b32.cont [12/16] 0.0, 128
        %1302 = vxpose.xlu0.b32.cont [13/16] 0.0, 128
        %1303 = vxpose.xlu0.b32.cont [14/16] 0.0, 128
        %1304 = vxpose.xlu0.b32.cont [15/16] 0.0, 128
        %1305 = vxpose.xlu0.b32.end [16/16] 0.0, 128
        %v1306 = vpop.trf.xlu0
        %v1307 = vpop.trf.xlu0
        %v1308 = vpop.trf.xlu0
        %v1309 = vpop.trf.xlu0
        %v1310 = vpop.trf.xlu0
        %v1311 = vpop.trf.xlu0
        %v1312 = vpop.trf.xlu0
        %v1313 = vpop.trf.xlu0
        %v1314 = vpop.trf.xlu0
        %v1315 = vpop.trf.xlu0
        %v1316 = vpop.trf.xlu0
        %v1317 = vpop.trf.xlu0
        %v1318 = vpop.trf.xlu0
        %v1319 = vpop.trf.xlu0
        %v1320 = vpop.trf.xlu0
        %v1321 = vpop.trf.xlu0
        %1322 = vxpose.xlu0.b32.start [1/16] %v1276, 128
        %1323 = vxpose.xlu0.b32.cont [2/16] %v1277, 128
        %1324 = vxpose.xlu0.b32.cont [3/16] 0.0, 128
        %1325 = vxpose.xlu0.b32.cont [4/16] 0.0, 128
        %1326 = vxpose.xlu0.b32.cont [5/16] 0.0, 128
        %1327 = vxpose.xlu0.b32.cont [6/16] 0.0, 128
        %1328 = vxpose.xlu0.b32.cont [7/16] 0.0, 128
        %1329 = vxpose.xlu0.b32.cont [8/16] 0.0, 128
        %1330 = vxpose.xlu0.b32.cont [9/16] 0.0, 128
        %1331 = vxpose.xlu0.b32.cont [10/16] 0.0, 128
        %1332 = vxpose.xlu0.b32.cont [11/16] 0.0, 128
        %1333 = vxpose.xlu0.b32.cont [12/16] 0.0, 128
        %1334 = vxpose.xlu0.b32.cont [13/16] 0.0, 128
        %1335 = vxpose.xlu0.b32.cont [14/16] 0.0, 128
        %1336 = vxpose.xlu0.b32.cont [15/16] 0.0, 128
        %1337 = vxpose.xlu0.b32.end [16/16] 0.0, 128
        %v1338 = vpop.trf.xlu0
        %v1339 = vpop.trf.xlu0
        %v1340 = vpop.trf.xlu0
        %v1341 = vpop.trf.xlu0
        %v1342 = vpop.trf.xlu0
        %v1343 = vpop.trf.xlu0
        %v1344 = vpop.trf.xlu0
        %v1345 = vpop.trf.xlu0
        %v1346 = vpop.trf.xlu0
        %v1347 = vpop.trf.xlu0
        %v1348 = vpop.trf.xlu0
        %v1349 = vpop.trf.xlu0
        %v1350 = vpop.trf.xlu0
        %v1351 = vpop.trf.xlu0
        %v1352 = vpop.trf.xlu0
        %v1353 = vpop.trf.xlu0
        %1354 = vxpose.xlu0.b32.start [1/16] %v1278, 128
        %1355 = vxpose.xlu0.b32.cont [2/16] %v1279, 128
        %1356 = vxpose.xlu0.b32.cont [3/16] 0.0, 128
        %1357 = vxpose.xlu0.b32.cont [4/16] 0.0, 128
        %1358 = vxpose.xlu0.b32.cont [5/16] 0.0, 128
        %1359 = vxpose.xlu0.b32.cont [6/16] 0.0, 128
        %1360 = vxpose.xlu0.b32.cont [7/16] 0.0, 128
        %1361 = vxpose.xlu0.b32.cont [8/16] 0.0, 128
        %1362 = vxpose.xlu0.b32.cont [9/16] 0.0, 128
        %1363 = vxpose.xlu0.b32.cont [10/16] 0.0, 128
        %1364 = vxpose.xlu0.b32.cont [11/16] 0.0, 128
        %1365 = vxpose.xlu0.b32.cont [12/16] 0.0, 128
        %1366 = vxpose.xlu0.b32.cont [13/16] 0.0, 128
        %1367 = vxpose.xlu0.b32.cont [14/16] 0.0, 128
        %1368 = vxpose.xlu0.b32.cont [15/16] 0.0, 128
        %1369 = vxpose.xlu0.b32.end [16/16] 0.0, 128
        %v1370 = vpop.trf.xlu0
        %v1371 = vpop.trf.xlu0
        %v1372 = vpop.trf.xlu0
        %v1373 = vpop.trf.xlu0
        %v1374 = vpop.trf.xlu0
        %v1375 = vpop.trf.xlu0
        %v1376 = vpop.trf.xlu0
        %v1377 = vpop.trf.xlu0
        %v1378 = vpop.trf.xlu0
        %v1379 = vpop.trf.xlu0
        %v1380 = vpop.trf.xlu0
        %v1381 = vpop.trf.xlu0
        %v1382 = vpop.trf.xlu0
        %v1383 = vpop.trf.xlu0
        %v1384 = vpop.trf.xlu0
        %v1385 = vpop.trf.xlu0
        %1386 = vxpose.xlu0.b32.start [1/16] %v1280, 128
        %1387 = vxpose.xlu0.b32.cont [2/16] %v1281, 128
        %1388 = vxpose.xlu0.b32.cont [3/16] 0.0, 128
        %1389 = vxpose.xlu0.b32.cont [4/16] 0.0, 128
        %1390 = vxpose.xlu0.b32.cont [5/16] 0.0, 128
        %1391 = vxpose.xlu0.b32.cont [6/16] 0.0, 128
        %1392 = vxpose.xlu0.b32.cont [7/16] 0.0, 128
        %1393 = vxpose.xlu0.b32.cont [8/16] 0.0, 128
        %1394 = vxpose.xlu0.b32.cont [9/16] 0.0, 128
        %1395 = vxpose.xlu0.b32.cont [10/16] 0.0, 128
        %1396 = vxpose.xlu0.b32.cont [11/16] 0.0, 128
        %1397 = vxpose.xlu0.b32.cont [12/16] 0.0, 128
        %1398 = vxpose.xlu0.b32.cont [13/16] 0.0, 128
        %1399 = vxpose.xlu0.b32.cont [14/16] 0.0, 128
        %1400 = vxpose.xlu0.b32.cont [15/16] 0.0, 128
        %1401 = vxpose.xlu0.b32.end [16/16] 0.0, 128
        %v1402 = vpop.trf.xlu0
        %v1403 = vpop.trf.xlu0
        %v1404 = vpop.trf.xlu0
        %v1405 = vpop.trf.xlu0
        %v1406 = vpop.trf.xlu0
        %v1407 = vpop.trf.xlu0
        %v1408 = vpop.trf.xlu0
        %v1409 = vpop.trf.xlu0
        %v1410 = vpop.trf.xlu0
        %v1411 = vpop.trf.xlu0
        %v1412 = vpop.trf.xlu0
        %v1413 = vpop.trf.xlu0
        %v1414 = vpop.trf.xlu0
        %v1415 = vpop.trf.xlu0
        %v1416 = vpop.trf.xlu0
        %v1417 = vpop.trf.xlu0
        %1418 = vxpose.xlu0.b32.start [1/16] %v1282, 128
        %1419 = vxpose.xlu0.b32.cont [2/16] %v1283, 128
        %1420 = vxpose.xlu0.b32.cont [3/16] 0.0, 128
        %1421 = vxpose.xlu0.b32.cont [4/16] 0.0, 128
        %1422 = vxpose.xlu0.b32.cont [5/16] 0.0, 128
        %1423 = vxpose.xlu0.b32.cont [6/16] 0.0, 128
        %1424 = vxpose.xlu0.b32.cont [7/16] 0.0, 128
        %1425 = vxpose.xlu0.b32.cont [8/16] 0.0, 128
        %1426 = vxpose.xlu0.b32.cont [9/16] 0.0, 128
        %1427 = vxpose.xlu0.b32.cont [10/16] 0.0, 128
        %1428 = vxpose.xlu0.b32.cont [11/16] 0.0, 128
        %1429 = vxpose.xlu0.b32.cont [12/16] 0.0, 128
        %1430 = vxpose.xlu0.b32.cont [13/16] 0.0, 128
        %1431 = vxpose.xlu0.b32.cont [14/16] 0.0, 128
        %1432 = vxpose.xlu0.b32.cont [15/16] 0.0, 128
        %1433 = vxpose.xlu0.b32.end [16/16] 0.0, 128
        %v1434 = vpop.trf.xlu0
        %v1435 = vpop.trf.xlu0
        %v1436 = vpop.trf.xlu0
        %v1437 = vpop.trf.xlu0
        %v1438 = vpop.trf.xlu0
        %v1439 = vpop.trf.xlu0
        %v1440 = vpop.trf.xlu0
        %v1441 = vpop.trf.xlu0
        %v1442 = vpop.trf.xlu0
        %v1443 = vpop.trf.xlu0
        %v1444 = vpop.trf.xlu0
        %v1445 = vpop.trf.xlu0
        %v1446 = vpop.trf.xlu0
        %v1447 = vpop.trf.xlu0
        %v1448 = vpop.trf.xlu0
        %v1449 = vpop.trf.xlu0
        %1450 = vxpose.xlu0.b32.start [1/16] %v1284, 128
        %1451 = vxpose.xlu0.b32.cont [2/16] %v1285, 128
        %1452 = vxpose.xlu0.b32.cont [3/16] 0.0, 128
        %1453 = vxpose.xlu0.b32.cont [4/16] 0.0, 128
        %1454 = vxpose.xlu0.b32.cont [5/16] 0.0, 128
        %1455 = vxpose.xlu0.b32.cont [6/16] 0.0, 128
        %1456 = vxpose.xlu0.b32.cont [7/16] 0.0, 128
        %1457 = vxpose.xlu0.b32.cont [8/16] 0.0, 128
        %1458 = vxpose.xlu0.b32.cont [9/16] 0.0, 128
        %1459 = vxpose.xlu0.b32.cont [10/16] 0.0, 128
        %1460 = vxpose.xlu0.b32.cont [11/16] 0.0, 128
        %1461 = vxpose.xlu0.b32.cont [12/16] 0.0, 128
        %1462 = vxpose.xlu0.b32.cont [13/16] 0.0, 128
        %1463 = vxpose.xlu0.b32.cont [14/16] 0.0, 128
        %1464 = vxpose.xlu0.b32.cont [15/16] 0.0, 128
        %1465 = vxpose.xlu0.b32.end [16/16] 0.0, 128
        %v1466 = vpop.trf.xlu0
        %v1467 = vpop.trf.xlu0
        %v1468 = vpop.trf.xlu0
        %v1469 = vpop.trf.xlu0
        %v1470 = vpop.trf.xlu0
        %v1471 = vpop.trf.xlu0
        %v1472 = vpop.trf.xlu0
        %v1473 = vpop.trf.xlu0
        %v1474 = vpop.trf.xlu0
        %v1475 = vpop.trf.xlu0
        %v1476 = vpop.trf.xlu0
        %v1477 = vpop.trf.xlu0
        %v1478 = vpop.trf.xlu0
        %v1479 = vpop.trf.xlu0
        %v1480 = vpop.trf.xlu0
        %v1481 = vpop.trf.xlu0
        %1482 = vxpose.xlu0.b32.start [1/16] %v1286, 128
        %1483 = vxpose.xlu0.b32.cont [2/16] %v1287, 128
        %1484 = vxpose.xlu0.b32.cont [3/16] 0.0, 128
        %1485 = vxpose.xlu0.b32.cont [4/16] 0.0, 128
        %1486 = vxpose.xlu0.b32.cont [5/16] 0.0, 128
        %1487 = vxpose.xlu0.b32.cont [6/16] 0.0, 128
        %1488 = vxpose.xlu0.b32.cont [7/16] 0.0, 128
        %1489 = vxpose.xlu0.b32.cont [8/16] 0.0, 128
        %1490 = vxpose.xlu0.b32.cont [9/16] 0.0, 128
        %1491 = vxpose.xlu0.b32.cont [10/16] 0.0, 128
        %1492 = vxpose.xlu0.b32.cont [11/16] 0.0, 128
        %1493 = vxpose.xlu0.b32.cont [12/16] 0.0, 128
        %1494 = vxpose.xlu0.b32.cont [13/16] 0.0, 128
        %1495 = vxpose.xlu0.b32.cont [14/16] 0.0, 128
        %1496 = vxpose.xlu0.b32.cont [15/16] 0.0, 128
        %1497 = vxpose.xlu0.b32.end [16/16] 0.0, 128
        %v1498 = vpop.trf.xlu0
        %v1499 = vpop.trf.xlu0
        %v1500 = vpop.trf.xlu0
        %v1501 = vpop.trf.xlu0
        %v1502 = vpop.trf.xlu0
        %v1503 = vpop.trf.xlu0
        %v1504 = vpop.trf.xlu0
        %v1505 = vpop.trf.xlu0
        %v1506 = vpop.trf.xlu0
        %v1507 = vpop.trf.xlu0
        %v1508 = vpop.trf.xlu0
        %v1509 = vpop.trf.xlu0
        %v1510 = vpop.trf.xlu0
        %v1511 = vpop.trf.xlu0
        %v1512 = vpop.trf.xlu0
        %v1513 = vpop.trf.xlu0
        %1514 = vxpose.xlu0.b32.start [1/16] %v1288, 128
        %1515 = vxpose.xlu0.b32.cont [2/16] %v1289, 128
        %1516 = vxpose.xlu0.b32.cont [3/16] 0.0, 128
        %1517 = vxpose.xlu0.b32.cont [4/16] 0.0, 128
        %1518 = vxpose.xlu0.b32.cont [5/16] 0.0, 128
        %1519 = vxpose.xlu0.b32.cont [6/16] 0.0, 128
        %1520 = vxpose.xlu0.b32.cont [7/16] 0.0, 128
        %1521 = vxpose.xlu0.b32.cont [8/16] 0.0, 128
        %1522 = vxpose.xlu0.b32.cont [9/16] 0.0, 128
        %1523 = vxpose.xlu0.b32.cont [10/16] 0.0, 128
        %1524 = vxpose.xlu0.b32.cont [11/16] 0.0, 128
        %1525 = vxpose.xlu0.b32.cont [12/16] 0.0, 128
        %1526 = vxpose.xlu0.b32.cont [13/16] 0.0, 128
        %1527 = vxpose.xlu0.b32.cont [14/16] 0.0, 128
        %1528 = vxpose.xlu0.b32.cont [15/16] 0.0, 128
        %1529 = vxpose.xlu0.b32.end [16/16] 0.0, 128
        %v1530 = vpop.trf.xlu0
        %v1531 = vpop.trf.xlu0
        %v1532 = vpop.trf.xlu0
        %v1533 = vpop.trf.xlu0
        %v1534 = vpop.trf.xlu0
        %v1535 = vpop.trf.xlu0
        %v1536 = vpop.trf.xlu0
        %v1537 = vpop.trf.xlu0
        %v1538 = vpop.trf.xlu0
        %v1539 = vpop.trf.xlu0
        %v1540 = vpop.trf.xlu0
        %v1541 = vpop.trf.xlu0
        %v1542 = vpop.trf.xlu0
        %v1543 = vpop.trf.xlu0
        %v1544 = vpop.trf.xlu0
        %v1545 = vpop.trf.xlu0
        %v1546 = vpack.c.bf16 %v1306, %v1306
        %v1547 = vpack.c.bf16 %v1338, %v1338
        %v1548 = vpack.c.bf16 %v1370, %v1370
        %v1549 = vpack.c.bf16 %v1402, %v1402
        %v1550 = vpack.c.bf16 %v1434, %v1434
        %v1551 = vpack.c.bf16 %v1466, %v1466
        %v1552 = vpack.c.bf16 %v1498, %v1498
        %v1553 = vpack.c.bf16 %v1530, %v1530
        %1554 = vxpose.xlu0.b32.start [1/16] %v954, 128
        %1555 = vxpose.xlu0.b32.cont [2/16] 0.0, 128
        %1556 = vxpose.xlu0.b32.cont [3/16] 0.0, 128
        %1557 = vxpose.xlu0.b32.cont [4/16] 0.0, 128
        %1558 = vxpose.xlu0.b32.cont [5/16] 0.0, 128
        %1559 = vxpose.xlu0.b32.cont [6/16] 0.0, 128
        %1560 = vxpose.xlu0.b32.cont [7/16] 0.0, 128
        %1561 = vxpose.xlu0.b32.cont [8/16] 0.0, 128
        %1562 = vxpose.xlu0.b32.cont [9/16] 0.0, 128
        %1563 = vxpose.xlu0.b32.cont [10/16] 0.0, 128
        %1564 = vxpose.xlu0.b32.cont [11/16] 0.0, 128
        %1565 = vxpose.xlu0.b32.cont [12/16] 0.0, 128
        %1566 = vxpose.xlu0.b32.cont [13/16] 0.0, 128
        %1567 = vxpose.xlu0.b32.cont [14/16] 0.0, 128
        %1568 = vxpose.xlu0.b32.cont [15/16] 0.0, 128
        %1569 = vxpose.xlu0.b32.end [16/16] 0.0, 128
        %v1570 = vpop.trf.xlu0
        %v1571 = vpop.trf.xlu0
        %v1572 = vpop.trf.xlu0
        %v1573 = vpop.trf.xlu0
        %v1574 = vpop.trf.xlu0
        %v1575 = vpop.trf.xlu0
        %v1576 = vpop.trf.xlu0
        %v1577 = vpop.trf.xlu0
        %v1578 = vpop.trf.xlu0
        %v1579 = vpop.trf.xlu0
        %v1580 = vpop.trf.xlu0
        %v1581 = vpop.trf.xlu0
        %v1582 = vpop.trf.xlu0
        %v1583 = vpop.trf.xlu0
        %v1584 = vpop.trf.xlu0
        %v1585 = vpop.trf.xlu0
        %1586 = vxpose.xlu0.b32.start [1/16] %v1570, 128
        %1587 = vxpose.xlu0.b32.cont [2/16] %v1571, 128
        %1588 = vxpose.xlu0.b32.cont [3/16] 0.0, 128
        %1589 = vxpose.xlu0.b32.cont [4/16] 0.0, 128
        %1590 = vxpose.xlu0.b32.cont [5/16] 0.0, 128
        %1591 = vxpose.xlu0.b32.cont [6/16] 0.0, 128
        %1592 = vxpose.xlu0.b32.cont [7/16] 0.0, 128
        %1593 = vxpose.xlu0.b32.cont [8/16] 0.0, 128
        %1594 = vxpose.xlu0.b32.cont [9/16] 0.0, 128
        %1595 = vxpose.xlu0.b32.cont [10/16] 0.0, 128
        %1596 = vxpose.xlu0.b32.cont [11/16] 0.0, 128
        %1597 = vxpose.xlu0.b32.cont [12/16] 0.0, 128
        %1598 = vxpose.xlu0.b32.cont [13/16] 0.0, 128
        %1599 = vxpose.xlu0.b32.cont [14/16] 0.0, 128
        %1600 = vxpose.xlu0.b32.cont [15/16] 0.0, 128
        %1601 = vxpose.xlu0.b32.end [16/16] 0.0, 128
        %v1602 = vpop.trf.xlu0
        %v1603 = vpop.trf.xlu0
        %v1604 = vpop.trf.xlu0
        %v1605 = vpop.trf.xlu0
        %v1606 = vpop.trf.xlu0
        %v1607 = vpop.trf.xlu0
        %v1608 = vpop.trf.xlu0
        %v1609 = vpop.trf.xlu0
        %v1610 = vpop.trf.xlu0
        %v1611 = vpop.trf.xlu0
        %v1612 = vpop.trf.xlu0
        %v1613 = vpop.trf.xlu0
        %v1614 = vpop.trf.xlu0
        %v1615 = vpop.trf.xlu0
        %v1616 = vpop.trf.xlu0
        %v1617 = vpop.trf.xlu0
        %1618 = vxpose.xlu0.b32.start [1/16] %v1572, 128
        %1619 = vxpose.xlu0.b32.cont [2/16] %v1573, 128
        %1620 = vxpose.xlu0.b32.cont [3/16] 0.0, 128
        %1621 = vxpose.xlu0.b32.cont [4/16] 0.0, 128
        %1622 = vxpose.xlu0.b32.cont [5/16] 0.0, 128
        %1623 = vxpose.xlu0.b32.cont [6/16] 0.0, 128
        %1624 = vxpose.xlu0.b32.cont [7/16] 0.0, 128
        %1625 = vxpose.xlu0.b32.cont [8/16] 0.0, 128
        %1626 = vxpose.xlu0.b32.cont [9/16] 0.0, 128
        %1627 = vxpose.xlu0.b32.cont [10/16] 0.0, 128
        %1628 = vxpose.xlu0.b32.cont [11/16] 0.0, 128
        %1629 = vxpose.xlu0.b32.cont [12/16] 0.0, 128
        %1630 = vxpose.xlu0.b32.cont [13/16] 0.0, 128
        %1631 = vxpose.xlu0.b32.cont [14/16] 0.0, 128
        %1632 = vxpose.xlu0.b32.cont [15/16] 0.0, 128
        %1633 = vxpose.xlu0.b32.end [16/16] 0.0, 128
        %v1634 = vpop.trf.xlu0
        %v1635 = vpop.trf.xlu0
        %v1636 = vpop.trf.xlu0
        %v1637 = vpop.trf.xlu0
        %v1638 = vpop.trf.xlu0
        %v1639 = vpop.trf.xlu0
        %v1640 = vpop.trf.xlu0
        %v1641 = vpop.trf.xlu0
        %v1642 = vpop.trf.xlu0
        %v1643 = vpop.trf.xlu0
        %v1644 = vpop.trf.xlu0
        %v1645 = vpop.trf.xlu0
        %v1646 = vpop.trf.xlu0
        %v1647 = vpop.trf.xlu0
        %v1648 = vpop.trf.xlu0
        %v1649 = vpop.trf.xlu0
        %1650 = vxpose.xlu0.b32.start [1/16] %v1574, 128
        %1651 = vxpose.xlu0.b32.cont [2/16] %v1575, 128
        %1652 = vxpose.xlu0.b32.cont [3/16] 0.0, 128
        %1653 = vxpose.xlu0.b32.cont [4/16] 0.0, 128
        %1654 = vxpose.xlu0.b32.cont [5/16] 0.0, 128
        %1655 = vxpose.xlu0.b32.cont [6/16] 0.0, 128
        %1656 = vxpose.xlu0.b32.cont [7/16] 0.0, 128
        %1657 = vxpose.xlu0.b32.cont [8/16] 0.0, 128
        %1658 = vxpose.xlu0.b32.cont [9/16] 0.0, 128
        %1659 = vxpose.xlu0.b32.cont [10/16] 0.0, 128
        %1660 = vxpose.xlu0.b32.cont [11/16] 0.0, 128
        %1661 = vxpose.xlu0.b32.cont [12/16] 0.0, 128
        %1662 = vxpose.xlu0.b32.cont [13/16] 0.0, 128
        %1663 = vxpose.xlu0.b32.cont [14/16] 0.0, 128
        %1664 = vxpose.xlu0.b32.cont [15/16] 0.0, 128
        %1665 = vxpose.xlu0.b32.end [16/16] 0.0, 128
        %v1666 = vpop.trf.xlu0
        %v1667 = vpop.trf.xlu0
        %v1668 = vpop.trf.xlu0
        %v1669 = vpop.trf.xlu0
        %v1670 = vpop.trf.xlu0
        %v1671 = vpop.trf.xlu0
        %v1672 = vpop.trf.xlu0
        %v1673 = vpop.trf.xlu0
        %v1674 = vpop.trf.xlu0
        %v1675 = vpop.trf.xlu0
        %v1676 = vpop.trf.xlu0
        %v1677 = vpop.trf.xlu0
        %v1678 = vpop.trf.xlu0
        %v1679 = vpop.trf.xlu0
        %v1680 = vpop.trf.xlu0
        %v1681 = vpop.trf.xlu0
        %1682 = vxpose.xlu0.b32.start [1/16] %v1576, 128
        %1683 = vxpose.xlu0.b32.cont [2/16] %v1577, 128
        %1684 = vxpose.xlu0.b32.cont [3/16] 0.0, 128
        %1685 = vxpose.xlu0.b32.cont [4/16] 0.0, 128
        %1686 = vxpose.xlu0.b32.cont [5/16] 0.0, 128
        %1687 = vxpose.xlu0.b32.cont [6/16] 0.0, 128
        %1688 = vxpose.xlu0.b32.cont [7/16] 0.0, 128
        %1689 = vxpose.xlu0.b32.cont [8/16] 0.0, 128
        %1690 = vxpose.xlu0.b32.cont [9/16] 0.0, 128
        %1691 = vxpose.xlu0.b32.cont [10/16] 0.0, 128
        %1692 = vxpose.xlu0.b32.cont [11/16] 0.0, 128
        %1693 = vxpose.xlu0.b32.cont [12/16] 0.0, 128
        %1694 = vxpose.xlu0.b32.cont [13/16] 0.0, 128
        %1695 = vxpose.xlu0.b32.cont [14/16] 0.0, 128
        %1696 = vxpose.xlu0.b32.cont [15/16] 0.0, 128
        %1697 = vxpose.xlu0.b32.end [16/16] 0.0, 128
        %v1698 = vpop.trf.xlu0
        %v1699 = vpop.trf.xlu0
        %v1700 = vpop.trf.xlu0
        %v1701 = vpop.trf.xlu0
        %v1702 = vpop.trf.xlu0
        %v1703 = vpop.trf.xlu0
        %v1704 = vpop.trf.xlu0
        %v1705 = vpop.trf.xlu0
        %v1706 = vpop.trf.xlu0
        %v1707 = vpop.trf.xlu0
        %v1708 = vpop.trf.xlu0
        %v1709 = vpop.trf.xlu0
        %v1710 = vpop.trf.xlu0
        %v1711 = vpop.trf.xlu0
        %v1712 = vpop.trf.xlu0
        %v1713 = vpop.trf.xlu0
        %1714 = vxpose.xlu0.b32.start [1/16] %v1578, 128
        %1715 = vxpose.xlu0.b32.cont [2/16] %v1579, 128
        %1716 = vxpose.xlu0.b32.cont [3/16] 0.0, 128
        %1717 = vxpose.xlu0.b32.cont [4/16] 0.0, 128
        %1718 = vxpose.xlu0.b32.cont [5/16] 0.0, 128
        %1719 = vxpose.xlu0.b32.cont [6/16] 0.0, 128
        %1720 = vxpose.xlu0.b32.cont [7/16] 0.0, 128
        %1721 = vxpose.xlu0.b32.cont [8/16] 0.0, 128
        %1722 = vxpose.xlu0.b32.cont [9/16] 0.0, 128
        %1723 = vxpose.xlu0.b32.cont [10/16] 0.0, 128
        %1724 = vxpose.xlu0.b32.cont [11/16] 0.0, 128
        %1725 = vxpose.xlu0.b32.cont [12/16] 0.0, 128
        %1726 = vxpose.xlu0.b32.cont [13/16] 0.0, 128
        %1727 = vxpose.xlu0.b32.cont [14/16] 0.0, 128
        %1728 = vxpose.xlu0.b32.cont [15/16] 0.0, 128
        %1729 = vxpose.xlu0.b32.end [16/16] 0.0, 128
        %v1730 = vpop.trf.xlu0
        %v1731 = vpop.trf.xlu0
        %v1732 = vpop.trf.xlu0
        %v1733 = vpop.trf.xlu0
        %v1734 = vpop.trf.xlu0
        %v1735 = vpop.trf.xlu0
        %v1736 = vpop.trf.xlu0
        %v1737 = vpop.trf.xlu0
        %v1738 = vpop.trf.xlu0
        %v1739 = vpop.trf.xlu0
        %v1740 = vpop.trf.xlu0
        %v1741 = vpop.trf.xlu0
        %v1742 = vpop.trf.xlu0
        %v1743 = vpop.trf.xlu0
        %v1744 = vpop.trf.xlu0
        %v1745 = vpop.trf.xlu0
        %1746 = vxpose.xlu0.b32.start [1/16] %v1580, 128
        %1747 = vxpose.xlu0.b32.cont [2/16] %v1581, 128
        %1748 = vxpose.xlu0.b32.cont [3/16] 0.0, 128
        %1749 = vxpose.xlu0.b32.cont [4/16] 0.0, 128
        %1750 = vxpose.xlu0.b32.cont [5/16] 0.0, 128
        %1751 = vxpose.xlu0.b32.cont [6/16] 0.0, 128
        %1752 = vxpose.xlu0.b32.cont [7/16] 0.0, 128
        %1753 = vxpose.xlu0.b32.cont [8/16] 0.0, 128
        %1754 = vxpose.xlu0.b32.cont [9/16] 0.0, 128
        %1755 = vxpose.xlu0.b32.cont [10/16] 0.0, 128
        %1756 = vxpose.xlu0.b32.cont [11/16] 0.0, 128
        %1757 = vxpose.xlu0.b32.cont [12/16] 0.0, 128
        %1758 = vxpose.xlu0.b32.cont [13/16] 0.0, 128
        %1759 = vxpose.xlu0.b32.cont [14/16] 0.0, 128
        %1760 = vxpose.xlu0.b32.cont [15/16] 0.0, 128
        %1761 = vxpose.xlu0.b32.end [16/16] 0.0, 128
        %v1762 = vpop.trf.xlu0
        %v1763 = vpop.trf.xlu0
        %v1764 = vpop.trf.xlu0
        %v1765 = vpop.trf.xlu0
        %v1766 = vpop.trf.xlu0
        %v1767 = vpop.trf.xlu0
        %v1768 = vpop.trf.xlu0
        %v1769 = vpop.trf.xlu0
        %v1770 = vpop.trf.xlu0
        %v1771 = vpop.trf.xlu0
        %v1772 = vpop.trf.xlu0
        %v1773 = vpop.trf.xlu0
        %v1774 = vpop.trf.xlu0
        %v1775 = vpop.trf.xlu0
        %v1776 = vpop.trf.xlu0
        %v1777 = vpop.trf.xlu0
        %1778 = vxpose.xlu0.b32.start [1/16] %v1582, 128
        %1779 = vxpose.xlu0.b32.cont [2/16] %v1583, 128
        %1780 = vxpose.xlu0.b32.cont [3/16] 0.0, 128
        %1781 = vxpose.xlu0.b32.cont [4/16] 0.0, 128
        %1782 = vxpose.xlu0.b32.cont [5/16] 0.0, 128
        %1783 = vxpose.xlu0.b32.cont [6/16] 0.0, 128
        %1784 = vxpose.xlu0.b32.cont [7/16] 0.0, 128
        %1785 = vxpose.xlu0.b32.cont [8/16] 0.0, 128
        %1786 = vxpose.xlu0.b32.cont [9/16] 0.0, 128
        %1787 = vxpose.xlu0.b32.cont [10/16] 0.0, 128
        %1788 = vxpose.xlu0.b32.cont [11/16] 0.0, 128
        %1789 = vxpose.xlu0.b32.cont [12/16] 0.0, 128
        %1790 = vxpose.xlu0.b32.cont [13/16] 0.0, 128
        %1791 = vxpose.xlu0.b32.cont [14/16] 0.0, 128
        %1792 = vxpose.xlu0.b32.cont [15/16] 0.0, 128
        %1793 = vxpose.xlu0.b32.end [16/16] 0.0, 128
        %v1794 = vpop.trf.xlu0
        %v1795 = vpop.trf.xlu0
        %v1796 = vpop.trf.xlu0
        %v1797 = vpop.trf.xlu0
        %v1798 = vpop.trf.xlu0
        %v1799 = vpop.trf.xlu0
        %v1800 = vpop.trf.xlu0
        %v1801 = vpop.trf.xlu0
        %v1802 = vpop.trf.xlu0
        %v1803 = vpop.trf.xlu0
        %v1804 = vpop.trf.xlu0
        %v1805 = vpop.trf.xlu0
        %v1806 = vpop.trf.xlu0
        %v1807 = vpop.trf.xlu0
        %v1808 = vpop.trf.xlu0
        %v1809 = vpop.trf.xlu0
        %1810 = vxpose.xlu0.b32.start [1/16] %v1584, 128
        %1811 = vxpose.xlu0.b32.cont [2/16] %v1585, 128
        %1812 = vxpose.xlu0.b32.cont [3/16] 0.0, 128
        %1813 = vxpose.xlu0.b32.cont [4/16] 0.0, 128
        %1814 = vxpose.xlu0.b32.cont [5/16] 0.0, 128
        %1815 = vxpose.xlu0.b32.cont [6/16] 0.0, 128
        %1816 = vxpose.xlu0.b32.cont [7/16] 0.0, 128
        %1817 = vxpose.xlu0.b32.cont [8/16] 0.0, 128
        %1818 = vxpose.xlu0.b32.cont [9/16] 0.0, 128
        %1819 = vxpose.xlu0.b32.cont [10/16] 0.0, 128
        %1820 = vxpose.xlu0.b32.cont [11/16] 0.0, 128
        %1821 = vxpose.xlu0.b32.cont [12/16] 0.0, 128
        %1822 = vxpose.xlu0.b32.cont [13/16] 0.0, 128
        %1823 = vxpose.xlu0.b32.cont [14/16] 0.0, 128
        %1824 = vxpose.xlu0.b32.cont [15/16] 0.0, 128
        %1825 = vxpose.xlu0.b32.end [16/16] 0.0, 128
        %v1826 = vpop.trf.xlu0
        %v1827 = vpop.trf.xlu0
        %v1828 = vpop.trf.xlu0
        %v1829 = vpop.trf.xlu0
        %v1830 = vpop.trf.xlu0
        %v1831 = vpop.trf.xlu0
        %v1832 = vpop.trf.xlu0
        %v1833 = vpop.trf.xlu0
        %v1834 = vpop.trf.xlu0
        %v1835 = vpop.trf.xlu0
        %v1836 = vpop.trf.xlu0
        %v1837 = vpop.trf.xlu0
        %v1838 = vpop.trf.xlu0
        %v1839 = vpop.trf.xlu0
        %v1840 = vpop.trf.xlu0
        %v1841 = vpop.trf.xlu0
        %v1842 = vpack.c.bf16 %v1602, %v1602
        %v1843 = vpack.c.bf16 %v1634, %v1634
        %v1844 = vpack.c.bf16 %v1666, %v1666
        %v1845 = vpack.c.bf16 %v1698, %v1698
        %v1846 = vpack.c.bf16 %v1730, %v1730
        %v1847 = vpack.c.bf16 %v1762, %v1762
        %v1848 = vpack.c.bf16 %v1794, %v1794
        %v1849 = vpack.c.bf16 %v1826, %v1826
        %v1850 = vld [vmem:[%s607] sm:$0xff]
        %vm1851 = vcmask 130048
        %v1853 = vsel %vm1851, %v1250, 0
        %v1856 = vsel %vm1851, %v1546, 0
        %1858 = vmatprep.subr.bf16.mxu0 0
        %1859 = vmatpush1.bf16.xpose.msra.mxu0 %v1856
        %1860 = vmatprep.subr.bf16.mxu0 0
        %1861 = vmatpush1.bf16.xpose.msra.mxu0 0
        %1862 = vmatprep.subr.bf16.mxu0 0
        %1863 = vmatpush1.bf16.xpose.msra.mxu0 0
        %1864 = vmatprep.subr.bf16.mxu0 0
        %1865 = vmatpush1.bf16.xpose.msra.mxu0 0
        %1866 = vmatprep.subr.bf16.mxu0 0
        %1867 = vmatpush1.bf16.xpose.msra.mxu0 0
        %1868 = vmatprep.subr.bf16.mxu0 0
        %1869 = vmatpush1.bf16.xpose.msra.mxu0 0
        %1870 = vmatprep.subr.bf16.mxu0 0
        %1871 = vmatpush1.bf16.xpose.msra.mxu0 0
        %1872 = vmatprep.subr.bf16.mxu0 0
        %1873 = vmatpush1.bf16.xpose.msra.mxu0 0
        %1874 = vmatprep.subr.bf16.mxu0 0
        %1875 = vmatpush1.bf16.xpose.msra.mxu0 0
        %1876 = vmatprep.subr.bf16.mxu0 0
        %1877 = vmatpush1.bf16.xpose.msra.mxu0 0
        %1878 = vmatprep.subr.bf16.mxu0 0
        %1879 = vmatpush1.bf16.xpose.msra.mxu0 0
        %1880 = vmatprep.subr.bf16.mxu0 0
        %1881 = vmatpush1.bf16.xpose.msra.mxu0 0
        %1882 = vmatprep.subr.bf16.mxu0 0
        %1883 = vmatpush1.bf16.xpose.msra.mxu0 0
        %1884 = vmatprep.subr.bf16.mxu0 0
        %1885 = vmatpush1.bf16.xpose.msra.mxu0 0
        %1886 = vmatprep.subr.bf16.mxu0 0
        %1887 = vmatpush1.bf16.xpose.msra.mxu0 0
        %1888 = vmatprep.subr.bf16.mxu0 0
        %1889 = vmatpush1.bf16.xpose.msra.mxu0 0
        %1890 = vmatprep.mubr.bf16.mxu0 0
        %1891 = vmatmul.mubr.bf16.gmra.mrb[0].mxu0 %v1853
        %v1892 = vpop.f32.mrb[0].mxu0
        %v1893 = vadd.f32 %v1850, %v1892
        %v1894 = vpop.f32.mrb[0].mxu0
        %v1895 = vpop.f32.mrb[0].mxu0
        %v1896 = vpop.f32.mrb[0].mxu0
        %1897 = vdwg.mxu0
        %v1899 = vsel %vm1851, %v1251, 0
        %v1902 = vsel %vm1851, %v1547, 0
        %1904 = vmatprep.subr.bf16.mxu0 0
        %1905 = vmatpush1.bf16.xpose.msra.mxu0 %v1902
        %1906 = vmatprep.subr.bf16.mxu0 0
        %1907 = vmatpush1.bf16.xpose.msra.mxu0 0
        %1908 = vmatprep.subr.bf16.mxu0 0
        %1909 = vmatpush1.bf16.xpose.msra.mxu0 0
        %1910 = vmatprep.subr.bf16.mxu0 0
        %1911 = vmatpush1.bf16.xpose.msra.mxu0 0
        %1912 = vmatprep.subr.bf16.mxu0 0
        %1913 = vmatpush1.bf16.xpose.msra.mxu0 0
        %1914 = vmatprep.subr.bf16.mxu0 0
        %1915 = vmatpush1.bf16.xpose.msra.mxu0 0
        %1916 = vmatprep.subr.bf16.mxu0 0
        %1917 = vmatpush1.bf16.xpose.msra.mxu0 0
        %1918 = vmatprep.subr.bf16.mxu0 0
        %1919 = vmatpush1.bf16.xpose.msra.mxu0 0
        %1920 = vmatprep.subr.bf16.mxu0 0
        %1921 = vmatpush1.bf16.xpose.msra.mxu0 0
        %1922 = vmatprep.subr.bf16.mxu0 0
        %1923 = vmatpush1.bf16.xpose.msra.mxu0 0
        %1924 = vmatprep.subr.bf16.mxu0 0
        %1925 = vmatpush1.bf16.xpose.msra.mxu0 0
        %1926 = vmatprep.subr.bf16.mxu0 0
        %1927 = vmatpush1.bf16.xpose.msra.mxu0 0
        %1928 = vmatprep.subr.bf16.mxu0 0
        %1929 = vmatpush1.bf16.xpose.msra.mxu0 0
        %1930 = vmatprep.subr.bf16.mxu0 0
        %1931 = vmatpush1.bf16.xpose.msra.mxu0 0
        %1932 = vmatprep.subr.bf16.mxu0 0
        %1933 = vmatpush1.bf16.xpose.msra.mxu0 0
        %1934 = vmatprep.subr.bf16.mxu0 0
        %1935 = vmatpush1.bf16.xpose.msra.mxu0 0
        %1936 = vmatprep.mubr.bf16.mxu0 0
        %1937 = vmatmul.mubr.bf16.gmra.mrb[0].mxu0 %v1899
        %v1938 = vpop.f32.mrb[0].mxu0
        %v1939 = vadd.f32 %v1850, %v1938
        %v1940 = vpop.f32.mrb[0].mxu0
        %v1941 = vpop.f32.mrb[0].mxu0
        %v1942 = vpop.f32.mrb[0].mxu0
        %1943 = vdwg.mxu0
        %v1945 = vsel %vm1851, %v1252, 0
        %v1948 = vsel %vm1851, %v1548, 0
        %1950 = vmatprep.subr.bf16.mxu0 0
        %1951 = vmatpush1.bf16.xpose.msra.mxu0 %v1948
        %1952 = vmatprep.subr.bf16.mxu0 0
        %1953 = vmatpush1.bf16.xpose.msra.mxu0 0
        %1954 = vmatprep.subr.bf16.mxu0 0
        %1955 = vmatpush1.bf16.xpose.msra.mxu0 0
        %1956 = vmatprep.subr.bf16.mxu0 0
        %1957 = vmatpush1.bf16.xpose.msra.mxu0 0
        %1958 = vmatprep.subr.bf16.mxu0 0
        %1959 = vmatpush1.bf16.xpose.msra.mxu0 0
        %1960 = vmatprep.subr.bf16.mxu0 0
        %1961 = vmatpush1.bf16.xpose.msra.mxu0 0
        %1962 = vmatprep.subr.bf16.mxu0 0
        %1963 = vmatpush1.bf16.xpose.msra.mxu0 0
        %1964 = vmatprep.subr.bf16.mxu0 0
        %1965 = vmatpush1.bf16.xpose.msra.mxu0 0
        %1966 = vmatprep.subr.bf16.mxu0 0
        %1967 = vmatpush1.bf16.xpose.msra.mxu0 0
        %1968 = vmatprep.subr.bf16.mxu0 0
        %1969 = vmatpush1.bf16.xpose.msra.mxu0 0
        %1970 = vmatprep.subr.bf16.mxu0 0
        %1971 = vmatpush1.bf16.xpose.msra.mxu0 0
        %1972 = vmatprep.subr.bf16.mxu0 0
        %1973 = vmatpush1.bf16.xpose.msra.mxu0 0
        %1974 = vmatprep.subr.bf16.mxu0 0
        %1975 = vmatpush1.bf16.xpose.msra.mxu0 0
        %1976 = vmatprep.subr.bf16.mxu0 0
        %1977 = vmatpush1.bf16.xpose.msra.mxu0 0
        %1978 = vmatprep.subr.bf16.mxu0 0
        %1979 = vmatpush1.bf16.xpose.msra.mxu0 0
        %1980 = vmatprep.subr.bf16.mxu0 0
        %1981 = vmatpush1.bf16.xpose.msra.mxu0 0
        %1982 = vmatprep.mubr.bf16.mxu0 0
        %1983 = vmatmul.mubr.bf16.gmra.mrb[0].mxu0 %v1945
        %v1984 = vpop.f32.mrb[0].mxu0
        %v1985 = vadd.f32 %v1850, %v1984
        %v1986 = vpop.f32.mrb[0].mxu0
        %v1987 = vpop.f32.mrb[0].mxu0
        %v1988 = vpop.f32.mrb[0].mxu0
        %1989 = vdwg.mxu0
        %v1991 = vsel %vm1851, %v1253, 0
        %v1994 = vsel %vm1851, %v1549, 0
        %1996 = vmatprep.subr.bf16.mxu0 0
        %1997 = vmatpush1.bf16.xpose.msra.mxu0 %v1994
        %1998 = vmatprep.subr.bf16.mxu0 0
        %1999 = vmatpush1.bf16.xpose.msra.mxu0 0
        %2000 = vmatprep.subr.bf16.mxu0 0
        %2001 = vmatpush1.bf16.xpose.msra.mxu0 0
        %2002 = vmatprep.subr.bf16.mxu0 0
        %2003 = vmatpush1.bf16.xpose.msra.mxu0 0
        %2004 = vmatprep.subr.bf16.mxu0 0
        %2005 = vmatpush1.bf16.xpose.msra.mxu0 0
        %2006 = vmatprep.subr.bf16.mxu0 0
        %2007 = vmatpush1.bf16.xpose.msra.mxu0 0
        %2008 = vmatprep.subr.bf16.mxu0 0
        %2009 = vmatpush1.bf16.xpose.msra.mxu0 0
        %2010 = vmatprep.subr.bf16.mxu0 0
        %2011 = vmatpush1.bf16.xpose.msra.mxu0 0
        %2012 = vmatprep.subr.bf16.mxu0 0
        %2013 = vmatpush1.bf16.xpose.msra.mxu0 0
        %2014 = vmatprep.subr.bf16.mxu0 0
        %2015 = vmatpush1.bf16.xpose.msra.mxu0 0
        %2016 = vmatprep.subr.bf16.mxu0 0
        %2017 = vmatpush1.bf16.xpose.msra.mxu0 0
        %2018 = vmatprep.subr.bf16.mxu0 0
        %2019 = vmatpush1.bf16.xpose.msra.mxu0 0
        %2020 = vmatprep.subr.bf16.mxu0 0
        %2021 = vmatpush1.bf16.xpose.msra.mxu0 0
        %2022 = vmatprep.subr.bf16.mxu0 0
        %2023 = vmatpush1.bf16.xpose.msra.mxu0 0
        %2024 = vmatprep.subr.bf16.mxu0 0
        %2025 = vmatpush1.bf16.xpose.msra.mxu0 0
        %2026 = vmatprep.subr.bf16.mxu0 0
        %2027 = vmatpush1.bf16.xpose.msra.mxu0 0
        %2028 = vmatprep.mubr.bf16.mxu0 0
        %2029 = vmatmul.mubr.bf16.gmra.mrb[0].mxu0 %v1991
        %v2030 = vpop.f32.mrb[0].mxu0
        %v2031 = vadd.f32 %v1850, %v2030
        %v2032 = vpop.f32.mrb[0].mxu0
        %v2033 = vpop.f32.mrb[0].mxu0
        %v2034 = vpop.f32.mrb[0].mxu0
        %2035 = vdwg.mxu0
        %v2037 = vsel %vm1851, %v1254, 0
        %v2040 = vsel %vm1851, %v1550, 0
        %2042 = vmatprep.subr.bf16.mxu0 0
        %2043 = vmatpush1.bf16.xpose.msra.mxu0 %v2040
        %2044 = vmatprep.subr.bf16.mxu0 0
        %2045 = vmatpush1.bf16.xpose.msra.mxu0 0
        %2046 = vmatprep.subr.bf16.mxu0 0
        %2047 = vmatpush1.bf16.xpose.msra.mxu0 0
        %2048 = vmatprep.subr.bf16.mxu0 0
        %2049 = vmatpush1.bf16.xpose.msra.mxu0 0
        %2050 = vmatprep.subr.bf16.mxu0 0
        %2051 = vmatpush1.bf16.xpose.msra.mxu0 0
        %2052 = vmatprep.subr.bf16.mxu0 0
        %2053 = vmatpush1.bf16.xpose.msra.mxu0 0
        %2054 = vmatprep.subr.bf16.mxu0 0
        %2055 = vmatpush1.bf16.xpose.msra.mxu0 0
        %2056 = vmatprep.subr.bf16.mxu0 0
        %2057 = vmatpush1.bf16.xpose.msra.mxu0 0
        %2058 = vmatprep.subr.bf16.mxu0 0
        %2059 = vmatpush1.bf16.xpose.msra.mxu0 0
        %2060 = vmatprep.subr.bf16.mxu0 0
        %2061 = vmatpush1.bf16.xpose.msra.mxu0 0
        %2062 = vmatprep.subr.bf16.mxu0 0
        %2063 = vmatpush1.bf16.xpose.msra.mxu0 0
        %2064 = vmatprep.subr.bf16.mxu0 0
        %2065 = vmatpush1.bf16.xpose.msra.mxu0 0
        %2066 = vmatprep.subr.bf16.mxu0 0
        %2067 = vmatpush1.bf16.xpose.msra.mxu0 0
        %2068 = vmatprep.subr.bf16.mxu0 0
        %2069 = vmatpush1.bf16.xpose.msra.mxu0 0
        %2070 = vmatprep.subr.bf16.mxu0 0
        %2071 = vmatpush1.bf16.xpose.msra.mxu0 0
        %2072 = vmatprep.subr.bf16.mxu0 0
        %2073 = vmatpush1.bf16.xpose.msra.mxu0 0
        %2074 = vmatprep.mubr.bf16.mxu0 0
        %2075 = vmatmul.mubr.bf16.gmra.mrb[0].mxu0 %v2037
        %v2076 = vpop.f32.mrb[0].mxu0
        %v2077 = vadd.f32 %v1850, %v2076
        %v2078 = vpop.f32.mrb[0].mxu0
        %v2079 = vpop.f32.mrb[0].mxu0
        %v2080 = vpop.f32.mrb[0].mxu0
        %2081 = vdwg.mxu0
        %v2083 = vsel %vm1851, %v1255, 0
        %v2086 = vsel %vm1851, %v1551, 0
        %2088 = vmatprep.subr.bf16.mxu0 0
        %2089 = vmatpush1.bf16.xpose.msra.mxu0 %v2086
        %2090 = vmatprep.subr.bf16.mxu0 0
        %2091 = vmatpush1.bf16.xpose.msra.mxu0 0
        %2092 = vmatprep.subr.bf16.mxu0 0
        %2093 = vmatpush1.bf16.xpose.msra.mxu0 0
        %2094 = vmatprep.subr.bf16.mxu0 0
        %2095 = vmatpush1.bf16.xpose.msra.mxu0 0
        %2096 = vmatprep.subr.bf16.mxu0 0
        %2097 = vmatpush1.bf16.xpose.msra.mxu0 0
        %2098 = vmatprep.subr.bf16.mxu0 0
        %2099 = vmatpush1.bf16.xpose.msra.mxu0 0
        %2100 = vmatprep.subr.bf16.mxu0 0
        %2101 = vmatpush1.bf16.xpose.msra.mxu0 0
        %2102 = vmatprep.subr.bf16.mxu0 0
        %2103 = vmatpush1.bf16.xpose.msra.mxu0 0
        %2104 = vmatprep.subr.bf16.mxu0 0
        %2105 = vmatpush1.bf16.xpose.msra.mxu0 0
        %2106 = vmatprep.subr.bf16.mxu0 0
        %2107 = vmatpush1.bf16.xpose.msra.mxu0 0
        %2108 = vmatprep.subr.bf16.mxu0 0
        %2109 = vmatpush1.bf16.xpose.msra.mxu0 0
        %2110 = vmatprep.subr.bf16.mxu0 0
        %2111 = vmatpush1.bf16.xpose.msra.mxu0 0
        %2112 = vmatprep.subr.bf16.mxu0 0
        %2113 = vmatpush1.bf16.xpose.msra.mxu0 0
        %2114 = vmatprep.subr.bf16.mxu0 0
        %2115 = vmatpush1.bf16.xpose.msra.mxu0 0
        %2116 = vmatprep.subr.bf16.mxu0 0
        %2117 = vmatpush1.bf16.xpose.msra.mxu0 0
        %2118 = vmatprep.subr.bf16.mxu0 0
        %2119 = vmatpush1.bf16.xpose.msra.mxu0 0
        %2120 = vmatprep.mubr.bf16.mxu0 0
        %2121 = vmatmul.mubr.bf16.gmra.mrb[0].mxu0 %v2083
        %v2122 = vpop.f32.mrb[0].mxu0
        %v2123 = vadd.f32 %v1850, %v2122
        %v2124 = vpop.f32.mrb[0].mxu0
        %v2125 = vpop.f32.mrb[0].mxu0
        %v2126 = vpop.f32.mrb[0].mxu0
        %2127 = vdwg.mxu0
        %v2129 = vsel %vm1851, %v1256, 0
        %v2132 = vsel %vm1851, %v1552, 0
        %2134 = vmatprep.subr.bf16.mxu0 0
        %2135 = vmatpush1.bf16.xpose.msra.mxu0 %v2132
        %2136 = vmatprep.subr.bf16.mxu0 0
        %2137 = vmatpush1.bf16.xpose.msra.mxu0 0
        %2138 = vmatprep.subr.bf16.mxu0 0
        %2139 = vmatpush1.bf16.xpose.msra.mxu0 0
        %2140 = vmatprep.subr.bf16.mxu0 0
        %2141 = vmatpush1.bf16.xpose.msra.mxu0 0
        %2142 = vmatprep.subr.bf16.mxu0 0
        %2143 = vmatpush1.bf16.xpose.msra.mxu0 0
        %2144 = vmatprep.subr.bf16.mxu0 0
        %2145 = vmatpush1.bf16.xpose.msra.mxu0 0
        %2146 = vmatprep.subr.bf16.mxu0 0
        %2147 = vmatpush1.bf16.xpose.msra.mxu0 0
        %2148 = vmatprep.subr.bf16.mxu0 0
        %2149 = vmatpush1.bf16.xpose.msra.mxu0 0
        %2150 = vmatprep.subr.bf16.mxu0 0
        %2151 = vmatpush1.bf16.xpose.msra.mxu0 0
        %2152 = vmatprep.subr.bf16.mxu0 0
        %2153 = vmatpush1.bf16.xpose.msra.mxu0 0
        %2154 = vmatprep.subr.bf16.mxu0 0
        %2155 = vmatpush1.bf16.xpose.msra.mxu0 0
        %2156 = vmatprep.subr.bf16.mxu0 0
        %2157 = vmatpush1.bf16.xpose.msra.mxu0 0
        %2158 = vmatprep.subr.bf16.mxu0 0
        %2159 = vmatpush1.bf16.xpose.msra.mxu0 0
        %2160 = vmatprep.subr.bf16.mxu0 0
        %2161 = vmatpush1.bf16.xpose.msra.mxu0 0
        %2162 = vmatprep.subr.bf16.mxu0 0
        %2163 = vmatpush1.bf16.xpose.msra.mxu0 0
        %2164 = vmatprep.subr.bf16.mxu0 0
        %2165 = vmatpush1.bf16.xpose.msra.mxu0 0
        %2166 = vmatprep.mubr.bf16.mxu0 0
        %2167 = vmatmul.mubr.bf16.gmra.mrb[0].mxu0 %v2129
        %v2168 = vpop.f32.mrb[0].mxu0
        %v2169 = vadd.f32 %v1850, %v2168
        %v2170 = vpop.f32.mrb[0].mxu0
        %v2171 = vpop.f32.mrb[0].mxu0
        %v2172 = vpop.f32.mrb[0].mxu0
        %2173 = vdwg.mxu0
        %v2175 = vsel %vm1851, %v1257, 0
        %v2178 = vsel %vm1851, %v1553, 0
        %2180 = vmatprep.subr.bf16.mxu0 0
        %2181 = vmatpush1.bf16.xpose.msra.mxu0 %v2178
        %2182 = vmatprep.subr.bf16.mxu0 0
        %2183 = vmatpush1.bf16.xpose.msra.mxu0 0
        %2184 = vmatprep.subr.bf16.mxu0 0
        %2185 = vmatpush1.bf16.xpose.msra.mxu0 0
        %2186 = vmatprep.subr.bf16.mxu0 0
        %2187 = vmatpush1.bf16.xpose.msra.mxu0 0
        %2188 = vmatprep.subr.bf16.mxu0 0
        %2189 = vmatpush1.bf16.xpose.msra.mxu0 0
        %2190 = vmatprep.subr.bf16.mxu0 0
        %2191 = vmatpush1.bf16.xpose.msra.mxu0 0
        %2192 = vmatprep.subr.bf16.mxu0 0
        %2193 = vmatpush1.bf16.xpose.msra.mxu0 0
        %2194 = vmatprep.subr.bf16.mxu0 0
        %2195 = vmatpush1.bf16.xpose.msra.mxu0 0
        %2196 = vmatprep.subr.bf16.mxu0 0
        %2197 = vmatpush1.bf16.xpose.msra.mxu0 0
        %2198 = vmatprep.subr.bf16.mxu0 0
        %2199 = vmatpush1.bf16.xpose.msra.mxu0 0
        %2200 = vmatprep.subr.bf16.mxu0 0
        %2201 = vmatpush1.bf16.xpose.msra.mxu0 0
        %2202 = vmatprep.subr.bf16.mxu0 0
        %2203 = vmatpush1.bf16.xpose.msra.mxu0 0
        %2204 = vmatprep.subr.bf16.mxu0 0
        %2205 = vmatpush1.bf16.xpose.msra.mxu0 0
        %2206 = vmatprep.subr.bf16.mxu0 0
        %2207 = vmatpush1.bf16.xpose.msra.mxu0 0
        %2208 = vmatprep.subr.bf16.mxu0 0
        %2209 = vmatpush1.bf16.xpose.msra.mxu0 0
        %2210 = vmatprep.subr.bf16.mxu0 0
        %2211 = vmatpush1.bf16.xpose.msra.mxu0 0
        %2212 = vmatprep.mubr.bf16.mxu0 0
        %2213 = vmatmul.mubr.bf16.gmra.mrb[0].mxu0 %v2175
        %v2214 = vpop.f32.mrb[0].mxu0
        %v2215 = vadd.f32 %v1850, %v2214
        %v2216 = vpop.f32.mrb[0].mxu0
        %v2217 = vpop.f32.mrb[0].mxu0
        %v2218 = vpop.f32.mrb[0].mxu0
        %2219 = vdwg.mxu0
        %vm2220 = vcmask 64512
        %v2221 = vsel %vm2220, %v1893, -inf
        %2222 = vmax.xlane.f32.xlu0 %v2221
        %v2223 = vpop.xlane.xlu0 %2222
        %v2224 = vsel %vm2220, %v1939, -inf
        %2225 = vmax.xlane.f32.xlu0 %v2224
        %v2226 = vpop.xlane.xlu0 %2225
        %v2227 = vsel %vm2220, %v1985, -inf
        %2228 = vmax.xlane.f32.xlu0 %v2227
        %v2229 = vpop.xlane.xlu0 %2228
        %v2230 = vsel %vm2220, %v2031, -inf
        %2231 = vmax.xlane.f32.xlu0 %v2230
        %v2232 = vpop.xlane.xlu0 %2231
        %v2233 = vsel %vm2220, %v2077, -inf
        %2234 = vmax.xlane.f32.xlu0 %v2233
        %v2235 = vpop.xlane.xlu0 %2234
        %v2236 = vsel %vm2220, %v2123, -inf
        %2237 = vmax.xlane.f32.xlu0 %v2236
        %v2238 = vpop.xlane.xlu0 %2237
        %v2239 = vsel %vm2220, %v2169, -inf
        %2240 = vmax.xlane.f32.xlu0 %v2239
        %v2241 = vpop.xlane.xlu0 %2240
        %v2242 = vsel %vm2220, %v2215, -inf
        %2243 = vmax.xlane.f32.xlu0 %v2242
        %v2244 = vpop.xlane.xlu0 %2243
        %v2245 = vsub.f32 %v1893, %v2223
        %v2246 = vsub.f32 %v1939, %v2226
        %v2247 = vsub.f32 %v1985, %v2229
        %v2248 = vsub.f32 %v2031, %v2232
        %v2249 = vsub.f32 %v2077, %v2235
        %v2250 = vsub.f32 %v2123, %v2238
        %v2251 = vsub.f32 %v2169, %v2241
        %v2252 = vsub.f32 %v2215, %v2244
        %v2253 = vmul.f32 %v2245, 1.442695
        %v2254 = vpow.pop %v2253
        %v2255 = vmul.f32 %v2246, 1.442695
        %v2256 = vpow.pop %v2255
        %v2257 = vmul.f32 %v2247, 1.442695
        %v2258 = vpow.pop %v2257
        %v2259 = vmul.f32 %v2248, 1.442695
        %v2260 = vpow.pop %v2259
        %v2261 = vmul.f32 %v2249, 1.442695
        %v2262 = vpow.pop %v2261
        %v2263 = vmul.f32 %v2250, 1.442695
        %v2264 = vpow.pop %v2263
        %v2265 = vmul.f32 %v2251, 1.442695
        %v2266 = vpow.pop %v2265
        %v2267 = vmul.f32 %v2252, 1.442695
        %v2268 = vpow.pop %v2267
        %v2269 = vsel %vm2220, %v2254, 0.0
        %2270 = vadd.xlane.f32.xlu0 %v2269
        %v2271 = vpop.xlane.xlu0 %2270
        %v2272 = vsel %vm2220, %v2256, 0.0
        %2273 = vadd.xlane.f32.xlu0 %v2272
        %v2274 = vpop.xlane.xlu0 %2273
        %v2275 = vsel %vm2220, %v2258, 0.0
        %2276 = vadd.xlane.f32.xlu0 %v2275
        %v2277 = vpop.xlane.xlu0 %2276
        %v2278 = vsel %vm2220, %v2260, 0.0
        %2279 = vadd.xlane.f32.xlu0 %v2278
        %v2280 = vpop.xlane.xlu0 %2279
        %v2281 = vsel %vm2220, %v2262, 0.0
        %2282 = vadd.xlane.f32.xlu0 %v2281
        %v2283 = vpop.xlane.xlu0 %2282
        %v2284 = vsel %vm2220, %v2264, 0.0
        %2285 = vadd.xlane.f32.xlu0 %v2284
        %v2286 = vpop.xlane.xlu0 %2285
        %v2287 = vsel %vm2220, %v2266, 0.0
        %2288 = vadd.xlane.f32.xlu0 %v2287
        %v2289 = vpop.xlane.xlu0 %2288
        %v2290 = vsel %vm2220, %v2268, 0.0
        %2291 = vadd.xlane.f32.xlu0 %v2290
        %v2292 = vpop.xlane.xlu0 %2291
        %v2293 = vrcp.pop %v2271
        %v2294 = vrcp.pop %v2274
        %v2295 = vrcp.pop %v2277
        %v2296 = vrcp.pop %v2280
        %v2297 = vrcp.pop %v2283
        %v2298 = vrcp.pop %v2286
        %v2299 = vrcp.pop %v2289
        %v2300 = vrcp.pop %v2292
        %v2301 = vmul.f32 %v2254, %v2293
        %v2302 = vmul.f32 %v2256, %v2294
        %v2303 = vmul.f32 %v2258, %v2295
        %v2304 = vmul.f32 %v2260, %v2296
        %v2305 = vmul.f32 %v2262, %v2297
        %v2306 = vmul.f32 %v2264, %v2298
        %v2307 = vmul.f32 %v2266, %v2299
        %v2308 = vmul.f32 %v2268, %v2300
        %v2309 = vpack.c.bf16 %v2301, %v2301
        %v2310 = vpack.c.bf16 %v2302, %v2302
        %v2311 = vpack.c.bf16 %v2303, %v2303
        %v2312 = vpack.c.bf16 %v2304, %v2304
        %v2313 = vpack.c.bf16 %v2305, %v2305
        %v2314 = vpack.c.bf16 %v2306, %v2306
        %v2315 = vpack.c.bf16 %v2307, %v2307
        %v2316 = vpack.c.bf16 %v2308, %v2308
        %v2318 = vsel %vm2220, %v2309, 0
        %vm2320 = vcmask 1043456
        %v2322 = vsel %vm2320, %v1842, 0
        %2324 = vmatprep.subr.bf16.mxu0 0
        %2325 = vmatpush1.bf16.msra.mxu0 %v2322
        %2326 = vmatprep.subr.bf16.mxu0 0
        %2327 = vmatpush1.bf16.msra.mxu0 0
        %2328 = vmatprep.subr.bf16.mxu0 0
        %2329 = vmatpush1.bf16.msra.mxu0 0
        %2330 = vmatprep.subr.bf16.mxu0 0
        %2331 = vmatpush1.bf16.msra.mxu0 0
        %2332 = vmatprep.subr.bf16.mxu0 0
        %2333 = vmatpush1.bf16.msra.mxu0 0
        %2334 = vmatprep.subr.bf16.mxu0 0
        %2335 = vmatpush1.bf16.msra.mxu0 0
        %2336 = vmatprep.subr.bf16.mxu0 0
        %2337 = vmatpush1.bf16.msra.mxu0 0
        %2338 = vmatprep.subr.bf16.mxu0 0
        %2339 = vmatpush1.bf16.msra.mxu0 0
        %2340 = vmatprep.subr.bf16.mxu0 0
        %2341 = vmatpush1.bf16.msra.mxu0 0
        %2342 = vmatprep.subr.bf16.mxu0 0
        %2343 = vmatpush1.bf16.msra.mxu0 0
        %2344 = vmatprep.subr.bf16.mxu0 0
        %2345 = vmatpush1.bf16.msra.mxu0 0
        %2346 = vmatprep.subr.bf16.mxu0 0
        %2347 = vmatpush1.bf16.msra.mxu0 0
        %2348 = vmatprep.subr.bf16.mxu0 0
        %2349 = vmatpush1.bf16.msra.mxu0 0
        %2350 = vmatprep.subr.bf16.mxu0 0
        %2351 = vmatpush1.bf16.msra.mxu0 0
        %2352 = vmatprep.subr.bf16.mxu0 0
        %2353 = vmatpush1.bf16.msra.mxu0 0
        %2354 = vmatprep.subr.bf16.mxu0 0
        %2355 = vmatpush1.bf16.msra.mxu0 0
        %2356 = vmatprep.mubr.bf16.mxu0 0
        %2357 = vmatmul.mubr.bf16.gmra.mrb[0].mxu0 %v2318
        %v2358 = vpop.f32.mrb[0].mxu0
        %v2359 = vadd.f32 0.0, %v2358
        %v2360 = vpop.f32.mrb[0].mxu0
        %v2361 = vpop.f32.mrb[0].mxu0
        %v2362 = vpop.f32.mrb[0].mxu0
        %2363 = vdwg.mxu0
        %v2365 = vsel %vm2220, %v2310, 0
        %v2368 = vsel %vm2320, %v1843, 0
        %2370 = vmatprep.subr.bf16.mxu0 0
        %2371 = vmatpush1.bf16.msra.mxu0 %v2368
        %2372 = vmatprep.subr.bf16.mxu0 0
        %2373 = vmatpush1.bf16.msra.mxu0 0
        %2374 = vmatprep.subr.bf16.mxu0 0
        %2375 = vmatpush1.bf16.msra.mxu0 0
        %2376 = vmatprep.subr.bf16.mxu0 0
        %2377 = vmatpush1.bf16.msra.mxu0 0
        %2378 = vmatprep.subr.bf16.mxu0 0
        %2379 = vmatpush1.bf16.msra.mxu0 0
        %2380 = vmatprep.subr.bf16.mxu0 0
        %2381 = vmatpush1.bf16.msra.mxu0 0
        %2382 = vmatprep.subr.bf16.mxu0 0
        %2383 = vmatpush1.bf16.msra.mxu0 0
        %2384 = vmatprep.subr.bf16.mxu0 0
        %2385 = vmatpush1.bf16.msra.mxu0 0
        %2386 = vmatprep.subr.bf16.mxu0 0
        %2387 = vmatpush1.bf16.msra.mxu0 0
        %2388 = vmatprep.subr.bf16.mxu0 0
        %2389 = vmatpush1.bf16.msra.mxu0 0
        %2390 = vmatprep.subr.bf16.mxu0 0
        %2391 = vmatpush1.bf16.msra.mxu0 0
        %2392 = vmatprep.subr.bf16.mxu0 0
        %2393 = vmatpush1.bf16.msra.mxu0 0
        %2394 = vmatprep.subr.bf16.mxu0 0
        %2395 = vmatpush1.bf16.msra.mxu0 0
        %2396 = vmatprep.subr.bf16.mxu0 0
        %2397 = vmatpush1.bf16.msra.mxu0 0
        %2398 = vmatprep.subr.bf16.mxu0 0
        %2399 = vmatpush1.bf16.msra.mxu0 0
        %2400 = vmatprep.subr.bf16.mxu0 0
        %2401 = vmatpush1.bf16.msra.mxu0 0
        %2402 = vmatprep.mubr.bf16.mxu0 0
        %2403 = vmatmul.mubr.bf16.gmra.mrb[0].mxu0 %v2365
        %v2404 = vpop.f32.mrb[0].mxu0
        %v2405 = vadd.f32 0.0, %v2404
        %v2406 = vpop.f32.mrb[0].mxu0
        %v2407 = vpop.f32.mrb[0].mxu0
        %v2408 = vpop.f32.mrb[0].mxu0
        %2409 = vdwg.mxu0
        %v2411 = vsel %vm2220, %v2311, 0
        %v2414 = vsel %vm2320, %v1844, 0
        %2416 = vmatprep.subr.bf16.mxu0 0
        %2417 = vmatpush1.bf16.msra.mxu0 %v2414
        %2418 = vmatprep.subr.bf16.mxu0 0
        %2419 = vmatpush1.bf16.msra.mxu0 0
        %2420 = vmatprep.subr.bf16.mxu0 0
        %2421 = vmatpush1.bf16.msra.mxu0 0
        %2422 = vmatprep.subr.bf16.mxu0 0
        %2423 = vmatpush1.bf16.msra.mxu0 0
        %2424 = vmatprep.subr.bf16.mxu0 0
        %2425 = vmatpush1.bf16.msra.mxu0 0
        %2426 = vmatprep.subr.bf16.mxu0 0
        %2427 = vmatpush1.bf16.msra.mxu0 0
        %2428 = vmatprep.subr.bf16.mxu0 0
        %2429 = vmatpush1.bf16.msra.mxu0 0
        %2430 = vmatprep.subr.bf16.mxu0 0
        %2431 = vmatpush1.bf16.msra.mxu0 0
        %2432 = vmatprep.subr.bf16.mxu0 0
        %2433 = vmatpush1.bf16.msra.mxu0 0
        %2434 = vmatprep.subr.bf16.mxu0 0
        %2435 = vmatpush1.bf16.msra.mxu0 0
        %2436 = vmatprep.subr.bf16.mxu0 0
        %2437 = vmatpush1.bf16.msra.mxu0 0
        %2438 = vmatprep.subr.bf16.mxu0 0
        %2439 = vmatpush1.bf16.msra.mxu0 0
        %2440 = vmatprep.subr.bf16.mxu0 0
        %2441 = vmatpush1.bf16.msra.mxu0 0
        %2442 = vmatprep.subr.bf16.mxu0 0
        %2443 = vmatpush1.bf16.msra.mxu0 0
        %2444 = vmatprep.subr.bf16.mxu0 0
        %2445 = vmatpush1.bf16.msra.mxu0 0
        %2446 = vmatprep.subr.bf16.mxu0 0
        %2447 = vmatpush1.bf16.msra.mxu0 0
        %2448 = vmatprep.mubr.bf16.mxu0 0
        %2449 = vmatmul.mubr.bf16.gmra.mrb[0].mxu0 %v2411
        %v2450 = vpop.f32.mrb[0].mxu0
        %v2451 = vadd.f32 0.0, %v2450
        %v2452 = vpop.f32.mrb[0].mxu0
        %v2453 = vpop.f32.mrb[0].mxu0
        %v2454 = vpop.f32.mrb[0].mxu0
        %2455 = vdwg.mxu0
        %v2457 = vsel %vm2220, %v2312, 0
        %v2460 = vsel %vm2320, %v1845, 0
        %2462 = vmatprep.subr.bf16.mxu0 0
        %2463 = vmatpush1.bf16.msra.mxu0 %v2460
        %2464 = vmatprep.subr.bf16.mxu0 0
        %2465 = vmatpush1.bf16.msra.mxu0 0
        %2466 = vmatprep.subr.bf16.mxu0 0
        %2467 = vmatpush1.bf16.msra.mxu0 0
        %2468 = vmatprep.subr.bf16.mxu0 0
        %2469 = vmatpush1.bf16.msra.mxu0 0
        %2470 = vmatprep.subr.bf16.mxu0 0
        %2471 = vmatpush1.bf16.msra.mxu0 0
        %2472 = vmatprep.subr.bf16.mxu0 0
        %2473 = vmatpush1.bf16.msra.mxu0 0
        %2474 = vmatprep.subr.bf16.mxu0 0
        %2475 = vmatpush1.bf16.msra.mxu0 0
        %2476 = vmatprep.subr.bf16.mxu0 0
        %2477 = vmatpush1.bf16.msra.mxu0 0
        %2478 = vmatprep.subr.bf16.mxu0 0
        %2479 = vmatpush1.bf16.msra.mxu0 0
        %2480 = vmatprep.subr.bf16.mxu0 0
        %2481 = vmatpush1.bf16.msra.mxu0 0
        %2482 = vmatprep.subr.bf16.mxu0 0
        %2483 = vmatpush1.bf16.msra.mxu0 0
        %2484 = vmatprep.subr.bf16.mxu0 0
        %2485 = vmatpush1.bf16.msra.mxu0 0
        %2486 = vmatprep.subr.bf16.mxu0 0
        %2487 = vmatpush1.bf16.msra.mxu0 0
        %2488 = vmatprep.subr.bf16.mxu0 0
        %2489 = vmatpush1.bf16.msra.mxu0 0
        %2490 = vmatprep.subr.bf16.mxu0 0
        %2491 = vmatpush1.bf16.msra.mxu0 0
        %2492 = vmatprep.subr.bf16.mxu0 0
        %2493 = vmatpush1.bf16.msra.mxu0 0
        %2494 = vmatprep.mubr.bf16.mxu0 0
        %2495 = vmatmul.mubr.bf16.gmra.mrb[0].mxu0 %v2457
        %v2496 = vpop.f32.mrb[0].mxu0
        %v2497 = vadd.f32 0.0, %v2496
        %v2498 = vpop.f32.mrb[0].mxu0
        %v2499 = vpop.f32.mrb[0].mxu0
        %v2500 = vpop.f32.mrb[0].mxu0
        %2501 = vdwg.mxu0
        %v2503 = vsel %vm2220, %v2313, 0
        %v2506 = vsel %vm2320, %v1846, 0
        %2508 = vmatprep.subr.bf16.mxu0 0
        %2509 = vmatpush1.bf16.msra.mxu0 %v2506
        %2510 = vmatprep.subr.bf16.mxu0 0
        %2511 = vmatpush1.bf16.msra.mxu0 0
        %2512 = vmatprep.subr.bf16.mxu0 0
        %2513 = vmatpush1.bf16.msra.mxu0 0
        %2514 = vmatprep.subr.bf16.mxu0 0
        %2515 = vmatpush1.bf16.msra.mxu0 0
        %2516 = vmatprep.subr.bf16.mxu0 0
        %2517 = vmatpush1.bf16.msra.mxu0 0
        %2518 = vmatprep.subr.bf16.mxu0 0
        %2519 = vmatpush1.bf16.msra.mxu0 0
        %2520 = vmatprep.subr.bf16.mxu0 0
        %2521 = vmatpush1.bf16.msra.mxu0 0
        %2522 = vmatprep.subr.bf16.mxu0 0
        %2523 = vmatpush1.bf16.msra.mxu0 0
        %2524 = vmatprep.subr.bf16.mxu0 0
        %2525 = vmatpush1.bf16.msra.mxu0 0
        %2526 = vmatprep.subr.bf16.mxu0 0
        %2527 = vmatpush1.bf16.msra.mxu0 0
        %2528 = vmatprep.subr.bf16.mxu0 0
        %2529 = vmatpush1.bf16.msra.mxu0 0
        %2530 = vmatprep.subr.bf16.mxu0 0
        %2531 = vmatpush1.bf16.msra.mxu0 0
        %2532 = vmatprep.subr.bf16.mxu0 0
        %2533 = vmatpush1.bf16.msra.mxu0 0
        %2534 = vmatprep.subr.bf16.mxu0 0
        %2535 = vmatpush1.bf16.msra.mxu0 0
        %2536 = vmatprep.subr.bf16.mxu0 0
        %2537 = vmatpush1.bf16.msra.mxu0 0
        %2538 = vmatprep.subr.bf16.mxu0 0
        %2539 = vmatpush1.bf16.msra.mxu0 0
        %2540 = vmatprep.mubr.bf16.mxu0 0
        %2541 = vmatmul.mubr.bf16.gmra.mrb[0].mxu0 %v2503
        %v2542 = vpop.f32.mrb[0].mxu0
        %v2543 = vadd.f32 0.0, %v2542
        %v2544 = vpop.f32.mrb[0].mxu0
        %v2545 = vpop.f32.mrb[0].mxu0
        %v2546 = vpop.f32.mrb[0].mxu0
        %2547 = vdwg.mxu0
        %v2549 = vsel %vm2220, %v2314, 0
        %v2552 = vsel %vm2320, %v1847, 0
        %2554 = vmatprep.subr.bf16.mxu0 0
        %2555 = vmatpush1.bf16.msra.mxu0 %v2552
        %2556 = vmatprep.subr.bf16.mxu0 0
        %2557 = vmatpush1.bf16.msra.mxu0 0
        %2558 = vmatprep.subr.bf16.mxu0 0
        %2559 = vmatpush1.bf16.msra.mxu0 0
        %2560 = vmatprep.subr.bf16.mxu0 0
        %2561 = vmatpush1.bf16.msra.mxu0 0
        %2562 = vmatprep.subr.bf16.mxu0 0
        %2563 = vmatpush1.bf16.msra.mxu0 0
        %2564 = vmatprep.subr.bf16.mxu0 0
        %2565 = vmatpush1.bf16.msra.mxu0 0
        %2566 = vmatprep.subr.bf16.mxu0 0
        %2567 = vmatpush1.bf16.msra.mxu0 0
        %2568 = vmatprep.subr.bf16.mxu0 0
        %2569 = vmatpush1.bf16.msra.mxu0 0
        %2570 = vmatprep.subr.bf16.mxu0 0
        %2571 = vmatpush1.bf16.msra.mxu0 0
        %2572 = vmatprep.subr.bf16.mxu0 0
        %2573 = vmatpush1.bf16.msra.mxu0 0
        %2574 = vmatprep.subr.bf16.mxu0 0
        %2575 = vmatpush1.bf16.msra.mxu0 0
        %2576 = vmatprep.subr.bf16.mxu0 0
        %2577 = vmatpush1.bf16.msra.mxu0 0
        %2578 = vmatprep.subr.bf16.mxu0 0
        %2579 = vmatpush1.bf16.msra.mxu0 0
        %2580 = vmatprep.subr.bf16.mxu0 0
        %2581 = vmatpush1.bf16.msra.mxu0 0
        %2582 = vmatprep.subr.bf16.mxu0 0
        %2583 = vmatpush1.bf16.msra.mxu0 0
        %2584 = vmatprep.subr.bf16.mxu0 0
        %2585 = vmatpush1.bf16.msra.mxu0 0
        %2586 = vmatprep.mubr.bf16.mxu0 0
        %2587 = vmatmul.mubr.bf16.gmra.mrb[0].mxu0 %v2549
        %v2588 = vpop.f32.mrb[0].mxu0
        %v2589 = vadd.f32 0.0, %v2588
        %v2590 = vpop.f32.mrb[0].mxu0
        %v2591 = vpop.f32.mrb[0].mxu0
        %v2592 = vpop.f32.mrb[0].mxu0
        %2593 = vdwg.mxu0
        %v2595 = vsel %vm2220, %v2315, 0
        %v2598 = vsel %vm2320, %v1848, 0
        %2600 = vmatprep.subr.bf16.mxu0 0
        %2601 = vmatpush1.bf16.msra.mxu0 %v2598
        %2602 = vmatprep.subr.bf16.mxu0 0
        %2603 = vmatpush1.bf16.msra.mxu0 0
        %2604 = vmatprep.subr.bf16.mxu0 0
        %2605 = vmatpush1.bf16.msra.mxu0 0
        %2606 = vmatprep.subr.bf16.mxu0 0
        %2607 = vmatpush1.bf16.msra.mxu0 0
        %2608 = vmatprep.subr.bf16.mxu0 0
        %2609 = vmatpush1.bf16.msra.mxu0 0
        %2610 = vmatprep.subr.bf16.mxu0 0
        %2611 = vmatpush1.bf16.msra.mxu0 0
        %2612 = vmatprep.subr.bf16.mxu0 0
        %2613 = vmatpush1.bf16.msra.mxu0 0
        %2614 = vmatprep.subr.bf16.mxu0 0
        %2615 = vmatpush1.bf16.msra.mxu0 0
        %2616 = vmatprep.subr.bf16.mxu0 0
        %2617 = vmatpush1.bf16.msra.mxu0 0
        %2618 = vmatprep.subr.bf16.mxu0 0
        %2619 = vmatpush1.bf16.msra.mxu0 0
        %2620 = vmatprep.subr.bf16.mxu0 0
        %2621 = vmatpush1.bf16.msra.mxu0 0
        %2622 = vmatprep.subr.bf16.mxu0 0
        %2623 = vmatpush1.bf16.msra.mxu0 0
        %2624 = vmatprep.subr.bf16.mxu0 0
        %2625 = vmatpush1.bf16.msra.mxu0 0
        %2626 = vmatprep.subr.bf16.mxu0 0
        %2627 = vmatpush1.bf16.msra.mxu0 0
        %2628 = vmatprep.subr.bf16.mxu0 0
        %2629 = vmatpush1.bf16.msra.mxu0 0
        %2630 = vmatprep.subr.bf16.mxu0 0
        %2631 = vmatpush1.bf16.msra.mxu0 0
        %2632 = vmatprep.mubr.bf16.mxu0 0
        %2633 = vmatmul.mubr.bf16.gmra.mrb[0].mxu0 %v2595
        %v2634 = vpop.f32.mrb[0].mxu0
        %v2635 = vadd.f32 0.0, %v2634
        %v2636 = vpop.f32.mrb[0].mxu0
        %v2637 = vpop.f32.mrb[0].mxu0
        %v2638 = vpop.f32.mrb[0].mxu0
        %2639 = vdwg.mxu0
        %v2641 = vsel %vm2220, %v2316, 0
        %v2644 = vsel %vm2320, %v1849, 0
        %2646 = vmatprep.subr.bf16.mxu0 0
        %2647 = vmatpush1.bf16.msra.mxu0 %v2644
        %2648 = vmatprep.subr.bf16.mxu0 0
        %2649 = vmatpush1.bf16.msra.mxu0 0
        %2650 = vmatprep.subr.bf16.mxu0 0
        %2651 = vmatpush1.bf16.msra.mxu0 0
        %2652 = vmatprep.subr.bf16.mxu0 0
        %2653 = vmatpush1.bf16.msra.mxu0 0
        %2654 = vmatprep.subr.bf16.mxu0 0
        %2655 = vmatpush1.bf16.msra.mxu0 0
        %2656 = vmatprep.subr.bf16.mxu0 0
        %2657 = vmatpush1.bf16.msra.mxu0 0
        %2658 = vmatprep.subr.bf16.mxu0 0
        %2659 = vmatpush1.bf16.msra.mxu0 0
        %2660 = vmatprep.subr.bf16.mxu0 0
        %2661 = vmatpush1.bf16.msra.mxu0 0
        %2662 = vmatprep.subr.bf16.mxu0 0
        %2663 = vmatpush1.bf16.msra.mxu0 0
        %2664 = vmatprep.subr.bf16.mxu0 0
        %2665 = vmatpush1.bf16.msra.mxu0 0
        %2666 = vmatprep.subr.bf16.mxu0 0
        %2667 = vmatpush1.bf16.msra.mxu0 0
        %2668 = vmatprep.subr.bf16.mxu0 0
        %2669 = vmatpush1.bf16.msra.mxu0 0
        %2670 = vmatprep.subr.bf16.mxu0 0
        %2671 = vmatpush1.bf16.msra.mxu0 0
        %2672 = vmatprep.subr.bf16.mxu0 0
        %2673 = vmatpush1.bf16.msra.mxu0 0
        %2674 = vmatprep.subr.bf16.mxu0 0
        %2675 = vmatpush1.bf16.msra.mxu0 0
        %2676 = vmatprep.subr.bf16.mxu0 0
        %2677 = vmatpush1.bf16.msra.mxu0 0
        %2678 = vmatprep.mubr.bf16.mxu0 0
        %2679 = vmatmul.mubr.bf16.gmra.mrb[0].mxu0 %v2641
        %v2680 = vpop.f32.mrb[0].mxu0
        %v2681 = vadd.f32 0.0, %v2680
        %v2682 = vpop.f32.mrb[0].mxu0
        %v2683 = vpop.f32.mrb[0].mxu0
        %v2684 = vpop.f32.mrb[0].mxu0
        %2685 = vdwg.mxu0
        %2686 = vxpose.xlu0.b32.start [1/16] %v2359, 128
        %2687 = vxpose.xlu0.b32.cont [2/16] 0.0, 128
        %2688 = vxpose.xlu0.b32.cont [3/16] 0.0, 128
        %2689 = vxpose.xlu0.b32.cont [4/16] 0.0, 128
        %2690 = vxpose.xlu0.b32.cont [5/16] 0.0, 128
        %2691 = vxpose.xlu0.b32.cont [6/16] 0.0, 128
        %2692 = vxpose.xlu0.b32.cont [7/16] 0.0, 128
        %2693 = vxpose.xlu0.b32.cont [8/16] 0.0, 128
        %2694 = vxpose.xlu0.b32.cont [9/16] 0.0, 128
        %2695 = vxpose.xlu0.b32.cont [10/16] 0.0, 128
        %2696 = vxpose.xlu0.b32.cont [11/16] 0.0, 128
        %2697 = vxpose.xlu0.b32.cont [12/16] 0.0, 128
        %2698 = vxpose.xlu0.b32.cont [13/16] 0.0, 128
        %2699 = vxpose.xlu0.b32.cont [14/16] 0.0, 128
        %2700 = vxpose.xlu0.b32.cont [15/16] 0.0, 128
        %2701 = vxpose.xlu0.b32.end [16/16] 0.0, 128
        %v2702 = vpop.trf.xlu0
        %v2703 = vpop.trf.xlu0
        %v2704 = vpop.trf.xlu0
        %v2705 = vpop.trf.xlu0
        %v2706 = vpop.trf.xlu0
        %v2707 = vpop.trf.xlu0
        %v2708 = vpop.trf.xlu0
        %v2709 = vpop.trf.xlu0
        %v2710 = vpop.trf.xlu0
        %v2711 = vpop.trf.xlu0
        %v2712 = vpop.trf.xlu0
        %v2713 = vpop.trf.xlu0
        %v2714 = vpop.trf.xlu0
        %v2715 = vpop.trf.xlu0
        %v2716 = vpop.trf.xlu0
        %v2717 = vpop.trf.xlu0
        %2718 = vxpose.xlu0.b32.start [1/16] %v2405, 128
        %2719 = vxpose.xlu0.b32.cont [2/16] 0.0, 128
        %2720 = vxpose.xlu0.b32.cont [3/16] 0.0, 128
        %2721 = vxpose.xlu0.b32.cont [4/16] 0.0, 128
        %2722 = vxpose.xlu0.b32.cont [5/16] 0.0, 128
        %2723 = vxpose.xlu0.b32.cont [6/16] 0.0, 128
        %2724 = vxpose.xlu0.b32.cont [7/16] 0.0, 128
        %2725 = vxpose.xlu0.b32.cont [8/16] 0.0, 128
        %2726 = vxpose.xlu0.b32.cont [9/16] 0.0, 128
        %2727 = vxpose.xlu0.b32.cont [10/16] 0.0, 128
        %2728 = vxpose.xlu0.b32.cont [11/16] 0.0, 128
        %2729 = vxpose.xlu0.b32.cont [12/16] 0.0, 128
        %2730 = vxpose.xlu0.b32.cont [13/16] 0.0, 128
        %2731 = vxpose.xlu0.b32.cont [14/16] 0.0, 128
        %2732 = vxpose.xlu0.b32.cont [15/16] 0.0, 128
        %2733 = vxpose.xlu0.b32.end [16/16] 0.0, 128
        %v2734 = vpop.trf.xlu0
        %v2735 = vpop.trf.xlu0
        %v2736 = vpop.trf.xlu0
        %v2737 = vpop.trf.xlu0
        %v2738 = vpop.trf.xlu0
        %v2739 = vpop.trf.xlu0
        %v2740 = vpop.trf.xlu0
        %v2741 = vpop.trf.xlu0
        %v2742 = vpop.trf.xlu0
        %v2743 = vpop.trf.xlu0
        %v2744 = vpop.trf.xlu0
        %v2745 = vpop.trf.xlu0
        %v2746 = vpop.trf.xlu0
        %v2747 = vpop.trf.xlu0
        %v2748 = vpop.trf.xlu0
        %v2749 = vpop.trf.xlu0
        %2750 = vxpose.xlu0.b32.start [1/16] %v2451, 128
        %2751 = vxpose.xlu0.b32.cont [2/16] 0.0, 128
        %2752 = vxpose.xlu0.b32.cont [3/16] 0.0, 128
        %2753 = vxpose.xlu0.b32.cont [4/16] 0.0, 128
        %2754 = vxpose.xlu0.b32.cont [5/16] 0.0, 128
        %2755 = vxpose.xlu0.b32.cont [6/16] 0.0, 128
        %2756 = vxpose.xlu0.b32.cont [7/16] 0.0, 128
        %2757 = vxpose.xlu0.b32.cont [8/16] 0.0, 128
        %2758 = vxpose.xlu0.b32.cont [9/16] 0.0, 128
        %2759 = vxpose.xlu0.b32.cont [10/16] 0.0, 128
        %2760 = vxpose.xlu0.b32.cont [11/16] 0.0, 128
        %2761 = vxpose.xlu0.b32.cont [12/16] 0.0, 128
        %2762 = vxpose.xlu0.b32.cont [13/16] 0.0, 128
        %2763 = vxpose.xlu0.b32.cont [14/16] 0.0, 128
        %2764 = vxpose.xlu0.b32.cont [15/16] 0.0, 128
        %2765 = vxpose.xlu0.b32.end [16/16] 0.0, 128
        %v2766 = vpop.trf.xlu0
        %v2767 = vpop.trf.xlu0
        %v2768 = vpop.trf.xlu0
        %v2769 = vpop.trf.xlu0
        %v2770 = vpop.trf.xlu0
        %v2771 = vpop.trf.xlu0
        %v2772 = vpop.trf.xlu0
        %v2773 = vpop.trf.xlu0
        %v2774 = vpop.trf.xlu0
        %v2775 = vpop.trf.xlu0
        %v2776 = vpop.trf.xlu0
        %v2777 = vpop.trf.xlu0
        %v2778 = vpop.trf.xlu0
        %v2779 = vpop.trf.xlu0
        %v2780 = vpop.trf.xlu0
        %v2781 = vpop.trf.xlu0
        %2782 = vxpose.xlu0.b32.start [1/16] %v2497, 128
        %2783 = vxpose.xlu0.b32.cont [2/16] 0.0, 128
        %2784 = vxpose.xlu0.b32.cont [3/16] 0.0, 128
        %2785 = vxpose.xlu0.b32.cont [4/16] 0.0, 128
        %2786 = vxpose.xlu0.b32.cont [5/16] 0.0, 128
        %2787 = vxpose.xlu0.b32.cont [6/16] 0.0, 128
        %2788 = vxpose.xlu0.b32.cont [7/16] 0.0, 128
        %2789 = vxpose.xlu0.b32.cont [8/16] 0.0, 128
        %2790 = vxpose.xlu0.b32.cont [9/16] 0.0, 128
        %2791 = vxpose.xlu0.b32.cont [10/16] 0.0, 128
        %2792 = vxpose.xlu0.b32.cont [11/16] 0.0, 128
        %2793 = vxpose.xlu0.b32.cont [12/16] 0.0, 128
        %2794 = vxpose.xlu0.b32.cont [13/16] 0.0, 128
        %2795 = vxpose.xlu0.b32.cont [14/16] 0.0, 128
        %2796 = vxpose.xlu0.b32.cont [15/16] 0.0, 128
        %2797 = vxpose.xlu0.b32.end [16/16] 0.0, 128
        %v2798 = vpop.trf.xlu0
        %v2799 = vpop.trf.xlu0
        %v2800 = vpop.trf.xlu0
        %v2801 = vpop.trf.xlu0
        %v2802 = vpop.trf.xlu0
        %v2803 = vpop.trf.xlu0
        %v2804 = vpop.trf.xlu0
        %v2805 = vpop.trf.xlu0
        %v2806 = vpop.trf.xlu0
        %v2807 = vpop.trf.xlu0
        %v2808 = vpop.trf.xlu0
        %v2809 = vpop.trf.xlu0
        %v2810 = vpop.trf.xlu0
        %v2811 = vpop.trf.xlu0
        %v2812 = vpop.trf.xlu0
        %v2813 = vpop.trf.xlu0
        %2814 = vxpose.xlu0.b32.start [1/16] %v2543, 128
        %2815 = vxpose.xlu0.b32.cont [2/16] 0.0, 128
        %2816 = vxpose.xlu0.b32.cont [3/16] 0.0, 128
        %2817 = vxpose.xlu0.b32.cont [4/16] 0.0, 128
        %2818 = vxpose.xlu0.b32.cont [5/16] 0.0, 128
        %2819 = vxpose.xlu0.b32.cont [6/16] 0.0, 128
        %2820 = vxpose.xlu0.b32.cont [7/16] 0.0, 128
        %2821 = vxpose.xlu0.b32.cont [8/16] 0.0, 128
        %2822 = vxpose.xlu0.b32.cont [9/16] 0.0, 128
        %2823 = vxpose.xlu0.b32.cont [10/16] 0.0, 128
        %2824 = vxpose.xlu0.b32.cont [11/16] 0.0, 128
        %2825 = vxpose.xlu0.b32.cont [12/16] 0.0, 128
        %2826 = vxpose.xlu0.b32.cont [13/16] 0.0, 128
        %2827 = vxpose.xlu0.b32.cont [14/16] 0.0, 128
        %2828 = vxpose.xlu0.b32.cont [15/16] 0.0, 128
        %2829 = vxpose.xlu0.b32.end [16/16] 0.0, 128
        %v2830 = vpop.trf.xlu0
        %v2831 = vpop.trf.xlu0
        %v2832 = vpop.trf.xlu0
        %v2833 = vpop.trf.xlu0
        %v2834 = vpop.trf.xlu0
        %v2835 = vpop.trf.xlu0
        %v2836 = vpop.trf.xlu0
        %v2837 = vpop.trf.xlu0
        %v2838 = vpop.trf.xlu0
        %v2839 = vpop.trf.xlu0
        %v2840 = vpop.trf.xlu0
        %v2841 = vpop.trf.xlu0
        %v2842 = vpop.trf.xlu0
        %v2843 = vpop.trf.xlu0
        %v2844 = vpop.trf.xlu0
        %v2845 = vpop.trf.xlu0
        %2846 = vxpose.xlu0.b32.start [1/16] %v2589, 128
        %2847 = vxpose.xlu0.b32.cont [2/16] 0.0, 128
        %2848 = vxpose.xlu0.b32.cont [3/16] 0.0, 128
        %2849 = vxpose.xlu0.b32.cont [4/16] 0.0, 128
        %2850 = vxpose.xlu0.b32.cont [5/16] 0.0, 128
        %2851 = vxpose.xlu0.b32.cont [6/16] 0.0, 128
        %2852 = vxpose.xlu0.b32.cont [7/16] 0.0, 128
        %2853 = vxpose.xlu0.b32.cont [8/16] 0.0, 128
        %2854 = vxpose.xlu0.b32.cont [9/16] 0.0, 128
        %2855 = vxpose.xlu0.b32.cont [10/16] 0.0, 128
        %2856 = vxpose.xlu0.b32.cont [11/16] 0.0, 128
        %2857 = vxpose.xlu0.b32.cont [12/16] 0.0, 128
        %2858 = vxpose.xlu0.b32.cont [13/16] 0.0, 128
        %2859 = vxpose.xlu0.b32.cont [14/16] 0.0, 128
        %2860 = vxpose.xlu0.b32.cont [15/16] 0.0, 128
        %2861 = vxpose.xlu0.b32.end [16/16] 0.0, 128
        %v2862 = vpop.trf.xlu0
        %v2863 = vpop.trf.xlu0
        %v2864 = vpop.trf.xlu0
        %v2865 = vpop.trf.xlu0
        %v2866 = vpop.trf.xlu0
        %v2867 = vpop.trf.xlu0
        %v2868 = vpop.trf.xlu0
        %v2869 = vpop.trf.xlu0
        %v2870 = vpop.trf.xlu0
        %v2871 = vpop.trf.xlu0
        %v2872 = vpop.trf.xlu0
        %v2873 = vpop.trf.xlu0
        %v2874 = vpop.trf.xlu0
        %v2875 = vpop.trf.xlu0
        %v2876 = vpop.trf.xlu0
        %v2877 = vpop.trf.xlu0
        %2878 = vxpose.xlu0.b32.start [1/16] %v2635, 128
        %2879 = vxpose.xlu0.b32.cont [2/16] 0.0, 128
        %2880 = vxpose.xlu0.b32.cont [3/16] 0.0, 128
        %2881 = vxpose.xlu0.b32.cont [4/16] 0.0, 128
        %2882 = vxpose.xlu0.b32.cont [5/16] 0.0, 128
        %2883 = vxpose.xlu0.b32.cont [6/16] 0.0, 128
        %2884 = vxpose.xlu0.b32.cont [7/16] 0.0, 128
        %2885 = vxpose.xlu0.b32.cont [8/16] 0.0, 128
        %2886 = vxpose.xlu0.b32.cont [9/16] 0.0, 128
        %2887 = vxpose.xlu0.b32.cont [10/16] 0.0, 128
        %2888 = vxpose.xlu0.b32.cont [11/16] 0.0, 128
        %2889 = vxpose.xlu0.b32.cont [12/16] 0.0, 128
        %2890 = vxpose.xlu0.b32.cont [13/16] 0.0, 128
        %2891 = vxpose.xlu0.b32.cont [14/16] 0.0, 128
        %2892 = vxpose.xlu0.b32.cont [15/16] 0.0, 128
        %2893 = vxpose.xlu0.b32.end [16/16] 0.0, 128
        %v2894 = vpop.trf.xlu0
        %v2895 = vpop.trf.xlu0
        %v2896 = vpop.trf.xlu0
        %v2897 = vpop.trf.xlu0
        %v2898 = vpop.trf.xlu0
        %v2899 = vpop.trf.xlu0
        %v2900 = vpop.trf.xlu0
        %v2901 = vpop.trf.xlu0
        %v2902 = vpop.trf.xlu0
        %v2903 = vpop.trf.xlu0
        %v2904 = vpop.trf.xlu0
        %v2905 = vpop.trf.xlu0
        %v2906 = vpop.trf.xlu0
        %v2907 = vpop.trf.xlu0
        %v2908 = vpop.trf.xlu0
        %v2909 = vpop.trf.xlu0
        %2910 = vxpose.xlu0.b32.start [1/16] %v2681, 128
        %2911 = vxpose.xlu0.b32.cont [2/16] 0.0, 128
        %2912 = vxpose.xlu0.b32.cont [3/16] 0.0, 128
        %2913 = vxpose.xlu0.b32.cont [4/16] 0.0, 128
        %2914 = vxpose.xlu0.b32.cont [5/16] 0.0, 128
        %2915 = vxpose.xlu0.b32.cont [6/16] 0.0, 128
        %2916 = vxpose.xlu0.b32.cont [7/16] 0.0, 128
        %2917 = vxpose.xlu0.b32.cont [8/16] 0.0, 128
        %2918 = vxpose.xlu0.b32.cont [9/16] 0.0, 128
        %2919 = vxpose.xlu0.b32.cont [10/16] 0.0, 128
        %2920 = vxpose.xlu0.b32.cont [11/16] 0.0, 128
        %2921 = vxpose.xlu0.b32.cont [12/16] 0.0, 128
        %2922 = vxpose.xlu0.b32.cont [13/16] 0.0, 128
        %2923 = vxpose.xlu0.b32.cont [14/16] 0.0, 128
        %2924 = vxpose.xlu0.b32.cont [15/16] 0.0, 128
        %2925 = vxpose.xlu0.b32.end [16/16] 0.0, 128
        %v2926 = vpop.trf.xlu0
        %v2927 = vpop.trf.xlu0
        %v2928 = vpop.trf.xlu0
        %v2929 = vpop.trf.xlu0
        %v2930 = vpop.trf.xlu0
        %v2931 = vpop.trf.xlu0
        %v2932 = vpop.trf.xlu0
        %v2933 = vpop.trf.xlu0
        %v2934 = vpop.trf.xlu0
        %v2935 = vpop.trf.xlu0
        %v2936 = vpop.trf.xlu0
        %v2937 = vpop.trf.xlu0
        %v2938 = vpop.trf.xlu0
        %v2939 = vpop.trf.xlu0
        %v2940 = vpop.trf.xlu0
        %v2941 = vpop.trf.xlu0
        %2942 = vxpose.xlu0.b32.start [1/16] %v2702, 128
        %2943 = vxpose.xlu0.b32.cont [2/16] %v2703, 128
        %2944 = vxpose.xlu0.b32.cont [3/16] %v2734, 128
        %2945 = vxpose.xlu0.b32.cont [4/16] %v2735, 128
        %2946 = vxpose.xlu0.b32.cont [5/16] %v2766, 128
        %2947 = vxpose.xlu0.b32.cont [6/16] %v2767, 128
        %2948 = vxpose.xlu0.b32.cont [7/16] %v2798, 128
        %2949 = vxpose.xlu0.b32.cont [8/16] %v2799, 128
        %2950 = vxpose.xlu0.b32.cont [9/16] %v2830, 128
        %2951 = vxpose.xlu0.b32.cont [10/16] %v2831, 128
        %2952 = vxpose.xlu0.b32.cont [11/16] %v2862, 128
        %2953 = vxpose.xlu0.b32.cont [12/16] %v2863, 128
        %2954 = vxpose.xlu0.b32.cont [13/16] %v2894, 128
        %2955 = vxpose.xlu0.b32.cont [14/16] %v2895, 128
        %2956 = vxpose.xlu0.b32.cont [15/16] %v2926, 128
        %2957 = vxpose.xlu0.b32.end [16/16] %v2927, 128
        %v2958 = vpop.trf.xlu0
        %v2959 = vpop.trf.xlu0
        %v2960 = vpop.trf.xlu0
        %v2961 = vpop.trf.xlu0
        %v2962 = vpop.trf.xlu0
        %v2963 = vpop.trf.xlu0
        %v2964 = vpop.trf.xlu0
        %v2965 = vpop.trf.xlu0
        %v2966 = vpop.trf.xlu0
        %v2967 = vpop.trf.xlu0
        %v2968 = vpop.trf.xlu0
        %v2969 = vpop.trf.xlu0
        %v2970 = vpop.trf.xlu0
        %v2971 = vpop.trf.xlu0
        %v2972 = vpop.trf.xlu0
        %v2973 = vpop.trf.xlu0
        %2974 = vxpose.xlu0.b32.start [1/16] %v961, 128
        %2975 = vxpose.xlu0.b32.cont [2/16] 0.0, 128
        %2976 = vxpose.xlu0.b32.cont [3/16] 0.0, 128
        %2977 = vxpose.xlu0.b32.cont [4/16] 0.0, 128
        %2978 = vxpose.xlu0.b32.cont [5/16] 0.0, 128
        %2979 = vxpose.xlu0.b32.cont [6/16] 0.0, 128
        %2980 = vxpose.xlu0.b32.cont [7/16] 0.0, 128
        %2981 = vxpose.xlu0.b32.cont [8/16] 0.0, 128
        %2982 = vxpose.xlu0.b32.cont [9/16] 0.0, 128
        %2983 = vxpose.xlu0.b32.cont [10/16] 0.0, 128
        %2984 = vxpose.xlu0.b32.cont [11/16] 0.0, 128
        %2985 = vxpose.xlu0.b32.cont [12/16] 0.0, 128
        %2986 = vxpose.xlu0.b32.cont [13/16] 0.0, 128
        %2987 = vxpose.xlu0.b32.cont [14/16] 0.0, 128
        %2988 = vxpose.xlu0.b32.cont [15/16] 0.0, 128
        %2989 = vxpose.xlu0.b32.end [16/16] 0.0, 128
        %v2990 = vpop.trf.xlu0
        %v2991 = vpop.trf.xlu0
        %v2992 = vpop.trf.xlu0
        %v2993 = vpop.trf.xlu0
        %v2994 = vpop.trf.xlu0
        %v2995 = vpop.trf.xlu0
        %v2996 = vpop.trf.xlu0
        %v2997 = vpop.trf.xlu0
        %v2998 = vpop.trf.xlu0
        %v2999 = vpop.trf.xlu0
        %v3000 = vpop.trf.xlu0
        %v3001 = vpop.trf.xlu0
        %v3002 = vpop.trf.xlu0
        %v3003 = vpop.trf.xlu0
        %v3004 = vpop.trf.xlu0
        %v3005 = vpop.trf.xlu0
        %3006 = vxpose.xlu0.b32.start [1/16] %v2990, 128
        %3007 = vxpose.xlu0.b32.cont [2/16] %v2991, 128
        %3008 = vxpose.xlu0.b32.cont [3/16] 0.0, 128
        %3009 = vxpose.xlu0.b32.cont [4/16] 0.0, 128
        %3010 = vxpose.xlu0.b32.cont [5/16] 0.0, 128
        %3011 = vxpose.xlu0.b32.cont [6/16] 0.0, 128
        %3012 = vxpose.xlu0.b32.cont [7/16] 0.0, 128
        %3013 = vxpose.xlu0.b32.cont [8/16] 0.0, 128
        %3014 = vxpose.xlu0.b32.cont [9/16] 0.0, 128
        %3015 = vxpose.xlu0.b32.cont [10/16] 0.0, 128
        %3016 = vxpose.xlu0.b32.cont [11/16] 0.0, 128
        %3017 = vxpose.xlu0.b32.cont [12/16] 0.0, 128
        %3018 = vxpose.xlu0.b32.cont [13/16] 0.0, 128
        %3019 = vxpose.xlu0.b32.cont [14/16] 0.0, 128
        %3020 = vxpose.xlu0.b32.cont [15/16] 0.0, 128
        %3021 = vxpose.xlu0.b32.end [16/16] 0.0, 128
        %v3022 = vpop.trf.xlu0
        %v3023 = vpop.trf.xlu0
        %v3024 = vpop.trf.xlu0
        %v3025 = vpop.trf.xlu0
        %v3026 = vpop.trf.xlu0
        %v3027 = vpop.trf.xlu0
        %v3028 = vpop.trf.xlu0
        %v3029 = vpop.trf.xlu0
        %v3030 = vpop.trf.xlu0
        %v3031 = vpop.trf.xlu0
        %v3032 = vpop.trf.xlu0
        %v3033 = vpop.trf.xlu0
        %v3034 = vpop.trf.xlu0
        %v3035 = vpop.trf.xlu0
        %v3036 = vpop.trf.xlu0
        %v3037 = vpop.trf.xlu0
        %3038 = vxpose.xlu0.b32.start [1/16] %v2992, 128
        %3039 = vxpose.xlu0.b32.cont [2/16] %v2993, 128
        %3040 = vxpose.xlu0.b32.cont [3/16] 0.0, 128
        %3041 = vxpose.xlu0.b32.cont [4/16] 0.0, 128
        %3042 = vxpose.xlu0.b32.cont [5/16] 0.0, 128
        %3043 = vxpose.xlu0.b32.cont [6/16] 0.0, 128
        %3044 = vxpose.xlu0.b32.cont [7/16] 0.0, 128
        %3045 = vxpose.xlu0.b32.cont [8/16] 0.0, 128
        %3046 = vxpose.xlu0.b32.cont [9/16] 0.0, 128
        %3047 = vxpose.xlu0.b32.cont [10/16] 0.0, 128
        %3048 = vxpose.xlu0.b32.cont [11/16] 0.0, 128
        %3049 = vxpose.xlu0.b32.cont [12/16] 0.0, 128
        %3050 = vxpose.xlu0.b32.cont [13/16] 0.0, 128
        %3051 = vxpose.xlu0.b32.cont [14/16] 0.0, 128
        %3052 = vxpose.xlu0.b32.cont [15/16] 0.0, 128
        %3053 = vxpose.xlu0.b32.end [16/16] 0.0, 128
        %v3054 = vpop.trf.xlu0
        %v3055 = vpop.trf.xlu0
        %v3056 = vpop.trf.xlu0
        %v3057 = vpop.trf.xlu0
        %v3058 = vpop.trf.xlu0
        %v3059 = vpop.trf.xlu0
        %v3060 = vpop.trf.xlu0
        %v3061 = vpop.trf.xlu0
        %v3062 = vpop.trf.xlu0
        %v3063 = vpop.trf.xlu0
        %v3064 = vpop.trf.xlu0
        %v3065 = vpop.trf.xlu0
        %v3066 = vpop.trf.xlu0
        %v3067 = vpop.trf.xlu0
        %v3068 = vpop.trf.xlu0
        %v3069 = vpop.trf.xlu0
        %3070 = vxpose.xlu0.b32.start [1/16] %v2994, 128
        %3071 = vxpose.xlu0.b32.cont [2/16] %v2995, 128
        %3072 = vxpose.xlu0.b32.cont [3/16] 0.0, 128
        %3073 = vxpose.xlu0.b32.cont [4/16] 0.0, 128
        %3074 = vxpose.xlu0.b32.cont [5/16] 0.0, 128
        %3075 = vxpose.xlu0.b32.cont [6/16] 0.0, 128
        %3076 = vxpose.xlu0.b32.cont [7/16] 0.0, 128
        %3077 = vxpose.xlu0.b32.cont [8/16] 0.0, 128
        %3078 = vxpose.xlu0.b32.cont [9/16] 0.0, 128
        %3079 = vxpose.xlu0.b32.cont [10/16] 0.0, 128
        %3080 = vxpose.xlu0.b32.cont [11/16] 0.0, 128
        %3081 = vxpose.xlu0.b32.cont [12/16] 0.0, 128
        %3082 = vxpose.xlu0.b32.cont [13/16] 0.0, 128
        %3083 = vxpose.xlu0.b32.cont [14/16] 0.0, 128
        %3084 = vxpose.xlu0.b32.cont [15/16] 0.0, 128
        %3085 = vxpose.xlu0.b32.end [16/16] 0.0, 128
        %v3086 = vpop.trf.xlu0
        %v3087 = vpop.trf.xlu0
        %v3088 = vpop.trf.xlu0
        %v3089 = vpop.trf.xlu0
        %v3090 = vpop.trf.xlu0
        %v3091 = vpop.trf.xlu0
        %v3092 = vpop.trf.xlu0
        %v3093 = vpop.trf.xlu0
        %v3094 = vpop.trf.xlu0
        %v3095 = vpop.trf.xlu0
        %v3096 = vpop.trf.xlu0
        %v3097 = vpop.trf.xlu0
        %v3098 = vpop.trf.xlu0
        %v3099 = vpop.trf.xlu0
        %v3100 = vpop.trf.xlu0
        %v3101 = vpop.trf.xlu0
        %3102 = vxpose.xlu0.b32.start [1/16] %v2996, 128
        %3103 = vxpose.xlu0.b32.cont [2/16] %v2997, 128
        %3104 = vxpose.xlu0.b32.cont [3/16] 0.0, 128
        %3105 = vxpose.xlu0.b32.cont [4/16] 0.0, 128
        %3106 = vxpose.xlu0.b32.cont [5/16] 0.0, 128
        %3107 = vxpose.xlu0.b32.cont [6/16] 0.0, 128
        %3108 = vxpose.xlu0.b32.cont [7/16] 0.0, 128
        %3109 = vxpose.xlu0.b32.cont [8/16] 0.0, 128
        %3110 = vxpose.xlu0.b32.cont [9/16] 0.0, 128
        %3111 = vxpose.xlu0.b32.cont [10/16] 0.0, 128
        %3112 = vxpose.xlu0.b32.cont [11/16] 0.0, 128
        %3113 = vxpose.xlu0.b32.cont [12/16] 0.0, 128
        %3114 = vxpose.xlu0.b32.cont [13/16] 0.0, 128
        %3115 = vxpose.xlu0.b32.cont [14/16] 0.0, 128
        %3116 = vxpose.xlu0.b32.cont [15/16] 0.0, 128
        %3117 = vxpose.xlu0.b32.end [16/16] 0.0, 128
        %v3118 = vpop.trf.xlu0
        %v3119 = vpop.trf.xlu0
        %v3120 = vpop.trf.xlu0
        %v3121 = vpop.trf.xlu0
        %v3122 = vpop.trf.xlu0
        %v3123 = vpop.trf.xlu0
        %v3124 = vpop.trf.xlu0
        %v3125 = vpop.trf.xlu0
        %v3126 = vpop.trf.xlu0
        %v3127 = vpop.trf.xlu0
        %v3128 = vpop.trf.xlu0
        %v3129 = vpop.trf.xlu0
        %v3130 = vpop.trf.xlu0
        %v3131 = vpop.trf.xlu0
        %v3132 = vpop.trf.xlu0
        %v3133 = vpop.trf.xlu0
        %3134 = vxpose.xlu0.b32.start [1/16] %v2998, 128
        %3135 = vxpose.xlu0.b32.cont [2/16] %v2999, 128
        %3136 = vxpose.xlu0.b32.cont [3/16] 0.0, 128
        %3137 = vxpose.xlu0.b32.cont [4/16] 0.0, 128
        %3138 = vxpose.xlu0.b32.cont [5/16] 0.0, 128
        %3139 = vxpose.xlu0.b32.cont [6/16] 0.0, 128
        %3140 = vxpose.xlu0.b32.cont [7/16] 0.0, 128
        %3141 = vxpose.xlu0.b32.cont [8/16] 0.0, 128
        %3142 = vxpose.xlu0.b32.cont [9/16] 0.0, 128
        %3143 = vxpose.xlu0.b32.cont [10/16] 0.0, 128
        %3144 = vxpose.xlu0.b32.cont [11/16] 0.0, 128
        %3145 = vxpose.xlu0.b32.cont [12/16] 0.0, 128
        %3146 = vxpose.xlu0.b32.cont [13/16] 0.0, 128
        %3147 = vxpose.xlu0.b32.cont [14/16] 0.0, 128
        %3148 = vxpose.xlu0.b32.cont [15/16] 0.0, 128
        %3149 = vxpose.xlu0.b32.end [16/16] 0.0, 128
        %v3150 = vpop.trf.xlu0
        %v3151 = vpop.trf.xlu0
        %v3152 = vpop.trf.xlu0
        %v3153 = vpop.trf.xlu0
        %v3154 = vpop.trf.xlu0
        %v3155 = vpop.trf.xlu0
        %v3156 = vpop.trf.xlu0
        %v3157 = vpop.trf.xlu0
        %v3158 = vpop.trf.xlu0
        %v3159 = vpop.trf.xlu0
        %v3160 = vpop.trf.xlu0
        %v3161 = vpop.trf.xlu0
        %v3162 = vpop.trf.xlu0
        %v3163 = vpop.trf.xlu0
        %v3164 = vpop.trf.xlu0
        %v3165 = vpop.trf.xlu0
        %3166 = vxpose.xlu0.b32.start [1/16] %v3000, 128
        %3167 = vxpose.xlu0.b32.cont [2/16] %v3001, 128
        %3168 = vxpose.xlu0.b32.cont [3/16] 0.0, 128
        %3169 = vxpose.xlu0.b32.cont [4/16] 0.0, 128
        %3170 = vxpose.xlu0.b32.cont [5/16] 0.0, 128
        %3171 = vxpose.xlu0.b32.cont [6/16] 0.0, 128
        %3172 = vxpose.xlu0.b32.cont [7/16] 0.0, 128
        %3173 = vxpose.xlu0.b32.cont [8/16] 0.0, 128
        %3174 = vxpose.xlu0.b32.cont [9/16] 0.0, 128
        %3175 = vxpose.xlu0.b32.cont [10/16] 0.0, 128
        %3176 = vxpose.xlu0.b32.cont [11/16] 0.0, 128
        %3177 = vxpose.xlu0.b32.cont [12/16] 0.0, 128
        %3178 = vxpose.xlu0.b32.cont [13/16] 0.0, 128
        %3179 = vxpose.xlu0.b32.cont [14/16] 0.0, 128
        %3180 = vxpose.xlu0.b32.cont [15/16] 0.0, 128
        %3181 = vxpose.xlu0.b32.end [16/16] 0.0, 128
        %v3182 = vpop.trf.xlu0
        %v3183 = vpop.trf.xlu0
        %v3184 = vpop.trf.xlu0
        %v3185 = vpop.trf.xlu0
        %v3186 = vpop.trf.xlu0
        %v3187 = vpop.trf.xlu0
        %v3188 = vpop.trf.xlu0
        %v3189 = vpop.trf.xlu0
        %v3190 = vpop.trf.xlu0
        %v3191 = vpop.trf.xlu0
        %v3192 = vpop.trf.xlu0
        %v3193 = vpop.trf.xlu0
        %v3194 = vpop.trf.xlu0
        %v3195 = vpop.trf.xlu0
        %v3196 = vpop.trf.xlu0
        %v3197 = vpop.trf.xlu0
        %3198 = vxpose.xlu0.b32.start [1/16] %v3002, 128
        %3199 = vxpose.xlu0.b32.cont [2/16] %v3003, 128
        %3200 = vxpose.xlu0.b32.cont [3/16] 0.0, 128
        %3201 = vxpose.xlu0.b32.cont [4/16] 0.0, 128
        %3202 = vxpose.xlu0.b32.cont [5/16] 0.0, 128
        %3203 = vxpose.xlu0.b32.cont [6/16] 0.0, 128
        %3204 = vxpose.xlu0.b32.cont [7/16] 0.0, 128
        %3205 = vxpose.xlu0.b32.cont [8/16] 0.0, 128
        %3206 = vxpose.xlu0.b32.cont [9/16] 0.0, 128
        %3207 = vxpose.xlu0.b32.cont [10/16] 0.0, 128
        %3208 = vxpose.xlu0.b32.cont [11/16] 0.0, 128
        %3209 = vxpose.xlu0.b32.cont [12/16] 0.0, 128
        %3210 = vxpose.xlu0.b32.cont [13/16] 0.0, 128
        %3211 = vxpose.xlu0.b32.cont [14/16] 0.0, 128
        %3212 = vxpose.xlu0.b32.cont [15/16] 0.0, 128
        %3213 = vxpose.xlu0.b32.end [16/16] 0.0, 128
        %v3214 = vpop.trf.xlu0
        %v3215 = vpop.trf.xlu0
        %v3216 = vpop.trf.xlu0
        %v3217 = vpop.trf.xlu0
        %v3218 = vpop.trf.xlu0
        %v3219 = vpop.trf.xlu0
        %v3220 = vpop.trf.xlu0
        %v3221 = vpop.trf.xlu0
        %v3222 = vpop.trf.xlu0
        %v3223 = vpop.trf.xlu0
        %v3224 = vpop.trf.xlu0
        %v3225 = vpop.trf.xlu0
        %v3226 = vpop.trf.xlu0
        %v3227 = vpop.trf.xlu0
        %v3228 = vpop.trf.xlu0
        %v3229 = vpop.trf.xlu0
        %3230 = vxpose.xlu0.b32.start [1/16] %v3004, 128
        %3231 = vxpose.xlu0.b32.cont [2/16] %v3005, 128
        %3232 = vxpose.xlu0.b32.cont [3/16] 0.0, 128
        %3233 = vxpose.xlu0.b32.cont [4/16] 0.0, 128
        %3234 = vxpose.xlu0.b32.cont [5/16] 0.0, 128
        %3235 = vxpose.xlu0.b32.cont [6/16] 0.0, 128
        %3236 = vxpose.xlu0.b32.cont [7/16] 0.0, 128
        %3237 = vxpose.xlu0.b32.cont [8/16] 0.0, 128
        %3238 = vxpose.xlu0.b32.cont [9/16] 0.0, 128
        %3239 = vxpose.xlu0.b32.cont [10/16] 0.0, 128
        %3240 = vxpose.xlu0.b32.cont [11/16] 0.0, 128
        %3241 = vxpose.xlu0.b32.cont [12/16] 0.0, 128
        %3242 = vxpose.xlu0.b32.cont [13/16] 0.0, 128
        %3243 = vxpose.xlu0.b32.cont [14/16] 0.0, 128
        %3244 = vxpose.xlu0.b32.cont [15/16] 0.0, 128
        %3245 = vxpose.xlu0.b32.end [16/16] 0.0, 128
        %v3246 = vpop.trf.xlu0
        %v3247 = vpop.trf.xlu0
        %v3248 = vpop.trf.xlu0
        %v3249 = vpop.trf.xlu0
        %v3250 = vpop.trf.xlu0
        %v3251 = vpop.trf.xlu0
        %v3252 = vpop.trf.xlu0
        %v3253 = vpop.trf.xlu0
        %v3254 = vpop.trf.xlu0
        %v3255 = vpop.trf.xlu0
        %v3256 = vpop.trf.xlu0
        %v3257 = vpop.trf.xlu0
        %v3258 = vpop.trf.xlu0
        %v3259 = vpop.trf.xlu0
        %v3260 = vpop.trf.xlu0
        %v3261 = vpop.trf.xlu0
        %v3262 = vpack.c.bf16 %v3022, %v3022
        %v3263 = vpack.c.bf16 %v3054, %v3054
        %v3264 = vpack.c.bf16 %v3086, %v3086
        %v3265 = vpack.c.bf16 %v3118, %v3118
        %v3266 = vpack.c.bf16 %v3150, %v3150
        %v3267 = vpack.c.bf16 %v3182, %v3182
        %v3268 = vpack.c.bf16 %v3214, %v3214
        %v3269 = vpack.c.bf16 %v3246, %v3246
        %3270 = vxpose.xlu0.b32.start [1/16] %v917, 128
        %3271 = vxpose.xlu0.b32.cont [2/16] 0.0, 128
        %3272 = vxpose.xlu0.b32.cont [3/16] 0.0, 128
        %3273 = vxpose.xlu0.b32.cont [4/16] 0.0, 128
        %3274 = vxpose.xlu0.b32.cont [5/16] 0.0, 128
        %3275 = vxpose.xlu0.b32.cont [6/16] 0.0, 128
        %3276 = vxpose.xlu0.b32.cont [7/16] 0.0, 128
        %3277 = vxpose.xlu0.b32.cont [8/16] 0.0, 128
        %3278 = vxpose.xlu0.b32.cont [9/16] 0.0, 128
        %3279 = vxpose.xlu0.b32.cont [10/16] 0.0, 128
        %3280 = vxpose.xlu0.b32.cont [11/16] 0.0, 128
        %3281 = vxpose.xlu0.b32.cont [12/16] 0.0, 128
        %3282 = vxpose.xlu0.b32.cont [13/16] 0.0, 128
        %3283 = vxpose.xlu0.b32.cont [14/16] 0.0, 128
        %3284 = vxpose.xlu0.b32.cont [15/16] 0.0, 128
        %3285 = vxpose.xlu0.b32.end [16/16] 0.0, 128
        %v3286 = vpop.trf.xlu0
        %v3287 = vpop.trf.xlu0
        %v3288 = vpop.trf.xlu0
        %v3289 = vpop.trf.xlu0
        %v3290 = vpop.trf.xlu0
        %v3291 = vpop.trf.xlu0
        %v3292 = vpop.trf.xlu0
        %v3293 = vpop.trf.xlu0
        %v3294 = vpop.trf.xlu0
        %v3295 = vpop.trf.xlu0
        %v3296 = vpop.trf.xlu0
        %v3297 = vpop.trf.xlu0
        %v3298 = vpop.trf.xlu0
        %v3299 = vpop.trf.xlu0
        %v3300 = vpop.trf.xlu0
        %v3301 = vpop.trf.xlu0
        %3302 = vxpose.xlu0.b32.start [1/16] %v3286, 128
        %3303 = vxpose.xlu0.b32.cont [2/16] %v3287, 128
        %3304 = vxpose.xlu0.b32.cont [3/16] 0.0, 128
        %3305 = vxpose.xlu0.b32.cont [4/16] 0.0, 128
        %3306 = vxpose.xlu0.b32.cont [5/16] 0.0, 128
        %3307 = vxpose.xlu0.b32.cont [6/16] 0.0, 128
        %3308 = vxpose.xlu0.b32.cont [7/16] 0.0, 128
        %3309 = vxpose.xlu0.b32.cont [8/16] 0.0, 128
        %3310 = vxpose.xlu0.b32.cont [9/16] 0.0, 128
        %3311 = vxpose.xlu0.b32.cont [10/16] 0.0, 128
        %3312 = vxpose.xlu0.b32.cont [11/16] 0.0, 128
        %3313 = vxpose.xlu0.b32.cont [12/16] 0.0, 128
        %3314 = vxpose.xlu0.b32.cont [13/16] 0.0, 128
        %3315 = vxpose.xlu0.b32.cont [14/16] 0.0, 128
        %3316 = vxpose.xlu0.b32.cont [15/16] 0.0, 128
        %3317 = vxpose.xlu0.b32.end [16/16] 0.0, 128
        %v3318 = vpop.trf.xlu0
        %v3319 = vpop.trf.xlu0
        %v3320 = vpop.trf.xlu0
        %v3321 = vpop.trf.xlu0
        %v3322 = vpop.trf.xlu0
        %v3323 = vpop.trf.xlu0
        %v3324 = vpop.trf.xlu0
        %v3325 = vpop.trf.xlu0
        %v3326 = vpop.trf.xlu0
        %v3327 = vpop.trf.xlu0
        %v3328 = vpop.trf.xlu0
        %v3329 = vpop.trf.xlu0
        %v3330 = vpop.trf.xlu0
        %v3331 = vpop.trf.xlu0
        %v3332 = vpop.trf.xlu0
        %v3333 = vpop.trf.xlu0
        %3334 = vxpose.xlu0.b32.start [1/16] %v3288, 128
        %3335 = vxpose.xlu0.b32.cont [2/16] %v3289, 128
        %3336 = vxpose.xlu0.b32.cont [3/16] 0.0, 128
        %3337 = vxpose.xlu0.b32.cont [4/16] 0.0, 128
        %3338 = vxpose.xlu0.b32.cont [5/16] 0.0, 128
        %3339 = vxpose.xlu0.b32.cont [6/16] 0.0, 128
        %3340 = vxpose.xlu0.b32.cont [7/16] 0.0, 128
        %3341 = vxpose.xlu0.b32.cont [8/16] 0.0, 128
        %3342 = vxpose.xlu0.b32.cont [9/16] 0.0, 128
        %3343 = vxpose.xlu0.b32.cont [10/16] 0.0, 128
        %3344 = vxpose.xlu0.b32.cont [11/16] 0.0, 128
        %3345 = vxpose.xlu0.b32.cont [12/16] 0.0, 128
        %3346 = vxpose.xlu0.b32.cont [13/16] 0.0, 128
        %3347 = vxpose.xlu0.b32.cont [14/16] 0.0, 128
        %3348 = vxpose.xlu0.b32.cont [15/16] 0.0, 128
        %3349 = vxpose.xlu0.b32.end [16/16] 0.0, 128
        %v3350 = vpop.trf.xlu0
        %v3351 = vpop.trf.xlu0
        %v3352 = vpop.trf.xlu0
        %v3353 = vpop.trf.xlu0
        %v3354 = vpop.trf.xlu0
        %v3355 = vpop.trf.xlu0
        %v3356 = vpop.trf.xlu0
        %v3357 = vpop.trf.xlu0
        %v3358 = vpop.trf.xlu0
        %v3359 = vpop.trf.xlu0
        %v3360 = vpop.trf.xlu0
        %v3361 = vpop.trf.xlu0
        %v3362 = vpop.trf.xlu0
        %v3363 = vpop.trf.xlu0
        %v3364 = vpop.trf.xlu0
        %v3365 = vpop.trf.xlu0
        %3366 = vxpose.xlu0.b32.start [1/16] %v3290, 128
        %3367 = vxpose.xlu0.b32.cont [2/16] %v3291, 128
        %3368 = vxpose.xlu0.b32.cont [3/16] 0.0, 128
        %3369 = vxpose.xlu0.b32.cont [4/16] 0.0, 128
        %3370 = vxpose.xlu0.b32.cont [5/16] 0.0, 128
        %3371 = vxpose.xlu0.b32.cont [6/16] 0.0, 128
        %3372 = vxpose.xlu0.b32.cont [7/16] 0.0, 128
        %3373 = vxpose.xlu0.b32.cont [8/16] 0.0, 128
        %3374 = vxpose.xlu0.b32.cont [9/16] 0.0, 128
        %3375 = vxpose.xlu0.b32.cont [10/16] 0.0, 128
        %3376 = vxpose.xlu0.b32.cont [11/16] 0.0, 128
        %3377 = vxpose.xlu0.b32.cont [12/16] 0.0, 128
        %3378 = vxpose.xlu0.b32.cont [13/16] 0.0, 128
        %3379 = vxpose.xlu0.b32.cont [14/16] 0.0, 128
        %3380 = vxpose.xlu0.b32.cont [15/16] 0.0, 128
        %3381 = vxpose.xlu0.b32.end [16/16] 0.0, 128
        %v3382 = vpop.trf.xlu0
        %v3383 = vpop.trf.xlu0
        %v3384 = vpop.trf.xlu0
        %v3385 = vpop.trf.xlu0
        %v3386 = vpop.trf.xlu0
        %v3387 = vpop.trf.xlu0
        %v3388 = vpop.trf.xlu0
        %v3389 = vpop.trf.xlu0
        %v3390 = vpop.trf.xlu0
        %v3391 = vpop.trf.xlu0
        %v3392 = vpop.trf.xlu0
        %v3393 = vpop.trf.xlu0
        %v3394 = vpop.trf.xlu0
        %v3395 = vpop.trf.xlu0
        %v3396 = vpop.trf.xlu0
        %v3397 = vpop.trf.xlu0
        %3398 = vxpose.xlu0.b32.start [1/16] %v3292, 128
        %3399 = vxpose.xlu0.b32.cont [2/16] %v3293, 128
        %3400 = vxpose.xlu0.b32.cont [3/16] 0.0, 128
        %3401 = vxpose.xlu0.b32.cont [4/16] 0.0, 128
        %3402 = vxpose.xlu0.b32.cont [5/16] 0.0, 128
        %3403 = vxpose.xlu0.b32.cont [6/16] 0.0, 128
        %3404 = vxpose.xlu0.b32.cont [7/16] 0.0, 128
        %3405 = vxpose.xlu0.b32.cont [8/16] 0.0, 128
        %3406 = vxpose.xlu0.b32.cont [9/16] 0.0, 128
        %3407 = vxpose.xlu0.b32.cont [10/16] 0.0, 128
        %3408 = vxpose.xlu0.b32.cont [11/16] 0.0, 128
        %3409 = vxpose.xlu0.b32.cont [12/16] 0.0, 128
        %3410 = vxpose.xlu0.b32.cont [13/16] 0.0, 128
        %3411 = vxpose.xlu0.b32.cont [14/16] 0.0, 128
        %3412 = vxpose.xlu0.b32.cont [15/16] 0.0, 128
        %3413 = vxpose.xlu0.b32.end [16/16] 0.0, 128
        %v3414 = vpop.trf.xlu0
        %v3415 = vpop.trf.xlu0
        %v3416 = vpop.trf.xlu0
        %v3417 = vpop.trf.xlu0
        %v3418 = vpop.trf.xlu0
        %v3419 = vpop.trf.xlu0
        %v3420 = vpop.trf.xlu0
        %v3421 = vpop.trf.xlu0
        %v3422 = vpop.trf.xlu0
        %v3423 = vpop.trf.xlu0
        %v3424 = vpop.trf.xlu0
        %v3425 = vpop.trf.xlu0
        %v3426 = vpop.trf.xlu0
        %v3427 = vpop.trf.xlu0
        %v3428 = vpop.trf.xlu0
        %v3429 = vpop.trf.xlu0
        %3430 = vxpose.xlu0.b32.start [1/16] %v3294, 128
        %3431 = vxpose.xlu0.b32.cont [2/16] %v3295, 128
        %3432 = vxpose.xlu0.b32.cont [3/16] 0.0, 128
        %3433 = vxpose.xlu0.b32.cont [4/16] 0.0, 128
        %3434 = vxpose.xlu0.b32.cont [5/16] 0.0, 128
        %3435 = vxpose.xlu0.b32.cont [6/16] 0.0, 128
        %3436 = vxpose.xlu0.b32.cont [7/16] 0.0, 128
        %3437 = vxpose.xlu0.b32.cont [8/16] 0.0, 128
        %3438 = vxpose.xlu0.b32.cont [9/16] 0.0, 128
        %3439 = vxpose.xlu0.b32.cont [10/16] 0.0, 128
        %3440 = vxpose.xlu0.b32.cont [11/16] 0.0, 128
        %3441 = vxpose.xlu0.b32.cont [12/16] 0.0, 128
        %3442 = vxpose.xlu0.b32.cont [13/16] 0.0, 128
        %3443 = vxpose.xlu0.b32.cont [14/16] 0.0, 128
        %3444 = vxpose.xlu0.b32.cont [15/16] 0.0, 128
        %3445 = vxpose.xlu0.b32.end [16/16] 0.0, 128
        %v3446 = vpop.trf.xlu0
        %v3447 = vpop.trf.xlu0
        %v3448 = vpop.trf.xlu0
        %v3449 = vpop.trf.xlu0
        %v3450 = vpop.trf.xlu0
        %v3451 = vpop.trf.xlu0
        %v3452 = vpop.trf.xlu0
        %v3453 = vpop.trf.xlu0
        %v3454 = vpop.trf.xlu0
        %v3455 = vpop.trf.xlu0
        %v3456 = vpop.trf.xlu0
        %v3457 = vpop.trf.xlu0
        %v3458 = vpop.trf.xlu0
        %v3459 = vpop.trf.xlu0
        %v3460 = vpop.trf.xlu0
        %v3461 = vpop.trf.xlu0
        %3462 = vxpose.xlu0.b32.start [1/16] %v3296, 128
        %3463 = vxpose.xlu0.b32.cont [2/16] %v3297, 128
        %3464 = vxpose.xlu0.b32.cont [3/16] 0.0, 128
        %3465 = vxpose.xlu0.b32.cont [4/16] 0.0, 128
        %3466 = vxpose.xlu0.b32.cont [5/16] 0.0, 128
        %3467 = vxpose.xlu0.b32.cont [6/16] 0.0, 128
        %3468 = vxpose.xlu0.b32.cont [7/16] 0.0, 128
        %3469 = vxpose.xlu0.b32.cont [8/16] 0.0, 128
        %3470 = vxpose.xlu0.b32.cont [9/16] 0.0, 128
        %3471 = vxpose.xlu0.b32.cont [10/16] 0.0, 128
        %3472 = vxpose.xlu0.b32.cont [11/16] 0.0, 128
        %3473 = vxpose.xlu0.b32.cont [12/16] 0.0, 128
        %3474 = vxpose.xlu0.b32.cont [13/16] 0.0, 128
        %3475 = vxpose.xlu0.b32.cont [14/16] 0.0, 128
        %3476 = vxpose.xlu0.b32.cont [15/16] 0.0, 128
        %3477 = vxpose.xlu0.b32.end [16/16] 0.0, 128
        %v3478 = vpop.trf.xlu0
        %v3479 = vpop.trf.xlu0
        %v3480 = vpop.trf.xlu0
        %v3481 = vpop.trf.xlu0
        %v3482 = vpop.trf.xlu0
        %v3483 = vpop.trf.xlu0
        %v3484 = vpop.trf.xlu0
        %v3485 = vpop.trf.xlu0
        %v3486 = vpop.trf.xlu0
        %v3487 = vpop.trf.xlu0
        %v3488 = vpop.trf.xlu0
        %v3489 = vpop.trf.xlu0
        %v3490 = vpop.trf.xlu0
        %v3491 = vpop.trf.xlu0
        %v3492 = vpop.trf.xlu0
        %v3493 = vpop.trf.xlu0
        %3494 = vxpose.xlu0.b32.start [1/16] %v3298, 128
        %3495 = vxpose.xlu0.b32.cont [2/16] %v3299, 128
        %3496 = vxpose.xlu0.b32.cont [3/16] 0.0, 128
        %3497 = vxpose.xlu0.b32.cont [4/16] 0.0, 128
        %3498 = vxpose.xlu0.b32.cont [5/16] 0.0, 128
        %3499 = vxpose.xlu0.b32.cont [6/16] 0.0, 128
        %3500 = vxpose.xlu0.b32.cont [7/16] 0.0, 128
        %3501 = vxpose.xlu0.b32.cont [8/16] 0.0, 128
        %3502 = vxpose.xlu0.b32.cont [9/16] 0.0, 128
        %3503 = vxpose.xlu0.b32.cont [10/16] 0.0, 128
        %3504 = vxpose.xlu0.b32.cont [11/16] 0.0, 128
        %3505 = vxpose.xlu0.b32.cont [12/16] 0.0, 128
        %3506 = vxpose.xlu0.b32.cont [13/16] 0.0, 128
        %3507 = vxpose.xlu0.b32.cont [14/16] 0.0, 128
        %3508 = vxpose.xlu0.b32.cont [15/16] 0.0, 128
        %3509 = vxpose.xlu0.b32.end [16/16] 0.0, 128
        %v3510 = vpop.trf.xlu0
        %v3511 = vpop.trf.xlu0
        %v3512 = vpop.trf.xlu0
        %v3513 = vpop.trf.xlu0
        %v3514 = vpop.trf.xlu0
        %v3515 = vpop.trf.xlu0
        %v3516 = vpop.trf.xlu0
        %v3517 = vpop.trf.xlu0
        %v3518 = vpop.trf.xlu0
        %v3519 = vpop.trf.xlu0
        %v3520 = vpop.trf.xlu0
        %v3521 = vpop.trf.xlu0
        %v3522 = vpop.trf.xlu0
        %v3523 = vpop.trf.xlu0
        %v3524 = vpop.trf.xlu0
        %v3525 = vpop.trf.xlu0
        %3526 = vxpose.xlu0.b32.start [1/16] %v3300, 128
        %3527 = vxpose.xlu0.b32.cont [2/16] %v3301, 128
        %3528 = vxpose.xlu0.b32.cont [3/16] 0.0, 128
        %3529 = vxpose.xlu0.b32.cont [4/16] 0.0, 128
        %3530 = vxpose.xlu0.b32.cont [5/16] 0.0, 128
        %3531 = vxpose.xlu0.b32.cont [6/16] 0.0, 128
        %3532 = vxpose.xlu0.b32.cont [7/16] 0.0, 128
        %3533 = vxpose.xlu0.b32.cont [8/16] 0.0, 128
        %3534 = vxpose.xlu0.b32.cont [9/16] 0.0, 128
        %3535 = vxpose.xlu0.b32.cont [10/16] 0.0, 128
        %3536 = vxpose.xlu0.b32.cont [11/16] 0.0, 128
        %3537 = vxpose.xlu0.b32.cont [12/16] 0.0, 128
        %3538 = vxpose.xlu0.b32.cont [13/16] 0.0, 128
        %3539 = vxpose.xlu0.b32.cont [14/16] 0.0, 128
        %3540 = vxpose.xlu0.b32.cont [15/16] 0.0, 128
        %3541 = vxpose.xlu0.b32.end [16/16] 0.0, 128
        %v3542 = vpop.trf.xlu0
        %v3543 = vpop.trf.xlu0
        %v3544 = vpop.trf.xlu0
        %v3545 = vpop.trf.xlu0
        %v3546 = vpop.trf.xlu0
        %v3547 = vpop.trf.xlu0
        %v3548 = vpop.trf.xlu0
        %v3549 = vpop.trf.xlu0
        %v3550 = vpop.trf.xlu0
        %v3551 = vpop.trf.xlu0
        %v3552 = vpop.trf.xlu0
        %v3553 = vpop.trf.xlu0
        %v3554 = vpop.trf.xlu0
        %v3555 = vpop.trf.xlu0
        %v3556 = vpop.trf.xlu0
        %v3557 = vpop.trf.xlu0
        %v3558 = vpack.c.bf16 %v3318, %v3318
        %v3559 = vpack.c.bf16 %v3350, %v3350
        %v3560 = vpack.c.bf16 %v3382, %v3382
        %v3561 = vpack.c.bf16 %v3414, %v3414
        %v3562 = vpack.c.bf16 %v3446, %v3446
        %v3563 = vpack.c.bf16 %v3478, %v3478
        %v3564 = vpack.c.bf16 %v3510, %v3510
        %v3565 = vpack.c.bf16 %v3542, %v3542
        %3566 = vxpose.xlu0.b32.start [1/16] %v957, 128
        %3567 = vxpose.xlu0.b32.cont [2/16] 0.0, 128
        %3568 = vxpose.xlu0.b32.cont [3/16] 0.0, 128
        %3569 = vxpose.xlu0.b32.cont [4/16] 0.0, 128
        %3570 = vxpose.xlu0.b32.cont [5/16] 0.0, 128
        %3571 = vxpose.xlu0.b32.cont [6/16] 0.0, 128
        %3572 = vxpose.xlu0.b32.cont [7/16] 0.0, 128
        %3573 = vxpose.xlu0.b32.cont [8/16] 0.0, 128
        %3574 = vxpose.xlu0.b32.cont [9/16] 0.0, 128
        %3575 = vxpose.xlu0.b32.cont [10/16] 0.0, 128
        %3576 = vxpose.xlu0.b32.cont [11/16] 0.0, 128
        %3577 = vxpose.xlu0.b32.cont [12/16] 0.0, 128
        %3578 = vxpose.xlu0.b32.cont [13/16] 0.0, 128
        %3579 = vxpose.xlu0.b32.cont [14/16] 0.0, 128
        %3580 = vxpose.xlu0.b32.cont [15/16] 0.0, 128
        %3581 = vxpose.xlu0.b32.end [16/16] 0.0, 128
        %v3582 = vpop.trf.xlu0
        %v3583 = vpop.trf.xlu0
        %v3584 = vpop.trf.xlu0
        %v3585 = vpop.trf.xlu0
        %v3586 = vpop.trf.xlu0
        %v3587 = vpop.trf.xlu0
        %v3588 = vpop.trf.xlu0
        %v3589 = vpop.trf.xlu0
        %v3590 = vpop.trf.xlu0
        %v3591 = vpop.trf.xlu0
        %v3592 = vpop.trf.xlu0
        %v3593 = vpop.trf.xlu0
        %v3594 = vpop.trf.xlu0
        %v3595 = vpop.trf.xlu0
        %v3596 = vpop.trf.xlu0
        %v3597 = vpop.trf.xlu0
        %3598 = vxpose.xlu0.b32.start [1/16] %v3582, 128
        %3599 = vxpose.xlu0.b32.cont [2/16] %v3583, 128
        %3600 = vxpose.xlu0.b32.cont [3/16] 0.0, 128
        %3601 = vxpose.xlu0.b32.cont [4/16] 0.0, 128
        %3602 = vxpose.xlu0.b32.cont [5/16] 0.0, 128
        %3603 = vxpose.xlu0.b32.cont [6/16] 0.0, 128
        %3604 = vxpose.xlu0.b32.cont [7/16] 0.0, 128
        %3605 = vxpose.xlu0.b32.cont [8/16] 0.0, 128
        %3606 = vxpose.xlu0.b32.cont [9/16] 0.0, 128
        %3607 = vxpose.xlu0.b32.cont [10/16] 0.0, 128
        %3608 = vxpose.xlu0.b32.cont [11/16] 0.0, 128
        %3609 = vxpose.xlu0.b32.cont [12/16] 0.0, 128
        %3610 = vxpose.xlu0.b32.cont [13/16] 0.0, 128
        %3611 = vxpose.xlu0.b32.cont [14/16] 0.0, 128
        %3612 = vxpose.xlu0.b32.cont [15/16] 0.0, 128
        %3613 = vxpose.xlu0.b32.end [16/16] 0.0, 128
        %v3614 = vpop.trf.xlu0
        %v3615 = vpop.trf.xlu0
        %v3616 = vpop.trf.xlu0
        %v3617 = vpop.trf.xlu0
        %v3618 = vpop.trf.xlu0
        %v3619 = vpop.trf.xlu0
        %v3620 = vpop.trf.xlu0
        %v3621 = vpop.trf.xlu0
        %v3622 = vpop.trf.xlu0
        %v3623 = vpop.trf.xlu0
        %v3624 = vpop.trf.xlu0
        %v3625 = vpop.trf.xlu0
        %v3626 = vpop.trf.xlu0
        %v3627 = vpop.trf.xlu0
        %v3628 = vpop.trf.xlu0
        %v3629 = vpop.trf.xlu0
        %3630 = vxpose.xlu0.b32.start [1/16] %v3584, 128
        %3631 = vxpose.xlu0.b32.cont [2/16] %v3585, 128
        %3632 = vxpose.xlu0.b32.cont [3/16] 0.0, 128
        %3633 = vxpose.xlu0.b32.cont [4/16] 0.0, 128
        %3634 = vxpose.xlu0.b32.cont [5/16] 0.0, 128
        %3635 = vxpose.xlu0.b32.cont [6/16] 0.0, 128
        %3636 = vxpose.xlu0.b32.cont [7/16] 0.0, 128
        %3637 = vxpose.xlu0.b32.cont [8/16] 0.0, 128
        %3638 = vxpose.xlu0.b32.cont [9/16] 0.0, 128
        %3639 = vxpose.xlu0.b32.cont [10/16] 0.0, 128
        %3640 = vxpose.xlu0.b32.cont [11/16] 0.0, 128
        %3641 = vxpose.xlu0.b32.cont [12/16] 0.0, 128
        %3642 = vxpose.xlu0.b32.cont [13/16] 0.0, 128
        %3643 = vxpose.xlu0.b32.cont [14/16] 0.0, 128
        %3644 = vxpose.xlu0.b32.cont [15/16] 0.0, 128
        %3645 = vxpose.xlu0.b32.end [16/16] 0.0, 128
        %v3646 = vpop.trf.xlu0
        %v3647 = vpop.trf.xlu0
        %v3648 = vpop.trf.xlu0
        %v3649 = vpop.trf.xlu0
        %v3650 = vpop.trf.xlu0
        %v3651 = vpop.trf.xlu0
        %v3652 = vpop.trf.xlu0
        %v3653 = vpop.trf.xlu0
        %v3654 = vpop.trf.xlu0
        %v3655 = vpop.trf.xlu0
        %v3656 = vpop.trf.xlu0
        %v3657 = vpop.trf.xlu0
        %v3658 = vpop.trf.xlu0
        %v3659 = vpop.trf.xlu0
        %v3660 = vpop.trf.xlu0
        %v3661 = vpop.trf.xlu0
        %3662 = vxpose.xlu0.b32.start [1/16] %v3586, 128
        %3663 = vxpose.xlu0.b32.cont [2/16] %v3587, 128
        %3664 = vxpose.xlu0.b32.cont [3/16] 0.0, 128
        %3665 = vxpose.xlu0.b32.cont [4/16] 0.0, 128
        %3666 = vxpose.xlu0.b32.cont [5/16] 0.0, 128
        %3667 = vxpose.xlu0.b32.cont [6/16] 0.0, 128
        %3668 = vxpose.xlu0.b32.cont [7/16] 0.0, 128
        %3669 = vxpose.xlu0.b32.cont [8/16] 0.0, 128
        %3670 = vxpose.xlu0.b32.cont [9/16] 0.0, 128
        %3671 = vxpose.xlu0.b32.cont [10/16] 0.0, 128
        %3672 = vxpose.xlu0.b32.cont [11/16] 0.0, 128
        %3673 = vxpose.xlu0.b32.cont [12/16] 0.0, 128
        %3674 = vxpose.xlu0.b32.cont [13/16] 0.0, 128
        %3675 = vxpose.xlu0.b32.cont [14/16] 0.0, 128
        %3676 = vxpose.xlu0.b32.cont [15/16] 0.0, 128
        %3677 = vxpose.xlu0.b32.end [16/16] 0.0, 128
        %v3678 = vpop.trf.xlu0
        %v3679 = vpop.trf.xlu0
        %v3680 = vpop.trf.xlu0
        %v3681 = vpop.trf.xlu0
        %v3682 = vpop.trf.xlu0
        %v3683 = vpop.trf.xlu0
        %v3684 = vpop.trf.xlu0
        %v3685 = vpop.trf.xlu0
        %v3686 = vpop.trf.xlu0
        %v3687 = vpop.trf.xlu0
        %v3688 = vpop.trf.xlu0
        %v3689 = vpop.trf.xlu0
        %v3690 = vpop.trf.xlu0
        %v3691 = vpop.trf.xlu0
        %v3692 = vpop.trf.xlu0
        %v3693 = vpop.trf.xlu0
        %3694 = vxpose.xlu0.b32.start [1/16] %v3588, 128
        %3695 = vxpose.xlu0.b32.cont [2/16] %v3589, 128
        %3696 = vxpose.xlu0.b32.cont [3/16] 0.0, 128
        %3697 = vxpose.xlu0.b32.cont [4/16] 0.0, 128
        %3698 = vxpose.xlu0.b32.cont [5/16] 0.0, 128
        %3699 = vxpose.xlu0.b32.cont [6/16] 0.0, 128
        %3700 = vxpose.xlu0.b32.cont [7/16] 0.0, 128
        %3701 = vxpose.xlu0.b32.cont [8/16] 0.0, 128
        %3702 = vxpose.xlu0.b32.cont [9/16] 0.0, 128
        %3703 = vxpose.xlu0.b32.cont [10/16] 0.0, 128
        %3704 = vxpose.xlu0.b32.cont [11/16] 0.0, 128
        %3705 = vxpose.xlu0.b32.cont [12/16] 0.0, 128
        %3706 = vxpose.xlu0.b32.cont [13/16] 0.0, 128
        %3707 = vxpose.xlu0.b32.cont [14/16] 0.0, 128
        %3708 = vxpose.xlu0.b32.cont [15/16] 0.0, 128
        %3709 = vxpose.xlu0.b32.end [16/16] 0.0, 128
        %v3710 = vpop.trf.xlu0
        %v3711 = vpop.trf.xlu0
        %v3712 = vpop.trf.xlu0
        %v3713 = vpop.trf.xlu0
        %v3714 = vpop.trf.xlu0
        %v3715 = vpop.trf.xlu0
        %v3716 = vpop.trf.xlu0
        %v3717 = vpop.trf.xlu0
        %v3718 = vpop.trf.xlu0
        %v3719 = vpop.trf.xlu0
        %v3720 = vpop.trf.xlu0
        %v3721 = vpop.trf.xlu0
        %v3722 = vpop.trf.xlu0
        %v3723 = vpop.trf.xlu0
        %v3724 = vpop.trf.xlu0
        %v3725 = vpop.trf.xlu0
        %3726 = vxpose.xlu0.b32.start [1/16] %v3590, 128
        %3727 = vxpose.xlu0.b32.cont [2/16] %v3591, 128
        %3728 = vxpose.xlu0.b32.cont [3/16] 0.0, 128
        %3729 = vxpose.xlu0.b32.cont [4/16] 0.0, 128
        %3730 = vxpose.xlu0.b32.cont [5/16] 0.0, 128
        %3731 = vxpose.xlu0.b32.cont [6/16] 0.0, 128
        %3732 = vxpose.xlu0.b32.cont [7/16] 0.0, 128
        %3733 = vxpose.xlu0.b32.cont [8/16] 0.0, 128
        %3734 = vxpose.xlu0.b32.cont [9/16] 0.0, 128
        %3735 = vxpose.xlu0.b32.cont [10/16] 0.0, 128
        %3736 = vxpose.xlu0.b32.cont [11/16] 0.0, 128
        %3737 = vxpose.xlu0.b32.cont [12/16] 0.0, 128
        %3738 = vxpose.xlu0.b32.cont [13/16] 0.0, 128
        %3739 = vxpose.xlu0.b32.cont [14/16] 0.0, 128
        %3740 = vxpose.xlu0.b32.cont [15/16] 0.0, 128
        %3741 = vxpose.xlu0.b32.end [16/16] 0.0, 128
        %v3742 = vpop.trf.xlu0
        %v3743 = vpop.trf.xlu0
        %v3744 = vpop.trf.xlu0
        %v3745 = vpop.trf.xlu0
        %v3746 = vpop.trf.xlu0
        %v3747 = vpop.trf.xlu0
        %v3748 = vpop.trf.xlu0
        %v3749 = vpop.trf.xlu0
        %v3750 = vpop.trf.xlu0
        %v3751 = vpop.trf.xlu0
        %v3752 = vpop.trf.xlu0
        %v3753 = vpop.trf.xlu0
        %v3754 = vpop.trf.xlu0
        %v3755 = vpop.trf.xlu0
        %v3756 = vpop.trf.xlu0
        %v3757 = vpop.trf.xlu0
        %3758 = vxpose.xlu0.b32.start [1/16] %v3592, 128
        %3759 = vxpose.xlu0.b32.cont [2/16] %v3593, 128
        %3760 = vxpose.xlu0.b32.cont [3/16] 0.0, 128
        %3761 = vxpose.xlu0.b32.cont [4/16] 0.0, 128
        %3762 = vxpose.xlu0.b32.cont [5/16] 0.0, 128
        %3763 = vxpose.xlu0.b32.cont [6/16] 0.0, 128
        %3764 = vxpose.xlu0.b32.cont [7/16] 0.0, 128
        %3765 = vxpose.xlu0.b32.cont [8/16] 0.0, 128
        %3766 = vxpose.xlu0.b32.cont [9/16] 0.0, 128
        %3767 = vxpose.xlu0.b32.cont [10/16] 0.0, 128
        %3768 = vxpose.xlu0.b32.cont [11/16] 0.0, 128
        %3769 = vxpose.xlu0.b32.cont [12/16] 0.0, 128
        %3770 = vxpose.xlu0.b32.cont [13/16] 0.0, 128
        %3771 = vxpose.xlu0.b32.cont [14/16] 0.0, 128
        %3772 = vxpose.xlu0.b32.cont [15/16] 0.0, 128
        %3773 = vxpose.xlu0.b32.end [16/16] 0.0, 128
        %v3774 = vpop.trf.xlu0
        %v3775 = vpop.trf.xlu0
        %v3776 = vpop.trf.xlu0
        %v3777 = vpop.trf.xlu0
        %v3778 = vpop.trf.xlu0
        %v3779 = vpop.trf.xlu0
        %v3780 = vpop.trf.xlu0
        %v3781 = vpop.trf.xlu0
        %v3782 = vpop.trf.xlu0
        %v3783 = vpop.trf.xlu0
        %v3784 = vpop.trf.xlu0
        %v3785 = vpop.trf.xlu0
        %v3786 = vpop.trf.xlu0
        %v3787 = vpop.trf.xlu0
        %v3788 = vpop.trf.xlu0
        %v3789 = vpop.trf.xlu0
        %3790 = vxpose.xlu0.b32.start [1/16] %v3594, 128
        %3791 = vxpose.xlu0.b32.cont [2/16] %v3595, 128
        %3792 = vxpose.xlu0.b32.cont [3/16] 0.0, 128
        %3793 = vxpose.xlu0.b32.cont [4/16] 0.0, 128
        %3794 = vxpose.xlu0.b32.cont [5/16] 0.0, 128
        %3795 = vxpose.xlu0.b32.cont [6/16] 0.0, 128
        %3796 = vxpose.xlu0.b32.cont [7/16] 0.0, 128
        %3797 = vxpose.xlu0.b32.cont [8/16] 0.0, 128
        %3798 = vxpose.xlu0.b32.cont [9/16] 0.0, 128
        %3799 = vxpose.xlu0.b32.cont [10/16] 0.0, 128
        %3800 = vxpose.xlu0.b32.cont [11/16] 0.0, 128
        %3801 = vxpose.xlu0.b32.cont [12/16] 0.0, 128
        %3802 = vxpose.xlu0.b32.cont [13/16] 0.0, 128
        %3803 = vxpose.xlu0.b32.cont [14/16] 0.0, 128
        %3804 = vxpose.xlu0.b32.cont [15/16] 0.0, 128
        %3805 = vxpose.xlu0.b32.end [16/16] 0.0, 128
        %v3806 = vpop.trf.xlu0
        %v3807 = vpop.trf.xlu0
        %v3808 = vpop.trf.xlu0
        %v3809 = vpop.trf.xlu0
        %v3810 = vpop.trf.xlu0
        %v3811 = vpop.trf.xlu0
        %v3812 = vpop.trf.xlu0
        %v3813 = vpop.trf.xlu0
        %v3814 = vpop.trf.xlu0
        %v3815 = vpop.trf.xlu0
        %v3816 = vpop.trf.xlu0
        %v3817 = vpop.trf.xlu0
        %v3818 = vpop.trf.xlu0
        %v3819 = vpop.trf.xlu0
        %v3820 = vpop.trf.xlu0
        %v3821 = vpop.trf.xlu0
        %3822 = vxpose.xlu0.b32.start [1/16] %v3596, 128
        %3823 = vxpose.xlu0.b32.cont [2/16] %v3597, 128
        %3824 = vxpose.xlu0.b32.cont [3/16] 0.0, 128
        %3825 = vxpose.xlu0.b32.cont [4/16] 0.0, 128
        %3826 = vxpose.xlu0.b32.cont [5/16] 0.0, 128
        %3827 = vxpose.xlu0.b32.cont [6/16] 0.0, 128
        %3828 = vxpose.xlu0.b32.cont [7/16] 0.0, 128
        %3829 = vxpose.xlu0.b32.cont [8/16] 0.0, 128
        %3830 = vxpose.xlu0.b32.cont [9/16] 0.0, 128
        %3831 = vxpose.xlu0.b32.cont [10/16] 0.0, 128
        %3832 = vxpose.xlu0.b32.cont [11/16] 0.0, 128
        %3833 = vxpose.xlu0.b32.cont [12/16] 0.0, 128
        %3834 = vxpose.xlu0.b32.cont [13/16] 0.0, 128
        %3835 = vxpose.xlu0.b32.cont [14/16] 0.0, 128
        %3836 = vxpose.xlu0.b32.cont [15/16] 0.0, 128
        %3837 = vxpose.xlu0.b32.end [16/16] 0.0, 128
        %v3838 = vpop.trf.xlu0
        %v3839 = vpop.trf.xlu0
        %v3840 = vpop.trf.xlu0
        %v3841 = vpop.trf.xlu0
        %v3842 = vpop.trf.xlu0
        %v3843 = vpop.trf.xlu0
        %v3844 = vpop.trf.xlu0
        %v3845 = vpop.trf.xlu0
        %v3846 = vpop.trf.xlu0
        %v3847 = vpop.trf.xlu0
        %v3848 = vpop.trf.xlu0
        %v3849 = vpop.trf.xlu0
        %v3850 = vpop.trf.xlu0
        %v3851 = vpop.trf.xlu0
        %v3852 = vpop.trf.xlu0
        %v3853 = vpop.trf.xlu0
        %v3854 = vpack.c.bf16 %v3614, %v3614
        %v3855 = vpack.c.bf16 %v3646, %v3646
        %v3856 = vpack.c.bf16 %v3678, %v3678
        %v3857 = vpack.c.bf16 %v3710, %v3710
        %v3858 = vpack.c.bf16 %v3742, %v3742
        %v3859 = vpack.c.bf16 %v3774, %v3774
        %v3860 = vpack.c.bf16 %v3806, %v3806
        %v3861 = vpack.c.bf16 %v3838, %v3838
        %s3862 = scalar_lea.vmem %s607, 8 [#allocation7]
        %v3863 = vld [vmem:[%s3862] sm:$0xff]
        %v3865 = vsel %vm1851, %v3262, 0
        %v3868 = vsel %vm1851, %v3558, 0
        %3870 = vmatprep.subr.bf16.mxu0 0
        %3871 = vmatpush1.bf16.xpose.msra.mxu0 %v3868
        %3872 = vmatprep.subr.bf16.mxu0 0
        %3873 = vmatpush1.bf16.xpose.msra.mxu0 0
        %3874 = vmatprep.subr.bf16.mxu0 0
        %3875 = vmatpush1.bf16.xpose.msra.mxu0 0
        %3876 = vmatprep.subr.bf16.mxu0 0
        %3877 = vmatpush1.bf16.xpose.msra.mxu0 0
        %3878 = vmatprep.subr.bf16.mxu0 0
        %3879 = vmatpush1.bf16.xpose.msra.mxu0 0
        %3880 = vmatprep.subr.bf16.mxu0 0
        %3881 = vmatpush1.bf16.xpose.msra.mxu0 0
        %3882 = vmatprep.subr.bf16.mxu0 0
        %3883 = vmatpush1.bf16.xpose.msra.mxu0 0
        %3884 = vmatprep.subr.bf16.mxu0 0
        %3885 = vmatpush1.bf16.xpose.msra.mxu0 0
        %3886 = vmatprep.subr.bf16.mxu0 0
        %3887 = vmatpush1.bf16.xpose.msra.mxu0 0
        %3888 = vmatprep.subr.bf16.mxu0 0
        %3889 = vmatpush1.bf16.xpose.msra.mxu0 0
        %3890 = vmatprep.subr.bf16.mxu0 0
        %3891 = vmatpush1.bf16.xpose.msra.mxu0 0
        %3892 = vmatprep.subr.bf16.mxu0 0
        %3893 = vmatpush1.bf16.xpose.msra.mxu0 0
        %3894 = vmatprep.subr.bf16.mxu0 0
        %3895 = vmatpush1.bf16.xpose.msra.mxu0 0
        %3896 = vmatprep.subr.bf16.mxu0 0
        %3897 = vmatpush1.bf16.xpose.msra.mxu0 0
        %3898 = vmatprep.subr.bf16.mxu0 0
        %3899 = vmatpush1.bf16.xpose.msra.mxu0 0
        %3900 = vmatprep.subr.bf16.mxu0 0
        %3901 = vmatpush1.bf16.xpose.msra.mxu0 0
        %3902 = vmatprep.mubr.bf16.mxu0 0
        %3903 = vmatmul.mubr.bf16.gmra.mrb[0].mxu0 %v3865
        %v3904 = vpop.f32.mrb[0].mxu0
        %v3905 = vadd.f32 %v3863, %v3904
        %v3906 = vpop.f32.mrb[0].mxu0
        %v3907 = vpop.f32.mrb[0].mxu0
        %v3908 = vpop.f32.mrb[0].mxu0
        %3909 = vdwg.mxu0
        %v3911 = vsel %vm1851, %v3263, 0
        %v3914 = vsel %vm1851, %v3559, 0
        %3916 = vmatprep.subr.bf16.mxu0 0
        %3917 = vmatpush1.bf16.xpose.msra.mxu0 %v3914
        %3918 = vmatprep.subr.bf16.mxu0 0
        %3919 = vmatpush1.bf16.xpose.msra.mxu0 0
        %3920 = vmatprep.subr.bf16.mxu0 0
        %3921 = vmatpush1.bf16.xpose.msra.mxu0 0
        %3922 = vmatprep.subr.bf16.mxu0 0
        %3923 = vmatpush1.bf16.xpose.msra.mxu0 0
        %3924 = vmatprep.subr.bf16.mxu0 0
        %3925 = vmatpush1.bf16.xpose.msra.mxu0 0
        %3926 = vmatprep.subr.bf16.mxu0 0
        %3927 = vmatpush1.bf16.xpose.msra.mxu0 0
        %3928 = vmatprep.subr.bf16.mxu0 0
        %3929 = vmatpush1.bf16.xpose.msra.mxu0 0
        %3930 = vmatprep.subr.bf16.mxu0 0
        %3931 = vmatpush1.bf16.xpose.msra.mxu0 0
        %3932 = vmatprep.subr.bf16.mxu0 0
        %3933 = vmatpush1.bf16.xpose.msra.mxu0 0
        %3934 = vmatprep.subr.bf16.mxu0 0
        %3935 = vmatpush1.bf16.xpose.msra.mxu0 0
        %3936 = vmatprep.subr.bf16.mxu0 0
        %3937 = vmatpush1.bf16.xpose.msra.mxu0 0
        %3938 = vmatprep.subr.bf16.mxu0 0
        %3939 = vmatpush1.bf16.xpose.msra.mxu0 0
        %3940 = vmatprep.subr.bf16.mxu0 0
        %3941 = vmatpush1.bf16.xpose.msra.mxu0 0
        %3942 = vmatprep.subr.bf16.mxu0 0
        %3943 = vmatpush1.bf16.xpose.msra.mxu0 0
        %3944 = vmatprep.subr.bf16.mxu0 0
        %3945 = vmatpush1.bf16.xpose.msra.mxu0 0
        %3946 = vmatprep.subr.bf16.mxu0 0
        %3947 = vmatpush1.bf16.xpose.msra.mxu0 0
        %3948 = vmatprep.mubr.bf16.mxu0 0
        %3949 = vmatmul.mubr.bf16.gmra.mrb[0].mxu0 %v3911
        %v3950 = vpop.f32.mrb[0].mxu0
        %v3951 = vadd.f32 %v3863, %v3950
        %v3952 = vpop.f32.mrb[0].mxu0
        %v3953 = vpop.f32.mrb[0].mxu0
        %v3954 = vpop.f32.mrb[0].mxu0
        %3955 = vdwg.mxu0
        %v3957 = vsel %vm1851, %v3264, 0
        %v3960 = vsel %vm1851, %v3560, 0
        %3962 = vmatprep.subr.bf16.mxu0 0
        %3963 = vmatpush1.bf16.xpose.msra.mxu0 %v3960
        %3964 = vmatprep.subr.bf16.mxu0 0
        %3965 = vmatpush1.bf16.xpose.msra.mxu0 0
        %3966 = vmatprep.subr.bf16.mxu0 0
        %3967 = vmatpush1.bf16.xpose.msra.mxu0 0
        %3968 = vmatprep.subr.bf16.mxu0 0
        %3969 = vmatpush1.bf16.xpose.msra.mxu0 0
        %3970 = vmatprep.subr.bf16.mxu0 0
        %3971 = vmatpush1.bf16.xpose.msra.mxu0 0
        %3972 = vmatprep.subr.bf16.mxu0 0
        %3973 = vmatpush1.bf16.xpose.msra.mxu0 0
        %3974 = vmatprep.subr.bf16.mxu0 0
        %3975 = vmatpush1.bf16.xpose.msra.mxu0 0
        %3976 = vmatprep.subr.bf16.mxu0 0
        %3977 = vmatpush1.bf16.xpose.msra.mxu0 0
        %3978 = vmatprep.subr.bf16.mxu0 0
        %3979 = vmatpush1.bf16.xpose.msra.mxu0 0
        %3980 = vmatprep.subr.bf16.mxu0 0
        %3981 = vmatpush1.bf16.xpose.msra.mxu0 0
        %3982 = vmatprep.subr.bf16.mxu0 0
        %3983 = vmatpush1.bf16.xpose.msra.mxu0 0
        %3984 = vmatprep.subr.bf16.mxu0 0
        %3985 = vmatpush1.bf16.xpose.msra.mxu0 0
        %3986 = vmatprep.subr.bf16.mxu0 0
        %3987 = vmatpush1.bf16.xpose.msra.mxu0 0
        %3988 = vmatprep.subr.bf16.mxu0 0
        %3989 = vmatpush1.bf16.xpose.msra.mxu0 0
        %3990 = vmatprep.subr.bf16.mxu0 0
        %3991 = vmatpush1.bf16.xpose.msra.mxu0 0
        %3992 = vmatprep.subr.bf16.mxu0 0
        %3993 = vmatpush1.bf16.xpose.msra.mxu0 0
        %3994 = vmatprep.mubr.bf16.mxu0 0
        %3995 = vmatmul.mubr.bf16.gmra.mrb[0].mxu0 %v3957
        %v3996 = vpop.f32.mrb[0].mxu0
        %v3997 = vadd.f32 %v3863, %v3996
        %v3998 = vpop.f32.mrb[0].mxu0
        %v3999 = vpop.f32.mrb[0].mxu0
        %v4000 = vpop.f32.mrb[0].mxu0
        %4001 = vdwg.mxu0
        %v4003 = vsel %vm1851, %v3265, 0
        %v4006 = vsel %vm1851, %v3561, 0
        %4008 = vmatprep.subr.bf16.mxu0 0
        %4009 = vmatpush1.bf16.xpose.msra.mxu0 %v4006
        %4010 = vmatprep.subr.bf16.mxu0 0
        %4011 = vmatpush1.bf16.xpose.msra.mxu0 0
        %4012 = vmatprep.subr.bf16.mxu0 0
        %4013 = vmatpush1.bf16.xpose.msra.mxu0 0
        %4014 = vmatprep.subr.bf16.mxu0 0
        %4015 = vmatpush1.bf16.xpose.msra.mxu0 0
        %4016 = vmatprep.subr.bf16.mxu0 0
        %4017 = vmatpush1.bf16.xpose.msra.mxu0 0
        %4018 = vmatprep.subr.bf16.mxu0 0
        %4019 = vmatpush1.bf16.xpose.msra.mxu0 0
        %4020 = vmatprep.subr.bf16.mxu0 0
        %4021 = vmatpush1.bf16.xpose.msra.mxu0 0
        %4022 = vmatprep.subr.bf16.mxu0 0
        %4023 = vmatpush1.bf16.xpose.msra.mxu0 0
        %4024 = vmatprep.subr.bf16.mxu0 0
        %4025 = vmatpush1.bf16.xpose.msra.mxu0 0
        %4026 = vmatprep.subr.bf16.mxu0 0
        %4027 = vmatpush1.bf16.xpose.msra.mxu0 0
        %4028 = vmatprep.subr.bf16.mxu0 0
        %4029 = vmatpush1.bf16.xpose.msra.mxu0 0
        %4030 = vmatprep.subr.bf16.mxu0 0
        %4031 = vmatpush1.bf16.xpose.msra.mxu0 0
        %4032 = vmatprep.subr.bf16.mxu0 0
        %4033 = vmatpush1.bf16.xpose.msra.mxu0 0
        %4034 = vmatprep.subr.bf16.mxu0 0
        %4035 = vmatpush1.bf16.xpose.msra.mxu0 0
        %4036 = vmatprep.subr.bf16.mxu0 0
        %4037 = vmatpush1.bf16.xpose.msra.mxu0 0
        %4038 = vmatprep.subr.bf16.mxu0 0
        %4039 = vmatpush1.bf16.xpose.msra.mxu0 0
        %4040 = vmatprep.mubr.bf16.mxu0 0
        %4041 = vmatmul.mubr.bf16.gmra.mrb[0].mxu0 %v4003
        %v4042 = vpop.f32.mrb[0].mxu0
        %v4043 = vadd.f32 %v3863, %v4042
        %v4044 = vpop.f32.mrb[0].mxu0
        %v4045 = vpop.f32.mrb[0].mxu0
        %v4046 = vpop.f32.mrb[0].mxu0
        %4047 = vdwg.mxu0
        %v4049 = vsel %vm1851, %v3266, 0
        %v4052 = vsel %vm1851, %v3562, 0
        %4054 = vmatprep.subr.bf16.mxu0 0
        %4055 = vmatpush1.bf16.xpose.msra.mxu0 %v4052
        %4056 = vmatprep.subr.bf16.mxu0 0
        %4057 = vmatpush1.bf16.xpose.msra.mxu0 0
        %4058 = vmatprep.subr.bf16.mxu0 0
        %4059 = vmatpush1.bf16.xpose.msra.mxu0 0
        %4060 = vmatprep.subr.bf16.mxu0 0
        %4061 = vmatpush1.bf16.xpose.msra.mxu0 0
        %4062 = vmatprep.subr.bf16.mxu0 0
        %4063 = vmatpush1.bf16.xpose.msra.mxu0 0
        %4064 = vmatprep.subr.bf16.mxu0 0
        %4065 = vmatpush1.bf16.xpose.msra.mxu0 0
        %4066 = vmatprep.subr.bf16.mxu0 0
        %4067 = vmatpush1.bf16.xpose.msra.mxu0 0
        %4068 = vmatprep.subr.bf16.mxu0 0
        %4069 = vmatpush1.bf16.xpose.msra.mxu0 0
        %4070 = vmatprep.subr.bf16.mxu0 0
        %4071 = vmatpush1.bf16.xpose.msra.mxu0 0
        %4072 = vmatprep.subr.bf16.mxu0 0
        %4073 = vmatpush1.bf16.xpose.msra.mxu0 0
        %4074 = vmatprep.subr.bf16.mxu0 0
        %4075 = vmatpush1.bf16.xpose.msra.mxu0 0
        %4076 = vmatprep.subr.bf16.mxu0 0
        %4077 = vmatpush1.bf16.xpose.msra.mxu0 0
        %4078 = vmatprep.subr.bf16.mxu0 0
        %4079 = vmatpush1.bf16.xpose.msra.mxu0 0
        %4080 = vmatprep.subr.bf16.mxu0 0
        %4081 = vmatpush1.bf16.xpose.msra.mxu0 0
        %4082 = vmatprep.subr.bf16.mxu0 0
        %4083 = vmatpush1.bf16.xpose.msra.mxu0 0
        %4084 = vmatprep.subr.bf16.mxu0 0
        %4085 = vmatpush1.bf16.xpose.msra.mxu0 0
        %4086 = vmatprep.mubr.bf16.mxu0 0
        %4087 = vmatmul.mubr.bf16.gmra.mrb[0].mxu0 %v4049
        %v4088 = vpop.f32.mrb[0].mxu0
        %v4089 = vadd.f32 %v3863, %v4088
        %v4090 = vpop.f32.mrb[0].mxu0
        %v4091 = vpop.f32.mrb[0].mxu0
        %v4092 = vpop.f32.mrb[0].mxu0
        %4093 = vdwg.mxu0
        %v4095 = vsel %vm1851, %v3267, 0
        %v4098 = vsel %vm1851, %v3563, 0
        %4100 = vmatprep.subr.bf16.mxu0 0
        %4101 = vmatpush1.bf16.xpose.msra.mxu0 %v4098
        %4102 = vmatprep.subr.bf16.mxu0 0
        %4103 = vmatpush1.bf16.xpose.msra.mxu0 0
        %4104 = vmatprep.subr.bf16.mxu0 0
        %4105 = vmatpush1.bf16.xpose.msra.mxu0 0
        %4106 = vmatprep.subr.bf16.mxu0 0
        %4107 = vmatpush1.bf16.xpose.msra.mxu0 0
        %4108 = vmatprep.subr.bf16.mxu0 0
        %4109 = vmatpush1.bf16.xpose.msra.mxu0 0
        %4110 = vmatprep.subr.bf16.mxu0 0
        %4111 = vmatpush1.bf16.xpose.msra.mxu0 0
        %4112 = vmatprep.subr.bf16.mxu0 0
        %4113 = vmatpush1.bf16.xpose.msra.mxu0 0
        %4114 = vmatprep.subr.bf16.mxu0 0
        %4115 = vmatpush1.bf16.xpose.msra.mxu0 0
        %4116 = vmatprep.subr.bf16.mxu0 0
        %4117 = vmatpush1.bf16.xpose.msra.mxu0 0
        %4118 = vmatprep.subr.bf16.mxu0 0
        %4119 = vmatpush1.bf16.xpose.msra.mxu0 0
        %4120 = vmatprep.subr.bf16.mxu0 0
        %4121 = vmatpush1.bf16.xpose.msra.mxu0 0
        %4122 = vmatprep.subr.bf16.mxu0 0
        %4123 = vmatpush1.bf16.xpose.msra.mxu0 0
        %4124 = vmatprep.subr.bf16.mxu0 0
        %4125 = vmatpush1.bf16.xpose.msra.mxu0 0
        %4126 = vmatprep.subr.bf16.mxu0 0
        %4127 = vmatpush1.bf16.xpose.msra.mxu0 0
        %4128 = vmatprep.subr.bf16.mxu0 0
        %4129 = vmatpush1.bf16.xpose.msra.mxu0 0
        %4130 = vmatprep.subr.bf16.mxu0 0
        %4131 = vmatpush1.bf16.xpose.msra.mxu0 0
        %4132 = vmatprep.mubr.bf16.mxu0 0
        %4133 = vmatmul.mubr.bf16.gmra.mrb[0].mxu0 %v4095
        %v4134 = vpop.f32.mrb[0].mxu0
        %v4135 = vadd.f32 %v3863, %v4134
        %v4136 = vpop.f32.mrb[0].mxu0
        %v4137 = vpop.f32.mrb[0].mxu0
        %v4138 = vpop.f32.mrb[0].mxu0
        %4139 = vdwg.mxu0
        %v4141 = vsel %vm1851, %v3268, 0
        %v4144 = vsel %vm1851, %v3564, 0
        %4146 = vmatprep.subr.bf16.mxu0 0
        %4147 = vmatpush1.bf16.xpose.msra.mxu0 %v4144
        %4148 = vmatprep.subr.bf16.mxu0 0
        %4149 = vmatpush1.bf16.xpose.msra.mxu0 0
        %4150 = vmatprep.subr.bf16.mxu0 0
        %4151 = vmatpush1.bf16.xpose.msra.mxu0 0
        %4152 = vmatprep.subr.bf16.mxu0 0
        %4153 = vmatpush1.bf16.xpose.msra.mxu0 0
        %4154 = vmatprep.subr.bf16.mxu0 0
        %4155 = vmatpush1.bf16.xpose.msra.mxu0 0
        %4156 = vmatprep.subr.bf16.mxu0 0
        %4157 = vmatpush1.bf16.xpose.msra.mxu0 0
        %4158 = vmatprep.subr.bf16.mxu0 0
        %4159 = vmatpush1.bf16.xpose.msra.mxu0 0
        %4160 = vmatprep.subr.bf16.mxu0 0
        %4161 = vmatpush1.bf16.xpose.msra.mxu0 0
        %4162 = vmatprep.subr.bf16.mxu0 0
        %4163 = vmatpush1.bf16.xpose.msra.mxu0 0
        %4164 = vmatprep.subr.bf16.mxu0 0
        %4165 = vmatpush1.bf16.xpose.msra.mxu0 0
        %4166 = vmatprep.subr.bf16.mxu0 0
        %4167 = vmatpush1.bf16.xpose.msra.mxu0 0
        %4168 = vmatprep.subr.bf16.mxu0 0
        %4169 = vmatpush1.bf16.xpose.msra.mxu0 0
        %4170 = vmatprep.subr.bf16.mxu0 0
        %4171 = vmatpush1.bf16.xpose.msra.mxu0 0
        %4172 = vmatprep.subr.bf16.mxu0 0
        %4173 = vmatpush1.bf16.xpose.msra.mxu0 0
        %4174 = vmatprep.subr.bf16.mxu0 0
        %4175 = vmatpush1.bf16.xpose.msra.mxu0 0
        %4176 = vmatprep.subr.bf16.mxu0 0
        %4177 = vmatpush1.bf16.xpose.msra.mxu0 0
        %4178 = vmatprep.mubr.bf16.mxu0 0
        %4179 = vmatmul.mubr.bf16.gmra.mrb[0].mxu0 %v4141
        %v4180 = vpop.f32.mrb[0].mxu0
        %v4181 = vadd.f32 %v3863, %v4180
        %v4182 = vpop.f32.mrb[0].mxu0
        %v4183 = vpop.f32.mrb[0].mxu0
        %v4184 = vpop.f32.mrb[0].mxu0
        %4185 = vdwg.mxu0
        %v4187 = vsel %vm1851, %v3269, 0
        %v4190 = vsel %vm1851, %v3565, 0
        %4192 = vmatprep.subr.bf16.mxu0 0
        %4193 = vmatpush1.bf16.xpose.msra.mxu0 %v4190
        %4194 = vmatprep.subr.bf16.mxu0 0
        %4195 = vmatpush1.bf16.xpose.msra.mxu0 0
        %4196 = vmatprep.subr.bf16.mxu0 0
        %4197 = vmatpush1.bf16.xpose.msra.mxu0 0
        %4198 = vmatprep.subr.bf16.mxu0 0
        %4199 = vmatpush1.bf16.xpose.msra.mxu0 0
        %4200 = vmatprep.subr.bf16.mxu0 0
        %4201 = vmatpush1.bf16.xpose.msra.mxu0 0
        %4202 = vmatprep.subr.bf16.mxu0 0
        %4203 = vmatpush1.bf16.xpose.msra.mxu0 0
        %4204 = vmatprep.subr.bf16.mxu0 0
        %4205 = vmatpush1.bf16.xpose.msra.mxu0 0
        %4206 = vmatprep.subr.bf16.mxu0 0
        %4207 = vmatpush1.bf16.xpose.msra.mxu0 0
        %4208 = vmatprep.subr.bf16.mxu0 0
        %4209 = vmatpush1.bf16.xpose.msra.mxu0 0
        %4210 = vmatprep.subr.bf16.mxu0 0
        %4211 = vmatpush1.bf16.xpose.msra.mxu0 0
        %4212 = vmatprep.subr.bf16.mxu0 0
        %4213 = vmatpush1.bf16.xpose.msra.mxu0 0
        %4214 = vmatprep.subr.bf16.mxu0 0
        %4215 = vmatpush1.bf16.xpose.msra.mxu0 0
        %4216 = vmatprep.subr.bf16.mxu0 0
        %4217 = vmatpush1.bf16.xpose.msra.mxu0 0
        %4218 = vmatprep.subr.bf16.mxu0 0
        %4219 = vmatpush1.bf16.xpose.msra.mxu0 0
        %4220 = vmatprep.subr.bf16.mxu0 0
        %4221 = vmatpush1.bf16.xpose.msra.mxu0 0
        %4222 = vmatprep.subr.bf16.mxu0 0
        %4223 = vmatpush1.bf16.xpose.msra.mxu0 0
        %4224 = vmatprep.mubr.bf16.mxu0 0
        %4225 = vmatmul.mubr.bf16.gmra.mrb[0].mxu0 %v4187
        %v4226 = vpop.f32.mrb[0].mxu0
        %v4227 = vadd.f32 %v3863, %v4226
        %v4228 = vpop.f32.mrb[0].mxu0
        %v4229 = vpop.f32.mrb[0].mxu0
        %v4230 = vpop.f32.mrb[0].mxu0
        %4231 = vdwg.mxu0
        %v4232 = vsel %vm2220, %v3905, -inf
        %4233 = vmax.xlane.f32.xlu0 %v4232
        %v4234 = vpop.xlane.xlu0 %4233
        %v4235 = vsel %vm2220, %v3951, -inf
        %4236 = vmax.xlane.f32.xlu0 %v4235
        %v4237 = vpop.xlane.xlu0 %4236
        %v4238 = vsel %vm2220, %v3997, -inf
        %4239 = vmax.xlane.f32.xlu0 %v4238
        %v4240 = vpop.xlane.xlu0 %4239
        %v4241 = vsel %vm2220, %v4043, -inf
        %4242 = vmax.xlane.f32.xlu0 %v4241
        %v4243 = vpop.xlane.xlu0 %4242
        %v4244 = vsel %vm2220, %v4089, -inf
        %4245 = vmax.xlane.f32.xlu0 %v4244
        %v4246 = vpop.xlane.xlu0 %4245
        %v4247 = vsel %vm2220, %v4135, -inf
        %4248 = vmax.xlane.f32.xlu0 %v4247
        %v4249 = vpop.xlane.xlu0 %4248
        %v4250 = vsel %vm2220, %v4181, -inf
        %4251 = vmax.xlane.f32.xlu0 %v4250
        %v4252 = vpop.xlane.xlu0 %4251
        %v4253 = vsel %vm2220, %v4227, -inf
        %4254 = vmax.xlane.f32.xlu0 %v4253
        %v4255 = vpop.xlane.xlu0 %4254
        %v4256 = vsub.f32 %v3905, %v4234
        %v4257 = vsub.f32 %v3951, %v4237
        %v4258 = vsub.f32 %v3997, %v4240
        %v4259 = vsub.f32 %v4043, %v4243
        %v4260 = vsub.f32 %v4089, %v4246
        %v4261 = vsub.f32 %v4135, %v4249
        %v4262 = vsub.f32 %v4181, %v4252
        %v4263 = vsub.f32 %v4227, %v4255
        %v4264 = vmul.f32 %v4256, 1.442695
        %v4265 = vpow.pop %v4264
        %v4266 = vmul.f32 %v4257, 1.442695
        %v4267 = vpow.pop %v4266
        %v4268 = vmul.f32 %v4258, 1.442695
        %v4269 = vpow.pop %v4268
        %v4270 = vmul.f32 %v4259, 1.442695
        %v4271 = vpow.pop %v4270
        %v4272 = vmul.f32 %v4260, 1.442695
        %v4273 = vpow.pop %v4272
        %v4274 = vmul.f32 %v4261, 1.442695
        %v4275 = vpow.pop %v4274
        %v4276 = vmul.f32 %v4262, 1.442695
        %v4277 = vpow.pop %v4276
        %v4278 = vmul.f32 %v4263, 1.442695
        %v4279 = vpow.pop %v4278
        %v4280 = vsel %vm2220, %v4265, 0.0
        %4281 = vadd.xlane.f32.xlu0 %v4280
        %v4282 = vpop.xlane.xlu0 %4281
        %v4283 = vsel %vm2220, %v4267, 0.0
        %4284 = vadd.xlane.f32.xlu0 %v4283
        %v4285 = vpop.xlane.xlu0 %4284
        %v4286 = vsel %vm2220, %v4269, 0.0
        %4287 = vadd.xlane.f32.xlu0 %v4286
        %v4288 = vpop.xlane.xlu0 %4287
        %v4289 = vsel %vm2220, %v4271, 0.0
        %4290 = vadd.xlane.f32.xlu0 %v4289
        %v4291 = vpop.xlane.xlu0 %4290
        %v4292 = vsel %vm2220, %v4273, 0.0
        %4293 = vadd.xlane.f32.xlu0 %v4292
        %v4294 = vpop.xlane.xlu0 %4293
        %v4295 = vsel %vm2220, %v4275, 0.0
        %4296 = vadd.xlane.f32.xlu0 %v4295
        %v4297 = vpop.xlane.xlu0 %4296
        %v4298 = vsel %vm2220, %v4277, 0.0
        %4299 = vadd.xlane.f32.xlu0 %v4298
        %v4300 = vpop.xlane.xlu0 %4299
        %v4301 = vsel %vm2220, %v4279, 0.0
        %4302 = vadd.xlane.f32.xlu0 %v4301
        %v4303 = vpop.xlane.xlu0 %4302
        %v4304 = vrcp.pop %v4282
        %v4305 = vrcp.pop %v4285
        %v4306 = vrcp.pop %v4288
        %v4307 = vrcp.pop %v4291
        %v4308 = vrcp.pop %v4294
        %v4309 = vrcp.pop %v4297
        %v4310 = vrcp.pop %v4300
        %v4311 = vrcp.pop %v4303
        %v4312 = vmul.f32 %v4265, %v4304
        %v4313 = vmul.f32 %v4267, %v4305
        %v4314 = vmul.f32 %v4269, %v4306
        %v4315 = vmul.f32 %v4271, %v4307
        %v4316 = vmul.f32 %v4273, %v4308
        %v4317 = vmul.f32 %v4275, %v4309
        %v4318 = vmul.f32 %v4277, %v4310
        %v4319 = vmul.f32 %v4279, %v4311
        %v4320 = vpack.c.bf16 %v4312, %v4312
        %v4321 = vpack.c.bf16 %v4313, %v4313
        %v4322 = vpack.c.bf16 %v4314, %v4314
        %v4323 = vpack.c.bf16 %v4315, %v4315
        %v4324 = vpack.c.bf16 %v4316, %v4316
        %v4325 = vpack.c.bf16 %v4317, %v4317
        %v4326 = vpack.c.bf16 %v4318, %v4318
        %v4327 = vpack.c.bf16 %v4319, %v4319
        %v4329 = vsel %vm2220, %v4320, 0
        %v4332 = vsel %vm2320, %v3854, 0
        %4334 = vmatprep.subr.bf16.mxu0 0
        %4335 = vmatpush1.bf16.msra.mxu0 %v4332
        %4336 = vmatprep.subr.bf16.mxu0 0
        %4337 = vmatpush1.bf16.msra.mxu0 0
        %4338 = vmatprep.subr.bf16.mxu0 0
        %4339 = vmatpush1.bf16.msra.mxu0 0
        %4340 = vmatprep.subr.bf16.mxu0 0
        %4341 = vmatpush1.bf16.msra.mxu0 0
        %4342 = vmatprep.subr.bf16.mxu0 0
        %4343 = vmatpush1.bf16.msra.mxu0 0
        %4344 = vmatprep.subr.bf16.mxu0 0
        %4345 = vmatpush1.bf16.msra.mxu0 0
        %4346 = vmatprep.subr.bf16.mxu0 0
        %4347 = vmatpush1.bf16.msra.mxu0 0
        %4348 = vmatprep.subr.bf16.mxu0 0
        %4349 = vmatpush1.bf16.msra.mxu0 0
        %4350 = vmatprep.subr.bf16.mxu0 0
        %4351 = vmatpush1.bf16.msra.mxu0 0
        %4352 = vmatprep.subr.bf16.mxu0 0
        %4353 = vmatpush1.bf16.msra.mxu0 0
        %4354 = vmatprep.subr.bf16.mxu0 0
        %4355 = vmatpush1.bf16.msra.mxu0 0
        %4356 = vmatprep.subr.bf16.mxu0 0
        %4357 = vmatpush1.bf16.msra.mxu0 0
        %4358 = vmatprep.subr.bf16.mxu0 0
        %4359 = vmatpush1.bf16.msra.mxu0 0
        %4360 = vmatprep.subr.bf16.mxu0 0
        %4361 = vmatpush1.bf16.msra.mxu0 0
        %4362 = vmatprep.subr.bf16.mxu0 0
        %4363 = vmatpush1.bf16.msra.mxu0 0
        %4364 = vmatprep.subr.bf16.mxu0 0
        %4365 = vmatpush1.bf16.msra.mxu0 0
        %4366 = vmatprep.mubr.bf16.mxu0 0
        %4367 = vmatmul.mubr.bf16.gmra.mrb[0].mxu0 %v4329
        %v4368 = vpop.f32.mrb[0].mxu0
        %v4369 = vadd.f32 0.0, %v4368
        %v4370 = vpop.f32.mrb[0].mxu0
        %v4371 = vpop.f32.mrb[0].mxu0
        %v4372 = vpop.f32.mrb[0].mxu0
        %4373 = vdwg.mxu0
        %v4375 = vsel %vm2220, %v4321, 0
        %v4378 = vsel %vm2320, %v3855, 0
        %4380 = vmatprep.subr.bf16.mxu0 0
        %4381 = vmatpush1.bf16.msra.mxu0 %v4378
        %4382 = vmatprep.subr.bf16.mxu0 0
        %4383 = vmatpush1.bf16.msra.mxu0 0
        %4384 = vmatprep.subr.bf16.mxu0 0
        %4385 = vmatpush1.bf16.msra.mxu0 0
        %4386 = vmatprep.subr.bf16.mxu0 0
        %4387 = vmatpush1.bf16.msra.mxu0 0
        %4388 = vmatprep.subr.bf16.mxu0 0
        %4389 = vmatpush1.bf16.msra.mxu0 0
        %4390 = vmatprep.subr.bf16.mxu0 0
        %4391 = vmatpush1.bf16.msra.mxu0 0
        %4392 = vmatprep.subr.bf16.mxu0 0
        %4393 = vmatpush1.bf16.msra.mxu0 0
        %4394 = vmatprep.subr.bf16.mxu0 0
        %4395 = vmatpush1.bf16.msra.mxu0 0
        %4396 = vmatprep.subr.bf16.mxu0 0
        %4397 = vmatpush1.bf16.msra.mxu0 0
        %4398 = vmatprep.subr.bf16.mxu0 0
        %4399 = vmatpush1.bf16.msra.mxu0 0
        %4400 = vmatprep.subr.bf16.mxu0 0
        %4401 = vmatpush1.bf16.msra.mxu0 0
        %4402 = vmatprep.subr.bf16.mxu0 0
        %4403 = vmatpush1.bf16.msra.mxu0 0
        %4404 = vmatprep.subr.bf16.mxu0 0
        %4405 = vmatpush1.bf16.msra.mxu0 0
        %4406 = vmatprep.subr.bf16.mxu0 0
        %4407 = vmatpush1.bf16.msra.mxu0 0
        %4408 = vmatprep.subr.bf16.mxu0 0
        %4409 = vmatpush1.bf16.msra.mxu0 0
        %4410 = vmatprep.subr.bf16.mxu0 0
        %4411 = vmatpush1.bf16.msra.mxu0 0
        %4412 = vmatprep.mubr.bf16.mxu0 0
        %4413 = vmatmul.mubr.bf16.gmra.mrb[0].mxu0 %v4375
        %v4414 = vpop.f32.mrb[0].mxu0
        %v4415 = vadd.f32 0.0, %v4414
        %v4416 = vpop.f32.mrb[0].mxu0
        %v4417 = vpop.f32.mrb[0].mxu0
        %v4418 = vpop.f32.mrb[0].mxu0
        %4419 = vdwg.mxu0
        %v4421 = vsel %vm2220, %v4322, 0
        %v4424 = vsel %vm2320, %v3856, 0
        %4426 = vmatprep.subr.bf16.mxu0 0
        %4427 = vmatpush1.bf16.msra.mxu0 %v4424
        %4428 = vmatprep.subr.bf16.mxu0 0
        %4429 = vmatpush1.bf16.msra.mxu0 0
        %4430 = vmatprep.subr.bf16.mxu0 0
        %4431 = vmatpush1.bf16.msra.mxu0 0
        %4432 = vmatprep.subr.bf16.mxu0 0
        %4433 = vmatpush1.bf16.msra.mxu0 0
        %4434 = vmatprep.subr.bf16.mxu0 0
        %4435 = vmatpush1.bf16.msra.mxu0 0
        %4436 = vmatprep.subr.bf16.mxu0 0
        %4437 = vmatpush1.bf16.msra.mxu0 0
        %4438 = vmatprep.subr.bf16.mxu0 0
        %4439 = vmatpush1.bf16.msra.mxu0 0
        %4440 = vmatprep.subr.bf16.mxu0 0
        %4441 = vmatpush1.bf16.msra.mxu0 0
        %4442 = vmatprep.subr.bf16.mxu0 0
        %4443 = vmatpush1.bf16.msra.mxu0 0
        %4444 = vmatprep.subr.bf16.mxu0 0
        %4445 = vmatpush1.bf16.msra.mxu0 0
        %4446 = vmatprep.subr.bf16.mxu0 0
        %4447 = vmatpush1.bf16.msra.mxu0 0
        %4448 = vmatprep.subr.bf16.mxu0 0
        %4449 = vmatpush1.bf16.msra.mxu0 0
        %4450 = vmatprep.subr.bf16.mxu0 0
        %4451 = vmatpush1.bf16.msra.mxu0 0
        %4452 = vmatprep.subr.bf16.mxu0 0
        %4453 = vmatpush1.bf16.msra.mxu0 0
        %4454 = vmatprep.subr.bf16.mxu0 0
        %4455 = vmatpush1.bf16.msra.mxu0 0
        %4456 = vmatprep.subr.bf16.mxu0 0
        %4457 = vmatpush1.bf16.msra.mxu0 0
        %4458 = vmatprep.mubr.bf16.mxu0 0
        %4459 = vmatmul.mubr.bf16.gmra.mrb[0].mxu0 %v4421
        %v4460 = vpop.f32.mrb[0].mxu0
        %v4461 = vadd.f32 0.0, %v4460
        %v4462 = vpop.f32.mrb[0].mxu0
        %v4463 = vpop.f32.mrb[0].mxu0
        %v4464 = vpop.f32.mrb[0].mxu0
        %4465 = vdwg.mxu0
        %v4467 = vsel %vm2220, %v4323, 0
        %v4470 = vsel %vm2320, %v3857, 0
        %4472 = vmatprep.subr.bf16.mxu0 0
        %4473 = vmatpush1.bf16.msra.mxu0 %v4470
        %4474 = vmatprep.subr.bf16.mxu0 0
        %4475 = vmatpush1.bf16.msra.mxu0 0
        %4476 = vmatprep.subr.bf16.mxu0 0
        %4477 = vmatpush1.bf16.msra.mxu0 0
        %4478 = vmatprep.subr.bf16.mxu0 0
        %4479 = vmatpush1.bf16.msra.mxu0 0
        %4480 = vmatprep.subr.bf16.mxu0 0
        %4481 = vmatpush1.bf16.msra.mxu0 0
        %4482 = vmatprep.subr.bf16.mxu0 0
        %4483 = vmatpush1.bf16.msra.mxu0 0
        %4484 = vmatprep.subr.bf16.mxu0 0
        %4485 = vmatpush1.bf16.msra.mxu0 0
        %4486 = vmatprep.subr.bf16.mxu0 0
        %4487 = vmatpush1.bf16.msra.mxu0 0
        %4488 = vmatprep.subr.bf16.mxu0 0
        %4489 = vmatpush1.bf16.msra.mxu0 0
        %4490 = vmatprep.subr.bf16.mxu0 0
        %4491 = vmatpush1.bf16.msra.mxu0 0
        %4492 = vmatprep.subr.bf16.mxu0 0
        %4493 = vmatpush1.bf16.msra.mxu0 0
        %4494 = vmatprep.subr.bf16.mxu0 0
        %4495 = vmatpush1.bf16.msra.mxu0 0
        %4496 = vmatprep.subr.bf16.mxu0 0
        %4497 = vmatpush1.bf16.msra.mxu0 0
        %4498 = vmatprep.subr.bf16.mxu0 0
        %4499 = vmatpush1.bf16.msra.mxu0 0
        %4500 = vmatprep.subr.bf16.mxu0 0
        %4501 = vmatpush1.bf16.msra.mxu0 0
        %4502 = vmatprep.subr.bf16.mxu0 0
        %4503 = vmatpush1.bf16.msra.mxu0 0
        %4504 = vmatprep.mubr.bf16.mxu0 0
        %4505 = vmatmul.mubr.bf16.gmra.mrb[0].mxu0 %v4467
        %v4506 = vpop.f32.mrb[0].mxu0
        %v4507 = vadd.f32 0.0, %v4506
        %v4508 = vpop.f32.mrb[0].mxu0
        %v4509 = vpop.f32.mrb[0].mxu0
        %v4510 = vpop.f32.mrb[0].mxu0
        %4511 = vdwg.mxu0
        %v4513 = vsel %vm2220, %v4324, 0
        %v4516 = vsel %vm2320, %v3858, 0
        %4518 = vmatprep.subr.bf16.mxu0 0
        %4519 = vmatpush1.bf16.msra.mxu0 %v4516
        %4520 = vmatprep.subr.bf16.mxu0 0
        %4521 = vmatpush1.bf16.msra.mxu0 0
        %4522 = vmatprep.subr.bf16.mxu0 0
        %4523 = vmatpush1.bf16.msra.mxu0 0
        %4524 = vmatprep.subr.bf16.mxu0 0
        %4525 = vmatpush1.bf16.msra.mxu0 0
        %4526 = vmatprep.subr.bf16.mxu0 0
        %4527 = vmatpush1.bf16.msra.mxu0 0
        %4528 = vmatprep.subr.bf16.mxu0 0
        %4529 = vmatpush1.bf16.msra.mxu0 0
        %4530 = vmatprep.subr.bf16.mxu0 0
        %4531 = vmatpush1.bf16.msra.mxu0 0
        %4532 = vmatprep.subr.bf16.mxu0 0
        %4533 = vmatpush1.bf16.msra.mxu0 0
        %4534 = vmatprep.subr.bf16.mxu0 0
        %4535 = vmatpush1.bf16.msra.mxu0 0
        %4536 = vmatprep.subr.bf16.mxu0 0
        %4537 = vmatpush1.bf16.msra.mxu0 0
        %4538 = vmatprep.subr.bf16.mxu0 0
        %4539 = vmatpush1.bf16.msra.mxu0 0
        %4540 = vmatprep.subr.bf16.mxu0 0
        %4541 = vmatpush1.bf16.msra.mxu0 0
        %4542 = vmatprep.subr.bf16.mxu0 0
        %4543 = vmatpush1.bf16.msra.mxu0 0
        %4544 = vmatprep.subr.bf16.mxu0 0
        %4545 = vmatpush1.bf16.msra.mxu0 0
        %4546 = vmatprep.subr.bf16.mxu0 0
        %4547 = vmatpush1.bf16.msra.mxu0 0
        %4548 = vmatprep.subr.bf16.mxu0 0
        %4549 = vmatpush1.bf16.msra.mxu0 0
        %4550 = vmatprep.mubr.bf16.mxu0 0
        %4551 = vmatmul.mubr.bf16.gmra.mrb[0].mxu0 %v4513
        %v4552 = vpop.f32.mrb[0].mxu0
        %v4553 = vadd.f32 0.0, %v4552
        %v4554 = vpop.f32.mrb[0].mxu0
        %v4555 = vpop.f32.mrb[0].mxu0
        %v4556 = vpop.f32.mrb[0].mxu0
        %4557 = vdwg.mxu0
        %v4559 = vsel %vm2220, %v4325, 0
        %v4562 = vsel %vm2320, %v3859, 0
        %4564 = vmatprep.subr.bf16.mxu0 0
        %4565 = vmatpush1.bf16.msra.mxu0 %v4562
        %4566 = vmatprep.subr.bf16.mxu0 0
        %4567 = vmatpush1.bf16.msra.mxu0 0
        %4568 = vmatprep.subr.bf16.mxu0 0
        %4569 = vmatpush1.bf16.msra.mxu0 0
        %4570 = vmatprep.subr.bf16.mxu0 0
        %4571 = vmatpush1.bf16.msra.mxu0 0
        %4572 = vmatprep.subr.bf16.mxu0 0
        %4573 = vmatpush1.bf16.msra.mxu0 0
        %4574 = vmatprep.subr.bf16.mxu0 0
        %4575 = vmatpush1.bf16.msra.mxu0 0
        %4576 = vmatprep.subr.bf16.mxu0 0
        %4577 = vmatpush1.bf16.msra.mxu0 0
        %4578 = vmatprep.subr.bf16.mxu0 0
        %4579 = vmatpush1.bf16.msra.mxu0 0
        %4580 = vmatprep.subr.bf16.mxu0 0
        %4581 = vmatpush1.bf16.msra.mxu0 0
        %4582 = vmatprep.subr.bf16.mxu0 0
        %4583 = vmatpush1.bf16.msra.mxu0 0
        %4584 = vmatprep.subr.bf16.mxu0 0
        %4585 = vmatpush1.bf16.msra.mxu0 0
        %4586 = vmatprep.subr.bf16.mxu0 0
        %4587 = vmatpush1.bf16.msra.mxu0 0
        %4588 = vmatprep.subr.bf16.mxu0 0
        %4589 = vmatpush1.bf16.msra.mxu0 0
        %4590 = vmatprep.subr.bf16.mxu0 0
        %4591 = vmatpush1.bf16.msra.mxu0 0
        %4592 = vmatprep.subr.bf16.mxu0 0
        %4593 = vmatpush1.bf16.msra.mxu0 0
        %4594 = vmatprep.subr.bf16.mxu0 0
        %4595 = vmatpush1.bf16.msra.mxu0 0
        %4596 = vmatprep.mubr.bf16.mxu0 0
        %4597 = vmatmul.mubr.bf16.gmra.mrb[0].mxu0 %v4559
        %v4598 = vpop.f32.mrb[0].mxu0
        %v4599 = vadd.f32 0.0, %v4598
        %v4600 = vpop.f32.mrb[0].mxu0
        %v4601 = vpop.f32.mrb[0].mxu0
        %v4602 = vpop.f32.mrb[0].mxu0
        %4603 = vdwg.mxu0
        %v4605 = vsel %vm2220, %v4326, 0
        %v4608 = vsel %vm2320, %v3860, 0
        %4610 = vmatprep.subr.bf16.mxu0 0
        %4611 = vmatpush1.bf16.msra.mxu0 %v4608
        %4612 = vmatprep.subr.bf16.mxu0 0
        %4613 = vmatpush1.bf16.msra.mxu0 0
        %4614 = vmatprep.subr.bf16.mxu0 0
        %4615 = vmatpush1.bf16.msra.mxu0 0
        %4616 = vmatprep.subr.bf16.mxu0 0
        %4617 = vmatpush1.bf16.msra.mxu0 0
        %4618 = vmatprep.subr.bf16.mxu0 0
        %4619 = vmatpush1.bf16.msra.mxu0 0
        %4620 = vmatprep.subr.bf16.mxu0 0
        %4621 = vmatpush1.bf16.msra.mxu0 0
        %4622 = vmatprep.subr.bf16.mxu0 0
        %4623 = vmatpush1.bf16.msra.mxu0 0
        %4624 = vmatprep.subr.bf16.mxu0 0
        %4625 = vmatpush1.bf16.msra.mxu0 0
        %4626 = vmatprep.subr.bf16.mxu0 0
        %4627 = vmatpush1.bf16.msra.mxu0 0
        %4628 = vmatprep.subr.bf16.mxu0 0
        %4629 = vmatpush1.bf16.msra.mxu0 0
        %4630 = vmatprep.subr.bf16.mxu0 0
        %4631 = vmatpush1.bf16.msra.mxu0 0
        %4632 = vmatprep.subr.bf16.mxu0 0
        %4633 = vmatpush1.bf16.msra.mxu0 0
        %4634 = vmatprep.subr.bf16.mxu0 0
        %4635 = vmatpush1.bf16.msra.mxu0 0
        %4636 = vmatprep.subr.bf16.mxu0 0
        %4637 = vmatpush1.bf16.msra.mxu0 0
        %4638 = vmatprep.subr.bf16.mxu0 0
        %4639 = vmatpush1.bf16.msra.mxu0 0
        %4640 = vmatprep.subr.bf16.mxu0 0
        %4641 = vmatpush1.bf16.msra.mxu0 0
        %4642 = vmatprep.mubr.bf16.mxu0 0
        %4643 = vmatmul.mubr.bf16.gmra.mrb[0].mxu0 %v4605
        %v4644 = vpop.f32.mrb[0].mxu0
        %v4645 = vadd.f32 0.0, %v4644
        %v4646 = vpop.f32.mrb[0].mxu0
        %v4647 = vpop.f32.mrb[0].mxu0
        %v4648 = vpop.f32.mrb[0].mxu0
        %4649 = vdwg.mxu0
        %v4651 = vsel %vm2220, %v4327, 0
        %v4654 = vsel %vm2320, %v3861, 0
        %4656 = vmatprep.subr.bf16.mxu0 0
        %4657 = vmatpush1.bf16.msra.mxu0 %v4654
        %4658 = vmatprep.subr.bf16.mxu0 0
        %4659 = vmatpush1.bf16.msra.mxu0 0
        %4660 = vmatprep.subr.bf16.mxu0 0
        %4661 = vmatpush1.bf16.msra.mxu0 0
        %4662 = vmatprep.subr.bf16.mxu0 0
        %4663 = vmatpush1.bf16.msra.mxu0 0
        %4664 = vmatprep.subr.bf16.mxu0 0
        %4665 = vmatpush1.bf16.msra.mxu0 0
        %4666 = vmatprep.subr.bf16.mxu0 0
        %4667 = vmatpush1.bf16.msra.mxu0 0
        %4668 = vmatprep.subr.bf16.mxu0 0
        %4669 = vmatpush1.bf16.msra.mxu0 0
        %4670 = vmatprep.subr.bf16.mxu0 0
        %4671 = vmatpush1.bf16.msra.mxu0 0
        %4672 = vmatprep.subr.bf16.mxu0 0
        %4673 = vmatpush1.bf16.msra.mxu0 0
        %4674 = vmatprep.subr.bf16.mxu0 0
        %4675 = vmatpush1.bf16.msra.mxu0 0
        %4676 = vmatprep.subr.bf16.mxu0 0
        %4677 = vmatpush1.bf16.msra.mxu0 0
        %4678 = vmatprep.subr.bf16.mxu0 0
        %4679 = vmatpush1.bf16.msra.mxu0 0
        %4680 = vmatprep.subr.bf16.mxu0 0
        %4681 = vmatpush1.bf16.msra.mxu0 0
        %4682 = vmatprep.subr.bf16.mxu0 0
        %4683 = vmatpush1.bf16.msra.mxu0 0
        %4684 = vmatprep.subr.bf16.mxu0 0
        %4685 = vmatpush1.bf16.msra.mxu0 0
        %4686 = vmatprep.subr.bf16.mxu0 0
        %4687 = vmatpush1.bf16.msra.mxu0 0
        %4688 = vmatprep.mubr.bf16.mxu0 0
        %4689 = vmatmul.mubr.bf16.gmra.mrb[0].mxu0 %v4651
        %v4690 = vpop.f32.mrb[0].mxu0
        %v4691 = vadd.f32 0.0, %v4690
        %v4692 = vpop.f32.mrb[0].mxu0
        %v4693 = vpop.f32.mrb[0].mxu0
        %v4694 = vpop.f32.mrb[0].mxu0
        %4695 = vdwg.mxu0
        %4696 = vxpose.xlu0.b32.start [1/16] %v4369, 128
        %4697 = vxpose.xlu0.b32.cont [2/16] 0.0, 128
        %4698 = vxpose.xlu0.b32.cont [3/16] 0.0, 128
        %4699 = vxpose.xlu0.b32.cont [4/16] 0.0, 128
        %4700 = vxpose.xlu0.b32.cont [5/16] 0.0, 128
        %4701 = vxpose.xlu0.b32.cont [6/16] 0.0, 128
        %4702 = vxpose.xlu0.b32.cont [7/16] 0.0, 128
        %4703 = vxpose.xlu0.b32.cont [8/16] 0.0, 128
        %4704 = vxpose.xlu0.b32.cont [9/16] 0.0, 128
        %4705 = vxpose.xlu0.b32.cont [10/16] 0.0, 128
        %4706 = vxpose.xlu0.b32.cont [11/16] 0.0, 128
        %4707 = vxpose.xlu0.b32.cont [12/16] 0.0, 128
        %4708 = vxpose.xlu0.b32.cont [13/16] 0.0, 128
        %4709 = vxpose.xlu0.b32.cont [14/16] 0.0, 128
        %4710 = vxpose.xlu0.b32.cont [15/16] 0.0, 128
        %4711 = vxpose.xlu0.b32.end [16/16] 0.0, 128
        %v4712 = vpop.trf.xlu0
        %v4713 = vpop.trf.xlu0
        %v4714 = vpop.trf.xlu0
        %v4715 = vpop.trf.xlu0
        %v4716 = vpop.trf.xlu0
        %v4717 = vpop.trf.xlu0
        %v4718 = vpop.trf.xlu0
        %v4719 = vpop.trf.xlu0
        %v4720 = vpop.trf.xlu0
        %v4721 = vpop.trf.xlu0
        %v4722 = vpop.trf.xlu0
        %v4723 = vpop.trf.xlu0
        %v4724 = vpop.trf.xlu0
        %v4725 = vpop.trf.xlu0
        %v4726 = vpop.trf.xlu0
        %v4727 = vpop.trf.xlu0
        %4728 = vxpose.xlu0.b32.start [1/16] %v4415, 128
        %4729 = vxpose.xlu0.b32.cont [2/16] 0.0, 128
        %4730 = vxpose.xlu0.b32.cont [3/16] 0.0, 128
        %4731 = vxpose.xlu0.b32.cont [4/16] 0.0, 128
        %4732 = vxpose.xlu0.b32.cont [5/16] 0.0, 128
        %4733 = vxpose.xlu0.b32.cont [6/16] 0.0, 128
        %4734 = vxpose.xlu0.b32.cont [7/16] 0.0, 128
        %4735 = vxpose.xlu0.b32.cont [8/16] 0.0, 128
        %4736 = vxpose.xlu0.b32.cont [9/16] 0.0, 128
        %4737 = vxpose.xlu0.b32.cont [10/16] 0.0, 128
        %4738 = vxpose.xlu0.b32.cont [11/16] 0.0, 128
        %4739 = vxpose.xlu0.b32.cont [12/16] 0.0, 128
        %4740 = vxpose.xlu0.b32.cont [13/16] 0.0, 128
        %4741 = vxpose.xlu0.b32.cont [14/16] 0.0, 128
        %4742 = vxpose.xlu0.b32.cont [15/16] 0.0, 128
        %4743 = vxpose.xlu0.b32.end [16/16] 0.0, 128
        %v4744 = vpop.trf.xlu0
        %v4745 = vpop.trf.xlu0
        %v4746 = vpop.trf.xlu0
        %v4747 = vpop.trf.xlu0
        %v4748 = vpop.trf.xlu0
        %v4749 = vpop.trf.xlu0
        %v4750 = vpop.trf.xlu0
        %v4751 = vpop.trf.xlu0
        %v4752 = vpop.trf.xlu0
        %v4753 = vpop.trf.xlu0
        %v4754 = vpop.trf.xlu0
        %v4755 = vpop.trf.xlu0
        %v4756 = vpop.trf.xlu0
        %v4757 = vpop.trf.xlu0
        %v4758 = vpop.trf.xlu0
        %v4759 = vpop.trf.xlu0
        %4760 = vxpose.xlu0.b32.start [1/16] %v4461, 128
        %4761 = vxpose.xlu0.b32.cont [2/16] 0.0, 128
        %4762 = vxpose.xlu0.b32.cont [3/16] 0.0, 128
        %4763 = vxpose.xlu0.b32.cont [4/16] 0.0, 128
        %4764 = vxpose.xlu0.b32.cont [5/16] 0.0, 128
        %4765 = vxpose.xlu0.b32.cont [6/16] 0.0, 128
        %4766 = vxpose.xlu0.b32.cont [7/16] 0.0, 128
        %4767 = vxpose.xlu0.b32.cont [8/16] 0.0, 128
        %4768 = vxpose.xlu0.b32.cont [9/16] 0.0, 128
        %4769 = vxpose.xlu0.b32.cont [10/16] 0.0, 128
        %4770 = vxpose.xlu0.b32.cont [11/16] 0.0, 128
        %4771 = vxpose.xlu0.b32.cont [12/16] 0.0, 128
        %4772 = vxpose.xlu0.b32.cont [13/16] 0.0, 128
        %4773 = vxpose.xlu0.b32.cont [14/16] 0.0, 128
        %4774 = vxpose.xlu0.b32.cont [15/16] 0.0, 128
        %4775 = vxpose.xlu0.b32.end [16/16] 0.0, 128
        %v4776 = vpop.trf.xlu0
        %v4777 = vpop.trf.xlu0
        %v4778 = vpop.trf.xlu0
        %v4779 = vpop.trf.xlu0
        %v4780 = vpop.trf.xlu0
        %v4781 = vpop.trf.xlu0
        %v4782 = vpop.trf.xlu0
        %v4783 = vpop.trf.xlu0
        %v4784 = vpop.trf.xlu0
        %v4785 = vpop.trf.xlu0
        %v4786 = vpop.trf.xlu0
        %v4787 = vpop.trf.xlu0
        %v4788 = vpop.trf.xlu0
        %v4789 = vpop.trf.xlu0
        %v4790 = vpop.trf.xlu0
        %v4791 = vpop.trf.xlu0
        %4792 = vxpose.xlu0.b32.start [1/16] %v4507, 128
        %4793 = vxpose.xlu0.b32.cont [2/16] 0.0, 128
        %4794 = vxpose.xlu0.b32.cont [3/16] 0.0, 128
        %4795 = vxpose.xlu0.b32.cont [4/16] 0.0, 128
        %4796 = vxpose.xlu0.b32.cont [5/16] 0.0, 128
        %4797 = vxpose.xlu0.b32.cont [6/16] 0.0, 128
        %4798 = vxpose.xlu0.b32.cont [7/16] 0.0, 128
        %4799 = vxpose.xlu0.b32.cont [8/16] 0.0, 128
        %4800 = vxpose.xlu0.b32.cont [9/16] 0.0, 128
        %4801 = vxpose.xlu0.b32.cont [10/16] 0.0, 128
        %4802 = vxpose.xlu0.b32.cont [11/16] 0.0, 128
        %4803 = vxpose.xlu0.b32.cont [12/16] 0.0, 128
        %4804 = vxpose.xlu0.b32.cont [13/16] 0.0, 128
        %4805 = vxpose.xlu0.b32.cont [14/16] 0.0, 128
        %4806 = vxpose.xlu0.b32.cont [15/16] 0.0, 128
        %4807 = vxpose.xlu0.b32.end [16/16] 0.0, 128
        %v4808 = vpop.trf.xlu0
        %v4809 = vpop.trf.xlu0
        %v4810 = vpop.trf.xlu0
        %v4811 = vpop.trf.xlu0
        %v4812 = vpop.trf.xlu0
        %v4813 = vpop.trf.xlu0
        %v4814 = vpop.trf.xlu0
        %v4815 = vpop.trf.xlu0
        %v4816 = vpop.trf.xlu0
        %v4817 = vpop.trf.xlu0
        %v4818 = vpop.trf.xlu0
        %v4819 = vpop.trf.xlu0
        %v4820 = vpop.trf.xlu0
        %v4821 = vpop.trf.xlu0
        %v4822 = vpop.trf.xlu0
        %v4823 = vpop.trf.xlu0
        %4824 = vxpose.xlu0.b32.start [1/16] %v4553, 128
        %4825 = vxpose.xlu0.b32.cont [2/16] 0.0, 128
        %4826 = vxpose.xlu0.b32.cont [3/16] 0.0, 128
        %4827 = vxpose.xlu0.b32.cont [4/16] 0.0, 128
        %4828 = vxpose.xlu0.b32.cont [5/16] 0.0, 128
        %4829 = vxpose.xlu0.b32.cont [6/16] 0.0, 128
        %4830 = vxpose.xlu0.b32.cont [7/16] 0.0, 128
        %4831 = vxpose.xlu0.b32.cont [8/16] 0.0, 128
        %4832 = vxpose.xlu0.b32.cont [9/16] 0.0, 128
        %4833 = vxpose.xlu0.b32.cont [10/16] 0.0, 128
        %4834 = vxpose.xlu0.b32.cont [11/16] 0.0, 128
        %4835 = vxpose.xlu0.b32.cont [12/16] 0.0, 128
        %4836 = vxpose.xlu0.b32.cont [13/16] 0.0, 128
        %4837 = vxpose.xlu0.b32.cont [14/16] 0.0, 128
        %4838 = vxpose.xlu0.b32.cont [15/16] 0.0, 128
        %4839 = vxpose.xlu0.b32.end [16/16] 0.0, 128
        %v4840 = vpop.trf.xlu0
        %v4841 = vpop.trf.xlu0
        %v4842 = vpop.trf.xlu0
        %v4843 = vpop.trf.xlu0
        %v4844 = vpop.trf.xlu0
        %v4845 = vpop.trf.xlu0
        %v4846 = vpop.trf.xlu0
        %v4847 = vpop.trf.xlu0
        %v4848 = vpop.trf.xlu0
        %v4849 = vpop.trf.xlu0
        %v4850 = vpop.trf.xlu0
        %v4851 = vpop.trf.xlu0
        %v4852 = vpop.trf.xlu0
        %v4853 = vpop.trf.xlu0
        %v4854 = vpop.trf.xlu0
        %v4855 = vpop.trf.xlu0
        %4856 = vxpose.xlu0.b32.start [1/16] %v4599, 128
        %4857 = vxpose.xlu0.b32.cont [2/16] 0.0, 128
        %4858 = vxpose.xlu0.b32.cont [3/16] 0.0, 128
        %4859 = vxpose.xlu0.b32.cont [4/16] 0.0, 128
        %4860 = vxpose.xlu0.b32.cont [5/16] 0.0, 128
        %4861 = vxpose.xlu0.b32.cont [6/16] 0.0, 128
        %4862 = vxpose.xlu0.b32.cont [7/16] 0.0, 128
        %4863 = vxpose.xlu0.b32.cont [8/16] 0.0, 128
        %4864 = vxpose.xlu0.b32.cont [9/16] 0.0, 128
        %4865 = vxpose.xlu0.b32.cont [10/16] 0.0, 128
        %4866 = vxpose.xlu0.b32.cont [11/16] 0.0, 128
        %4867 = vxpose.xlu0.b32.cont [12/16] 0.0, 128
        %4868 = vxpose.xlu0.b32.cont [13/16] 0.0, 128
        %4869 = vxpose.xlu0.b32.cont [14/16] 0.0, 128
        %4870 = vxpose.xlu0.b32.cont [15/16] 0.0, 128
        %4871 = vxpose.xlu0.b32.end [16/16] 0.0, 128
        %v4872 = vpop.trf.xlu0
        %v4873 = vpop.trf.xlu0
        %v4874 = vpop.trf.xlu0
        %v4875 = vpop.trf.xlu0
        %v4876 = vpop.trf.xlu0
        %v4877 = vpop.trf.xlu0
        %v4878 = vpop.trf.xlu0
        %v4879 = vpop.trf.xlu0
        %v4880 = vpop.trf.xlu0
        %v4881 = vpop.trf.xlu0
        %v4882 = vpop.trf.xlu0
        %v4883 = vpop.trf.xlu0
        %v4884 = vpop.trf.xlu0
        %v4885 = vpop.trf.xlu0
        %v4886 = vpop.trf.xlu0
        %v4887 = vpop.trf.xlu0
        %4888 = vxpose.xlu0.b32.start [1/16] %v4645, 128
        %4889 = vxpose.xlu0.b32.cont [2/16] 0.0, 128
        %4890 = vxpose.xlu0.b32.cont [3/16] 0.0, 128
        %4891 = vxpose.xlu0.b32.cont [4/16] 0.0, 128
        %4892 = vxpose.xlu0.b32.cont [5/16] 0.0, 128
        %4893 = vxpose.xlu0.b32.cont [6/16] 0.0, 128
        %4894 = vxpose.xlu0.b32.cont [7/16] 0.0, 128
        %4895 = vxpose.xlu0.b32.cont [8/16] 0.0, 128
        %4896 = vxpose.xlu0.b32.cont [9/16] 0.0, 128
        %4897 = vxpose.xlu0.b32.cont [10/16] 0.0, 128
        %4898 = vxpose.xlu0.b32.cont [11/16] 0.0, 128
        %4899 = vxpose.xlu0.b32.cont [12/16] 0.0, 128
        %4900 = vxpose.xlu0.b32.cont [13/16] 0.0, 128
        %4901 = vxpose.xlu0.b32.cont [14/16] 0.0, 128
        %4902 = vxpose.xlu0.b32.cont [15/16] 0.0, 128
        %4903 = vxpose.xlu0.b32.end [16/16] 0.0, 128
        %v4904 = vpop.trf.xlu0
        %v4905 = vpop.trf.xlu0
        %v4906 = vpop.trf.xlu0
        %v4907 = vpop.trf.xlu0
        %v4908 = vpop.trf.xlu0
        %v4909 = vpop.trf.xlu0
        %v4910 = vpop.trf.xlu0
        %v4911 = vpop.trf.xlu0
        %v4912 = vpop.trf.xlu0
        %v4913 = vpop.trf.xlu0
        %v4914 = vpop.trf.xlu0
        %v4915 = vpop.trf.xlu0
        %v4916 = vpop.trf.xlu0
        %v4917 = vpop.trf.xlu0
        %v4918 = vpop.trf.xlu0
        %v4919 = vpop.trf.xlu0
        %4920 = vxpose.xlu0.b32.start [1/16] %v4691, 128
        %4921 = vxpose.xlu0.b32.cont [2/16] 0.0, 128
        %4922 = vxpose.xlu0.b32.cont [3/16] 0.0, 128
        %4923 = vxpose.xlu0.b32.cont [4/16] 0.0, 128
        %4924 = vxpose.xlu0.b32.cont [5/16] 0.0, 128
        %4925 = vxpose.xlu0.b32.cont [6/16] 0.0, 128
        %4926 = vxpose.xlu0.b32.cont [7/16] 0.0, 128
        %4927 = vxpose.xlu0.b32.cont [8/16] 0.0, 128
        %4928 = vxpose.xlu0.b32.cont [9/16] 0.0, 128
        %4929 = vxpose.xlu0.b32.cont [10/16] 0.0, 128
        %4930 = vxpose.xlu0.b32.cont [11/16] 0.0, 128
        %4931 = vxpose.xlu0.b32.cont [12/16] 0.0, 128
        %4932 = vxpose.xlu0.b32.cont [13/16] 0.0, 128
        %4933 = vxpose.xlu0.b32.cont [14/16] 0.0, 128
        %4934 = vxpose.xlu0.b32.cont [15/16] 0.0, 128
        %4935 = vxpose.xlu0.b32.end [16/16] 0.0, 128
        %v4936 = vpop.trf.xlu0
        %v4937 = vpop.trf.xlu0
        %v4938 = vpop.trf.xlu0
        %v4939 = vpop.trf.xlu0
        %v4940 = vpop.trf.xlu0
        %v4941 = vpop.trf.xlu0
        %v4942 = vpop.trf.xlu0
        %v4943 = vpop.trf.xlu0
        %v4944 = vpop.trf.xlu0
        %v4945 = vpop.trf.xlu0
        %v4946 = vpop.trf.xlu0
        %v4947 = vpop.trf.xlu0
        %v4948 = vpop.trf.xlu0
        %v4949 = vpop.trf.xlu0
        %v4950 = vpop.trf.xlu0
        %v4951 = vpop.trf.xlu0
        %4952 = vxpose.xlu0.b32.start [1/16] %v4712, 128
        %4953 = vxpose.xlu0.b32.cont [2/16] %v4713, 128
        %4954 = vxpose.xlu0.b32.cont [3/16] %v4744, 128
        %4955 = vxpose.xlu0.b32.cont [4/16] %v4745, 128
        %4956 = vxpose.xlu0.b32.cont [5/16] %v4776, 128
        %4957 = vxpose.xlu0.b32.cont [6/16] %v4777, 128
        %4958 = vxpose.xlu0.b32.cont [7/16] %v4808, 128
        %4959 = vxpose.xlu0.b32.cont [8/16] %v4809, 128
        %4960 = vxpose.xlu0.b32.cont [9/16] %v4840, 128
        %4961 = vxpose.xlu0.b32.cont [10/16] %v4841, 128
        %4962 = vxpose.xlu0.b32.cont [11/16] %v4872, 128
        %4963 = vxpose.xlu0.b32.cont [12/16] %v4873, 128
        %4964 = vxpose.xlu0.b32.cont [13/16] %v4904, 128
        %4965 = vxpose.xlu0.b32.cont [14/16] %v4905, 128
        %4966 = vxpose.xlu0.b32.cont [15/16] %v4936, 128
        %4967 = vxpose.xlu0.b32.end [16/16] %v4937, 128
        %v4968 = vpop.trf.xlu0
        %v4969 = vpop.trf.xlu0
        %v4970 = vpop.trf.xlu0
        %v4971 = vpop.trf.xlu0
        %v4972 = vpop.trf.xlu0
        %v4973 = vpop.trf.xlu0
        %v4974 = vpop.trf.xlu0
        %v4975 = vpop.trf.xlu0
        %v4976 = vpop.trf.xlu0
        %v4977 = vpop.trf.xlu0
        %v4978 = vpop.trf.xlu0
        %v4979 = vpop.trf.xlu0
        %v4980 = vpop.trf.xlu0
        %v4981 = vpop.trf.xlu0
        %v4982 = vpop.trf.xlu0
        %v4983 = vpop.trf.xlu0
        %v4984 = vpack.c.bf16 %v4968, %v2958
        %v4985 = vld [vmem:[#allocation11] sm:$0xf]
        %v4986 = vld [vmem:[#allocation11 + $0x4] sm:$0xf]
        %v4987 = vld [vmem:[#allocation11 + $0x8] sm:$0xf]
        %v4988 = vld [vmem:[#allocation11 + $0xc] sm:$0xf]
        %v4989 = vld [vmem:[#allocation11 + $0x10] sm:$0xf]
        %v4990 = vld [vmem:[#allocation11 + $0x14] sm:$0xf]
        %v4991 = vld [vmem:[#allocation11 + $0x18] sm:$0xf]
        %v4992 = vld [vmem:[#allocation11 + $0x1c] sm:$0xf]
        %v4993 = vld [vmem:[#allocation11 + $0x20] sm:$0xf]
        %v4994 = vld [vmem:[#allocation11 + $0x24] sm:$0xf]
        %v4995 = vld [vmem:[#allocation11 + $0x28] sm:$0xf]
        %v4996 = vld [vmem:[#allocation11 + $0x2c] sm:$0xf]
        %v4997 = vld [vmem:[#allocation11 + $0x30] sm:$0xf]
        %v4998 = vld [vmem:[#allocation11 + $0x34] sm:$0xf]
        %v4999 = vld [vmem:[#allocation11 + $0x38] sm:$0xf]
        %v5000 = vld [vmem:[#allocation11 + $0x3c] sm:$0xf]
        %v5017 = vunpack.c.l.b16 %v4985
        %v5018 = vunpack.c.l.b16 %v4986
        %v5019 = vunpack.c.l.b16 %v4987
        %v5020 = vunpack.c.l.b16 %v4988
        %v5021 = vunpack.c.l.b16 %v4989
        %v5022 = vunpack.c.l.b16 %v4990
        %v5023 = vunpack.c.l.b16 %v4991
        %v5024 = vunpack.c.l.b16 %v4992
        %v5025 = vunpack.c.l.b16 %v4993
        %v5026 = vunpack.c.l.b16 %v4994
        %v5027 = vunpack.c.l.b16 %v4995
        %v5028 = vunpack.c.l.b16 %v4996
        %v5029 = vunpack.c.l.b16 %v4997
        %v5030 = vunpack.c.l.b16 %v4998
        %v5031 = vunpack.c.l.b16 %v4999
        %v5032 = vunpack.c.l.b16 %v5000
        %v5033 = vpack.c.b16 %v5018, %v5017
        %v5034 = vpack.c.b16 %v5020, %v5019
        %v5035 = vpack.c.b16 %v5022, %v5021
        %v5036 = vpack.c.b16 %v5024, %v5023
        %v5037 = vpack.c.b16 %v5026, %v5025
        %v5038 = vpack.c.b16 %v5028, %v5027
        %v5039 = vpack.c.b16 %v5030, %v5029
        %v5040 = vpack.c.b16 %v5032, %v5031
        %5049 = vmatprep.subr.bf16.mxu0 0
        %5050 = vmatpush1.bf16.msra.mxu0 %v5033
        %5051 = vmatprep.subr.bf16.mxu0 0
        %5052 = vmatpush1.bf16.msra.mxu0 %v5034
        %5053 = vmatprep.subr.bf16.mxu0 0
        %5054 = vmatpush1.bf16.msra.mxu0 %v5035
        %5055 = vmatprep.subr.bf16.mxu0 0
        %5056 = vmatpush1.bf16.msra.mxu0 %v5036
        %5057 = vmatprep.subr.bf16.mxu0 0
        %5058 = vmatpush1.bf16.msra.mxu0 %v5037
        %5059 = vmatprep.subr.bf16.mxu0 0
        %5060 = vmatpush1.bf16.msra.mxu0 %v5038
        %5061 = vmatprep.subr.bf16.mxu0 0
        %5062 = vmatpush1.bf16.msra.mxu0 %v5039
        %5063 = vmatprep.subr.bf16.mxu0 0
        %5064 = vmatpush1.bf16.msra.mxu0 %v5040
        %5065 = vmatprep.subr.bf16.mxu0 0
        %5066 = vmatpush1.bf16.msra.mxu0 0
        %5067 = vmatprep.subr.bf16.mxu0 0
        %5068 = vmatpush1.bf16.msra.mxu0 0
        %5069 = vmatprep.subr.bf16.mxu0 0
        %5070 = vmatpush1.bf16.msra.mxu0 0
        %5071 = vmatprep.subr.bf16.mxu0 0
        %5072 = vmatpush1.bf16.msra.mxu0 0
        %5073 = vmatprep.subr.bf16.mxu0 0
        %5074 = vmatpush1.bf16.msra.mxu0 0
        %5075 = vmatprep.subr.bf16.mxu0 0
        %5076 = vmatpush1.bf16.msra.mxu0 0
        %5077 = vmatprep.subr.bf16.mxu0 0
        %5078 = vmatpush1.bf16.msra.mxu0 0
        %5079 = vmatprep.subr.bf16.mxu0 0
        %5080 = vmatpush1.bf16.msra.mxu0 0
        %5081 = vmatprep.mubr.bf16.mxu0 0
        %5082 = vmatmul.mubr.bf16.gmra.mrb[0].mxu0 %v4984
        %v5083 = vpop.f32.mrb[0].mxu0
        %v5084 = vadd.f32 %v710, %v5083
        %v5085 = vpop.f32.mrb[0].mxu0
        %v5086 = vpop.f32.mrb[0].mxu0
        %v5087 = vadd.f32 %v711, %v5086
        %v5088 = vpop.f32.mrb[0].mxu0
        %5089 = vdwg.mxu0
        %v5090 = vld [vmem:[%s13] sm:$0x1]
        %v5091 = vld [vmem:[%s13 + $0x1] sm:$0x1]
        %5092 = vadd.xlane.f32.xlu0 %v5084
        %v5093 = vpop.xlane.xlu0 %5092
        %5094 = vadd.xlane.f32.xlu0 %v5087
        %v5095 = vpop.xlane.xlu0 %5094
        %v5096 = vrcp.pop 128.0
        %v5097 = vmul.f32 %v5093, %v5096
        %v5098 = vmul.f32 %v5095, %v5096
        %v5099 = vsub.f32 %v5084, %v5097
        %v5100 = vsub.f32 %v5087, %v5098
        %v5101 = vmul.f32 %v5099, %v5099
        %v5102 = vmul.f32 %v5100, %v5100
        %5103 = vadd.xlane.f32.xlu0 %v5101
        %v5104 = vpop.xlane.xlu0 %5103
        %5105 = vadd.xlane.f32.xlu0 %v5102
        %v5106 = vpop.xlane.xlu0 %5105
        %v5107 = vmul.f32 %v5104, %v5096
        %v5108 = vmul.f32 %v5106, %v5096
        %v5109 = vadd.f32 %v5107, 1e-06
        %v5110 = vadd.f32 %v5108, 1e-06
        %v5111 = vrsqrt.pop %v5109
        %v5112 = vrsqrt.pop %v5110
        %v5113 = vmul.f32 %v5099, %v5111
        %v5114 = vmul.f32 %v5100, %v5112
        %v5115 = vlaneseq
        %v5116 = vshrl.u32 %v5115, 7
        %v5117 = vsub.s32 0, %v5116
        %v5118 = vrot.slane %v5090, %v5117
        %v5119 = vmul.f32 %v5113, %v5118
        %v5120 = vmul.f32 %v5114, %v5118
        %v5121 = vlaneseq
        %v5122 = vshrl.u32 %v5121, 7
        %v5123 = vsub.s32 0, %v5122
        %v5124 = vrot.slane %v5091, %v5123
        %v5125 = vadd.f32 %v5119, %v5124
        %v5126 = vadd.f32 %v5120, %v5124
        %v5127 = vpack.c.bf16 %v5126, %v5125
        %v5128 = vld [vmem:[#allocation13] sm:$0xf]
        %v5129 = vld [vmem:[#allocation13 + $0x4] sm:$0xf]
        %v5130 = vld [vmem:[#allocation13 + $0x8] sm:$0xf]
        %v5131 = vld [vmem:[#allocation13 + $0xc] sm:$0xf]
        %v5132 = vld [vmem:[#allocation13 + $0x10] sm:$0xf]
        %v5133 = vld [vmem:[#allocation13 + $0x14] sm:$0xf]
        %v5134 = vld [vmem:[#allocation13 + $0x18] sm:$0xf]
        %v5135 = vld [vmem:[#allocation13 + $0x1c] sm:$0xf]
        %v5136 = vld [vmem:[#allocation13 + $0x20] sm:$0xf]
        %v5137 = vld [vmem:[#allocation13 + $0x24] sm:$0xf]
        %v5138 = vld [vmem:[#allocation13 + $0x28] sm:$0xf]
        %v5139 = vld [vmem:[#allocation13 + $0x2c] sm:$0xf]
        %v5140 = vld [vmem:[#allocation13 + $0x30] sm:$0xf]
        %v5141 = vld [vmem:[#allocation13 + $0x34] sm:$0xf]
        %v5142 = vld [vmem:[#allocation13 + $0x38] sm:$0xf]
        %v5143 = vld [vmem:[#allocation13 + $0x3c] sm:$0xf]
        %v5160 = vunpack.c.l.b16 %v5128
        %v5161 = vunpack.c.l.b16 %v5129
        %v5162 = vunpack.c.l.b16 %v5130
        %v5163 = vunpack.c.l.b16 %v5131
        %v5164 = vunpack.c.l.b16 %v5132
        %v5165 = vunpack.c.l.b16 %v5133
        %v5166 = vunpack.c.l.b16 %v5134
        %v5167 = vunpack.c.l.b16 %v5135
        %v5168 = vunpack.c.l.b16 %v5136
        %v5169 = vunpack.c.l.b16 %v5137
        %v5170 = vunpack.c.l.b16 %v5138
        %v5171 = vunpack.c.l.b16 %v5139
        %v5172 = vunpack.c.l.b16 %v5140
        %v5173 = vunpack.c.l.b16 %v5141
        %v5174 = vunpack.c.l.b16 %v5142
        %v5175 = vunpack.c.l.b16 %v5143
        %v5176 = vpack.c.b16 %v5161, %v5160
        %v5177 = vpack.c.b16 %v5163, %v5162
        %v5178 = vpack.c.b16 %v5165, %v5164
        %v5179 = vpack.c.b16 %v5167, %v5166
        %v5180 = vpack.c.b16 %v5169, %v5168
        %v5181 = vpack.c.b16 %v5171, %v5170
        %v5182 = vpack.c.b16 %v5173, %v5172
        %v5183 = vpack.c.b16 %v5175, %v5174
        %5192 = vmatprep.subr.bf16.mxu0 0
        %5193 = vmatpush1.bf16.msra.mxu0 %v5176
        %5194 = vmatprep.subr.bf16.mxu0 0
        %5195 = vmatpush1.bf16.msra.mxu0 %v5177
        %5196 = vmatprep.subr.bf16.mxu0 0
        %5197 = vmatpush1.bf16.msra.mxu0 %v5178
        %5198 = vmatprep.subr.bf16.mxu0 0
        %5199 = vmatpush1.bf16.msra.mxu0 %v5179
        %5200 = vmatprep.subr.bf16.mxu0 0
        %5201 = vmatpush1.bf16.msra.mxu0 %v5180
        %5202 = vmatprep.subr.bf16.mxu0 0
        %5203 = vmatpush1.bf16.msra.mxu0 %v5181
        %5204 = vmatprep.subr.bf16.mxu0 0
        %5205 = vmatpush1.bf16.msra.mxu0 %v5182
        %5206 = vmatprep.subr.bf16.mxu0 0
        %5207 = vmatpush1.bf16.msra.mxu0 %v5183
        %5208 = vmatprep.subr.bf16.mxu0 0
        %5209 = vmatpush1.bf16.msra.mxu0 0
        %5210 = vmatprep.subr.bf16.mxu0 0
        %5211 = vmatpush1.bf16.msra.mxu0 0
        %5212 = vmatprep.subr.bf16.mxu0 0
        %5213 = vmatpush1.bf16.msra.mxu0 0
        %5214 = vmatprep.subr.bf16.mxu0 0
        %5215 = vmatpush1.bf16.msra.mxu0 0
        %5216 = vmatprep.subr.bf16.mxu0 0
        %5217 = vmatpush1.bf16.msra.mxu0 0
        %5218 = vmatprep.subr.bf16.mxu0 0
        %5219 = vmatpush1.bf16.msra.mxu0 0
        %5220 = vmatprep.subr.bf16.mxu0 0
        %5221 = vmatpush1.bf16.msra.mxu0 0
        %5222 = vmatprep.subr.bf16.mxu0 0
        %5223 = vmatpush1.bf16.msra.mxu0 0
        %5224 = vmatprep.mubr.bf16.mxu0 0
        %5225 = vmatmul.mubr.bf16.gmra.mrb[0].mxu0 %v5127
        %v5226 = vpop.f32.mrb[0].mxu0
        %v5227 = vadd.f32 0.0, %v5226
        %v5228 = vpop.f32.mrb[0].mxu0
        %v5229 = vpop.f32.mrb[0].mxu0
        %v5230 = vadd.f32 0.0, %v5229
        %v5231 = vpop.f32.mrb[0].mxu0
        %5232 = vdwg.mxu0
        %v5233 = vmul.f32 %v5227, 0.25
        %v5234 = vmul.f32 %v5230, 0.25
        %v5235 = vld [vmem:[#allocation14] sm:$0xff]
        %v5236 = vld [vmem:[#allocation14 + $0x8] sm:$0xff]
        %v5237 = vld [vmem:[#allocation14 + $0x10] sm:$0xff]
        %v5238 = vld [vmem:[#allocation14 + $0x18] sm:$0xff]
        %v5239 = vld [vmem:[#allocation14 + $0x20] sm:$0xff]
        %v5240 = vld [vmem:[#allocation14 + $0x28] sm:$0xff]
        %v5241 = vld [vmem:[#allocation14 + $0x30] sm:$0xff]
        %v5242 = vld [vmem:[#allocation14 + $0x38] sm:$0xff]
        %v5243 = vld [vmem:[#allocation14 + $0x40] sm:$0xff]
        %v5244 = vld [vmem:[#allocation14 + $0x48] sm:$0xff]
        %v5245 = vld [vmem:[#allocation14 + $0x50] sm:$0xff]
        %v5246 = vld [vmem:[#allocation14 + $0x58] sm:$0xff]
        %v5247 = vld [vmem:[#allocation14 + $0x60] sm:$0xff]
        %v5248 = vld [vmem:[#allocation14 + $0x68] sm:$0xff]
        %v5249 = vld [vmem:[#allocation14 + $0x70] sm:$0xff]
        %v5250 = vld [vmem:[#allocation14 + $0x78] sm:$0xff]
        %v5267 = vunpack.c.l.b16 %v5235
        %v5268 = vunpack.c.h.b16 %v5235
        %v5269 = vunpack.c.l.b16 %v5236
        %v5270 = vunpack.c.h.b16 %v5236
        %v5271 = vunpack.c.l.b16 %v5237
        %v5272 = vunpack.c.h.b16 %v5237
        %v5273 = vunpack.c.l.b16 %v5238
        %v5274 = vunpack.c.h.b16 %v5238
        %v5275 = vunpack.c.l.b16 %v5239
        %v5276 = vunpack.c.h.b16 %v5239
        %v5277 = vunpack.c.l.b16 %v5240
        %v5278 = vunpack.c.h.b16 %v5240
        %v5279 = vunpack.c.l.b16 %v5241
        %v5280 = vunpack.c.h.b16 %v5241
        %v5281 = vunpack.c.l.b16 %v5242
        %v5282 = vunpack.c.h.b16 %v5242
        %v5283 = vunpack.c.l.b16 %v5243
        %v5284 = vunpack.c.h.b16 %v5243
        %v5285 = vunpack.c.l.b16 %v5244
        %v5286 = vunpack.c.h.b16 %v5244
        %v5287 = vunpack.c.l.b16 %v5245
        %v5288 = vunpack.c.h.b16 %v5245
        %v5289 = vunpack.c.l.b16 %v5246
        %v5290 = vunpack.c.h.b16 %v5246
        %v5291 = vunpack.c.l.b16 %v5247
        %v5292 = vunpack.c.h.b16 %v5247
        %v5293 = vunpack.c.l.b16 %v5248
        %v5294 = vunpack.c.h.b16 %v5248
        %v5295 = vunpack.c.l.b16 %v5249
        %v5296 = vunpack.c.h.b16 %v5249
        %v5297 = vunpack.c.l.b16 %v5250
        %v5298 = vunpack.c.h.b16 %v5250
        %v5299 = vpack.c.b16 %v5269, %v5267
        %v5300 = vpack.c.b16 %v5270, %v5268
        %v5301 = vpack.c.b16 %v5273, %v5271
        %v5302 = vpack.c.b16 %v5274, %v5272
        %v5303 = vpack.c.b16 %v5277, %v5275
        %v5304 = vpack.c.b16 %v5278, %v5276
        %v5305 = vpack.c.b16 %v5281, %v5279
        %v5306 = vpack.c.b16 %v5282, %v5280
        %v5307 = vpack.c.b16 %v5285, %v5283
        %v5308 = vpack.c.b16 %v5286, %v5284
        %v5309 = vpack.c.b16 %v5289, %v5287
        %v5310 = vpack.c.b16 %v5290, %v5288
        %v5311 = vpack.c.b16 %v5293, %v5291
        %v5312 = vpack.c.b16 %v5294, %v5292
        %v5313 = vpack.c.b16 %v5297, %v5295
        %v5314 = vpack.c.b16 %v5298, %v5296
        %5331 = vmatprep.subr.bf16.mxu0 %v5300
        %5332 = vmatpush1.bf16.msra.mxu0 %v5299
        %5333 = vmatprep.subr.bf16.mxu0 %v5302
        %5334 = vmatpush1.bf16.msra.mxu0 %v5301
        %5335 = vmatprep.subr.bf16.mxu0 %v5304
        %5336 = vmatpush1.bf16.msra.mxu0 %v5303
        %5337 = vmatprep.subr.bf16.mxu0 %v5306
        %5338 = vmatpush1.bf16.msra.mxu0 %v5305
        %5339 = vmatprep.subr.bf16.mxu0 %v5308
        %5340 = vmatpush1.bf16.msra.mxu0 %v5307
        %5341 = vmatprep.subr.bf16.mxu0 %v5310
        %5342 = vmatpush1.bf16.msra.mxu0 %v5309
        %5343 = vmatprep.subr.bf16.mxu0 %v5312
        %5344 = vmatpush1.bf16.msra.mxu0 %v5311
        %5345 = vmatprep.subr.bf16.mxu0 %v5314
        %5346 = vmatpush1.bf16.msra.mxu0 %v5313
        %5347 = vmatprep.subr.bf16.mxu0 0
        %5348 = vmatpush1.bf16.msra.mxu0 0
        %5349 = vmatprep.subr.bf16.mxu0 0
        %5350 = vmatpush1.bf16.msra.mxu0 0
        %5351 = vmatprep.subr.bf16.mxu0 0
        %5352 = vmatpush1.bf16.msra.mxu0 0
        %5353 = vmatprep.subr.bf16.mxu0 0
        %5354 = vmatpush1.bf16.msra.mxu0 0
        %5355 = vmatprep.subr.bf16.mxu0 0
        %5356 = vmatpush1.bf16.msra.mxu0 0
        %5357 = vmatprep.subr.bf16.mxu0 0
        %5358 = vmatpush1.bf16.msra.mxu0 0
        %5359 = vmatprep.subr.bf16.mxu0 0
        %5360 = vmatpush1.bf16.msra.mxu0 0
        %5361 = vmatprep.subr.bf16.mxu0 0
        %5362 = vmatpush1.bf16.msra.mxu0 0
        %5363 = vmatprep.mubr.bf16.mxu0 0
        %5364 = vmatmul.mubr.bf16.gmra.mrb[0].mxu0 %v714
        %v5365 = vpop.f32.mrb[0].mxu0
        %v5366 = vadd.f32 0.0, %v5365
        %v5367 = vpop.f32.mrb[0].mxu0
        %v5368 = vadd.f32 0.0, %v5367
        %v5369 = vpop.f32.mrb[0].mxu0
        %v5370 = vadd.f32 0.0, %v5369
        %v5371 = vpop.f32.mrb[0].mxu0
        %v5372 = vadd.f32 0.0, %v5371
        %5373 = vdwg.mxu0
        %5374 = vxpose.xlu0.b32.start [1/16] %v5233, 128
        %5375 = vxpose.xlu0.b32.cont [2/16] 0.0, 128
        %5376 = vxpose.xlu0.b32.cont [3/16] 0.0, 128
        %5377 = vxpose.xlu0.b32.cont [4/16] 0.0, 128
        %5378 = vxpose.xlu0.b32.cont [5/16] 0.0, 128
        %5379 = vxpose.xlu0.b32.cont [6/16] 0.0, 128
        %5380 = vxpose.xlu0.b32.cont [7/16] 0.0, 128
        %5381 = vxpose.xlu0.b32.cont [8/16] 0.0, 128
        %5382 = vxpose.xlu0.b32.cont [9/16] 0.0, 128
        %5383 = vxpose.xlu0.b32.cont [10/16] 0.0, 128
        %5384 = vxpose.xlu0.b32.cont [11/16] 0.0, 128
        %5385 = vxpose.xlu0.b32.cont [12/16] 0.0, 128
        %5386 = vxpose.xlu0.b32.cont [13/16] 0.0, 128
        %5387 = vxpose.xlu0.b32.cont [14/16] 0.0, 128
        %5388 = vxpose.xlu0.b32.cont [15/16] 0.0, 128
        %5389 = vxpose.xlu0.b32.end [16/16] 0.0, 128
        %v5390 = vpop.trf.xlu0
        %v5391 = vpop.trf.xlu0
        %v5392 = vpop.trf.xlu0
        %v5393 = vpop.trf.xlu0
        %v5394 = vpop.trf.xlu0
        %v5395 = vpop.trf.xlu0
        %v5396 = vpop.trf.xlu0
        %v5397 = vpop.trf.xlu0
        %v5398 = vpop.trf.xlu0
        %v5399 = vpop.trf.xlu0
        %v5400 = vpop.trf.xlu0
        %v5401 = vpop.trf.xlu0
        %v5402 = vpop.trf.xlu0
        %v5403 = vpop.trf.xlu0
        %v5404 = vpop.trf.xlu0
        %v5405 = vpop.trf.xlu0
        %5406 = vxpose.xlu0.b32.start [1/16] %v5390, 128
        %5407 = vxpose.xlu0.b32.cont [2/16] %v5391, 128
        %5408 = vxpose.xlu0.b32.cont [3/16] 0.0, 128
        %5409 = vxpose.xlu0.b32.cont [4/16] 0.0, 128
        %5410 = vxpose.xlu0.b32.cont [5/16] 0.0, 128
        %5411 = vxpose.xlu0.b32.cont [6/16] 0.0, 128
        %5412 = vxpose.xlu0.b32.cont [7/16] 0.0, 128
        %5413 = vxpose.xlu0.b32.cont [8/16] 0.0, 128
        %5414 = vxpose.xlu0.b32.cont [9/16] 0.0, 128
        %5415 = vxpose.xlu0.b32.cont [10/16] 0.0, 128
        %5416 = vxpose.xlu0.b32.cont [11/16] 0.0, 128
        %5417 = vxpose.xlu0.b32.cont [12/16] 0.0, 128
        %5418 = vxpose.xlu0.b32.cont [13/16] 0.0, 128
        %5419 = vxpose.xlu0.b32.cont [14/16] 0.0, 128
        %5420 = vxpose.xlu0.b32.cont [15/16] 0.0, 128
        %5421 = vxpose.xlu0.b32.end [16/16] 0.0, 128
        %v5422 = vpop.trf.xlu0
        %v5423 = vpop.trf.xlu0
        %v5424 = vpop.trf.xlu0
        %v5425 = vpop.trf.xlu0
        %v5426 = vpop.trf.xlu0
        %v5427 = vpop.trf.xlu0
        %v5428 = vpop.trf.xlu0
        %v5429 = vpop.trf.xlu0
        %v5430 = vpop.trf.xlu0
        %v5431 = vpop.trf.xlu0
        %v5432 = vpop.trf.xlu0
        %v5433 = vpop.trf.xlu0
        %v5434 = vpop.trf.xlu0
        %v5435 = vpop.trf.xlu0
        %v5436 = vpop.trf.xlu0
        %v5437 = vpop.trf.xlu0
        %5438 = vxpose.xlu0.b32.start [1/16] %v5392, 128
        %5439 = vxpose.xlu0.b32.cont [2/16] %v5393, 128
        %5440 = vxpose.xlu0.b32.cont [3/16] 0.0, 128
        %5441 = vxpose.xlu0.b32.cont [4/16] 0.0, 128
        %5442 = vxpose.xlu0.b32.cont [5/16] 0.0, 128
        %5443 = vxpose.xlu0.b32.cont [6/16] 0.0, 128
        %5444 = vxpose.xlu0.b32.cont [7/16] 0.0, 128
        %5445 = vxpose.xlu0.b32.cont [8/16] 0.0, 128
        %5446 = vxpose.xlu0.b32.cont [9/16] 0.0, 128
        %5447 = vxpose.xlu0.b32.cont [10/16] 0.0, 128
        %5448 = vxpose.xlu0.b32.cont [11/16] 0.0, 128
        %5449 = vxpose.xlu0.b32.cont [12/16] 0.0, 128
        %5450 = vxpose.xlu0.b32.cont [13/16] 0.0, 128
        %5451 = vxpose.xlu0.b32.cont [14/16] 0.0, 128
        %5452 = vxpose.xlu0.b32.cont [15/16] 0.0, 128
        %5453 = vxpose.xlu0.b32.end [16/16] 0.0, 128
        %v5454 = vpop.trf.xlu0
        %v5455 = vpop.trf.xlu0
        %v5456 = vpop.trf.xlu0
        %v5457 = vpop.trf.xlu0
        %v5458 = vpop.trf.xlu0
        %v5459 = vpop.trf.xlu0
        %v5460 = vpop.trf.xlu0
        %v5461 = vpop.trf.xlu0
        %v5462 = vpop.trf.xlu0
        %v5463 = vpop.trf.xlu0
        %v5464 = vpop.trf.xlu0
        %v5465 = vpop.trf.xlu0
        %v5466 = vpop.trf.xlu0
        %v5467 = vpop.trf.xlu0
        %v5468 = vpop.trf.xlu0
        %v5469 = vpop.trf.xlu0
        %5470 = vxpose.xlu0.b32.start [1/16] %v5394, 128
        %5471 = vxpose.xlu0.b32.cont [2/16] %v5395, 128
        %5472 = vxpose.xlu0.b32.cont [3/16] 0.0, 128
        %5473 = vxpose.xlu0.b32.cont [4/16] 0.0, 128
        %5474 = vxpose.xlu0.b32.cont [5/16] 0.0, 128
        %5475 = vxpose.xlu0.b32.cont [6/16] 0.0, 128
        %5476 = vxpose.xlu0.b32.cont [7/16] 0.0, 128
        %5477 = vxpose.xlu0.b32.cont [8/16] 0.0, 128
        %5478 = vxpose.xlu0.b32.cont [9/16] 0.0, 128
        %5479 = vxpose.xlu0.b32.cont [10/16] 0.0, 128
        %5480 = vxpose.xlu0.b32.cont [11/16] 0.0, 128
        %5481 = vxpose.xlu0.b32.cont [12/16] 0.0, 128
        %5482 = vxpose.xlu0.b32.cont [13/16] 0.0, 128
        %5483 = vxpose.xlu0.b32.cont [14/16] 0.0, 128
        %5484 = vxpose.xlu0.b32.cont [15/16] 0.0, 128
        %5485 = vxpose.xlu0.b32.end [16/16] 0.0, 128
        %v5486 = vpop.trf.xlu0
        %v5487 = vpop.trf.xlu0
        %v5488 = vpop.trf.xlu0
        %v5489 = vpop.trf.xlu0
        %v5490 = vpop.trf.xlu0
        %v5491 = vpop.trf.xlu0
        %v5492 = vpop.trf.xlu0
        %v5493 = vpop.trf.xlu0
        %v5494 = vpop.trf.xlu0
        %v5495 = vpop.trf.xlu0
        %v5496 = vpop.trf.xlu0
        %v5497 = vpop.trf.xlu0
        %v5498 = vpop.trf.xlu0
        %v5499 = vpop.trf.xlu0
        %v5500 = vpop.trf.xlu0
        %v5501 = vpop.trf.xlu0
        %5502 = vxpose.xlu0.b32.start [1/16] %v5396, 128
        %5503 = vxpose.xlu0.b32.cont [2/16] %v5397, 128
        %5504 = vxpose.xlu0.b32.cont [3/16] 0.0, 128
        %5505 = vxpose.xlu0.b32.cont [4/16] 0.0, 128
        %5506 = vxpose.xlu0.b32.cont [5/16] 0.0, 128
        %5507 = vxpose.xlu0.b32.cont [6/16] 0.0, 128
        %5508 = vxpose.xlu0.b32.cont [7/16] 0.0, 128
        %5509 = vxpose.xlu0.b32.cont [8/16] 0.0, 128
        %5510 = vxpose.xlu0.b32.cont [9/16] 0.0, 128
        %5511 = vxpose.xlu0.b32.cont [10/16] 0.0, 128
        %5512 = vxpose.xlu0.b32.cont [11/16] 0.0, 128
        %5513 = vxpose.xlu0.b32.cont [12/16] 0.0, 128
        %5514 = vxpose.xlu0.b32.cont [13/16] 0.0, 128
        %5515 = vxpose.xlu0.b32.cont [14/16] 0.0, 128
        %5516 = vxpose.xlu0.b32.cont [15/16] 0.0, 128
        %5517 = vxpose.xlu0.b32.end [16/16] 0.0, 128
        %v5518 = vpop.trf.xlu0
        %v5519 = vpop.trf.xlu0
        %v5520 = vpop.trf.xlu0
        %v5521 = vpop.trf.xlu0
        %v5522 = vpop.trf.xlu0
        %v5523 = vpop.trf.xlu0
        %v5524 = vpop.trf.xlu0
        %v5525 = vpop.trf.xlu0
        %v5526 = vpop.trf.xlu0
        %v5527 = vpop.trf.xlu0
        %v5528 = vpop.trf.xlu0
        %v5529 = vpop.trf.xlu0
        %v5530 = vpop.trf.xlu0
        %v5531 = vpop.trf.xlu0
        %v5532 = vpop.trf.xlu0
        %v5533 = vpop.trf.xlu0
        %5534 = vxpose.xlu0.b32.start [1/16] %v5398, 128
        %5535 = vxpose.xlu0.b32.cont [2/16] %v5399, 128
        %5536 = vxpose.xlu0.b32.cont [3/16] 0.0, 128
        %5537 = vxpose.xlu0.b32.cont [4/16] 0.0, 128
        %5538 = vxpose.xlu0.b32.cont [5/16] 0.0, 128
        %5539 = vxpose.xlu0.b32.cont [6/16] 0.0, 128
        %5540 = vxpose.xlu0.b32.cont [7/16] 0.0, 128
        %5541 = vxpose.xlu0.b32.cont [8/16] 0.0, 128
        %5542 = vxpose.xlu0.b32.cont [9/16] 0.0, 128
        %5543 = vxpose.xlu0.b32.cont [10/16] 0.0, 128
        %5544 = vxpose.xlu0.b32.cont [11/16] 0.0, 128
        %5545 = vxpose.xlu0.b32.cont [12/16] 0.0, 128
        %5546 = vxpose.xlu0.b32.cont [13/16] 0.0, 128
        %5547 = vxpose.xlu0.b32.cont [14/16] 0.0, 128
        %5548 = vxpose.xlu0.b32.cont [15/16] 0.0, 128
        %5549 = vxpose.xlu0.b32.end [16/16] 0.0, 128
        %v5550 = vpop.trf.xlu0
        %v5551 = vpop.trf.xlu0
        %v5552 = vpop.trf.xlu0
        %v5553 = vpop.trf.xlu0
        %v5554 = vpop.trf.xlu0
        %v5555 = vpop.trf.xlu0
        %v5556 = vpop.trf.xlu0
        %v5557 = vpop.trf.xlu0
        %v5558 = vpop.trf.xlu0
        %v5559 = vpop.trf.xlu0
        %v5560 = vpop.trf.xlu0
        %v5561 = vpop.trf.xlu0
        %v5562 = vpop.trf.xlu0
        %v5563 = vpop.trf.xlu0
        %v5564 = vpop.trf.xlu0
        %v5565 = vpop.trf.xlu0
        %5566 = vxpose.xlu0.b32.start [1/16] %v5400, 128
        %5567 = vxpose.xlu0.b32.cont [2/16] %v5401, 128
        %5568 = vxpose.xlu0.b32.cont [3/16] 0.0, 128
        %5569 = vxpose.xlu0.b32.cont [4/16] 0.0, 128
        %5570 = vxpose.xlu0.b32.cont [5/16] 0.0, 128
        %5571 = vxpose.xlu0.b32.cont [6/16] 0.0, 128
        %5572 = vxpose.xlu0.b32.cont [7/16] 0.0, 128
        %5573 = vxpose.xlu0.b32.cont [8/16] 0.0, 128
        %5574 = vxpose.xlu0.b32.cont [9/16] 0.0, 128
        %5575 = vxpose.xlu0.b32.cont [10/16] 0.0, 128
        %5576 = vxpose.xlu0.b32.cont [11/16] 0.0, 128
        %5577 = vxpose.xlu0.b32.cont [12/16] 0.0, 128
        %5578 = vxpose.xlu0.b32.cont [13/16] 0.0, 128
        %5579 = vxpose.xlu0.b32.cont [14/16] 0.0, 128
        %5580 = vxpose.xlu0.b32.cont [15/16] 0.0, 128
        %5581 = vxpose.xlu0.b32.end [16/16] 0.0, 128
        %v5582 = vpop.trf.xlu0
        %v5583 = vpop.trf.xlu0
        %v5584 = vpop.trf.xlu0
        %v5585 = vpop.trf.xlu0
        %v5586 = vpop.trf.xlu0
        %v5587 = vpop.trf.xlu0
        %v5588 = vpop.trf.xlu0
        %v5589 = vpop.trf.xlu0
        %v5590 = vpop.trf.xlu0
        %v5591 = vpop.trf.xlu0
        %v5592 = vpop.trf.xlu0
        %v5593 = vpop.trf.xlu0
        %v5594 = vpop.trf.xlu0
        %v5595 = vpop.trf.xlu0
        %v5596 = vpop.trf.xlu0
        %v5597 = vpop.trf.xlu0
        %5598 = vxpose.xlu0.b32.start [1/16] %v5402, 128
        %5599 = vxpose.xlu0.b32.cont [2/16] %v5403, 128
        %5600 = vxpose.xlu0.b32.cont [3/16] 0.0, 128
        %5601 = vxpose.xlu0.b32.cont [4/16] 0.0, 128
        %5602 = vxpose.xlu0.b32.cont [5/16] 0.0, 128
        %5603 = vxpose.xlu0.b32.cont [6/16] 0.0, 128
        %5604 = vxpose.xlu0.b32.cont [7/16] 0.0, 128
        %5605 = vxpose.xlu0.b32.cont [8/16] 0.0, 128
        %5606 = vxpose.xlu0.b32.cont [9/16] 0.0, 128
        %5607 = vxpose.xlu0.b32.cont [10/16] 0.0, 128
        %5608 = vxpose.xlu0.b32.cont [11/16] 0.0, 128
        %5609 = vxpose.xlu0.b32.cont [12/16] 0.0, 128
        %5610 = vxpose.xlu0.b32.cont [13/16] 0.0, 128
        %5611 = vxpose.xlu0.b32.cont [14/16] 0.0, 128
        %5612 = vxpose.xlu0.b32.cont [15/16] 0.0, 128
        %5613 = vxpose.xlu0.b32.end [16/16] 0.0, 128
        %v5614 = vpop.trf.xlu0
        %v5615 = vpop.trf.xlu0
        %v5616 = vpop.trf.xlu0
        %v5617 = vpop.trf.xlu0
        %v5618 = vpop.trf.xlu0
        %v5619 = vpop.trf.xlu0
        %v5620 = vpop.trf.xlu0
        %v5621 = vpop.trf.xlu0
        %v5622 = vpop.trf.xlu0
        %v5623 = vpop.trf.xlu0
        %v5624 = vpop.trf.xlu0
        %v5625 = vpop.trf.xlu0
        %v5626 = vpop.trf.xlu0
        %v5627 = vpop.trf.xlu0
        %v5628 = vpop.trf.xlu0
        %v5629 = vpop.trf.xlu0
        %5630 = vxpose.xlu0.b32.start [1/16] %v5404, 128
        %5631 = vxpose.xlu0.b32.cont [2/16] %v5405, 128
        %5632 = vxpose.xlu0.b32.cont [3/16] 0.0, 128
        %5633 = vxpose.xlu0.b32.cont [4/16] 0.0, 128
        %5634 = vxpose.xlu0.b32.cont [5/16] 0.0, 128
        %5635 = vxpose.xlu0.b32.cont [6/16] 0.0, 128
        %5636 = vxpose.xlu0.b32.cont [7/16] 0.0, 128
        %5637 = vxpose.xlu0.b32.cont [8/16] 0.0, 128
        %5638 = vxpose.xlu0.b32.cont [9/16] 0.0, 128
        %5639 = vxpose.xlu0.b32.cont [10/16] 0.0, 128
        %5640 = vxpose.xlu0.b32.cont [11/16] 0.0, 128
        %5641 = vxpose.xlu0.b32.cont [12/16] 0.0, 128
        %5642 = vxpose.xlu0.b32.cont [13/16] 0.0, 128
        %5643 = vxpose.xlu0.b32.cont [14/16] 0.0, 128
        %5644 = vxpose.xlu0.b32.cont [15/16] 0.0, 128
        %5645 = vxpose.xlu0.b32.end [16/16] 0.0, 128
        %v5646 = vpop.trf.xlu0
        %v5647 = vpop.trf.xlu0
        %v5648 = vpop.trf.xlu0
        %v5649 = vpop.trf.xlu0
        %v5650 = vpop.trf.xlu0
        %v5651 = vpop.trf.xlu0
        %v5652 = vpop.trf.xlu0
        %v5653 = vpop.trf.xlu0
        %v5654 = vpop.trf.xlu0
        %v5655 = vpop.trf.xlu0
        %v5656 = vpop.trf.xlu0
        %v5657 = vpop.trf.xlu0
        %v5658 = vpop.trf.xlu0
        %v5659 = vpop.trf.xlu0
        %v5660 = vpop.trf.xlu0
        %v5661 = vpop.trf.xlu0
        %v5662 = vpack.c.bf16 %v5422, %v5422
        %v5663 = vpack.c.bf16 %v5454, %v5454
        %v5664 = vpack.c.bf16 %v5486, %v5486
        %v5665 = vpack.c.bf16 %v5518, %v5518
        %v5666 = vpack.c.bf16 %v5550, %v5550
        %v5667 = vpack.c.bf16 %v5582, %v5582
        %v5668 = vpack.c.bf16 %v5614, %v5614
        %v5669 = vpack.c.bf16 %v5646, %v5646
        %5670 = vxpose.xlu0.b32.start [1/16] %v5366, 128
        %5671 = vxpose.xlu0.b32.cont [2/16] 0.0, 128
        %5672 = vxpose.xlu0.b32.cont [3/16] 0.0, 128
        %5673 = vxpose.xlu0.b32.cont [4/16] 0.0, 128
        %5674 = vxpose.xlu0.b32.cont [5/16] 0.0, 128
        %5675 = vxpose.xlu0.b32.cont [6/16] 0.0, 128
        %5676 = vxpose.xlu0.b32.cont [7/16] 0.0, 128
        %5677 = vxpose.xlu0.b32.cont [8/16] 0.0, 128
        %5678 = vxpose.xlu0.b32.cont [9/16] 0.0, 128
        %5679 = vxpose.xlu0.b32.cont [10/16] 0.0, 128
        %5680 = vxpose.xlu0.b32.cont [11/16] 0.0, 128
        %5681 = vxpose.xlu0.b32.cont [12/16] 0.0, 128
        %5682 = vxpose.xlu0.b32.cont [13/16] 0.0, 128
        %5683 = vxpose.xlu0.b32.cont [14/16] 0.0, 128
        %5684 = vxpose.xlu0.b32.cont [15/16] 0.0, 128
        %5685 = vxpose.xlu0.b32.end [16/16] 0.0, 128
        %v5686 = vpop.trf.xlu0
        %v5687 = vpop.trf.xlu0
        %v5688 = vpop.trf.xlu0
        %v5689 = vpop.trf.xlu0
        %v5690 = vpop.trf.xlu0
        %v5691 = vpop.trf.xlu0
        %v5692 = vpop.trf.xlu0
        %v5693 = vpop.trf.xlu0
        %v5694 = vpop.trf.xlu0
        %v5695 = vpop.trf.xlu0
        %v5696 = vpop.trf.xlu0
        %v5697 = vpop.trf.xlu0
        %v5698 = vpop.trf.xlu0
        %v5699 = vpop.trf.xlu0
        %v5700 = vpop.trf.xlu0
        %v5701 = vpop.trf.xlu0
        %5702 = vxpose.xlu0.b32.start [1/16] %v5686, 128
        %5703 = vxpose.xlu0.b32.cont [2/16] %v5687, 128
        %5704 = vxpose.xlu0.b32.cont [3/16] 0.0, 128
        %5705 = vxpose.xlu0.b32.cont [4/16] 0.0, 128
        %5706 = vxpose.xlu0.b32.cont [5/16] 0.0, 128
        %5707 = vxpose.xlu0.b32.cont [6/16] 0.0, 128
        %5708 = vxpose.xlu0.b32.cont [7/16] 0.0, 128
        %5709 = vxpose.xlu0.b32.cont [8/16] 0.0, 128
        %5710 = vxpose.xlu0.b32.cont [9/16] 0.0, 128
        %5711 = vxpose.xlu0.b32.cont [10/16] 0.0, 128
        %5712 = vxpose.xlu0.b32.cont [11/16] 0.0, 128
        %5713 = vxpose.xlu0.b32.cont [12/16] 0.0, 128
        %5714 = vxpose.xlu0.b32.cont [13/16] 0.0, 128
        %5715 = vxpose.xlu0.b32.cont [14/16] 0.0, 128
        %5716 = vxpose.xlu0.b32.cont [15/16] 0.0, 128
        %5717 = vxpose.xlu0.b32.end [16/16] 0.0, 128
        %v5718 = vpop.trf.xlu0
        %v5719 = vpop.trf.xlu0
        %v5720 = vpop.trf.xlu0
        %v5721 = vpop.trf.xlu0
        %v5722 = vpop.trf.xlu0
        %v5723 = vpop.trf.xlu0
        %v5724 = vpop.trf.xlu0
        %v5725 = vpop.trf.xlu0
        %v5726 = vpop.trf.xlu0
        %v5727 = vpop.trf.xlu0
        %v5728 = vpop.trf.xlu0
        %v5729 = vpop.trf.xlu0
        %v5730 = vpop.trf.xlu0
        %v5731 = vpop.trf.xlu0
        %v5732 = vpop.trf.xlu0
        %v5733 = vpop.trf.xlu0
        %5734 = vxpose.xlu0.b32.start [1/16] %v5688, 128
        %5735 = vxpose.xlu0.b32.cont [2/16] %v5689, 128
        %5736 = vxpose.xlu0.b32.cont [3/16] 0.0, 128
        %5737 = vxpose.xlu0.b32.cont [4/16] 0.0, 128
        %5738 = vxpose.xlu0.b32.cont [5/16] 0.0, 128
        %5739 = vxpose.xlu0.b32.cont [6/16] 0.0, 128
        %5740 = vxpose.xlu0.b32.cont [7/16] 0.0, 128
        %5741 = vxpose.xlu0.b32.cont [8/16] 0.0, 128
        %5742 = vxpose.xlu0.b32.cont [9/16] 0.0, 128
        %5743 = vxpose.xlu0.b32.cont [10/16] 0.0, 128
        %5744 = vxpose.xlu0.b32.cont [11/16] 0.0, 128
        %5745 = vxpose.xlu0.b32.cont [12/16] 0.0, 128
        %5746 = vxpose.xlu0.b32.cont [13/16] 0.0, 128
        %5747 = vxpose.xlu0.b32.cont [14/16] 0.0, 128
        %5748 = vxpose.xlu0.b32.cont [15/16] 0.0, 128
        %5749 = vxpose.xlu0.b32.end [16/16] 0.0, 128
        %v5750 = vpop.trf.xlu0
        %v5751 = vpop.trf.xlu0
        %v5752 = vpop.trf.xlu0
        %v5753 = vpop.trf.xlu0
        %v5754 = vpop.trf.xlu0
        %v5755 = vpop.trf.xlu0
        %v5756 = vpop.trf.xlu0
        %v5757 = vpop.trf.xlu0
        %v5758 = vpop.trf.xlu0
        %v5759 = vpop.trf.xlu0
        %v5760 = vpop.trf.xlu0
        %v5761 = vpop.trf.xlu0
        %v5762 = vpop.trf.xlu0
        %v5763 = vpop.trf.xlu0
        %v5764 = vpop.trf.xlu0
        %v5765 = vpop.trf.xlu0
        %5766 = vxpose.xlu0.b32.start [1/16] %v5690, 128
        %5767 = vxpose.xlu0.b32.cont [2/16] %v5691, 128
        %5768 = vxpose.xlu0.b32.cont [3/16] 0.0, 128
        %5769 = vxpose.xlu0.b32.cont [4/16] 0.0, 128
        %5770 = vxpose.xlu0.b32.cont [5/16] 0.0, 128
        %5771 = vxpose.xlu0.b32.cont [6/16] 0.0, 128
        %5772 = vxpose.xlu0.b32.cont [7/16] 0.0, 128
        %5773 = vxpose.xlu0.b32.cont [8/16] 0.0, 128
        %5774 = vxpose.xlu0.b32.cont [9/16] 0.0, 128
        %5775 = vxpose.xlu0.b32.cont [10/16] 0.0, 128
        %5776 = vxpose.xlu0.b32.cont [11/16] 0.0, 128
        %5777 = vxpose.xlu0.b32.cont [12/16] 0.0, 128
        %5778 = vxpose.xlu0.b32.cont [13/16] 0.0, 128
        %5779 = vxpose.xlu0.b32.cont [14/16] 0.0, 128
        %5780 = vxpose.xlu0.b32.cont [15/16] 0.0, 128
        %5781 = vxpose.xlu0.b32.end [16/16] 0.0, 128
        %v5782 = vpop.trf.xlu0
        %v5783 = vpop.trf.xlu0
        %v5784 = vpop.trf.xlu0
        %v5785 = vpop.trf.xlu0
        %v5786 = vpop.trf.xlu0
        %v5787 = vpop.trf.xlu0
        %v5788 = vpop.trf.xlu0
        %v5789 = vpop.trf.xlu0
        %v5790 = vpop.trf.xlu0
        %v5791 = vpop.trf.xlu0
        %v5792 = vpop.trf.xlu0
        %v5793 = vpop.trf.xlu0
        %v5794 = vpop.trf.xlu0
        %v5795 = vpop.trf.xlu0
        %v5796 = vpop.trf.xlu0
        %v5797 = vpop.trf.xlu0
        %5798 = vxpose.xlu0.b32.start [1/16] %v5692, 128
        %5799 = vxpose.xlu0.b32.cont [2/16] %v5693, 128
        %5800 = vxpose.xlu0.b32.cont [3/16] 0.0, 128
        %5801 = vxpose.xlu0.b32.cont [4/16] 0.0, 128
        %5802 = vxpose.xlu0.b32.cont [5/16] 0.0, 128
        %5803 = vxpose.xlu0.b32.cont [6/16] 0.0, 128
        %5804 = vxpose.xlu0.b32.cont [7/16] 0.0, 128
        %5805 = vxpose.xlu0.b32.cont [8/16] 0.0, 128
        %5806 = vxpose.xlu0.b32.cont [9/16] 0.0, 128
        %5807 = vxpose.xlu0.b32.cont [10/16] 0.0, 128
        %5808 = vxpose.xlu0.b32.cont [11/16] 0.0, 128
        %5809 = vxpose.xlu0.b32.cont [12/16] 0.0, 128
        %5810 = vxpose.xlu0.b32.cont [13/16] 0.0, 128
        %5811 = vxpose.xlu0.b32.cont [14/16] 0.0, 128
        %5812 = vxpose.xlu0.b32.cont [15/16] 0.0, 128
        %5813 = vxpose.xlu0.b32.end [16/16] 0.0, 128
        %v5814 = vpop.trf.xlu0
        %v5815 = vpop.trf.xlu0
        %v5816 = vpop.trf.xlu0
        %v5817 = vpop.trf.xlu0
        %v5818 = vpop.trf.xlu0
        %v5819 = vpop.trf.xlu0
        %v5820 = vpop.trf.xlu0
        %v5821 = vpop.trf.xlu0
        %v5822 = vpop.trf.xlu0
        %v5823 = vpop.trf.xlu0
        %v5824 = vpop.trf.xlu0
        %v5825 = vpop.trf.xlu0
        %v5826 = vpop.trf.xlu0
        %v5827 = vpop.trf.xlu0
        %v5828 = vpop.trf.xlu0
        %v5829 = vpop.trf.xlu0
        %5830 = vxpose.xlu0.b32.start [1/16] %v5694, 128
        %5831 = vxpose.xlu0.b32.cont [2/16] %v5695, 128
        %5832 = vxpose.xlu0.b32.cont [3/16] 0.0, 128
        %5833 = vxpose.xlu0.b32.cont [4/16] 0.0, 128
        %5834 = vxpose.xlu0.b32.cont [5/16] 0.0, 128
        %5835 = vxpose.xlu0.b32.cont [6/16] 0.0, 128
        %5836 = vxpose.xlu0.b32.cont [7/16] 0.0, 128
        %5837 = vxpose.xlu0.b32.cont [8/16] 0.0, 128
        %5838 = vxpose.xlu0.b32.cont [9/16] 0.0, 128
        %5839 = vxpose.xlu0.b32.cont [10/16] 0.0, 128
        %5840 = vxpose.xlu0.b32.cont [11/16] 0.0, 128
        %5841 = vxpose.xlu0.b32.cont [12/16] 0.0, 128
        %5842 = vxpose.xlu0.b32.cont [13/16] 0.0, 128
        %5843 = vxpose.xlu0.b32.cont [14/16] 0.0, 128
        %5844 = vxpose.xlu0.b32.cont [15/16] 0.0, 128
        %5845 = vxpose.xlu0.b32.end [16/16] 0.0, 128
        %v5846 = vpop.trf.xlu0
        %v5847 = vpop.trf.xlu0
        %v5848 = vpop.trf.xlu0
        %v5849 = vpop.trf.xlu0
        %v5850 = vpop.trf.xlu0
        %v5851 = vpop.trf.xlu0
        %v5852 = vpop.trf.xlu0
        %v5853 = vpop.trf.xlu0
        %v5854 = vpop.trf.xlu0
        %v5855 = vpop.trf.xlu0
        %v5856 = vpop.trf.xlu0
        %v5857 = vpop.trf.xlu0
        %v5858 = vpop.trf.xlu0
        %v5859 = vpop.trf.xlu0
        %v5860 = vpop.trf.xlu0
        %v5861 = vpop.trf.xlu0
        %5862 = vxpose.xlu0.b32.start [1/16] %v5696, 128
        %5863 = vxpose.xlu0.b32.cont [2/16] %v5697, 128
        %5864 = vxpose.xlu0.b32.cont [3/16] 0.0, 128
        %5865 = vxpose.xlu0.b32.cont [4/16] 0.0, 128
        %5866 = vxpose.xlu0.b32.cont [5/16] 0.0, 128
        %5867 = vxpose.xlu0.b32.cont [6/16] 0.0, 128
        %5868 = vxpose.xlu0.b32.cont [7/16] 0.0, 128
        %5869 = vxpose.xlu0.b32.cont [8/16] 0.0, 128
        %5870 = vxpose.xlu0.b32.cont [9/16] 0.0, 128
        %5871 = vxpose.xlu0.b32.cont [10/16] 0.0, 128
        %5872 = vxpose.xlu0.b32.cont [11/16] 0.0, 128
        %5873 = vxpose.xlu0.b32.cont [12/16] 0.0, 128
        %5874 = vxpose.xlu0.b32.cont [13/16] 0.0, 128
        %5875 = vxpose.xlu0.b32.cont [14/16] 0.0, 128
        %5876 = vxpose.xlu0.b32.cont [15/16] 0.0, 128
        %5877 = vxpose.xlu0.b32.end [16/16] 0.0, 128
        %v5878 = vpop.trf.xlu0
        %v5879 = vpop.trf.xlu0
        %v5880 = vpop.trf.xlu0
        %v5881 = vpop.trf.xlu0
        %v5882 = vpop.trf.xlu0
        %v5883 = vpop.trf.xlu0
        %v5884 = vpop.trf.xlu0
        %v5885 = vpop.trf.xlu0
        %v5886 = vpop.trf.xlu0
        %v5887 = vpop.trf.xlu0
        %v5888 = vpop.trf.xlu0
        %v5889 = vpop.trf.xlu0
        %v5890 = vpop.trf.xlu0
        %v5891 = vpop.trf.xlu0
        %v5892 = vpop.trf.xlu0
        %v5893 = vpop.trf.xlu0
        %5894 = vxpose.xlu0.b32.start [1/16] %v5698, 128
        %5895 = vxpose.xlu0.b32.cont [2/16] %v5699, 128
        %5896 = vxpose.xlu0.b32.cont [3/16] 0.0, 128
        %5897 = vxpose.xlu0.b32.cont [4/16] 0.0, 128
        %5898 = vxpose.xlu0.b32.cont [5/16] 0.0, 128
        %5899 = vxpose.xlu0.b32.cont [6/16] 0.0, 128
        %5900 = vxpose.xlu0.b32.cont [7/16] 0.0, 128
        %5901 = vxpose.xlu0.b32.cont [8/16] 0.0, 128
        %5902 = vxpose.xlu0.b32.cont [9/16] 0.0, 128
        %5903 = vxpose.xlu0.b32.cont [10/16] 0.0, 128
        %5904 = vxpose.xlu0.b32.cont [11/16] 0.0, 128
        %5905 = vxpose.xlu0.b32.cont [12/16] 0.0, 128
        %5906 = vxpose.xlu0.b32.cont [13/16] 0.0, 128
        %5907 = vxpose.xlu0.b32.cont [14/16] 0.0, 128
        %5908 = vxpose.xlu0.b32.cont [15/16] 0.0, 128
        %5909 = vxpose.xlu0.b32.end [16/16] 0.0, 128
        %v5910 = vpop.trf.xlu0
        %v5911 = vpop.trf.xlu0
        %v5912 = vpop.trf.xlu0
        %v5913 = vpop.trf.xlu0
        %v5914 = vpop.trf.xlu0
        %v5915 = vpop.trf.xlu0
        %v5916 = vpop.trf.xlu0
        %v5917 = vpop.trf.xlu0
        %v5918 = vpop.trf.xlu0
        %v5919 = vpop.trf.xlu0
        %v5920 = vpop.trf.xlu0
        %v5921 = vpop.trf.xlu0
        %v5922 = vpop.trf.xlu0
        %v5923 = vpop.trf.xlu0
        %v5924 = vpop.trf.xlu0
        %v5925 = vpop.trf.xlu0
        %5926 = vxpose.xlu0.b32.start [1/16] %v5700, 128
        %5927 = vxpose.xlu0.b32.cont [2/16] %v5701, 128
        %5928 = vxpose.xlu0.b32.cont [3/16] 0.0, 128
        %5929 = vxpose.xlu0.b32.cont [4/16] 0.0, 128
        %5930 = vxpose.xlu0.b32.cont [5/16] 0.0, 128
        %5931 = vxpose.xlu0.b32.cont [6/16] 0.0, 128
        %5932 = vxpose.xlu0.b32.cont [7/16] 0.0, 128
        %5933 = vxpose.xlu0.b32.cont [8/16] 0.0, 128
        %5934 = vxpose.xlu0.b32.cont [9/16] 0.0, 128
        %5935 = vxpose.xlu0.b32.cont [10/16] 0.0, 128
        %5936 = vxpose.xlu0.b32.cont [11/16] 0.0, 128
        %5937 = vxpose.xlu0.b32.cont [12/16] 0.0, 128
        %5938 = vxpose.xlu0.b32.cont [13/16] 0.0, 128
        %5939 = vxpose.xlu0.b32.cont [14/16] 0.0, 128
        %5940 = vxpose.xlu0.b32.cont [15/16] 0.0, 128
        %5941 = vxpose.xlu0.b32.end [16/16] 0.0, 128
        %v5942 = vpop.trf.xlu0
        %v5943 = vpop.trf.xlu0
        %v5944 = vpop.trf.xlu0
        %v5945 = vpop.trf.xlu0
        %v5946 = vpop.trf.xlu0
        %v5947 = vpop.trf.xlu0
        %v5948 = vpop.trf.xlu0
        %v5949 = vpop.trf.xlu0
        %v5950 = vpop.trf.xlu0
        %v5951 = vpop.trf.xlu0
        %v5952 = vpop.trf.xlu0
        %v5953 = vpop.trf.xlu0
        %v5954 = vpop.trf.xlu0
        %v5955 = vpop.trf.xlu0
        %v5956 = vpop.trf.xlu0
        %v5957 = vpop.trf.xlu0
        %v5958 = vpack.c.bf16 %v5718, %v5718
        %v5959 = vpack.c.bf16 %v5750, %v5750
        %v5960 = vpack.c.bf16 %v5782, %v5782
        %v5961 = vpack.c.bf16 %v5814, %v5814
        %v5962 = vpack.c.bf16 %v5846, %v5846
        %v5963 = vpack.c.bf16 %v5878, %v5878
        %v5964 = vpack.c.bf16 %v5910, %v5910
        %v5965 = vpack.c.bf16 %v5942, %v5942
        %5966 = vxpose.xlu0.b32.start [1/16] %v5368, 128
        %5967 = vxpose.xlu0.b32.cont [2/16] 0.0, 128
        %5968 = vxpose.xlu0.b32.cont [3/16] 0.0, 128
        %5969 = vxpose.xlu0.b32.cont [4/16] 0.0, 128
        %5970 = vxpose.xlu0.b32.cont [5/16] 0.0, 128
        %5971 = vxpose.xlu0.b32.cont [6/16] 0.0, 128
        %5972 = vxpose.xlu0.b32.cont [7/16] 0.0, 128
        %5973 = vxpose.xlu0.b32.cont [8/16] 0.0, 128
        %5974 = vxpose.xlu0.b32.cont [9/16] 0.0, 128
        %5975 = vxpose.xlu0.b32.cont [10/16] 0.0, 128
        %5976 = vxpose.xlu0.b32.cont [11/16] 0.0, 128
        %5977 = vxpose.xlu0.b32.cont [12/16] 0.0, 128
        %5978 = vxpose.xlu0.b32.cont [13/16] 0.0, 128
        %5979 = vxpose.xlu0.b32.cont [14/16] 0.0, 128
        %5980 = vxpose.xlu0.b32.cont [15/16] 0.0, 128
        %5981 = vxpose.xlu0.b32.end [16/16] 0.0, 128
        %v5982 = vpop.trf.xlu0
        %v5983 = vpop.trf.xlu0
        %v5984 = vpop.trf.xlu0
        %v5985 = vpop.trf.xlu0
        %v5986 = vpop.trf.xlu0
        %v5987 = vpop.trf.xlu0
        %v5988 = vpop.trf.xlu0
        %v5989 = vpop.trf.xlu0
        %v5990 = vpop.trf.xlu0
        %v5991 = vpop.trf.xlu0
        %v5992 = vpop.trf.xlu0
        %v5993 = vpop.trf.xlu0
        %v5994 = vpop.trf.xlu0
        %v5995 = vpop.trf.xlu0
        %v5996 = vpop.trf.xlu0
        %v5997 = vpop.trf.xlu0
        %5998 = vxpose.xlu0.b32.start [1/16] %v5982, 128
        %5999 = vxpose.xlu0.b32.cont [2/16] %v5983, 128
        %6000 = vxpose.xlu0.b32.cont [3/16] 0.0, 128
        %6001 = vxpose.xlu0.b32.cont [4/16] 0.0, 128
        %6002 = vxpose.xlu0.b32.cont [5/16] 0.0, 128
        %6003 = vxpose.xlu0.b32.cont [6/16] 0.0, 128
        %6004 = vxpose.xlu0.b32.cont [7/16] 0.0, 128
        %6005 = vxpose.xlu0.b32.cont [8/16] 0.0, 128
        %6006 = vxpose.xlu0.b32.cont [9/16] 0.0, 128
        %6007 = vxpose.xlu0.b32.cont [10/16] 0.0, 128
        %6008 = vxpose.xlu0.b32.cont [11/16] 0.0, 128
        %6009 = vxpose.xlu0.b32.cont [12/16] 0.0, 128
        %6010 = vxpose.xlu0.b32.cont [13/16] 0.0, 128
        %6011 = vxpose.xlu0.b32.cont [14/16] 0.0, 128
        %6012 = vxpose.xlu0.b32.cont [15/16] 0.0, 128
        %6013 = vxpose.xlu0.b32.end [16/16] 0.0, 128
        %v6014 = vpop.trf.xlu0
        %v6015 = vpop.trf.xlu0
        %v6016 = vpop.trf.xlu0
        %v6017 = vpop.trf.xlu0
        %v6018 = vpop.trf.xlu0
        %v6019 = vpop.trf.xlu0
        %v6020 = vpop.trf.xlu0
        %v6021 = vpop.trf.xlu0
        %v6022 = vpop.trf.xlu0
        %v6023 = vpop.trf.xlu0
        %v6024 = vpop.trf.xlu0
        %v6025 = vpop.trf.xlu0
        %v6026 = vpop.trf.xlu0
        %v6027 = vpop.trf.xlu0
        %v6028 = vpop.trf.xlu0
        %v6029 = vpop.trf.xlu0
        %6030 = vxpose.xlu0.b32.start [1/16] %v5984, 128
        %6031 = vxpose.xlu0.b32.cont [2/16] %v5985, 128
        %6032 = vxpose.xlu0.b32.cont [3/16] 0.0, 128
        %6033 = vxpose.xlu0.b32.cont [4/16] 0.0, 128
        %6034 = vxpose.xlu0.b32.cont [5/16] 0.0, 128
        %6035 = vxpose.xlu0.b32.cont [6/16] 0.0, 128
        %6036 = vxpose.xlu0.b32.cont [7/16] 0.0, 128
        %6037 = vxpose.xlu0.b32.cont [8/16] 0.0, 128
        %6038 = vxpose.xlu0.b32.cont [9/16] 0.0, 128
        %6039 = vxpose.xlu0.b32.cont [10/16] 0.0, 128
        %6040 = vxpose.xlu0.b32.cont [11/16] 0.0, 128
        %6041 = vxpose.xlu0.b32.cont [12/16] 0.0, 128
        %6042 = vxpose.xlu0.b32.cont [13/16] 0.0, 128
        %6043 = vxpose.xlu0.b32.cont [14/16] 0.0, 128
        %6044 = vxpose.xlu0.b32.cont [15/16] 0.0, 128
        %6045 = vxpose.xlu0.b32.end [16/16] 0.0, 128
        %v6046 = vpop.trf.xlu0
        %v6047 = vpop.trf.xlu0
        %v6048 = vpop.trf.xlu0
        %v6049 = vpop.trf.xlu0
        %v6050 = vpop.trf.xlu0
        %v6051 = vpop.trf.xlu0
        %v6052 = vpop.trf.xlu0
        %v6053 = vpop.trf.xlu0
        %v6054 = vpop.trf.xlu0
        %v6055 = vpop.trf.xlu0
        %v6056 = vpop.trf.xlu0
        %v6057 = vpop.trf.xlu0
        %v6058 = vpop.trf.xlu0
        %v6059 = vpop.trf.xlu0
        %v6060 = vpop.trf.xlu0
        %v6061 = vpop.trf.xlu0
        %6062 = vxpose.xlu0.b32.start [1/16] %v5986, 128
        %6063 = vxpose.xlu0.b32.cont [2/16] %v5987, 128
        %6064 = vxpose.xlu0.b32.cont [3/16] 0.0, 128
        %6065 = vxpose.xlu0.b32.cont [4/16] 0.0, 128
        %6066 = vxpose.xlu0.b32.cont [5/16] 0.0, 128
        %6067 = vxpose.xlu0.b32.cont [6/16] 0.0, 128
        %6068 = vxpose.xlu0.b32.cont [7/16] 0.0, 128
        %6069 = vxpose.xlu0.b32.cont [8/16] 0.0, 128
        %6070 = vxpose.xlu0.b32.cont [9/16] 0.0, 128
        %6071 = vxpose.xlu0.b32.cont [10/16] 0.0, 128
        %6072 = vxpose.xlu0.b32.cont [11/16] 0.0, 128
        %6073 = vxpose.xlu0.b32.cont [12/16] 0.0, 128
        %6074 = vxpose.xlu0.b32.cont [13/16] 0.0, 128
        %6075 = vxpose.xlu0.b32.cont [14/16] 0.0, 128
        %6076 = vxpose.xlu0.b32.cont [15/16] 0.0, 128
        %6077 = vxpose.xlu0.b32.end [16/16] 0.0, 128
        %v6078 = vpop.trf.xlu0
        %v6079 = vpop.trf.xlu0
        %v6080 = vpop.trf.xlu0
        %v6081 = vpop.trf.xlu0
        %v6082 = vpop.trf.xlu0
        %v6083 = vpop.trf.xlu0
        %v6084 = vpop.trf.xlu0
        %v6085 = vpop.trf.xlu0
        %v6086 = vpop.trf.xlu0
        %v6087 = vpop.trf.xlu0
        %v6088 = vpop.trf.xlu0
        %v6089 = vpop.trf.xlu0
        %v6090 = vpop.trf.xlu0
        %v6091 = vpop.trf.xlu0
        %v6092 = vpop.trf.xlu0
        %v6093 = vpop.trf.xlu0
        %6094 = vxpose.xlu0.b32.start [1/16] %v5988, 128
        %6095 = vxpose.xlu0.b32.cont [2/16] %v5989, 128
        %6096 = vxpose.xlu0.b32.cont [3/16] 0.0, 128
        %6097 = vxpose.xlu0.b32.cont [4/16] 0.0, 128
        %6098 = vxpose.xlu0.b32.cont [5/16] 0.0, 128
        %6099 = vxpose.xlu0.b32.cont [6/16] 0.0, 128
        %6100 = vxpose.xlu0.b32.cont [7/16] 0.0, 128
        %6101 = vxpose.xlu0.b32.cont [8/16] 0.0, 128
        %6102 = vxpose.xlu0.b32.cont [9/16] 0.0, 128
        %6103 = vxpose.xlu0.b32.cont [10/16] 0.0, 128
        %6104 = vxpose.xlu0.b32.cont [11/16] 0.0, 128
        %6105 = vxpose.xlu0.b32.cont [12/16] 0.0, 128
        %6106 = vxpose.xlu0.b32.cont [13/16] 0.0, 128
        %6107 = vxpose.xlu0.b32.cont [14/16] 0.0, 128
        %6108 = vxpose.xlu0.b32.cont [15/16] 0.0, 128
        %6109 = vxpose.xlu0.b32.end [16/16] 0.0, 128
        %v6110 = vpop.trf.xlu0
        %v6111 = vpop.trf.xlu0
        %v6112 = vpop.trf.xlu0
        %v6113 = vpop.trf.xlu0
        %v6114 = vpop.trf.xlu0
        %v6115 = vpop.trf.xlu0
        %v6116 = vpop.trf.xlu0
        %v6117 = vpop.trf.xlu0
        %v6118 = vpop.trf.xlu0
        %v6119 = vpop.trf.xlu0
        %v6120 = vpop.trf.xlu0
        %v6121 = vpop.trf.xlu0
        %v6122 = vpop.trf.xlu0
        %v6123 = vpop.trf.xlu0
        %v6124 = vpop.trf.xlu0
        %v6125 = vpop.trf.xlu0
        %6126 = vxpose.xlu0.b32.start [1/16] %v5990, 128
        %6127 = vxpose.xlu0.b32.cont [2/16] %v5991, 128
        %6128 = vxpose.xlu0.b32.cont [3/16] 0.0, 128
        %6129 = vxpose.xlu0.b32.cont [4/16] 0.0, 128
        %6130 = vxpose.xlu0.b32.cont [5/16] 0.0, 128
        %6131 = vxpose.xlu0.b32.cont [6/16] 0.0, 128
        %6132 = vxpose.xlu0.b32.cont [7/16] 0.0, 128
        %6133 = vxpose.xlu0.b32.cont [8/16] 0.0, 128
        %6134 = vxpose.xlu0.b32.cont [9/16] 0.0, 128
        %6135 = vxpose.xlu0.b32.cont [10/16] 0.0, 128
        %6136 = vxpose.xlu0.b32.cont [11/16] 0.0, 128
        %6137 = vxpose.xlu0.b32.cont [12/16] 0.0, 128
        %6138 = vxpose.xlu0.b32.cont [13/16] 0.0, 128
        %6139 = vxpose.xlu0.b32.cont [14/16] 0.0, 128
        %6140 = vxpose.xlu0.b32.cont [15/16] 0.0, 128
        %6141 = vxpose.xlu0.b32.end [16/16] 0.0, 128
        %v6142 = vpop.trf.xlu0
        %v6143 = vpop.trf.xlu0
        %v6144 = vpop.trf.xlu0
        %v6145 = vpop.trf.xlu0
        %v6146 = vpop.trf.xlu0
        %v6147 = vpop.trf.xlu0
        %v6148 = vpop.trf.xlu0
        %v6149 = vpop.trf.xlu0
        %v6150 = vpop.trf.xlu0
        %v6151 = vpop.trf.xlu0
        %v6152 = vpop.trf.xlu0
        %v6153 = vpop.trf.xlu0
        %v6154 = vpop.trf.xlu0
        %v6155 = vpop.trf.xlu0
        %v6156 = vpop.trf.xlu0
        %v6157 = vpop.trf.xlu0
        %6158 = vxpose.xlu0.b32.start [1/16] %v5992, 128
        %6159 = vxpose.xlu0.b32.cont [2/16] %v5993, 128
        %6160 = vxpose.xlu0.b32.cont [3/16] 0.0, 128
        %6161 = vxpose.xlu0.b32.cont [4/16] 0.0, 128
        %6162 = vxpose.xlu0.b32.cont [5/16] 0.0, 128
        %6163 = vxpose.xlu0.b32.cont [6/16] 0.0, 128
        %6164 = vxpose.xlu0.b32.cont [7/16] 0.0, 128
        %6165 = vxpose.xlu0.b32.cont [8/16] 0.0, 128
        %6166 = vxpose.xlu0.b32.cont [9/16] 0.0, 128
        %6167 = vxpose.xlu0.b32.cont [10/16] 0.0, 128
        %6168 = vxpose.xlu0.b32.cont [11/16] 0.0, 128
        %6169 = vxpose.xlu0.b32.cont [12/16] 0.0, 128
        %6170 = vxpose.xlu0.b32.cont [13/16] 0.0, 128
        %6171 = vxpose.xlu0.b32.cont [14/16] 0.0, 128
        %6172 = vxpose.xlu0.b32.cont [15/16] 0.0, 128
        %6173 = vxpose.xlu0.b32.end [16/16] 0.0, 128
        %v6174 = vpop.trf.xlu0
        %v6175 = vpop.trf.xlu0
        %v6176 = vpop.trf.xlu0
        %v6177 = vpop.trf.xlu0
        %v6178 = vpop.trf.xlu0
        %v6179 = vpop.trf.xlu0
        %v6180 = vpop.trf.xlu0
        %v6181 = vpop.trf.xlu0
        %v6182 = vpop.trf.xlu0
        %v6183 = vpop.trf.xlu0
        %v6184 = vpop.trf.xlu0
        %v6185 = vpop.trf.xlu0
        %v6186 = vpop.trf.xlu0
        %v6187 = vpop.trf.xlu0
        %v6188 = vpop.trf.xlu0
        %v6189 = vpop.trf.xlu0
        %6190 = vxpose.xlu0.b32.start [1/16] %v5994, 128
        %6191 = vxpose.xlu0.b32.cont [2/16] %v5995, 128
        %6192 = vxpose.xlu0.b32.cont [3/16] 0.0, 128
        %6193 = vxpose.xlu0.b32.cont [4/16] 0.0, 128
        %6194 = vxpose.xlu0.b32.cont [5/16] 0.0, 128
        %6195 = vxpose.xlu0.b32.cont [6/16] 0.0, 128
        %6196 = vxpose.xlu0.b32.cont [7/16] 0.0, 128
        %6197 = vxpose.xlu0.b32.cont [8/16] 0.0, 128
        %6198 = vxpose.xlu0.b32.cont [9/16] 0.0, 128
        %6199 = vxpose.xlu0.b32.cont [10/16] 0.0, 128
        %6200 = vxpose.xlu0.b32.cont [11/16] 0.0, 128
        %6201 = vxpose.xlu0.b32.cont [12/16] 0.0, 128
        %6202 = vxpose.xlu0.b32.cont [13/16] 0.0, 128
        %6203 = vxpose.xlu0.b32.cont [14/16] 0.0, 128
        %6204 = vxpose.xlu0.b32.cont [15/16] 0.0, 128
        %6205 = vxpose.xlu0.b32.end [16/16] 0.0, 128
        %v6206 = vpop.trf.xlu0
        %v6207 = vpop.trf.xlu0
        %v6208 = vpop.trf.xlu0
        %v6209 = vpop.trf.xlu0
        %v6210 = vpop.trf.xlu0
        %v6211 = vpop.trf.xlu0
        %v6212 = vpop.trf.xlu0
        %v6213 = vpop.trf.xlu0
        %v6214 = vpop.trf.xlu0
        %v6215 = vpop.trf.xlu0
        %v6216 = vpop.trf.xlu0
        %v6217 = vpop.trf.xlu0
        %v6218 = vpop.trf.xlu0
        %v6219 = vpop.trf.xlu0
        %v6220 = vpop.trf.xlu0
        %v6221 = vpop.trf.xlu0
        %6222 = vxpose.xlu0.b32.start [1/16] %v5996, 128
        %6223 = vxpose.xlu0.b32.cont [2/16] %v5997, 128
        %6224 = vxpose.xlu0.b32.cont [3/16] 0.0, 128
        %6225 = vxpose.xlu0.b32.cont [4/16] 0.0, 128
        %6226 = vxpose.xlu0.b32.cont [5/16] 0.0, 128
        %6227 = vxpose.xlu0.b32.cont [6/16] 0.0, 128
        %6228 = vxpose.xlu0.b32.cont [7/16] 0.0, 128
        %6229 = vxpose.xlu0.b32.cont [8/16] 0.0, 128
        %6230 = vxpose.xlu0.b32.cont [9/16] 0.0, 128
        %6231 = vxpose.xlu0.b32.cont [10/16] 0.0, 128
        %6232 = vxpose.xlu0.b32.cont [11/16] 0.0, 128
        %6233 = vxpose.xlu0.b32.cont [12/16] 0.0, 128
        %6234 = vxpose.xlu0.b32.cont [13/16] 0.0, 128
        %6235 = vxpose.xlu0.b32.cont [14/16] 0.0, 128
        %6236 = vxpose.xlu0.b32.cont [15/16] 0.0, 128
        %6237 = vxpose.xlu0.b32.end [16/16] 0.0, 128
        %v6238 = vpop.trf.xlu0
        %v6239 = vpop.trf.xlu0
        %v6240 = vpop.trf.xlu0
        %v6241 = vpop.trf.xlu0
        %v6242 = vpop.trf.xlu0
        %v6243 = vpop.trf.xlu0
        %v6244 = vpop.trf.xlu0
        %v6245 = vpop.trf.xlu0
        %v6246 = vpop.trf.xlu0
        %v6247 = vpop.trf.xlu0
        %v6248 = vpop.trf.xlu0
        %v6249 = vpop.trf.xlu0
        %v6250 = vpop.trf.xlu0
        %v6251 = vpop.trf.xlu0
        %v6252 = vpop.trf.xlu0
        %v6253 = vpop.trf.xlu0
        %v6254 = vpack.c.bf16 %v6014, %v6014
        %v6255 = vpack.c.bf16 %v6046, %v6046
        %v6256 = vpack.c.bf16 %v6078, %v6078
        %v6257 = vpack.c.bf16 %v6110, %v6110
        %v6258 = vpack.c.bf16 %v6142, %v6142
        %v6259 = vpack.c.bf16 %v6174, %v6174
        %v6260 = vpack.c.bf16 %v6206, %v6206
        %v6261 = vpack.c.bf16 %v6238, %v6238
        %v6262 = vld [vmem:[%s616] sm:$0xff]
        %v6264 = vsel %vm1851, %v5662, 0
        %v6267 = vsel %vm1851, %v5958, 0
        %6269 = vmatprep.subr.bf16.mxu0 0
        %6270 = vmatpush1.bf16.xpose.msra.mxu0 %v6267
        %6271 = vmatprep.subr.bf16.mxu0 0
        %6272 = vmatpush1.bf16.xpose.msra.mxu0 0
        %6273 = vmatprep.subr.bf16.mxu0 0
        %6274 = vmatpush1.bf16.xpose.msra.mxu0 0
        %6275 = vmatprep.subr.bf16.mxu0 0
        %6276 = vmatpush1.bf16.xpose.msra.mxu0 0
        %6277 = vmatprep.subr.bf16.mxu0 0
        %6278 = vmatpush1.bf16.xpose.msra.mxu0 0
        %6279 = vmatprep.subr.bf16.mxu0 0
        %6280 = vmatpush1.bf16.xpose.msra.mxu0 0
        %6281 = vmatprep.subr.bf16.mxu0 0
        %6282 = vmatpush1.bf16.xpose.msra.mxu0 0
        %6283 = vmatprep.subr.bf16.mxu0 0
        %6284 = vmatpush1.bf16.xpose.msra.mxu0 0
        %6285 = vmatprep.subr.bf16.mxu0 0
        %6286 = vmatpush1.bf16.xpose.msra.mxu0 0
        %6287 = vmatprep.subr.bf16.mxu0 0
        %6288 = vmatpush1.bf16.xpose.msra.mxu0 0
        %6289 = vmatprep.subr.bf16.mxu0 0
        %6290 = vmatpush1.bf16.xpose.msra.mxu0 0
        %6291 = vmatprep.subr.bf16.mxu0 0
        %6292 = vmatpush1.bf16.xpose.msra.mxu0 0
        %6293 = vmatprep.subr.bf16.mxu0 0
        %6294 = vmatpush1.bf16.xpose.msra.mxu0 0
        %6295 = vmatprep.subr.bf16.mxu0 0
        %6296 = vmatpush1.bf16.xpose.msra.mxu0 0
        %6297 = vmatprep.subr.bf16.mxu0 0
        %6298 = vmatpush1.bf16.xpose.msra.mxu0 0
        %6299 = vmatprep.subr.bf16.mxu0 0
        %6300 = vmatpush1.bf16.xpose.msra.mxu0 0
        %6301 = vmatprep.mubr.bf16.mxu0 0
        %6302 = vmatmul.mubr.bf16.gmra.mrb[0].mxu0 %v6264
        %v6303 = vpop.f32.mrb[0].mxu0
        %v6304 = vadd.f32 %v6262, %v6303
        %v6305 = vpop.f32.mrb[0].mxu0
        %v6306 = vpop.f32.mrb[0].mxu0
        %v6307 = vpop.f32.mrb[0].mxu0
        %6308 = vdwg.mxu0
        %v6310 = vsel %vm1851, %v5663, 0
        %v6313 = vsel %vm1851, %v5959, 0
        %6315 = vmatprep.subr.bf16.mxu0 0
        %6316 = vmatpush1.bf16.xpose.msra.mxu0 %v6313
        %6317 = vmatprep.subr.bf16.mxu0 0
        %6318 = vmatpush1.bf16.xpose.msra.mxu0 0
        %6319 = vmatprep.subr.bf16.mxu0 0
        %6320 = vmatpush1.bf16.xpose.msra.mxu0 0
        %6321 = vmatprep.subr.bf16.mxu0 0
        %6322 = vmatpush1.bf16.xpose.msra.mxu0 0
        %6323 = vmatprep.subr.bf16.mxu0 0
        %6324 = vmatpush1.bf16.xpose.msra.mxu0 0
        %6325 = vmatprep.subr.bf16.mxu0 0
        %6326 = vmatpush1.bf16.xpose.msra.mxu0 0
        %6327 = vmatprep.subr.bf16.mxu0 0
        %6328 = vmatpush1.bf16.xpose.msra.mxu0 0
        %6329 = vmatprep.subr.bf16.mxu0 0
        %6330 = vmatpush1.bf16.xpose.msra.mxu0 0
        %6331 = vmatprep.subr.bf16.mxu0 0
        %6332 = vmatpush1.bf16.xpose.msra.mxu0 0
        %6333 = vmatprep.subr.bf16.mxu0 0
        %6334 = vmatpush1.bf16.xpose.msra.mxu0 0
        %6335 = vmatprep.subr.bf16.mxu0 0
        %6336 = vmatpush1.bf16.xpose.msra.mxu0 0
        %6337 = vmatprep.subr.bf16.mxu0 0
        %6338 = vmatpush1.bf16.xpose.msra.mxu0 0
        %6339 = vmatprep.subr.bf16.mxu0 0
        %6340 = vmatpush1.bf16.xpose.msra.mxu0 0
        %6341 = vmatprep.subr.bf16.mxu0 0
        %6342 = vmatpush1.bf16.xpose.msra.mxu0 0
        %6343 = vmatprep.subr.bf16.mxu0 0
        %6344 = vmatpush1.bf16.xpose.msra.mxu0 0
        %6345 = vmatprep.subr.bf16.mxu0 0
        %6346 = vmatpush1.bf16.xpose.msra.mxu0 0
        %6347 = vmatprep.mubr.bf16.mxu0 0
        %6348 = vmatmul.mubr.bf16.gmra.mrb[0].mxu0 %v6310
        %v6349 = vpop.f32.mrb[0].mxu0
        %v6350 = vadd.f32 %v6262, %v6349
        %v6351 = vpop.f32.mrb[0].mxu0
        %v6352 = vpop.f32.mrb[0].mxu0
        %v6353 = vpop.f32.mrb[0].mxu0
        %6354 = vdwg.mxu0
        %v6356 = vsel %vm1851, %v5664, 0
        %v6359 = vsel %vm1851, %v5960, 0
        %6361 = vmatprep.subr.bf16.mxu0 0
        %6362 = vmatpush1.bf16.xpose.msra.mxu0 %v6359
        %6363 = vmatprep.subr.bf16.mxu0 0
        %6364 = vmatpush1.bf16.xpose.msra.mxu0 0
        %6365 = vmatprep.subr.bf16.mxu0 0
        %6366 = vmatpush1.bf16.xpose.msra.mxu0 0
        %6367 = vmatprep.subr.bf16.mxu0 0
        %6368 = vmatpush1.bf16.xpose.msra.mxu0 0
        %6369 = vmatprep.subr.bf16.mxu0 0
        %6370 = vmatpush1.bf16.xpose.msra.mxu0 0
        %6371 = vmatprep.subr.bf16.mxu0 0
        %6372 = vmatpush1.bf16.xpose.msra.mxu0 0
        %6373 = vmatprep.subr.bf16.mxu0 0
        %6374 = vmatpush1.bf16.xpose.msra.mxu0 0
        %6375 = vmatprep.subr.bf16.mxu0 0
        %6376 = vmatpush1.bf16.xpose.msra.mxu0 0
        %6377 = vmatprep.subr.bf16.mxu0 0
        %6378 = vmatpush1.bf16.xpose.msra.mxu0 0
        %6379 = vmatprep.subr.bf16.mxu0 0
        %6380 = vmatpush1.bf16.xpose.msra.mxu0 0
        %6381 = vmatprep.subr.bf16.mxu0 0
        %6382 = vmatpush1.bf16.xpose.msra.mxu0 0
        %6383 = vmatprep.subr.bf16.mxu0 0
        %6384 = vmatpush1.bf16.xpose.msra.mxu0 0
        %6385 = vmatprep.subr.bf16.mxu0 0
        %6386 = vmatpush1.bf16.xpose.msra.mxu0 0
        %6387 = vmatprep.subr.bf16.mxu0 0
        %6388 = vmatpush1.bf16.xpose.msra.mxu0 0
        %6389 = vmatprep.subr.bf16.mxu0 0
        %6390 = vmatpush1.bf16.xpose.msra.mxu0 0
        %6391 = vmatprep.subr.bf16.mxu0 0
        %6392 = vmatpush1.bf16.xpose.msra.mxu0 0
        %6393 = vmatprep.mubr.bf16.mxu0 0
        %6394 = vmatmul.mubr.bf16.gmra.mrb[0].mxu0 %v6356
        %v6395 = vpop.f32.mrb[0].mxu0
        %v6396 = vadd.f32 %v6262, %v6395
        %v6397 = vpop.f32.mrb[0].mxu0
        %v6398 = vpop.f32.mrb[0].mxu0
        %v6399 = vpop.f32.mrb[0].mxu0
        %6400 = vdwg.mxu0
        %v6402 = vsel %vm1851, %v5665, 0
        %v6405 = vsel %vm1851, %v5961, 0
        %6407 = vmatprep.subr.bf16.mxu0 0
        %6408 = vmatpush1.bf16.xpose.msra.mxu0 %v6405
        %6409 = vmatprep.subr.bf16.mxu0 0
        %6410 = vmatpush1.bf16.xpose.msra.mxu0 0
        %6411 = vmatprep.subr.bf16.mxu0 0
        %6412 = vmatpush1.bf16.xpose.msra.mxu0 0
        %6413 = vmatprep.subr.bf16.mxu0 0
        %6414 = vmatpush1.bf16.xpose.msra.mxu0 0
        %6415 = vmatprep.subr.bf16.mxu0 0
        %6416 = vmatpush1.bf16.xpose.msra.mxu0 0
        %6417 = vmatprep.subr.bf16.mxu0 0
        %6418 = vmatpush1.bf16.xpose.msra.mxu0 0
        %6419 = vmatprep.subr.bf16.mxu0 0
        %6420 = vmatpush1.bf16.xpose.msra.mxu0 0
        %6421 = vmatprep.subr.bf16.mxu0 0
        %6422 = vmatpush1.bf16.xpose.msra.mxu0 0
        %6423 = vmatprep.subr.bf16.mxu0 0
        %6424 = vmatpush1.bf16.xpose.msra.mxu0 0
        %6425 = vmatprep.subr.bf16.mxu0 0
        %6426 = vmatpush1.bf16.xpose.msra.mxu0 0
        %6427 = vmatprep.subr.bf16.mxu0 0
        %6428 = vmatpush1.bf16.xpose.msra.mxu0 0
        %6429 = vmatprep.subr.bf16.mxu0 0
        %6430 = vmatpush1.bf16.xpose.msra.mxu0 0
        %6431 = vmatprep.subr.bf16.mxu0 0
        %6432 = vmatpush1.bf16.xpose.msra.mxu0 0
        %6433 = vmatprep.subr.bf16.mxu0 0
        %6434 = vmatpush1.bf16.xpose.msra.mxu0 0
        %6435 = vmatprep.subr.bf16.mxu0 0
        %6436 = vmatpush1.bf16.xpose.msra.mxu0 0
        %6437 = vmatprep.subr.bf16.mxu0 0
        %6438 = vmatpush1.bf16.xpose.msra.mxu0 0
        %6439 = vmatprep.mubr.bf16.mxu0 0
        %6440 = vmatmul.mubr.bf16.gmra.mrb[0].mxu0 %v6402
        %v6441 = vpop.f32.mrb[0].mxu0
        %v6442 = vadd.f32 %v6262, %v6441
        %v6443 = vpop.f32.mrb[0].mxu0
        %v6444 = vpop.f32.mrb[0].mxu0
        %v6445 = vpop.f32.mrb[0].mxu0
        %6446 = vdwg.mxu0
        %v6448 = vsel %vm1851, %v5666, 0
        %v6451 = vsel %vm1851, %v5962, 0
        %6453 = vmatprep.subr.bf16.mxu0 0
        %6454 = vmatpush1.bf16.xpose.msra.mxu0 %v6451
        %6455 = vmatprep.subr.bf16.mxu0 0
        %6456 = vmatpush1.bf16.xpose.msra.mxu0 0
        %6457 = vmatprep.subr.bf16.mxu0 0
        %6458 = vmatpush1.bf16.xpose.msra.mxu0 0
        %6459 = vmatprep.subr.bf16.mxu0 0
        %6460 = vmatpush1.bf16.xpose.msra.mxu0 0
        %6461 = vmatprep.subr.bf16.mxu0 0
        %6462 = vmatpush1.bf16.xpose.msra.mxu0 0
        %6463 = vmatprep.subr.bf16.mxu0 0
        %6464 = vmatpush1.bf16.xpose.msra.mxu0 0
        %6465 = vmatprep.subr.bf16.mxu0 0
        %6466 = vmatpush1.bf16.xpose.msra.mxu0 0
        %6467 = vmatprep.subr.bf16.mxu0 0
        %6468 = vmatpush1.bf16.xpose.msra.mxu0 0
        %6469 = vmatprep.subr.bf16.mxu0 0
        %6470 = vmatpush1.bf16.xpose.msra.mxu0 0
        %6471 = vmatprep.subr.bf16.mxu0 0
        %6472 = vmatpush1.bf16.xpose.msra.mxu0 0
        %6473 = vmatprep.subr.bf16.mxu0 0
        %6474 = vmatpush1.bf16.xpose.msra.mxu0 0
        %6475 = vmatprep.subr.bf16.mxu0 0
        %6476 = vmatpush1.bf16.xpose.msra.mxu0 0
        %6477 = vmatprep.subr.bf16.mxu0 0
        %6478 = vmatpush1.bf16.xpose.msra.mxu0 0
        %6479 = vmatprep.subr.bf16.mxu0 0
        %6480 = vmatpush1.bf16.xpose.msra.mxu0 0
        %6481 = vmatprep.subr.bf16.mxu0 0
        %6482 = vmatpush1.bf16.xpose.msra.mxu0 0
        %6483 = vmatprep.subr.bf16.mxu0 0
        %6484 = vmatpush1.bf16.xpose.msra.mxu0 0
        %6485 = vmatprep.mubr.bf16.mxu0 0
        %6486 = vmatmul.mubr.bf16.gmra.mrb[0].mxu0 %v6448
        %v6487 = vpop.f32.mrb[0].mxu0
        %v6488 = vadd.f32 %v6262, %v6487
        %v6489 = vpop.f32.mrb[0].mxu0
        %v6490 = vpop.f32.mrb[0].mxu0
        %v6491 = vpop.f32.mrb[0].mxu0
        %6492 = vdwg.mxu0
        %v6494 = vsel %vm1851, %v5667, 0
        %v6497 = vsel %vm1851, %v5963, 0
        %6499 = vmatprep.subr.bf16.mxu0 0
        %6500 = vmatpush1.bf16.xpose.msra.mxu0 %v6497
        %6501 = vmatprep.subr.bf16.mxu0 0
        %6502 = vmatpush1.bf16.xpose.msra.mxu0 0
        %6503 = vmatprep.subr.bf16.mxu0 0
        %6504 = vmatpush1.bf16.xpose.msra.mxu0 0
        %6505 = vmatprep.subr.bf16.mxu0 0
        %6506 = vmatpush1.bf16.xpose.msra.mxu0 0
        %6507 = vmatprep.subr.bf16.mxu0 0
        %6508 = vmatpush1.bf16.xpose.msra.mxu0 0
        %6509 = vmatprep.subr.bf16.mxu0 0
        %6510 = vmatpush1.bf16.xpose.msra.mxu0 0
        %6511 = vmatprep.subr.bf16.mxu0 0
        %6512 = vmatpush1.bf16.xpose.msra.mxu0 0
        %6513 = vmatprep.subr.bf16.mxu0 0
        %6514 = vmatpush1.bf16.xpose.msra.mxu0 0
        %6515 = vmatprep.subr.bf16.mxu0 0
        %6516 = vmatpush1.bf16.xpose.msra.mxu0 0
        %6517 = vmatprep.subr.bf16.mxu0 0
        %6518 = vmatpush1.bf16.xpose.msra.mxu0 0
        %6519 = vmatprep.subr.bf16.mxu0 0
        %6520 = vmatpush1.bf16.xpose.msra.mxu0 0
        %6521 = vmatprep.subr.bf16.mxu0 0
        %6522 = vmatpush1.bf16.xpose.msra.mxu0 0
        %6523 = vmatprep.subr.bf16.mxu0 0
        %6524 = vmatpush1.bf16.xpose.msra.mxu0 0
        %6525 = vmatprep.subr.bf16.mxu0 0
        %6526 = vmatpush1.bf16.xpose.msra.mxu0 0
        %6527 = vmatprep.subr.bf16.mxu0 0
        %6528 = vmatpush1.bf16.xpose.msra.mxu0 0
        %6529 = vmatprep.subr.bf16.mxu0 0
        %6530 = vmatpush1.bf16.xpose.msra.mxu0 0
        %6531 = vmatprep.mubr.bf16.mxu0 0
        %6532 = vmatmul.mubr.bf16.gmra.mrb[0].mxu0 %v6494
        %v6533 = vpop.f32.mrb[0].mxu0
        %v6534 = vadd.f32 %v6262, %v6533
        %v6535 = vpop.f32.mrb[0].mxu0
        %v6536 = vpop.f32.mrb[0].mxu0
        %v6537 = vpop.f32.mrb[0].mxu0
        %6538 = vdwg.mxu0
        %v6540 = vsel %vm1851, %v5668, 0
        %v6543 = vsel %vm1851, %v5964, 0
        %6545 = vmatprep.subr.bf16.mxu0 0
        %6546 = vmatpush1.bf16.xpose.msra.mxu0 %v6543
        %6547 = vmatprep.subr.bf16.mxu0 0
        %6548 = vmatpush1.bf16.xpose.msra.mxu0 0
        %6549 = vmatprep.subr.bf16.mxu0 0
        %6550 = vmatpush1.bf16.xpose.msra.mxu0 0
        %6551 = vmatprep.subr.bf16.mxu0 0
        %6552 = vmatpush1.bf16.xpose.msra.mxu0 0
        %6553 = vmatprep.subr.bf16.mxu0 0
        %6554 = vmatpush1.bf16.xpose.msra.mxu0 0
        %6555 = vmatprep.subr.bf16.mxu0 0
        %6556 = vmatpush1.bf16.xpose.msra.mxu0 0
        %6557 = vmatprep.subr.bf16.mxu0 0
        %6558 = vmatpush1.bf16.xpose.msra.mxu0 0
        %6559 = vmatprep.subr.bf16.mxu0 0
        %6560 = vmatpush1.bf16.xpose.msra.mxu0 0
        %6561 = vmatprep.subr.bf16.mxu0 0
        %6562 = vmatpush1.bf16.xpose.msra.mxu0 0
        %6563 = vmatprep.subr.bf16.mxu0 0
        %6564 = vmatpush1.bf16.xpose.msra.mxu0 0
        %6565 = vmatprep.subr.bf16.mxu0 0
        %6566 = vmatpush1.bf16.xpose.msra.mxu0 0
        %6567 = vmatprep.subr.bf16.mxu0 0
        %6568 = vmatpush1.bf16.xpose.msra.mxu0 0
        %6569 = vmatprep.subr.bf16.mxu0 0
        %6570 = vmatpush1.bf16.xpose.msra.mxu0 0
        %6571 = vmatprep.subr.bf16.mxu0 0
        %6572 = vmatpush1.bf16.xpose.msra.mxu0 0
        %6573 = vmatprep.subr.bf16.mxu0 0
        %6574 = vmatpush1.bf16.xpose.msra.mxu0 0
        %6575 = vmatprep.subr.bf16.mxu0 0
        %6576 = vmatpush1.bf16.xpose.msra.mxu0 0
        %6577 = vmatprep.mubr.bf16.mxu0 0
        %6578 = vmatmul.mubr.bf16.gmra.mrb[0].mxu0 %v6540
        %v6579 = vpop.f32.mrb[0].mxu0
        %v6580 = vadd.f32 %v6262, %v6579
        %v6581 = vpop.f32.mrb[0].mxu0
        %v6582 = vpop.f32.mrb[0].mxu0
        %v6583 = vpop.f32.mrb[0].mxu0
        %6584 = vdwg.mxu0
        %v6586 = vsel %vm1851, %v5669, 0
        %v6589 = vsel %vm1851, %v5965, 0
        %6591 = vmatprep.subr.bf16.mxu0 0
        %6592 = vmatpush1.bf16.xpose.msra.mxu0 %v6589
        %6593 = vmatprep.subr.bf16.mxu0 0
        %6594 = vmatpush1.bf16.xpose.msra.mxu0 0
        %6595 = vmatprep.subr.bf16.mxu0 0
        %6596 = vmatpush1.bf16.xpose.msra.mxu0 0
        %6597 = vmatprep.subr.bf16.mxu0 0
        %6598 = vmatpush1.bf16.xpose.msra.mxu0 0
        %6599 = vmatprep.subr.bf16.mxu0 0
        %6600 = vmatpush1.bf16.xpose.msra.mxu0 0
        %6601 = vmatprep.subr.bf16.mxu0 0
        %6602 = vmatpush1.bf16.xpose.msra.mxu0 0
        %6603 = vmatprep.subr.bf16.mxu0 0
        %6604 = vmatpush1.bf16.xpose.msra.mxu0 0
        %6605 = vmatprep.subr.bf16.mxu0 0
        %6606 = vmatpush1.bf16.xpose.msra.mxu0 0
        %6607 = vmatprep.subr.bf16.mxu0 0
        %6608 = vmatpush1.bf16.xpose.msra.mxu0 0
        %6609 = vmatprep.subr.bf16.mxu0 0
        %6610 = vmatpush1.bf16.xpose.msra.mxu0 0
        %6611 = vmatprep.subr.bf16.mxu0 0
        %6612 = vmatpush1.bf16.xpose.msra.mxu0 0
        %6613 = vmatprep.subr.bf16.mxu0 0
        %6614 = vmatpush1.bf16.xpose.msra.mxu0 0
        %6615 = vmatprep.subr.bf16.mxu0 0
        %6616 = vmatpush1.bf16.xpose.msra.mxu0 0
        %6617 = vmatprep.subr.bf16.mxu0 0
        %6618 = vmatpush1.bf16.xpose.msra.mxu0 0
        %6619 = vmatprep.subr.bf16.mxu0 0
        %6620 = vmatpush1.bf16.xpose.msra.mxu0 0
        %6621 = vmatprep.subr.bf16.mxu0 0
        %6622 = vmatpush1.bf16.xpose.msra.mxu0 0
        %6623 = vmatprep.mubr.bf16.mxu0 0
        %6624 = vmatmul.mubr.bf16.gmra.mrb[0].mxu0 %v6586
        %v6625 = vpop.f32.mrb[0].mxu0
        %v6626 = vadd.f32 %v6262, %v6625
        %v6627 = vpop.f32.mrb[0].mxu0
        %v6628 = vpop.f32.mrb[0].mxu0
        %v6629 = vpop.f32.mrb[0].mxu0
        %6630 = vdwg.mxu0
        %v6631 = vsel %vm2220, %v6304, -inf
        %6632 = vmax.xlane.f32.xlu0 %v6631
        %v6633 = vpop.xlane.xlu0 %6632
        %v6634 = vsel %vm2220, %v6350, -inf
        %6635 = vmax.xlane.f32.xlu0 %v6634
        %v6636 = vpop.xlane.xlu0 %6635
        %v6637 = vsel %vm2220, %v6396, -inf
        %6638 = vmax.xlane.f32.xlu0 %v6637
        %v6639 = vpop.xlane.xlu0 %6638
        %v6640 = vsel %vm2220, %v6442, -inf
        %6641 = vmax.xlane.f32.xlu0 %v6640
        %v6642 = vpop.xlane.xlu0 %6641
        %v6643 = vsel %vm2220, %v6488, -inf
        %6644 = vmax.xlane.f32.xlu0 %v6643
        %v6645 = vpop.xlane.xlu0 %6644
        %v6646 = vsel %vm2220, %v6534, -inf
        %6647 = vmax.xlane.f32.xlu0 %v6646
        %v6648 = vpop.xlane.xlu0 %6647
        %v6649 = vsel %vm2220, %v6580, -inf
        %6650 = vmax.xlane.f32.xlu0 %v6649
        %v6651 = vpop.xlane.xlu0 %6650
        %v6652 = vsel %vm2220, %v6626, -inf
        %6653 = vmax.xlane.f32.xlu0 %v6652
        %v6654 = vpop.xlane.xlu0 %6653
        %v6655 = vsub.f32 %v6304, %v6633
        %v6656 = vsub.f32 %v6350, %v6636
        %v6657 = vsub.f32 %v6396, %v6639
        %v6658 = vsub.f32 %v6442, %v6642
        %v6659 = vsub.f32 %v6488, %v6645
        %v6660 = vsub.f32 %v6534, %v6648
        %v6661 = vsub.f32 %v6580, %v6651
        %v6662 = vsub.f32 %v6626, %v6654
        %v6663 = vmul.f32 %v6655, 1.442695
        %v6664 = vpow.pop %v6663
        %v6665 = vmul.f32 %v6656, 1.442695
        %v6666 = vpow.pop %v6665
        %v6667 = vmul.f32 %v6657, 1.442695
        %v6668 = vpow.pop %v6667
        %v6669 = vmul.f32 %v6658, 1.442695
        %v6670 = vpow.pop %v6669
        %v6671 = vmul.f32 %v6659, 1.442695
        %v6672 = vpow.pop %v6671
        %v6673 = vmul.f32 %v6660, 1.442695
        %v6674 = vpow.pop %v6673
        %v6675 = vmul.f32 %v6661, 1.442695
        %v6676 = vpow.pop %v6675
        %v6677 = vmul.f32 %v6662, 1.442695
        %v6678 = vpow.pop %v6677
        %v6679 = vsel %vm2220, %v6664, 0.0
        %6680 = vadd.xlane.f32.xlu0 %v6679
        %v6681 = vpop.xlane.xlu0 %6680
        %v6682 = vsel %vm2220, %v6666, 0.0
        %6683 = vadd.xlane.f32.xlu0 %v6682
        %v6684 = vpop.xlane.xlu0 %6683
        %v6685 = vsel %vm2220, %v6668, 0.0
        %6686 = vadd.xlane.f32.xlu0 %v6685
        %v6687 = vpop.xlane.xlu0 %6686
        %v6688 = vsel %vm2220, %v6670, 0.0
        %6689 = vadd.xlane.f32.xlu0 %v6688
        %v6690 = vpop.xlane.xlu0 %6689
        %v6691 = vsel %vm2220, %v6672, 0.0
        %6692 = vadd.xlane.f32.xlu0 %v6691
        %v6693 = vpop.xlane.xlu0 %6692
        %v6694 = vsel %vm2220, %v6674, 0.0
        %6695 = vadd.xlane.f32.xlu0 %v6694
        %v6696 = vpop.xlane.xlu0 %6695
        %v6697 = vsel %vm2220, %v6676, 0.0
        %6698 = vadd.xlane.f32.xlu0 %v6697
        %v6699 = vpop.xlane.xlu0 %6698
        %v6700 = vsel %vm2220, %v6678, 0.0
        %6701 = vadd.xlane.f32.xlu0 %v6700
        %v6702 = vpop.xlane.xlu0 %6701
        %v6703 = vrcp.pop %v6681
        %v6704 = vrcp.pop %v6684
        %v6705 = vrcp.pop %v6687
        %v6706 = vrcp.pop %v6690
        %v6707 = vrcp.pop %v6693
        %v6708 = vrcp.pop %v6696
        %v6709 = vrcp.pop %v6699
        %v6710 = vrcp.pop %v6702
        %v6711 = vmul.f32 %v6664, %v6703
        %v6712 = vmul.f32 %v6666, %v6704
        %v6713 = vmul.f32 %v6668, %v6705
        %v6714 = vmul.f32 %v6670, %v6706
        %v6715 = vmul.f32 %v6672, %v6707
        %v6716 = vmul.f32 %v6674, %v6708
        %v6717 = vmul.f32 %v6676, %v6709
        %v6718 = vmul.f32 %v6678, %v6710
        %v6719 = vpack.c.bf16 %v6711, %v6711
        %v6720 = vpack.c.bf16 %v6712, %v6712
        %v6721 = vpack.c.bf16 %v6713, %v6713
        %v6722 = vpack.c.bf16 %v6714, %v6714
        %v6723 = vpack.c.bf16 %v6715, %v6715
        %v6724 = vpack.c.bf16 %v6716, %v6716
        %v6725 = vpack.c.bf16 %v6717, %v6717
        %v6726 = vpack.c.bf16 %v6718, %v6718
        %v6728 = vsel %vm2220, %v6719, 0
        %v6731 = vsel %vm2320, %v6254, 0
        %6733 = vmatprep.subr.bf16.mxu0 0
        %6734 = vmatpush1.bf16.msra.mxu0 %v6731
        %6735 = vmatprep.subr.bf16.mxu0 0
        %6736 = vmatpush1.bf16.msra.mxu0 0
        %6737 = vmatprep.subr.bf16.mxu0 0
        %6738 = vmatpush1.bf16.msra.mxu0 0
        %6739 = vmatprep.subr.bf16.mxu0 0
        %6740 = vmatpush1.bf16.msra.mxu0 0
        %6741 = vmatprep.subr.bf16.mxu0 0
        %6742 = vmatpush1.bf16.msra.mxu0 0
        %6743 = vmatprep.subr.bf16.mxu0 0
        %6744 = vmatpush1.bf16.msra.mxu0 0
        %6745 = vmatprep.subr.bf16.mxu0 0
        %6746 = vmatpush1.bf16.msra.mxu0 0
        %6747 = vmatprep.subr.bf16.mxu0 0
        %6748 = vmatpush1.bf16.msra.mxu0 0
        %6749 = vmatprep.subr.bf16.mxu0 0
        %6750 = vmatpush1.bf16.msra.mxu0 0
        %6751 = vmatprep.subr.bf16.mxu0 0
        %6752 = vmatpush1.bf16.msra.mxu0 0
        %6753 = vmatprep.subr.bf16.mxu0 0
        %6754 = vmatpush1.bf16.msra.mxu0 0
        %6755 = vmatprep.subr.bf16.mxu0 0
        %6756 = vmatpush1.bf16.msra.mxu0 0
        %6757 = vmatprep.subr.bf16.mxu0 0
        %6758 = vmatpush1.bf16.msra.mxu0 0
        %6759 = vmatprep.subr.bf16.mxu0 0
        %6760 = vmatpush1.bf16.msra.mxu0 0
        %6761 = vmatprep.subr.bf16.mxu0 0
        %6762 = vmatpush1.bf16.msra.mxu0 0
        %6763 = vmatprep.subr.bf16.mxu0 0
        %6764 = vmatpush1.bf16.msra.mxu0 0
        %6765 = vmatprep.mubr.bf16.mxu0 0
        %6766 = vmatmul.mubr.bf16.gmra.mrb[0].mxu0 %v6728
        %v6767 = vpop.f32.mrb[0].mxu0
        %v6768 = vadd.f32 0.0, %v6767
        %v6769 = vpop.f32.mrb[0].mxu0
        %v6770 = vpop.f32.mrb[0].mxu0
        %v6771 = vpop.f32.mrb[0].mxu0
        %6772 = vdwg.mxu0
        %v6774 = vsel %vm2220, %v6720, 0
        %v6777 = vsel %vm2320, %v6255, 0
        %6779 = vmatprep.subr.bf16.mxu0 0
        %6780 = vmatpush1.bf16.msra.mxu0 %v6777
        %6781 = vmatprep.subr.bf16.mxu0 0
        %6782 = vmatpush1.bf16.msra.mxu0 0
        %6783 = vmatprep.subr.bf16.mxu0 0
        %6784 = vmatpush1.bf16.msra.mxu0 0
        %6785 = vmatprep.subr.bf16.mxu0 0
        %6786 = vmatpush1.bf16.msra.mxu0 0
        %6787 = vmatprep.subr.bf16.mxu0 0
        %6788 = vmatpush1.bf16.msra.mxu0 0
        %6789 = vmatprep.subr.bf16.mxu0 0
        %6790 = vmatpush1.bf16.msra.mxu0 0
        %6791 = vmatprep.subr.bf16.mxu0 0
        %6792 = vmatpush1.bf16.msra.mxu0 0
        %6793 = vmatprep.subr.bf16.mxu0 0
        %6794 = vmatpush1.bf16.msra.mxu0 0
        %6795 = vmatprep.subr.bf16.mxu0 0
        %6796 = vmatpush1.bf16.msra.mxu0 0
        %6797 = vmatprep.subr.bf16.mxu0 0
        %6798 = vmatpush1.bf16.msra.mxu0 0
        %6799 = vmatprep.subr.bf16.mxu0 0
        %6800 = vmatpush1.bf16.msra.mxu0 0
        %6801 = vmatprep.subr.bf16.mxu0 0
        %6802 = vmatpush1.bf16.msra.mxu0 0
        %6803 = vmatprep.subr.bf16.mxu0 0
        %6804 = vmatpush1.bf16.msra.mxu0 0
        %6805 = vmatprep.subr.bf16.mxu0 0
        %6806 = vmatpush1.bf16.msra.mxu0 0
        %6807 = vmatprep.subr.bf16.mxu0 0
        %6808 = vmatpush1.bf16.msra.mxu0 0
        %6809 = vmatprep.subr.bf16.mxu0 0
        %6810 = vmatpush1.bf16.msra.mxu0 0
        %6811 = vmatprep.mubr.bf16.mxu0 0
        %6812 = vmatmul.mubr.bf16.gmra.mrb[0].mxu0 %v6774
        %v6813 = vpop.f32.mrb[0].mxu0
        %v6814 = vadd.f32 0.0, %v6813
        %v6815 = vpop.f32.mrb[0].mxu0
        %v6816 = vpop.f32.mrb[0].mxu0
        %v6817 = vpop.f32.mrb[0].mxu0
        %6818 = vdwg.mxu0
        %v6820 = vsel %vm2220, %v6721, 0
        %v6823 = vsel %vm2320, %v6256, 0
        %6825 = vmatprep.subr.bf16.mxu0 0
        %6826 = vmatpush1.bf16.msra.mxu0 %v6823
        %6827 = vmatprep.subr.bf16.mxu0 0
        %6828 = vmatpush1.bf16.msra.mxu0 0
        %6829 = vmatprep.subr.bf16.mxu0 0
        %6830 = vmatpush1.bf16.msra.mxu0 0
        %6831 = vmatprep.subr.bf16.mxu0 0
        %6832 = vmatpush1.bf16.msra.mxu0 0
        %6833 = vmatprep.subr.bf16.mxu0 0
        %6834 = vmatpush1.bf16.msra.mxu0 0
        %6835 = vmatprep.subr.bf16.mxu0 0
        %6836 = vmatpush1.bf16.msra.mxu0 0
        %6837 = vmatprep.subr.bf16.mxu0 0
        %6838 = vmatpush1.bf16.msra.mxu0 0
        %6839 = vmatprep.subr.bf16.mxu0 0
        %6840 = vmatpush1.bf16.msra.mxu0 0
        %6841 = vmatprep.subr.bf16.mxu0 0
        %6842 = vmatpush1.bf16.msra.mxu0 0
        %6843 = vmatprep.subr.bf16.mxu0 0
        %6844 = vmatpush1.bf16.msra.mxu0 0
        %6845 = vmatprep.subr.bf16.mxu0 0
        %6846 = vmatpush1.bf16.msra.mxu0 0
        %6847 = vmatprep.subr.bf16.mxu0 0
        %6848 = vmatpush1.bf16.msra.mxu0 0
        %6849 = vmatprep.subr.bf16.mxu0 0
        %6850 = vmatpush1.bf16.msra.mxu0 0
        %6851 = vmatprep.subr.bf16.mxu0 0
        %6852 = vmatpush1.bf16.msra.mxu0 0
        %6853 = vmatprep.subr.bf16.mxu0 0
        %6854 = vmatpush1.bf16.msra.mxu0 0
        %6855 = vmatprep.subr.bf16.mxu0 0
        %6856 = vmatpush1.bf16.msra.mxu0 0
        %6857 = vmatprep.mubr.bf16.mxu0 0
        %6858 = vmatmul.mubr.bf16.gmra.mrb[0].mxu0 %v6820
        %v6859 = vpop.f32.mrb[0].mxu0
        %v6860 = vadd.f32 0.0, %v6859
        %v6861 = vpop.f32.mrb[0].mxu0
        %v6862 = vpop.f32.mrb[0].mxu0
        %v6863 = vpop.f32.mrb[0].mxu0
        %6864 = vdwg.mxu0
        %v6866 = vsel %vm2220, %v6722, 0
        %v6869 = vsel %vm2320, %v6257, 0
        %6871 = vmatprep.subr.bf16.mxu0 0
        %6872 = vmatpush1.bf16.msra.mxu0 %v6869
        %6873 = vmatprep.subr.bf16.mxu0 0
        %6874 = vmatpush1.bf16.msra.mxu0 0
        %6875 = vmatprep.subr.bf16.mxu0 0
        %6876 = vmatpush1.bf16.msra.mxu0 0
        %6877 = vmatprep.subr.bf16.mxu0 0
        %6878 = vmatpush1.bf16.msra.mxu0 0
        %6879 = vmatprep.subr.bf16.mxu0 0
        %6880 = vmatpush1.bf16.msra.mxu0 0
        %6881 = vmatprep.subr.bf16.mxu0 0
        %6882 = vmatpush1.bf16.msra.mxu0 0
        %6883 = vmatprep.subr.bf16.mxu0 0
        %6884 = vmatpush1.bf16.msra.mxu0 0
        %6885 = vmatprep.subr.bf16.mxu0 0
        %6886 = vmatpush1.bf16.msra.mxu0 0
        %6887 = vmatprep.subr.bf16.mxu0 0
        %6888 = vmatpush1.bf16.msra.mxu0 0
        %6889 = vmatprep.subr.bf16.mxu0 0
        %6890 = vmatpush1.bf16.msra.mxu0 0
        %6891 = vmatprep.subr.bf16.mxu0 0
        %6892 = vmatpush1.bf16.msra.mxu0 0
        %6893 = vmatprep.subr.bf16.mxu0 0
        %6894 = vmatpush1.bf16.msra.mxu0 0
        %6895 = vmatprep.subr.bf16.mxu0 0
        %6896 = vmatpush1.bf16.msra.mxu0 0
        %6897 = vmatprep.subr.bf16.mxu0 0
        %6898 = vmatpush1.bf16.msra.mxu0 0
        %6899 = vmatprep.subr.bf16.mxu0 0
        %6900 = vmatpush1.bf16.msra.mxu0 0
        %6901 = vmatprep.subr.bf16.mxu0 0
        %6902 = vmatpush1.bf16.msra.mxu0 0
        %6903 = vmatprep.mubr.bf16.mxu0 0
        %6904 = vmatmul.mubr.bf16.gmra.mrb[0].mxu0 %v6866
        %v6905 = vpop.f32.mrb[0].mxu0
        %v6906 = vadd.f32 0.0, %v6905
        %v6907 = vpop.f32.mrb[0].mxu0
        %v6908 = vpop.f32.mrb[0].mxu0
        %v6909 = vpop.f32.mrb[0].mxu0
        %6910 = vdwg.mxu0
        %v6912 = vsel %vm2220, %v6723, 0
        %v6915 = vsel %vm2320, %v6258, 0
        %6917 = vmatprep.subr.bf16.mxu0 0
        %6918 = vmatpush1.bf16.msra.mxu0 %v6915
        %6919 = vmatprep.subr.bf16.mxu0 0
        %6920 = vmatpush1.bf16.msra.mxu0 0
        %6921 = vmatprep.subr.bf16.mxu0 0
        %6922 = vmatpush1.bf16.msra.mxu0 0
        %6923 = vmatprep.subr.bf16.mxu0 0
        %6924 = vmatpush1.bf16.msra.mxu0 0
        %6925 = vmatprep.subr.bf16.mxu0 0
        %6926 = vmatpush1.bf16.msra.mxu0 0
        %6927 = vmatprep.subr.bf16.mxu0 0
        %6928 = vmatpush1.bf16.msra.mxu0 0
        %6929 = vmatprep.subr.bf16.mxu0 0
        %6930 = vmatpush1.bf16.msra.mxu0 0
        %6931 = vmatprep.subr.bf16.mxu0 0
        %6932 = vmatpush1.bf16.msra.mxu0 0
        %6933 = vmatprep.subr.bf16.mxu0 0
        %6934 = vmatpush1.bf16.msra.mxu0 0
        %6935 = vmatprep.subr.bf16.mxu0 0
        %6936 = vmatpush1.bf16.msra.mxu0 0
        %6937 = vmatprep.subr.bf16.mxu0 0
        %6938 = vmatpush1.bf16.msra.mxu0 0
        %6939 = vmatprep.subr.bf16.mxu0 0
        %6940 = vmatpush1.bf16.msra.mxu0 0
        %6941 = vmatprep.subr.bf16.mxu0 0
        %6942 = vmatpush1.bf16.msra.mxu0 0
        %6943 = vmatprep.subr.bf16.mxu0 0
        %6944 = vmatpush1.bf16.msra.mxu0 0
        %6945 = vmatprep.subr.bf16.mxu0 0
        %6946 = vmatpush1.bf16.msra.mxu0 0
        %6947 = vmatprep.subr.bf16.mxu0 0
        %6948 = vmatpush1.bf16.msra.mxu0 0
        %6949 = vmatprep.mubr.bf16.mxu0 0
        %6950 = vmatmul.mubr.bf16.gmra.mrb[0].mxu0 %v6912
        %v6951 = vpop.f32.mrb[0].mxu0
        %v6952 = vadd.f32 0.0, %v6951
        %v6953 = vpop.f32.mrb[0].mxu0
        %v6954 = vpop.f32.mrb[0].mxu0
        %v6955 = vpop.f32.mrb[0].mxu0
        %6956 = vdwg.mxu0
        %v6958 = vsel %vm2220, %v6724, 0
        %v6961 = vsel %vm2320, %v6259, 0
        %6963 = vmatprep.subr.bf16.mxu0 0
        %6964 = vmatpush1.bf16.msra.mxu0 %v6961
        %6965 = vmatprep.subr.bf16.mxu0 0
        %6966 = vmatpush1.bf16.msra.mxu0 0
        %6967 = vmatprep.subr.bf16.mxu0 0
        %6968 = vmatpush1.bf16.msra.mxu0 0
        %6969 = vmatprep.subr.bf16.mxu0 0
        %6970 = vmatpush1.bf16.msra.mxu0 0
        %6971 = vmatprep.subr.bf16.mxu0 0
        %6972 = vmatpush1.bf16.msra.mxu0 0
        %6973 = vmatprep.subr.bf16.mxu0 0
        %6974 = vmatpush1.bf16.msra.mxu0 0
        %6975 = vmatprep.subr.bf16.mxu0 0
        %6976 = vmatpush1.bf16.msra.mxu0 0
        %6977 = vmatprep.subr.bf16.mxu0 0
        %6978 = vmatpush1.bf16.msra.mxu0 0
        %6979 = vmatprep.subr.bf16.mxu0 0
        %6980 = vmatpush1.bf16.msra.mxu0 0
        %6981 = vmatprep.subr.bf16.mxu0 0
        %6982 = vmatpush1.bf16.msra.mxu0 0
        %6983 = vmatprep.subr.bf16.mxu0 0
        %6984 = vmatpush1.bf16.msra.mxu0 0
        %6985 = vmatprep.subr.bf16.mxu0 0
        %6986 = vmatpush1.bf16.msra.mxu0 0
        %6987 = vmatprep.subr.bf16.mxu0 0
        %6988 = vmatpush1.bf16.msra.mxu0 0
        %6989 = vmatprep.subr.bf16.mxu0 0
        %6990 = vmatpush1.bf16.msra.mxu0 0
        %6991 = vmatprep.subr.bf16.mxu0 0
        %6992 = vmatpush1.bf16.msra.mxu0 0
        %6993 = vmatprep.subr.bf16.mxu0 0
        %6994 = vmatpush1.bf16.msra.mxu0 0
        %6995 = vmatprep.mubr.bf16.mxu0 0
        %6996 = vmatmul.mubr.bf16.gmra.mrb[0].mxu0 %v6958
        %v6997 = vpop.f32.mrb[0].mxu0
        %v6998 = vadd.f32 0.0, %v6997
        %v6999 = vpop.f32.mrb[0].mxu0
        %v7000 = vpop.f32.mrb[0].mxu0
        %v7001 = vpop.f32.mrb[0].mxu0
        %7002 = vdwg.mxu0
        %v7004 = vsel %vm2220, %v6725, 0
        %v7007 = vsel %vm2320, %v6260, 0
        %7009 = vmatprep.subr.bf16.mxu0 0
        %7010 = vmatpush1.bf16.msra.mxu0 %v7007
        %7011 = vmatprep.subr.bf16.mxu0 0
        %7012 = vmatpush1.bf16.msra.mxu0 0
        %7013 = vmatprep.subr.bf16.mxu0 0
        %7014 = vmatpush1.bf16.msra.mxu0 0
        %7015 = vmatprep.subr.bf16.mxu0 0
        %7016 = vmatpush1.bf16.msra.mxu0 0
        %7017 = vmatprep.subr.bf16.mxu0 0
        %7018 = vmatpush1.bf16.msra.mxu0 0
        %7019 = vmatprep.subr.bf16.mxu0 0
        %7020 = vmatpush1.bf16.msra.mxu0 0
        %7021 = vmatprep.subr.bf16.mxu0 0
        %7022 = vmatpush1.bf16.msra.mxu0 0
        %7023 = vmatprep.subr.bf16.mxu0 0
        %7024 = vmatpush1.bf16.msra.mxu0 0
        %7025 = vmatprep.subr.bf16.mxu0 0
        %7026 = vmatpush1.bf16.msra.mxu0 0
        %7027 = vmatprep.subr.bf16.mxu0 0
        %7028 = vmatpush1.bf16.msra.mxu0 0
        %7029 = vmatprep.subr.bf16.mxu0 0
        %7030 = vmatpush1.bf16.msra.mxu0 0
        %7031 = vmatprep.subr.bf16.mxu0 0
        %7032 = vmatpush1.bf16.msra.mxu0 0
        %7033 = vmatprep.subr.bf16.mxu0 0
        %7034 = vmatpush1.bf16.msra.mxu0 0
        %7035 = vmatprep.subr.bf16.mxu0 0
        %7036 = vmatpush1.bf16.msra.mxu0 0
        %7037 = vmatprep.subr.bf16.mxu0 0
        %7038 = vmatpush1.bf16.msra.mxu0 0
        %7039 = vmatprep.subr.bf16.mxu0 0
        %7040 = vmatpush1.bf16.msra.mxu0 0
        %7041 = vmatprep.mubr.bf16.mxu0 0
        %7042 = vmatmul.mubr.bf16.gmra.mrb[0].mxu0 %v7004
        %v7043 = vpop.f32.mrb[0].mxu0
        %v7044 = vadd.f32 0.0, %v7043
        %v7045 = vpop.f32.mrb[0].mxu0
        %v7046 = vpop.f32.mrb[0].mxu0
        %v7047 = vpop.f32.mrb[0].mxu0
        %7048 = vdwg.mxu0
        %v7050 = vsel %vm2220, %v6726, 0
        %v7053 = vsel %vm2320, %v6261, 0
        %7055 = vmatprep.subr.bf16.mxu0 0
        %7056 = vmatpush1.bf16.msra.mxu0 %v7053
        %7057 = vmatprep.subr.bf16.mxu0 0
        %7058 = vmatpush1.bf16.msra.mxu0 0
        %7059 = vmatprep.subr.bf16.mxu0 0
        %7060 = vmatpush1.bf16.msra.mxu0 0
        %7061 = vmatprep.subr.bf16.mxu0 0
        %7062 = vmatpush1.bf16.msra.mxu0 0
        %7063 = vmatprep.subr.bf16.mxu0 0
        %7064 = vmatpush1.bf16.msra.mxu0 0
        %7065 = vmatprep.subr.bf16.mxu0 0
        %7066 = vmatpush1.bf16.msra.mxu0 0
        %7067 = vmatprep.subr.bf16.mxu0 0
        %7068 = vmatpush1.bf16.msra.mxu0 0
        %7069 = vmatprep.subr.bf16.mxu0 0
        %7070 = vmatpush1.bf16.msra.mxu0 0
        %7071 = vmatprep.subr.bf16.mxu0 0
        %7072 = vmatpush1.bf16.msra.mxu0 0
        %7073 = vmatprep.subr.bf16.mxu0 0
        %7074 = vmatpush1.bf16.msra.mxu0 0
        %7075 = vmatprep.subr.bf16.mxu0 0
        %7076 = vmatpush1.bf16.msra.mxu0 0
        %7077 = vmatprep.subr.bf16.mxu0 0
        %7078 = vmatpush1.bf16.msra.mxu0 0
        %7079 = vmatprep.subr.bf16.mxu0 0
        %7080 = vmatpush1.bf16.msra.mxu0 0
        %7081 = vmatprep.subr.bf16.mxu0 0
        %7082 = vmatpush1.bf16.msra.mxu0 0
        %7083 = vmatprep.subr.bf16.mxu0 0
        %7084 = vmatpush1.bf16.msra.mxu0 0
        %7085 = vmatprep.subr.bf16.mxu0 0
        %7086 = vmatpush1.bf16.msra.mxu0 0
        %7087 = vmatprep.mubr.bf16.mxu0 0
        %7088 = vmatmul.mubr.bf16.gmra.mrb[0].mxu0 %v7050
        %v7089 = vpop.f32.mrb[0].mxu0
        %v7090 = vadd.f32 0.0, %v7089
        %v7091 = vpop.f32.mrb[0].mxu0
        %v7092 = vpop.f32.mrb[0].mxu0
        %v7093 = vpop.f32.mrb[0].mxu0
        %7094 = vdwg.mxu0
        %7095 = vxpose.xlu0.b32.start [1/16] %v6768, 128
        %7096 = vxpose.xlu0.b32.cont [2/16] 0.0, 128
        %7097 = vxpose.xlu0.b32.cont [3/16] 0.0, 128
        %7098 = vxpose.xlu0.b32.cont [4/16] 0.0, 128
        %7099 = vxpose.xlu0.b32.cont [5/16] 0.0, 128
        %7100 = vxpose.xlu0.b32.cont [6/16] 0.0, 128
        %7101 = vxpose.xlu0.b32.cont [7/16] 0.0, 128
        %7102 = vxpose.xlu0.b32.cont [8/16] 0.0, 128
        %7103 = vxpose.xlu0.b32.cont [9/16] 0.0, 128
        %7104 = vxpose.xlu0.b32.cont [10/16] 0.0, 128
        %7105 = vxpose.xlu0.b32.cont [11/16] 0.0, 128
        %7106 = vxpose.xlu0.b32.cont [12/16] 0.0, 128
        %7107 = vxpose.xlu0.b32.cont [13/16] 0.0, 128
        %7108 = vxpose.xlu0.b32.cont [14/16] 0.0, 128
        %7109 = vxpose.xlu0.b32.cont [15/16] 0.0, 128
        %7110 = vxpose.xlu0.b32.end [16/16] 0.0, 128
        %v7111 = vpop.trf.xlu0
        %v7112 = vpop.trf.xlu0
        %v7113 = vpop.trf.xlu0
        %v7114 = vpop.trf.xlu0
        %v7115 = vpop.trf.xlu0
        %v7116 = vpop.trf.xlu0
        %v7117 = vpop.trf.xlu0
        %v7118 = vpop.trf.xlu0
        %v7119 = vpop.trf.xlu0
        %v7120 = vpop.trf.xlu0
        %v7121 = vpop.trf.xlu0
        %v7122 = vpop.trf.xlu0
        %v7123 = vpop.trf.xlu0
        %v7124 = vpop.trf.xlu0
        %v7125 = vpop.trf.xlu0
        %v7126 = vpop.trf.xlu0
        %7127 = vxpose.xlu0.b32.start [1/16] %v6814, 128
        %7128 = vxpose.xlu0.b32.cont [2/16] 0.0, 128
        %7129 = vxpose.xlu0.b32.cont [3/16] 0.0, 128
        %7130 = vxpose.xlu0.b32.cont [4/16] 0.0, 128
        %7131 = vxpose.xlu0.b32.cont [5/16] 0.0, 128
        %7132 = vxpose.xlu0.b32.cont [6/16] 0.0, 128
        %7133 = vxpose.xlu0.b32.cont [7/16] 0.0, 128
        %7134 = vxpose.xlu0.b32.cont [8/16] 0.0, 128
        %7135 = vxpose.xlu0.b32.cont [9/16] 0.0, 128
        %7136 = vxpose.xlu0.b32.cont [10/16] 0.0, 128
        %7137 = vxpose.xlu0.b32.cont [11/16] 0.0, 128
        %7138 = vxpose.xlu0.b32.cont [12/16] 0.0, 128
        %7139 = vxpose.xlu0.b32.cont [13/16] 0.0, 128
        %7140 = vxpose.xlu0.b32.cont [14/16] 0.0, 128
        %7141 = vxpose.xlu0.b32.cont [15/16] 0.0, 128
        %7142 = vxpose.xlu0.b32.end [16/16] 0.0, 128
        %v7143 = vpop.trf.xlu0
        %v7144 = vpop.trf.xlu0
        %v7145 = vpop.trf.xlu0
        %v7146 = vpop.trf.xlu0
        %v7147 = vpop.trf.xlu0
        %v7148 = vpop.trf.xlu0
        %v7149 = vpop.trf.xlu0
        %v7150 = vpop.trf.xlu0
        %v7151 = vpop.trf.xlu0
        %v7152 = vpop.trf.xlu0
        %v7153 = vpop.trf.xlu0
        %v7154 = vpop.trf.xlu0
        %v7155 = vpop.trf.xlu0
        %v7156 = vpop.trf.xlu0
        %v7157 = vpop.trf.xlu0
        %v7158 = vpop.trf.xlu0
        %7159 = vxpose.xlu0.b32.start [1/16] %v6860, 128
        %7160 = vxpose.xlu0.b32.cont [2/16] 0.0, 128
        %7161 = vxpose.xlu0.b32.cont [3/16] 0.0, 128
        %7162 = vxpose.xlu0.b32.cont [4/16] 0.0, 128
        %7163 = vxpose.xlu0.b32.cont [5/16] 0.0, 128
        %7164 = vxpose.xlu0.b32.cont [6/16] 0.0, 128
        %7165 = vxpose.xlu0.b32.cont [7/16] 0.0, 128
        %7166 = vxpose.xlu0.b32.cont [8/16] 0.0, 128
        %7167 = vxpose.xlu0.b32.cont [9/16] 0.0, 128
        %7168 = vxpose.xlu0.b32.cont [10/16] 0.0, 128
        %7169 = vxpose.xlu0.b32.cont [11/16] 0.0, 128
        %7170 = vxpose.xlu0.b32.cont [12/16] 0.0, 128
        %7171 = vxpose.xlu0.b32.cont [13/16] 0.0, 128
        %7172 = vxpose.xlu0.b32.cont [14/16] 0.0, 128
        %7173 = vxpose.xlu0.b32.cont [15/16] 0.0, 128
        %7174 = vxpose.xlu0.b32.end [16/16] 0.0, 128
        %v7175 = vpop.trf.xlu0
        %v7176 = vpop.trf.xlu0
        %v7177 = vpop.trf.xlu0
        %v7178 = vpop.trf.xlu0
        %v7179 = vpop.trf.xlu0
        %v7180 = vpop.trf.xlu0
        %v7181 = vpop.trf.xlu0
        %v7182 = vpop.trf.xlu0
        %v7183 = vpop.trf.xlu0
        %v7184 = vpop.trf.xlu0
        %v7185 = vpop.trf.xlu0
        %v7186 = vpop.trf.xlu0
        %v7187 = vpop.trf.xlu0
        %v7188 = vpop.trf.xlu0
        %v7189 = vpop.trf.xlu0
        %v7190 = vpop.trf.xlu0
        %7191 = vxpose.xlu0.b32.start [1/16] %v6906, 128
        %7192 = vxpose.xlu0.b32.cont [2/16] 0.0, 128
        %7193 = vxpose.xlu0.b32.cont [3/16] 0.0, 128
        %7194 = vxpose.xlu0.b32.cont [4/16] 0.0, 128
        %7195 = vxpose.xlu0.b32.cont [5/16] 0.0, 128
        %7196 = vxpose.xlu0.b32.cont [6/16] 0.0, 128
        %7197 = vxpose.xlu0.b32.cont [7/16] 0.0, 128
        %7198 = vxpose.xlu0.b32.cont [8/16] 0.0, 128
        %7199 = vxpose.xlu0.b32.cont [9/16] 0.0, 128
        %7200 = vxpose.xlu0.b32.cont [10/16] 0.0, 128
        %7201 = vxpose.xlu0.b32.cont [11/16] 0.0, 128
        %7202 = vxpose.xlu0.b32.cont [12/16] 0.0, 128
        %7203 = vxpose.xlu0.b32.cont [13/16] 0.0, 128
        %7204 = vxpose.xlu0.b32.cont [14/16] 0.0, 128
        %7205 = vxpose.xlu0.b32.cont [15/16] 0.0, 128
        %7206 = vxpose.xlu0.b32.end [16/16] 0.0, 128
        %v7207 = vpop.trf.xlu0
        %v7208 = vpop.trf.xlu0
        %v7209 = vpop.trf.xlu0
        %v7210 = vpop.trf.xlu0
        %v7211 = vpop.trf.xlu0
        %v7212 = vpop.trf.xlu0
        %v7213 = vpop.trf.xlu0
        %v7214 = vpop.trf.xlu0
        %v7215 = vpop.trf.xlu0
        %v7216 = vpop.trf.xlu0
        %v7217 = vpop.trf.xlu0
        %v7218 = vpop.trf.xlu0
        %v7219 = vpop.trf.xlu0
        %v7220 = vpop.trf.xlu0
        %v7221 = vpop.trf.xlu0
        %v7222 = vpop.trf.xlu0
        %7223 = vxpose.xlu0.b32.start [1/16] %v6952, 128
        %7224 = vxpose.xlu0.b32.cont [2/16] 0.0, 128
        %7225 = vxpose.xlu0.b32.cont [3/16] 0.0, 128
        %7226 = vxpose.xlu0.b32.cont [4/16] 0.0, 128
        %7227 = vxpose.xlu0.b32.cont [5/16] 0.0, 128
        %7228 = vxpose.xlu0.b32.cont [6/16] 0.0, 128
        %7229 = vxpose.xlu0.b32.cont [7/16] 0.0, 128
        %7230 = vxpose.xlu0.b32.cont [8/16] 0.0, 128
        %7231 = vxpose.xlu0.b32.cont [9/16] 0.0, 128
        %7232 = vxpose.xlu0.b32.cont [10/16] 0.0, 128
        %7233 = vxpose.xlu0.b32.cont [11/16] 0.0, 128
        %7234 = vxpose.xlu0.b32.cont [12/16] 0.0, 128
        %7235 = vxpose.xlu0.b32.cont [13/16] 0.0, 128
        %7236 = vxpose.xlu0.b32.cont [14/16] 0.0, 128
        %7237 = vxpose.xlu0.b32.cont [15/16] 0.0, 128
        %7238 = vxpose.xlu0.b32.end [16/16] 0.0, 128
        %v7239 = vpop.trf.xlu0
        %v7240 = vpop.trf.xlu0
        %v7241 = vpop.trf.xlu0
        %v7242 = vpop.trf.xlu0
        %v7243 = vpop.trf.xlu0
        %v7244 = vpop.trf.xlu0
        %v7245 = vpop.trf.xlu0
        %v7246 = vpop.trf.xlu0
        %v7247 = vpop.trf.xlu0
        %v7248 = vpop.trf.xlu0
        %v7249 = vpop.trf.xlu0
        %v7250 = vpop.trf.xlu0
        %v7251 = vpop.trf.xlu0
        %v7252 = vpop.trf.xlu0
        %v7253 = vpop.trf.xlu0
        %v7254 = vpop.trf.xlu0
        %7255 = vxpose.xlu0.b32.start [1/16] %v6998, 128
        %7256 = vxpose.xlu0.b32.cont [2/16] 0.0, 128
        %7257 = vxpose.xlu0.b32.cont [3/16] 0.0, 128
        %7258 = vxpose.xlu0.b32.cont [4/16] 0.0, 128
        %7259 = vxpose.xlu0.b32.cont [5/16] 0.0, 128
        %7260 = vxpose.xlu0.b32.cont [6/16] 0.0, 128
        %7261 = vxpose.xlu0.b32.cont [7/16] 0.0, 128
        %7262 = vxpose.xlu0.b32.cont [8/16] 0.0, 128
        %7263 = vxpose.xlu0.b32.cont [9/16] 0.0, 128
        %7264 = vxpose.xlu0.b32.cont [10/16] 0.0, 128
        %7265 = vxpose.xlu0.b32.cont [11/16] 0.0, 128
        %7266 = vxpose.xlu0.b32.cont [12/16] 0.0, 128
        %7267 = vxpose.xlu0.b32.cont [13/16] 0.0, 128
        %7268 = vxpose.xlu0.b32.cont [14/16] 0.0, 128
        %7269 = vxpose.xlu0.b32.cont [15/16] 0.0, 128
        %7270 = vxpose.xlu0.b32.end [16/16] 0.0, 128
        %v7271 = vpop.trf.xlu0
        %v7272 = vpop.trf.xlu0
        %v7273 = vpop.trf.xlu0
        %v7274 = vpop.trf.xlu0
        %v7275 = vpop.trf.xlu0
        %v7276 = vpop.trf.xlu0
        %v7277 = vpop.trf.xlu0
        %v7278 = vpop.trf.xlu0
        %v7279 = vpop.trf.xlu0
        %v7280 = vpop.trf.xlu0
        %v7281 = vpop.trf.xlu0
        %v7282 = vpop.trf.xlu0
        %v7283 = vpop.trf.xlu0
        %v7284 = vpop.trf.xlu0
        %v7285 = vpop.trf.xlu0
        %v7286 = vpop.trf.xlu0
        %7287 = vxpose.xlu0.b32.start [1/16] %v7044, 128
        %7288 = vxpose.xlu0.b32.cont [2/16] 0.0, 128
        %7289 = vxpose.xlu0.b32.cont [3/16] 0.0, 128
        %7290 = vxpose.xlu0.b32.cont [4/16] 0.0, 128
        %7291 = vxpose.xlu0.b32.cont [5/16] 0.0, 128
        %7292 = vxpose.xlu0.b32.cont [6/16] 0.0, 128
        %7293 = vxpose.xlu0.b32.cont [7/16] 0.0, 128
        %7294 = vxpose.xlu0.b32.cont [8/16] 0.0, 128
        %7295 = vxpose.xlu0.b32.cont [9/16] 0.0, 128
        %7296 = vxpose.xlu0.b32.cont [10/16] 0.0, 128
        %7297 = vxpose.xlu0.b32.cont [11/16] 0.0, 128
        %7298 = vxpose.xlu0.b32.cont [12/16] 0.0, 128
        %7299 = vxpose.xlu0.b32.cont [13/16] 0.0, 128
        %7300 = vxpose.xlu0.b32.cont [14/16] 0.0, 128
        %7301 = vxpose.xlu0.b32.cont [15/16] 0.0, 128
        %7302 = vxpose.xlu0.b32.end [16/16] 0.0, 128
        %v7303 = vpop.trf.xlu0
        %v7304 = vpop.trf.xlu0
        %v7305 = vpop.trf.xlu0
        %v7306 = vpop.trf.xlu0
        %v7307 = vpop.trf.xlu0
        %v7308 = vpop.trf.xlu0
        %v7309 = vpop.trf.xlu0
        %v7310 = vpop.trf.xlu0
        %v7311 = vpop.trf.xlu0
        %v7312 = vpop.trf.xlu0
        %v7313 = vpop.trf.xlu0
        %v7314 = vpop.trf.xlu0
        %v7315 = vpop.trf.xlu0
        %v7316 = vpop.trf.xlu0
        %v7317 = vpop.trf.xlu0
        %v7318 = vpop.trf.xlu0
        %7319 = vxpose.xlu0.b32.start [1/16] %v7090, 128
        %7320 = vxpose.xlu0.b32.cont [2/16] 0.0, 128
        %7321 = vxpose.xlu0.b32.cont [3/16] 0.0, 128
        %7322 = vxpose.xlu0.b32.cont [4/16] 0.0, 128
        %7323 = vxpose.xlu0.b32.cont [5/16] 0.0, 128
        %7324 = vxpose.xlu0.b32.cont [6/16] 0.0, 128
        %7325 = vxpose.xlu0.b32.cont [7/16] 0.0, 128
        %7326 = vxpose.xlu0.b32.cont [8/16] 0.0, 128
        %7327 = vxpose.xlu0.b32.cont [9/16] 0.0, 128
        %7328 = vxpose.xlu0.b32.cont [10/16] 0.0, 128
        %7329 = vxpose.xlu0.b32.cont [11/16] 0.0, 128
        %7330 = vxpose.xlu0.b32.cont [12/16] 0.0, 128
        %7331 = vxpose.xlu0.b32.cont [13/16] 0.0, 128
        %7332 = vxpose.xlu0.b32.cont [14/16] 0.0, 128
        %7333 = vxpose.xlu0.b32.cont [15/16] 0.0, 128
        %7334 = vxpose.xlu0.b32.end [16/16] 0.0, 128
        %v7335 = vpop.trf.xlu0
        %v7336 = vpop.trf.xlu0
        %v7337 = vpop.trf.xlu0
        %v7338 = vpop.trf.xlu0
        %v7339 = vpop.trf.xlu0
        %v7340 = vpop.trf.xlu0
        %v7341 = vpop.trf.xlu0
        %v7342 = vpop.trf.xlu0
        %v7343 = vpop.trf.xlu0
        %v7344 = vpop.trf.xlu0
        %v7345 = vpop.trf.xlu0
        %v7346 = vpop.trf.xlu0
        %v7347 = vpop.trf.xlu0
        %v7348 = vpop.trf.xlu0
        %v7349 = vpop.trf.xlu0
        %v7350 = vpop.trf.xlu0
        %7351 = vxpose.xlu0.b32.start [1/16] %v7111, 128
        %7352 = vxpose.xlu0.b32.cont [2/16] %v7112, 128
        %7353 = vxpose.xlu0.b32.cont [3/16] %v7143, 128
        %7354 = vxpose.xlu0.b32.cont [4/16] %v7144, 128
        %7355 = vxpose.xlu0.b32.cont [5/16] %v7175, 128
        %7356 = vxpose.xlu0.b32.cont [6/16] %v7176, 128
        %7357 = vxpose.xlu0.b32.cont [7/16] %v7207, 128
        %7358 = vxpose.xlu0.b32.cont [8/16] %v7208, 128
        %7359 = vxpose.xlu0.b32.cont [9/16] %v7239, 128
        %7360 = vxpose.xlu0.b32.cont [10/16] %v7240, 128
        %7361 = vxpose.xlu0.b32.cont [11/16] %v7271, 128
        %7362 = vxpose.xlu0.b32.cont [12/16] %v7272, 128
        %7363 = vxpose.xlu0.b32.cont [13/16] %v7303, 128
        %7364 = vxpose.xlu0.b32.cont [14/16] %v7304, 128
        %7365 = vxpose.xlu0.b32.cont [15/16] %v7335, 128
        %7366 = vxpose.xlu0.b32.end [16/16] %v7336, 128
        %v7367 = vpop.trf.xlu0
        %v7368 = vpop.trf.xlu0
        %v7369 = vpop.trf.xlu0
        %v7370 = vpop.trf.xlu0
        %v7371 = vpop.trf.xlu0
        %v7372 = vpop.trf.xlu0
        %v7373 = vpop.trf.xlu0
        %v7374 = vpop.trf.xlu0
        %v7375 = vpop.trf.xlu0
        %v7376 = vpop.trf.xlu0
        %v7377 = vpop.trf.xlu0
        %v7378 = vpop.trf.xlu0
        %v7379 = vpop.trf.xlu0
        %v7380 = vpop.trf.xlu0
        %v7381 = vpop.trf.xlu0
        %v7382 = vpop.trf.xlu0
        %7383 = vxpose.xlu0.b32.start [1/16] %v5234, 128
        %7384 = vxpose.xlu0.b32.cont [2/16] 0.0, 128
        %7385 = vxpose.xlu0.b32.cont [3/16] 0.0, 128
        %7386 = vxpose.xlu0.b32.cont [4/16] 0.0, 128
        %7387 = vxpose.xlu0.b32.cont [5/16] 0.0, 128
        %7388 = vxpose.xlu0.b32.cont [6/16] 0.0, 128
        %7389 = vxpose.xlu0.b32.cont [7/16] 0.0, 128
        %7390 = vxpose.xlu0.b32.cont [8/16] 0.0, 128
        %7391 = vxpose.xlu0.b32.cont [9/16] 0.0, 128
        %7392 = vxpose.xlu0.b32.cont [10/16] 0.0, 128
        %7393 = vxpose.xlu0.b32.cont [11/16] 0.0, 128
        %7394 = vxpose.xlu0.b32.cont [12/16] 0.0, 128
        %7395 = vxpose.xlu0.b32.cont [13/16] 0.0, 128
        %7396 = vxpose.xlu0.b32.cont [14/16] 0.0, 128
        %7397 = vxpose.xlu0.b32.cont [15/16] 0.0, 128
        %7398 = vxpose.xlu0.b32.end [16/16] 0.0, 128
        %v7399 = vpop.trf.xlu0
        %v7400 = vpop.trf.xlu0
        %v7401 = vpop.trf.xlu0
        %v7402 = vpop.trf.xlu0
        %v7403 = vpop.trf.xlu0
        %v7404 = vpop.trf.xlu0
        %v7405 = vpop.trf.xlu0
        %v7406 = vpop.trf.xlu0
        %v7407 = vpop.trf.xlu0
        %v7408 = vpop.trf.xlu0
        %v7409 = vpop.trf.xlu0
        %v7410 = vpop.trf.xlu0
        %v7411 = vpop.trf.xlu0
        %v7412 = vpop.trf.xlu0
        %v7413 = vpop.trf.xlu0
        %v7414 = vpop.trf.xlu0
        %7415 = vxpose.xlu0.b32.start [1/16] %v7399, 128
        %7416 = vxpose.xlu0.b32.cont [2/16] %v7400, 128
        %7417 = vxpose.xlu0.b32.cont [3/16] 0.0, 128
        %7418 = vxpose.xlu0.b32.cont [4/16] 0.0, 128
        %7419 = vxpose.xlu0.b32.cont [5/16] 0.0, 128
        %7420 = vxpose.xlu0.b32.cont [6/16] 0.0, 128
        %7421 = vxpose.xlu0.b32.cont [7/16] 0.0, 128
        %7422 = vxpose.xlu0.b32.cont [8/16] 0.0, 128
        %7423 = vxpose.xlu0.b32.cont [9/16] 0.0, 128
        %7424 = vxpose.xlu0.b32.cont [10/16] 0.0, 128
        %7425 = vxpose.xlu0.b32.cont [11/16] 0.0, 128
        %7426 = vxpose.xlu0.b32.cont [12/16] 0.0, 128
        %7427 = vxpose.xlu0.b32.cont [13/16] 0.0, 128
        %7428 = vxpose.xlu0.b32.cont [14/16] 0.0, 128
        %7429 = vxpose.xlu0.b32.cont [15/16] 0.0, 128
        %7430 = vxpose.xlu0.b32.end [16/16] 0.0, 128
        %v7431 = vpop.trf.xlu0
        %v7432 = vpop.trf.xlu0
        %v7433 = vpop.trf.xlu0
        %v7434 = vpop.trf.xlu0
        %v7435 = vpop.trf.xlu0
        %v7436 = vpop.trf.xlu0
        %v7437 = vpop.trf.xlu0
        %v7438 = vpop.trf.xlu0
        %v7439 = vpop.trf.xlu0
        %v7440 = vpop.trf.xlu0
        %v7441 = vpop.trf.xlu0
        %v7442 = vpop.trf.xlu0
        %v7443 = vpop.trf.xlu0
        %v7444 = vpop.trf.xlu0
        %v7445 = vpop.trf.xlu0
        %v7446 = vpop.trf.xlu0
        %7447 = vxpose.xlu0.b32.start [1/16] %v7401, 128
        %7448 = vxpose.xlu0.b32.cont [2/16] %v7402, 128
        %7449 = vxpose.xlu0.b32.cont [3/16] 0.0, 128
        %7450 = vxpose.xlu0.b32.cont [4/16] 0.0, 128
        %7451 = vxpose.xlu0.b32.cont [5/16] 0.0, 128
        %7452 = vxpose.xlu0.b32.cont [6/16] 0.0, 128
        %7453 = vxpose.xlu0.b32.cont [7/16] 0.0, 128
        %7454 = vxpose.xlu0.b32.cont [8/16] 0.0, 128
        %7455 = vxpose.xlu0.b32.cont [9/16] 0.0, 128
        %7456 = vxpose.xlu0.b32.cont [10/16] 0.0, 128
        %7457 = vxpose.xlu0.b32.cont [11/16] 0.0, 128
        %7458 = vxpose.xlu0.b32.cont [12/16] 0.0, 128
        %7459 = vxpose.xlu0.b32.cont [13/16] 0.0, 128
        %7460 = vxpose.xlu0.b32.cont [14/16] 0.0, 128
        %7461 = vxpose.xlu0.b32.cont [15/16] 0.0, 128
        %7462 = vxpose.xlu0.b32.end [16/16] 0.0, 128
        %v7463 = vpop.trf.xlu0
        %v7464 = vpop.trf.xlu0
        %v7465 = vpop.trf.xlu0
        %v7466 = vpop.trf.xlu0
        %v7467 = vpop.trf.xlu0
        %v7468 = vpop.trf.xlu0
        %v7469 = vpop.trf.xlu0
        %v7470 = vpop.trf.xlu0
        %v7471 = vpop.trf.xlu0
        %v7472 = vpop.trf.xlu0
        %v7473 = vpop.trf.xlu0
        %v7474 = vpop.trf.xlu0
        %v7475 = vpop.trf.xlu0
        %v7476 = vpop.trf.xlu0
        %v7477 = vpop.trf.xlu0
        %v7478 = vpop.trf.xlu0
        %7479 = vxpose.xlu0.b32.start [1/16] %v7403, 128
        %7480 = vxpose.xlu0.b32.cont [2/16] %v7404, 128
        %7481 = vxpose.xlu0.b32.cont [3/16] 0.0, 128
        %7482 = vxpose.xlu0.b32.cont [4/16] 0.0, 128
        %7483 = vxpose.xlu0.b32.cont [5/16] 0.0, 128
        %7484 = vxpose.xlu0.b32.cont [6/16] 0.0, 128
        %7485 = vxpose.xlu0.b32.cont [7/16] 0.0, 128
        %7486 = vxpose.xlu0.b32.cont [8/16] 0.0, 128
        %7487 = vxpose.xlu0.b32.cont [9/16] 0.0, 128
        %7488 = vxpose.xlu0.b32.cont [10/16] 0.0, 128
        %7489 = vxpose.xlu0.b32.cont [11/16] 0.0, 128
        %7490 = vxpose.xlu0.b32.cont [12/16] 0.0, 128
        %7491 = vxpose.xlu0.b32.cont [13/16] 0.0, 128
        %7492 = vxpose.xlu0.b32.cont [14/16] 0.0, 128
        %7493 = vxpose.xlu0.b32.cont [15/16] 0.0, 128
        %7494 = vxpose.xlu0.b32.end [16/16] 0.0, 128
        %v7495 = vpop.trf.xlu0
        %v7496 = vpop.trf.xlu0
        %v7497 = vpop.trf.xlu0
        %v7498 = vpop.trf.xlu0
        %v7499 = vpop.trf.xlu0
        %v7500 = vpop.trf.xlu0
        %v7501 = vpop.trf.xlu0
        %v7502 = vpop.trf.xlu0
        %v7503 = vpop.trf.xlu0
        %v7504 = vpop.trf.xlu0
        %v7505 = vpop.trf.xlu0
        %v7506 = vpop.trf.xlu0
        %v7507 = vpop.trf.xlu0
        %v7508 = vpop.trf.xlu0
        %v7509 = vpop.trf.xlu0
        %v7510 = vpop.trf.xlu0
        %7511 = vxpose.xlu0.b32.start [1/16] %v7405, 128
        %7512 = vxpose.xlu0.b32.cont [2/16] %v7406, 128
        %7513 = vxpose.xlu0.b32.cont [3/16] 0.0, 128
        %7514 = vxpose.xlu0.b32.cont [4/16] 0.0, 128
        %7515 = vxpose.xlu0.b32.cont [5/16] 0.0, 128
        %7516 = vxpose.xlu0.b32.cont [6/16] 0.0, 128
        %7517 = vxpose.xlu0.b32.cont [7/16] 0.0, 128
        %7518 = vxpose.xlu0.b32.cont [8/16] 0.0, 128
        %7519 = vxpose.xlu0.b32.cont [9/16] 0.0, 128
        %7520 = vxpose.xlu0.b32.cont [10/16] 0.0, 128
        %7521 = vxpose.xlu0.b32.cont [11/16] 0.0, 128
        %7522 = vxpose.xlu0.b32.cont [12/16] 0.0, 128
        %7523 = vxpose.xlu0.b32.cont [13/16] 0.0, 128
        %7524 = vxpose.xlu0.b32.cont [14/16] 0.0, 128
        %7525 = vxpose.xlu0.b32.cont [15/16] 0.0, 128
        %7526 = vxpose.xlu0.b32.end [16/16] 0.0, 128
        %v7527 = vpop.trf.xlu0
        %v7528 = vpop.trf.xlu0
        %v7529 = vpop.trf.xlu0
        %v7530 = vpop.trf.xlu0
        %v7531 = vpop.trf.xlu0
        %v7532 = vpop.trf.xlu0
        %v7533 = vpop.trf.xlu0
        %v7534 = vpop.trf.xlu0
        %v7535 = vpop.trf.xlu0
        %v7536 = vpop.trf.xlu0
        %v7537 = vpop.trf.xlu0
        %v7538 = vpop.trf.xlu0
        %v7539 = vpop.trf.xlu0
        %v7540 = vpop.trf.xlu0
        %v7541 = vpop.trf.xlu0
        %v7542 = vpop.trf.xlu0
        %7543 = vxpose.xlu0.b32.start [1/16] %v7407, 128
        %7544 = vxpose.xlu0.b32.cont [2/16] %v7408, 128
        %7545 = vxpose.xlu0.b32.cont [3/16] 0.0, 128
        %7546 = vxpose.xlu0.b32.cont [4/16] 0.0, 128
        %7547 = vxpose.xlu0.b32.cont [5/16] 0.0, 128
        %7548 = vxpose.xlu0.b32.cont [6/16] 0.0, 128
        %7549 = vxpose.xlu0.b32.cont [7/16] 0.0, 128
        %7550 = vxpose.xlu0.b32.cont [8/16] 0.0, 128
        %7551 = vxpose.xlu0.b32.cont [9/16] 0.0, 128
        %7552 = vxpose.xlu0.b32.cont [10/16] 0.0, 128
        %7553 = vxpose.xlu0.b32.cont [11/16] 0.0, 128
        %7554 = vxpose.xlu0.b32.cont [12/16] 0.0, 128
        %7555 = vxpose.xlu0.b32.cont [13/16] 0.0, 128
        %7556 = vxpose.xlu0.b32.cont [14/16] 0.0, 128
        %7557 = vxpose.xlu0.b32.cont [15/16] 0.0, 128
        %7558 = vxpose.xlu0.b32.end [16/16] 0.0, 128
        %v7559 = vpop.trf.xlu0
        %v7560 = vpop.trf.xlu0
        %v7561 = vpop.trf.xlu0
        %v7562 = vpop.trf.xlu0
        %v7563 = vpop.trf.xlu0
        %v7564 = vpop.trf.xlu0
        %v7565 = vpop.trf.xlu0
        %v7566 = vpop.trf.xlu0
        %v7567 = vpop.trf.xlu0
        %v7568 = vpop.trf.xlu0
        %v7569 = vpop.trf.xlu0
        %v7570 = vpop.trf.xlu0
        %v7571 = vpop.trf.xlu0
        %v7572 = vpop.trf.xlu0
        %v7573 = vpop.trf.xlu0
        %v7574 = vpop.trf.xlu0
        %7575 = vxpose.xlu0.b32.start [1/16] %v7409, 128
        %7576 = vxpose.xlu0.b32.cont [2/16] %v7410, 128
        %7577 = vxpose.xlu0.b32.cont [3/16] 0.0, 128
        %7578 = vxpose.xlu0.b32.cont [4/16] 0.0, 128
        %7579 = vxpose.xlu0.b32.cont [5/16] 0.0, 128
        %7580 = vxpose.xlu0.b32.cont [6/16] 0.0, 128
        %7581 = vxpose.xlu0.b32.cont [7/16] 0.0, 128
        %7582 = vxpose.xlu0.b32.cont [8/16] 0.0, 128
        %7583 = vxpose.xlu0.b32.cont [9/16] 0.0, 128
        %7584 = vxpose.xlu0.b32.cont [10/16] 0.0, 128
        %7585 = vxpose.xlu0.b32.cont [11/16] 0.0, 128
        %7586 = vxpose.xlu0.b32.cont [12/16] 0.0, 128
        %7587 = vxpose.xlu0.b32.cont [13/16] 0.0, 128
        %7588 = vxpose.xlu0.b32.cont [14/16] 0.0, 128
        %7589 = vxpose.xlu0.b32.cont [15/16] 0.0, 128
        %7590 = vxpose.xlu0.b32.end [16/16] 0.0, 128
        %v7591 = vpop.trf.xlu0
        %v7592 = vpop.trf.xlu0
        %v7593 = vpop.trf.xlu0
        %v7594 = vpop.trf.xlu0
        %v7595 = vpop.trf.xlu0
        %v7596 = vpop.trf.xlu0
        %v7597 = vpop.trf.xlu0
        %v7598 = vpop.trf.xlu0
        %v7599 = vpop.trf.xlu0
        %v7600 = vpop.trf.xlu0
        %v7601 = vpop.trf.xlu0
        %v7602 = vpop.trf.xlu0
        %v7603 = vpop.trf.xlu0
        %v7604 = vpop.trf.xlu0
        %v7605 = vpop.trf.xlu0
        %v7606 = vpop.trf.xlu0
        %7607 = vxpose.xlu0.b32.start [1/16] %v7411, 128
        %7608 = vxpose.xlu0.b32.cont [2/16] %v7412, 128
        %7609 = vxpose.xlu0.b32.cont [3/16] 0.0, 128
        %7610 = vxpose.xlu0.b32.cont [4/16] 0.0, 128
        %7611 = vxpose.xlu0.b32.cont [5/16] 0.0, 128
        %7612 = vxpose.xlu0.b32.cont [6/16] 0.0, 128
        %7613 = vxpose.xlu0.b32.cont [7/16] 0.0, 128
        %7614 = vxpose.xlu0.b32.cont [8/16] 0.0, 128
        %7615 = vxpose.xlu0.b32.cont [9/16] 0.0, 128
        %7616 = vxpose.xlu0.b32.cont [10/16] 0.0, 128
        %7617 = vxpose.xlu0.b32.cont [11/16] 0.0, 128
        %7618 = vxpose.xlu0.b32.cont [12/16] 0.0, 128
        %7619 = vxpose.xlu0.b32.cont [13/16] 0.0, 128
        %7620 = vxpose.xlu0.b32.cont [14/16] 0.0, 128
        %7621 = vxpose.xlu0.b32.cont [15/16] 0.0, 128
        %7622 = vxpose.xlu0.b32.end [16/16] 0.0, 128
        %v7623 = vpop.trf.xlu0
        %v7624 = vpop.trf.xlu0
        %v7625 = vpop.trf.xlu0
        %v7626 = vpop.trf.xlu0
        %v7627 = vpop.trf.xlu0
        %v7628 = vpop.trf.xlu0
        %v7629 = vpop.trf.xlu0
        %v7630 = vpop.trf.xlu0
        %v7631 = vpop.trf.xlu0
        %v7632 = vpop.trf.xlu0
        %v7633 = vpop.trf.xlu0
        %v7634 = vpop.trf.xlu0
        %v7635 = vpop.trf.xlu0
        %v7636 = vpop.trf.xlu0
        %v7637 = vpop.trf.xlu0
        %v7638 = vpop.trf.xlu0
        %7639 = vxpose.xlu0.b32.start [1/16] %v7413, 128
        %7640 = vxpose.xlu0.b32.cont [2/16] %v7414, 128
        %7641 = vxpose.xlu0.b32.cont [3/16] 0.0, 128
        %7642 = vxpose.xlu0.b32.cont [4/16] 0.0, 128
        %7643 = vxpose.xlu0.b32.cont [5/16] 0.0, 128
        %7644 = vxpose.xlu0.b32.cont [6/16] 0.0, 128
        %7645 = vxpose.xlu0.b32.cont [7/16] 0.0, 128
        %7646 = vxpose.xlu0.b32.cont [8/16] 0.0, 128
        %7647 = vxpose.xlu0.b32.cont [9/16] 0.0, 128
        %7648 = vxpose.xlu0.b32.cont [10/16] 0.0, 128
        %7649 = vxpose.xlu0.b32.cont [11/16] 0.0, 128
        %7650 = vxpose.xlu0.b32.cont [12/16] 0.0, 128
        %7651 = vxpose.xlu0.b32.cont [13/16] 0.0, 128
        %7652 = vxpose.xlu0.b32.cont [14/16] 0.0, 128
        %7653 = vxpose.xlu0.b32.cont [15/16] 0.0, 128
        %7654 = vxpose.xlu0.b32.end [16/16] 0.0, 128
        %v7655 = vpop.trf.xlu0
        %v7656 = vpop.trf.xlu0
        %v7657 = vpop.trf.xlu0
        %v7658 = vpop.trf.xlu0
        %v7659 = vpop.trf.xlu0
        %v7660 = vpop.trf.xlu0
        %v7661 = vpop.trf.xlu0
        %v7662 = vpop.trf.xlu0
        %v7663 = vpop.trf.xlu0
        %v7664 = vpop.trf.xlu0
        %v7665 = vpop.trf.xlu0
        %v7666 = vpop.trf.xlu0
        %v7667 = vpop.trf.xlu0
        %v7668 = vpop.trf.xlu0
        %v7669 = vpop.trf.xlu0
        %v7670 = vpop.trf.xlu0
        %v7671 = vpack.c.bf16 %v7431, %v7431
        %v7672 = vpack.c.bf16 %v7463, %v7463
        %v7673 = vpack.c.bf16 %v7495, %v7495
        %v7674 = vpack.c.bf16 %v7527, %v7527
        %v7675 = vpack.c.bf16 %v7559, %v7559
        %v7676 = vpack.c.bf16 %v7591, %v7591
        %v7677 = vpack.c.bf16 %v7623, %v7623
        %v7678 = vpack.c.bf16 %v7655, %v7655
        %7679 = vxpose.xlu0.b32.start [1/16] %v5370, 128
        %7680 = vxpose.xlu0.b32.cont [2/16] 0.0, 128
        %7681 = vxpose.xlu0.b32.cont [3/16] 0.0, 128
        %7682 = vxpose.xlu0.b32.cont [4/16] 0.0, 128
        %7683 = vxpose.xlu0.b32.cont [5/16] 0.0, 128
        %7684 = vxpose.xlu0.b32.cont [6/16] 0.0, 128
        %7685 = vxpose.xlu0.b32.cont [7/16] 0.0, 128
        %7686 = vxpose.xlu0.b32.cont [8/16] 0.0, 128
        %7687 = vxpose.xlu0.b32.cont [9/16] 0.0, 128
        %7688 = vxpose.xlu0.b32.cont [10/16] 0.0, 128
        %7689 = vxpose.xlu0.b32.cont [11/16] 0.0, 128
        %7690 = vxpose.xlu0.b32.cont [12/16] 0.0, 128
        %7691 = vxpose.xlu0.b32.cont [13/16] 0.0, 128
        %7692 = vxpose.xlu0.b32.cont [14/16] 0.0, 128
        %7693 = vxpose.xlu0.b32.cont [15/16] 0.0, 128
        %7694 = vxpose.xlu0.b32.end [16/16] 0.0, 128
        %v7695 = vpop.trf.xlu0
        %v7696 = vpop.trf.xlu0
        %v7697 = vpop.trf.xlu0
        %v7698 = vpop.trf.xlu0
        %v7699 = vpop.trf.xlu0
        %v7700 = vpop.trf.xlu0
        %v7701 = vpop.trf.xlu0
        %v7702 = vpop.trf.xlu0
        %v7703 = vpop.trf.xlu0
        %v7704 = vpop.trf.xlu0
        %v7705 = vpop.trf.xlu0
        %v7706 = vpop.trf.xlu0
        %v7707 = vpop.trf.xlu0
        %v7708 = vpop.trf.xlu0
        %v7709 = vpop.trf.xlu0
        %v7710 = vpop.trf.xlu0
        %7711 = vxpose.xlu0.b32.start [1/16] %v7695, 128
        %7712 = vxpose.xlu0.b32.cont [2/16] %v7696, 128
        %7713 = vxpose.xlu0.b32.cont [3/16] 0.0, 128
        %7714 = vxpose.xlu0.b32.cont [4/16] 0.0, 128
        %7715 = vxpose.xlu0.b32.cont [5/16] 0.0, 128
        %7716 = vxpose.xlu0.b32.cont [6/16] 0.0, 128
        %7717 = vxpose.xlu0.b32.cont [7/16] 0.0, 128
        %7718 = vxpose.xlu0.b32.cont [8/16] 0.0, 128
        %7719 = vxpose.xlu0.b32.cont [9/16] 0.0, 128
        %7720 = vxpose.xlu0.b32.cont [10/16] 0.0, 128
        %7721 = vxpose.xlu0.b32.cont [11/16] 0.0, 128
        %7722 = vxpose.xlu0.b32.cont [12/16] 0.0, 128
        %7723 = vxpose.xlu0.b32.cont [13/16] 0.0, 128
        %7724 = vxpose.xlu0.b32.cont [14/16] 0.0, 128
        %7725 = vxpose.xlu0.b32.cont [15/16] 0.0, 128
        %7726 = vxpose.xlu0.b32.end [16/16] 0.0, 128
        %v7727 = vpop.trf.xlu0
        %v7728 = vpop.trf.xlu0
        %v7729 = vpop.trf.xlu0
        %v7730 = vpop.trf.xlu0
        %v7731 = vpop.trf.xlu0
        %v7732 = vpop.trf.xlu0
        %v7733 = vpop.trf.xlu0
        %v7734 = vpop.trf.xlu0
        %v7735 = vpop.trf.xlu0
        %v7736 = vpop.trf.xlu0
        %v7737 = vpop.trf.xlu0
        %v7738 = vpop.trf.xlu0
        %v7739 = vpop.trf.xlu0
        %v7740 = vpop.trf.xlu0
        %v7741 = vpop.trf.xlu0
        %v7742 = vpop.trf.xlu0
        %7743 = vxpose.xlu0.b32.start [1/16] %v7697, 128
        %7744 = vxpose.xlu0.b32.cont [2/16] %v7698, 128
        %7745 = vxpose.xlu0.b32.cont [3/16] 0.0, 128
        %7746 = vxpose.xlu0.b32.cont [4/16] 0.0, 128
        %7747 = vxpose.xlu0.b32.cont [5/16] 0.0, 128
        %7748 = vxpose.xlu0.b32.cont [6/16] 0.0, 128
        %7749 = vxpose.xlu0.b32.cont [7/16] 0.0, 128
        %7750 = vxpose.xlu0.b32.cont [8/16] 0.0, 128
        %7751 = vxpose.xlu0.b32.cont [9/16] 0.0, 128
        %7752 = vxpose.xlu0.b32.cont [10/16] 0.0, 128
        %7753 = vxpose.xlu0.b32.cont [11/16] 0.0, 128
        %7754 = vxpose.xlu0.b32.cont [12/16] 0.0, 128
        %7755 = vxpose.xlu0.b32.cont [13/16] 0.0, 128
        %7756 = vxpose.xlu0.b32.cont [14/16] 0.0, 128
        %7757 = vxpose.xlu0.b32.cont [15/16] 0.0, 128
        %7758 = vxpose.xlu0.b32.end [16/16] 0.0, 128
        %v7759 = vpop.trf.xlu0
        %v7760 = vpop.trf.xlu0
        %v7761 = vpop.trf.xlu0
        %v7762 = vpop.trf.xlu0
        %v7763 = vpop.trf.xlu0
        %v7764 = vpop.trf.xlu0
        %v7765 = vpop.trf.xlu0
        %v7766 = vpop.trf.xlu0
        %v7767 = vpop.trf.xlu0
        %v7768 = vpop.trf.xlu0
        %v7769 = vpop.trf.xlu0
        %v7770 = vpop.trf.xlu0
        %v7771 = vpop.trf.xlu0
        %v7772 = vpop.trf.xlu0
        %v7773 = vpop.trf.xlu0
        %v7774 = vpop.trf.xlu0
        %7775 = vxpose.xlu0.b32.start [1/16] %v7699, 128
        %7776 = vxpose.xlu0.b32.cont [2/16] %v7700, 128
        %7777 = vxpose.xlu0.b32.cont [3/16] 0.0, 128
        %7778 = vxpose.xlu0.b32.cont [4/16] 0.0, 128
        %7779 = vxpose.xlu0.b32.cont [5/16] 0.0, 128
        %7780 = vxpose.xlu0.b32.cont [6/16] 0.0, 128
        %7781 = vxpose.xlu0.b32.cont [7/16] 0.0, 128
        %7782 = vxpose.xlu0.b32.cont [8/16] 0.0, 128
        %7783 = vxpose.xlu0.b32.cont [9/16] 0.0, 128
        %7784 = vxpose.xlu0.b32.cont [10/16] 0.0, 128
        %7785 = vxpose.xlu0.b32.cont [11/16] 0.0, 128
        %7786 = vxpose.xlu0.b32.cont [12/16] 0.0, 128
        %7787 = vxpose.xlu0.b32.cont [13/16] 0.0, 128
        %7788 = vxpose.xlu0.b32.cont [14/16] 0.0, 128
        %7789 = vxpose.xlu0.b32.cont [15/16] 0.0, 128
        %7790 = vxpose.xlu0.b32.end [16/16] 0.0, 128
        %v7791 = vpop.trf.xlu0
        %v7792 = vpop.trf.xlu0
        %v7793 = vpop.trf.xlu0
        %v7794 = vpop.trf.xlu0
        %v7795 = vpop.trf.xlu0
        %v7796 = vpop.trf.xlu0
        %v7797 = vpop.trf.xlu0
        %v7798 = vpop.trf.xlu0
        %v7799 = vpop.trf.xlu0
        %v7800 = vpop.trf.xlu0
        %v7801 = vpop.trf.xlu0
        %v7802 = vpop.trf.xlu0
        %v7803 = vpop.trf.xlu0
        %v7804 = vpop.trf.xlu0
        %v7805 = vpop.trf.xlu0
        %v7806 = vpop.trf.xlu0
        %7807 = vxpose.xlu0.b32.start [1/16] %v7701, 128
        %7808 = vxpose.xlu0.b32.cont [2/16] %v7702, 128
        %7809 = vxpose.xlu0.b32.cont [3/16] 0.0, 128
        %7810 = vxpose.xlu0.b32.cont [4/16] 0.0, 128
        %7811 = vxpose.xlu0.b32.cont [5/16] 0.0, 128
        %7812 = vxpose.xlu0.b32.cont [6/16] 0.0, 128
        %7813 = vxpose.xlu0.b32.cont [7/16] 0.0, 128
        %7814 = vxpose.xlu0.b32.cont [8/16] 0.0, 128
        %7815 = vxpose.xlu0.b32.cont [9/16] 0.0, 128
        %7816 = vxpose.xlu0.b32.cont [10/16] 0.0, 128
        %7817 = vxpose.xlu0.b32.cont [11/16] 0.0, 128
        %7818 = vxpose.xlu0.b32.cont [12/16] 0.0, 128
        %7819 = vxpose.xlu0.b32.cont [13/16] 0.0, 128
        %7820 = vxpose.xlu0.b32.cont [14/16] 0.0, 128
        %7821 = vxpose.xlu0.b32.cont [15/16] 0.0, 128
        %7822 = vxpose.xlu0.b32.end [16/16] 0.0, 128
        %v7823 = vpop.trf.xlu0
        %v7824 = vpop.trf.xlu0
        %v7825 = vpop.trf.xlu0
        %v7826 = vpop.trf.xlu0
        %v7827 = vpop.trf.xlu0
        %v7828 = vpop.trf.xlu0
        %v7829 = vpop.trf.xlu0
        %v7830 = vpop.trf.xlu0
        %v7831 = vpop.trf.xlu0
        %v7832 = vpop.trf.xlu0
        %v7833 = vpop.trf.xlu0
        %v7834 = vpop.trf.xlu0
        %v7835 = vpop.trf.xlu0
        %v7836 = vpop.trf.xlu0
        %v7837 = vpop.trf.xlu0
        %v7838 = vpop.trf.xlu0
        %7839 = vxpose.xlu0.b32.start [1/16] %v7703, 128
        %7840 = vxpose.xlu0.b32.cont [2/16] %v7704, 128
        %7841 = vxpose.xlu0.b32.cont [3/16] 0.0, 128
        %7842 = vxpose.xlu0.b32.cont [4/16] 0.0, 128
        %7843 = vxpose.xlu0.b32.cont [5/16] 0.0, 128
        %7844 = vxpose.xlu0.b32.cont [6/16] 0.0, 128
        %7845 = vxpose.xlu0.b32.cont [7/16] 0.0, 128
        %7846 = vxpose.xlu0.b32.cont [8/16] 0.0, 128
        %7847 = vxpose.xlu0.b32.cont [9/16] 0.0, 128
        %7848 = vxpose.xlu0.b32.cont [10/16] 0.0, 128
        %7849 = vxpose.xlu0.b32.cont [11/16] 0.0, 128
        %7850 = vxpose.xlu0.b32.cont [12/16] 0.0, 128
        %7851 = vxpose.xlu0.b32.cont [13/16] 0.0, 128
        %7852 = vxpose.xlu0.b32.cont [14/16] 0.0, 128
        %7853 = vxpose.xlu0.b32.cont [15/16] 0.0, 128
        %7854 = vxpose.xlu0.b32.end [16/16] 0.0, 128
        %v7855 = vpop.trf.xlu0
        %v7856 = vpop.trf.xlu0
        %v7857 = vpop.trf.xlu0
        %v7858 = vpop.trf.xlu0
        %v7859 = vpop.trf.xlu0
        %v7860 = vpop.trf.xlu0
        %v7861 = vpop.trf.xlu0
        %v7862 = vpop.trf.xlu0
        %v7863 = vpop.trf.xlu0
        %v7864 = vpop.trf.xlu0
        %v7865 = vpop.trf.xlu0
        %v7866 = vpop.trf.xlu0
        %v7867 = vpop.trf.xlu0
        %v7868 = vpop.trf.xlu0
        %v7869 = vpop.trf.xlu0
        %v7870 = vpop.trf.xlu0
        %7871 = vxpose.xlu0.b32.start [1/16] %v7705, 128
        %7872 = vxpose.xlu0.b32.cont [2/16] %v7706, 128
        %7873 = vxpose.xlu0.b32.cont [3/16] 0.0, 128
        %7874 = vxpose.xlu0.b32.cont [4/16] 0.0, 128
        %7875 = vxpose.xlu0.b32.cont [5/16] 0.0, 128
        %7876 = vxpose.xlu0.b32.cont [6/16] 0.0, 128
        %7877 = vxpose.xlu0.b32.cont [7/16] 0.0, 128
        %7878 = vxpose.xlu0.b32.cont [8/16] 0.0, 128
        %7879 = vxpose.xlu0.b32.cont [9/16] 0.0, 128
        %7880 = vxpose.xlu0.b32.cont [10/16] 0.0, 128
        %7881 = vxpose.xlu0.b32.cont [11/16] 0.0, 128
        %7882 = vxpose.xlu0.b32.cont [12/16] 0.0, 128
        %7883 = vxpose.xlu0.b32.cont [13/16] 0.0, 128
        %7884 = vxpose.xlu0.b32.cont [14/16] 0.0, 128
        %7885 = vxpose.xlu0.b32.cont [15/16] 0.0, 128
        %7886 = vxpose.xlu0.b32.end [16/16] 0.0, 128
        %v7887 = vpop.trf.xlu0
        %v7888 = vpop.trf.xlu0
        %v7889 = vpop.trf.xlu0
        %v7890 = vpop.trf.xlu0
        %v7891 = vpop.trf.xlu0
        %v7892 = vpop.trf.xlu0
        %v7893 = vpop.trf.xlu0
        %v7894 = vpop.trf.xlu0
        %v7895 = vpop.trf.xlu0
        %v7896 = vpop.trf.xlu0
        %v7897 = vpop.trf.xlu0
        %v7898 = vpop.trf.xlu0
        %v7899 = vpop.trf.xlu0
        %v7900 = vpop.trf.xlu0
        %v7901 = vpop.trf.xlu0
        %v7902 = vpop.trf.xlu0
        %7903 = vxpose.xlu0.b32.start [1/16] %v7707, 128
        %7904 = vxpose.xlu0.b32.cont [2/16] %v7708, 128
        %7905 = vxpose.xlu0.b32.cont [3/16] 0.0, 128
        %7906 = vxpose.xlu0.b32.cont [4/16] 0.0, 128
        %7907 = vxpose.xlu0.b32.cont [5/16] 0.0, 128
        %7908 = vxpose.xlu0.b32.cont [6/16] 0.0, 128
        %7909 = vxpose.xlu0.b32.cont [7/16] 0.0, 128
        %7910 = vxpose.xlu0.b32.cont [8/16] 0.0, 128
        %7911 = vxpose.xlu0.b32.cont [9/16] 0.0, 128
        %7912 = vxpose.xlu0.b32.cont [10/16] 0.0, 128
        %7913 = vxpose.xlu0.b32.cont [11/16] 0.0, 128
        %7914 = vxpose.xlu0.b32.cont [12/16] 0.0, 128
        %7915 = vxpose.xlu0.b32.cont [13/16] 0.0, 128
        %7916 = vxpose.xlu0.b32.cont [14/16] 0.0, 128
        %7917 = vxpose.xlu0.b32.cont [15/16] 0.0, 128
        %7918 = vxpose.xlu0.b32.end [16/16] 0.0, 128
        %v7919 = vpop.trf.xlu0
        %v7920 = vpop.trf.xlu0
        %v7921 = vpop.trf.xlu0
        %v7922 = vpop.trf.xlu0
        %v7923 = vpop.trf.xlu0
        %v7924 = vpop.trf.xlu0
        %v7925 = vpop.trf.xlu0
        %v7926 = vpop.trf.xlu0
        %v7927 = vpop.trf.xlu0
        %v7928 = vpop.trf.xlu0
        %v7929 = vpop.trf.xlu0
        %v7930 = vpop.trf.xlu0
        %v7931 = vpop.trf.xlu0
        %v7932 = vpop.trf.xlu0
        %v7933 = vpop.trf.xlu0
        %v7934 = vpop.trf.xlu0
        %7935 = vxpose.xlu0.b32.start [1/16] %v7709, 128
        %7936 = vxpose.xlu0.b32.cont [2/16] %v7710, 128
        %7937 = vxpose.xlu0.b32.cont [3/16] 0.0, 128
        %7938 = vxpose.xlu0.b32.cont [4/16] 0.0, 128
        %7939 = vxpose.xlu0.b32.cont [5/16] 0.0, 128
        %7940 = vxpose.xlu0.b32.cont [6/16] 0.0, 128
        %7941 = vxpose.xlu0.b32.cont [7/16] 0.0, 128
        %7942 = vxpose.xlu0.b32.cont [8/16] 0.0, 128
        %7943 = vxpose.xlu0.b32.cont [9/16] 0.0, 128
        %7944 = vxpose.xlu0.b32.cont [10/16] 0.0, 128
        %7945 = vxpose.xlu0.b32.cont [11/16] 0.0, 128
        %7946 = vxpose.xlu0.b32.cont [12/16] 0.0, 128
        %7947 = vxpose.xlu0.b32.cont [13/16] 0.0, 128
        %7948 = vxpose.xlu0.b32.cont [14/16] 0.0, 128
        %7949 = vxpose.xlu0.b32.cont [15/16] 0.0, 128
        %7950 = vxpose.xlu0.b32.end [16/16] 0.0, 128
        %v7951 = vpop.trf.xlu0
        %v7952 = vpop.trf.xlu0
        %v7953 = vpop.trf.xlu0
        %v7954 = vpop.trf.xlu0
        %v7955 = vpop.trf.xlu0
        %v7956 = vpop.trf.xlu0
        %v7957 = vpop.trf.xlu0
        %v7958 = vpop.trf.xlu0
        %v7959 = vpop.trf.xlu0
        %v7960 = vpop.trf.xlu0
        %v7961 = vpop.trf.xlu0
        %v7962 = vpop.trf.xlu0
        %v7963 = vpop.trf.xlu0
        %v7964 = vpop.trf.xlu0
        %v7965 = vpop.trf.xlu0
        %v7966 = vpop.trf.xlu0
        %v7967 = vpack.c.bf16 %v7727, %v7727
        %v7968 = vpack.c.bf16 %v7759, %v7759
        %v7969 = vpack.c.bf16 %v7791, %v7791
        %v7970 = vpack.c.bf16 %v7823, %v7823
        %v7971 = vpack.c.bf16 %v7855, %v7855
        %v7972 = vpack.c.bf16 %v7887, %v7887
        %v7973 = vpack.c.bf16 %v7919, %v7919
        %v7974 = vpack.c.bf16 %v7951, %v7951
        %7975 = vxpose.xlu0.b32.start [1/16] %v5372, 128
        %7976 = vxpose.xlu0.b32.cont [2/16] 0.0, 128
        %7977 = vxpose.xlu0.b32.cont [3/16] 0.0, 128
        %7978 = vxpose.xlu0.b32.cont [4/16] 0.0, 128
        %7979 = vxpose.xlu0.b32.cont [5/16] 0.0, 128
        %7980 = vxpose.xlu0.b32.cont [6/16] 0.0, 128
        %7981 = vxpose.xlu0.b32.cont [7/16] 0.0, 128
        %7982 = vxpose.xlu0.b32.cont [8/16] 0.0, 128
        %7983 = vxpose.xlu0.b32.cont [9/16] 0.0, 128
        %7984 = vxpose.xlu0.b32.cont [10/16] 0.0, 128
        %7985 = vxpose.xlu0.b32.cont [11/16] 0.0, 128
        %7986 = vxpose.xlu0.b32.cont [12/16] 0.0, 128
        %7987 = vxpose.xlu0.b32.cont [13/16] 0.0, 128
        %7988 = vxpose.xlu0.b32.cont [14/16] 0.0, 128
        %7989 = vxpose.xlu0.b32.cont [15/16] 0.0, 128
        %7990 = vxpose.xlu0.b32.end [16/16] 0.0, 128
        %v7991 = vpop.trf.xlu0
        %v7992 = vpop.trf.xlu0
        %v7993 = vpop.trf.xlu0
        %v7994 = vpop.trf.xlu0
        %v7995 = vpop.trf.xlu0
        %v7996 = vpop.trf.xlu0
        %v7997 = vpop.trf.xlu0
        %v7998 = vpop.trf.xlu0
        %v7999 = vpop.trf.xlu0
        %v8000 = vpop.trf.xlu0
        %v8001 = vpop.trf.xlu0
        %v8002 = vpop.trf.xlu0
        %v8003 = vpop.trf.xlu0
        %v8004 = vpop.trf.xlu0
        %v8005 = vpop.trf.xlu0
        %v8006 = vpop.trf.xlu0
        %8007 = vxpose.xlu0.b32.start [1/16] %v7991, 128
        %8008 = vxpose.xlu0.b32.cont [2/16] %v7992, 128
        %8009 = vxpose.xlu0.b32.cont [3/16] 0.0, 128
        %8010 = vxpose.xlu0.b32.cont [4/16] 0.0, 128
        %8011 = vxpose.xlu0.b32.cont [5/16] 0.0, 128
        %8012 = vxpose.xlu0.b32.cont [6/16] 0.0, 128
        %8013 = vxpose.xlu0.b32.cont [7/16] 0.0, 128
        %8014 = vxpose.xlu0.b32.cont [8/16] 0.0, 128
        %8015 = vxpose.xlu0.b32.cont [9/16] 0.0, 128
        %8016 = vxpose.xlu0.b32.cont [10/16] 0.0, 128
        %8017 = vxpose.xlu0.b32.cont [11/16] 0.0, 128
        %8018 = vxpose.xlu0.b32.cont [12/16] 0.0, 128
        %8019 = vxpose.xlu0.b32.cont [13/16] 0.0, 128
        %8020 = vxpose.xlu0.b32.cont [14/16] 0.0, 128
        %8021 = vxpose.xlu0.b32.cont [15/16] 0.0, 128
        %8022 = vxpose.xlu0.b32.end [16/16] 0.0, 128
        %v8023 = vpop.trf.xlu0
        %v8024 = vpop.trf.xlu0
        %v8025 = vpop.trf.xlu0
        %v8026 = vpop.trf.xlu0
        %v8027 = vpop.trf.xlu0
        %v8028 = vpop.trf.xlu0
        %v8029 = vpop.trf.xlu0
        %v8030 = vpop.trf.xlu0
        %v8031 = vpop.trf.xlu0
        %v8032 = vpop.trf.xlu0
        %v8033 = vpop.trf.xlu0
        %v8034 = vpop.trf.xlu0
        %v8035 = vpop.trf.xlu0
        %v8036 = vpop.trf.xlu0
        %v8037 = vpop.trf.xlu0
        %v8038 = vpop.trf.xlu0
        %8039 = vxpose.xlu0.b32.start [1/16] %v7993, 128
        %8040 = vxpose.xlu0.b32.cont [2/16] %v7994, 128
        %8041 = vxpose.xlu0.b32.cont [3/16] 0.0, 128
        %8042 = vxpose.xlu0.b32.cont [4/16] 0.0, 128
        %8043 = vxpose.xlu0.b32.cont [5/16] 0.0, 128
        %8044 = vxpose.xlu0.b32.cont [6/16] 0.0, 128
        %8045 = vxpose.xlu0.b32.cont [7/16] 0.0, 128
        %8046 = vxpose.xlu0.b32.cont [8/16] 0.0, 128
        %8047 = vxpose.xlu0.b32.cont [9/16] 0.0, 128
        %8048 = vxpose.xlu0.b32.cont [10/16] 0.0, 128
        %8049 = vxpose.xlu0.b32.cont [11/16] 0.0, 128
        %8050 = vxpose.xlu0.b32.cont [12/16] 0.0, 128
        %8051 = vxpose.xlu0.b32.cont [13/16] 0.0, 128
        %8052 = vxpose.xlu0.b32.cont [14/16] 0.0, 128
        %8053 = vxpose.xlu0.b32.cont [15/16] 0.0, 128
        %8054 = vxpose.xlu0.b32.end [16/16] 0.0, 128
        %v8055 = vpop.trf.xlu0
        %v8056 = vpop.trf.xlu0
        %v8057 = vpop.trf.xlu0
        %v8058 = vpop.trf.xlu0
        %v8059 = vpop.trf.xlu0
        %v8060 = vpop.trf.xlu0
        %v8061 = vpop.trf.xlu0
        %v8062 = vpop.trf.xlu0
        %v8063 = vpop.trf.xlu0
        %v8064 = vpop.trf.xlu0
        %v8065 = vpop.trf.xlu0
        %v8066 = vpop.trf.xlu0
        %v8067 = vpop.trf.xlu0
        %v8068 = vpop.trf.xlu0
        %v8069 = vpop.trf.xlu0
        %v8070 = vpop.trf.xlu0
        %8071 = vxpose.xlu0.b32.start [1/16] %v7995, 128
        %8072 = vxpose.xlu0.b32.cont [2/16] %v7996, 128
        %8073 = vxpose.xlu0.b32.cont [3/16] 0.0, 128
        %8074 = vxpose.xlu0.b32.cont [4/16] 0.0, 128
        %8075 = vxpose.xlu0.b32.cont [5/16] 0.0, 128
        %8076 = vxpose.xlu0.b32.cont [6/16] 0.0, 128
        %8077 = vxpose.xlu0.b32.cont [7/16] 0.0, 128
        %8078 = vxpose.xlu0.b32.cont [8/16] 0.0, 128
        %8079 = vxpose.xlu0.b32.cont [9/16] 0.0, 128
        %8080 = vxpose.xlu0.b32.cont [10/16] 0.0, 128
        %8081 = vxpose.xlu0.b32.cont [11/16] 0.0, 128
        %8082 = vxpose.xlu0.b32.cont [12/16] 0.0, 128
        %8083 = vxpose.xlu0.b32.cont [13/16] 0.0, 128
        %8084 = vxpose.xlu0.b32.cont [14/16] 0.0, 128
        %8085 = vxpose.xlu0.b32.cont [15/16] 0.0, 128
        %8086 = vxpose.xlu0.b32.end [16/16] 0.0, 128
        %v8087 = vpop.trf.xlu0
        %v8088 = vpop.trf.xlu0
        %v8089 = vpop.trf.xlu0
        %v8090 = vpop.trf.xlu0
        %v8091 = vpop.trf.xlu0
        %v8092 = vpop.trf.xlu0
        %v8093 = vpop.trf.xlu0
        %v8094 = vpop.trf.xlu0
        %v8095 = vpop.trf.xlu0
        %v8096 = vpop.trf.xlu0
        %v8097 = vpop.trf.xlu0
        %v8098 = vpop.trf.xlu0
        %v8099 = vpop.trf.xlu0
        %v8100 = vpop.trf.xlu0
        %v8101 = vpop.trf.xlu0
        %v8102 = vpop.trf.xlu0
        %8103 = vxpose.xlu0.b32.start [1/16] %v7997, 128
        %8104 = vxpose.xlu0.b32.cont [2/16] %v7998, 128
        %8105 = vxpose.xlu0.b32.cont [3/16] 0.0, 128
        %8106 = vxpose.xlu0.b32.cont [4/16] 0.0, 128
        %8107 = vxpose.xlu0.b32.cont [5/16] 0.0, 128
        %8108 = vxpose.xlu0.b32.cont [6/16] 0.0, 128
        %8109 = vxpose.xlu0.b32.cont [7/16] 0.0, 128
        %8110 = vxpose.xlu0.b32.cont [8/16] 0.0, 128
        %8111 = vxpose.xlu0.b32.cont [9/16] 0.0, 128
        %8112 = vxpose.xlu0.b32.cont [10/16] 0.0, 128
        %8113 = vxpose.xlu0.b32.cont [11/16] 0.0, 128
        %8114 = vxpose.xlu0.b32.cont [12/16] 0.0, 128
        %8115 = vxpose.xlu0.b32.cont [13/16] 0.0, 128
        %8116 = vxpose.xlu0.b32.cont [14/16] 0.0, 128
        %8117 = vxpose.xlu0.b32.cont [15/16] 0.0, 128
        %8118 = vxpose.xlu0.b32.end [16/16] 0.0, 128
        %v8119 = vpop.trf.xlu0
        %v8120 = vpop.trf.xlu0
        %v8121 = vpop.trf.xlu0
        %v8122 = vpop.trf.xlu0
        %v8123 = vpop.trf.xlu0
        %v8124 = vpop.trf.xlu0
        %v8125 = vpop.trf.xlu0
        %v8126 = vpop.trf.xlu0
        %v8127 = vpop.trf.xlu0
        %v8128 = vpop.trf.xlu0
        %v8129 = vpop.trf.xlu0
        %v8130 = vpop.trf.xlu0
        %v8131 = vpop.trf.xlu0
        %v8132 = vpop.trf.xlu0
        %v8133 = vpop.trf.xlu0
        %v8134 = vpop.trf.xlu0
        %8135 = vxpose.xlu0.b32.start [1/16] %v7999, 128
        %8136 = vxpose.xlu0.b32.cont [2/16] %v8000, 128
        %8137 = vxpose.xlu0.b32.cont [3/16] 0.0, 128
        %8138 = vxpose.xlu0.b32.cont [4/16] 0.0, 128
        %8139 = vxpose.xlu0.b32.cont [5/16] 0.0, 128
        %8140 = vxpose.xlu0.b32.cont [6/16] 0.0, 128
        %8141 = vxpose.xlu0.b32.cont [7/16] 0.0, 128
        %8142 = vxpose.xlu0.b32.cont [8/16] 0.0, 128
        %8143 = vxpose.xlu0.b32.cont [9/16] 0.0, 128
        %8144 = vxpose.xlu0.b32.cont [10/16] 0.0, 128
        %8145 = vxpose.xlu0.b32.cont [11/16] 0.0, 128
        %8146 = vxpose.xlu0.b32.cont [12/16] 0.0, 128
        %8147 = vxpose.xlu0.b32.cont [13/16] 0.0, 128
        %8148 = vxpose.xlu0.b32.cont [14/16] 0.0, 128
        %8149 = vxpose.xlu0.b32.cont [15/16] 0.0, 128
        %8150 = vxpose.xlu0.b32.end [16/16] 0.0, 128
        %v8151 = vpop.trf.xlu0
        %v8152 = vpop.trf.xlu0
        %v8153 = vpop.trf.xlu0
        %v8154 = vpop.trf.xlu0
        %v8155 = vpop.trf.xlu0
        %v8156 = vpop.trf.xlu0
        %v8157 = vpop.trf.xlu0
        %v8158 = vpop.trf.xlu0
        %v8159 = vpop.trf.xlu0
        %v8160 = vpop.trf.xlu0
        %v8161 = vpop.trf.xlu0
        %v8162 = vpop.trf.xlu0
        %v8163 = vpop.trf.xlu0
        %v8164 = vpop.trf.xlu0
        %v8165 = vpop.trf.xlu0
        %v8166 = vpop.trf.xlu0
        %8167 = vxpose.xlu0.b32.start [1/16] %v8001, 128
        %8168 = vxpose.xlu0.b32.cont [2/16] %v8002, 128
        %8169 = vxpose.xlu0.b32.cont [3/16] 0.0, 128
        %8170 = vxpose.xlu0.b32.cont [4/16] 0.0, 128
        %8171 = vxpose.xlu0.b32.cont [5/16] 0.0, 128
        %8172 = vxpose.xlu0.b32.cont [6/16] 0.0, 128
        %8173 = vxpose.xlu0.b32.cont [7/16] 0.0, 128
        %8174 = vxpose.xlu0.b32.cont [8/16] 0.0, 128
        %8175 = vxpose.xlu0.b32.cont [9/16] 0.0, 128
        %8176 = vxpose.xlu0.b32.cont [10/16] 0.0, 128
        %8177 = vxpose.xlu0.b32.cont [11/16] 0.0, 128
        %8178 = vxpose.xlu0.b32.cont [12/16] 0.0, 128
        %8179 = vxpose.xlu0.b32.cont [13/16] 0.0, 128
        %8180 = vxpose.xlu0.b32.cont [14/16] 0.0, 128
        %8181 = vxpose.xlu0.b32.cont [15/16] 0.0, 128
        %8182 = vxpose.xlu0.b32.end [16/16] 0.0, 128
        %v8183 = vpop.trf.xlu0
        %v8184 = vpop.trf.xlu0
        %v8185 = vpop.trf.xlu0
        %v8186 = vpop.trf.xlu0
        %v8187 = vpop.trf.xlu0
        %v8188 = vpop.trf.xlu0
        %v8189 = vpop.trf.xlu0
        %v8190 = vpop.trf.xlu0
        %v8191 = vpop.trf.xlu0
        %v8192 = vpop.trf.xlu0
        %v8193 = vpop.trf.xlu0
        %v8194 = vpop.trf.xlu0
        %v8195 = vpop.trf.xlu0
        %v8196 = vpop.trf.xlu0
        %v8197 = vpop.trf.xlu0
        %v8198 = vpop.trf.xlu0
        %8199 = vxpose.xlu0.b32.start [1/16] %v8003, 128
        %8200 = vxpose.xlu0.b32.cont [2/16] %v8004, 128
        %8201 = vxpose.xlu0.b32.cont [3/16] 0.0, 128
        %8202 = vxpose.xlu0.b32.cont [4/16] 0.0, 128
        %8203 = vxpose.xlu0.b32.cont [5/16] 0.0, 128
        %8204 = vxpose.xlu0.b32.cont [6/16] 0.0, 128
        %8205 = vxpose.xlu0.b32.cont [7/16] 0.0, 128
        %8206 = vxpose.xlu0.b32.cont [8/16] 0.0, 128
        %8207 = vxpose.xlu0.b32.cont [9/16] 0.0, 128
        %8208 = vxpose.xlu0.b32.cont [10/16] 0.0, 128
        %8209 = vxpose.xlu0.b32.cont [11/16] 0.0, 128
        %8210 = vxpose.xlu0.b32.cont [12/16] 0.0, 128
        %8211 = vxpose.xlu0.b32.cont [13/16] 0.0, 128
        %8212 = vxpose.xlu0.b32.cont [14/16] 0.0, 128
        %8213 = vxpose.xlu0.b32.cont [15/16] 0.0, 128
        %8214 = vxpose.xlu0.b32.end [16/16] 0.0, 128
        %v8215 = vpop.trf.xlu0
        %v8216 = vpop.trf.xlu0
        %v8217 = vpop.trf.xlu0
        %v8218 = vpop.trf.xlu0
        %v8219 = vpop.trf.xlu0
        %v8220 = vpop.trf.xlu0
        %v8221 = vpop.trf.xlu0
        %v8222 = vpop.trf.xlu0
        %v8223 = vpop.trf.xlu0
        %v8224 = vpop.trf.xlu0
        %v8225 = vpop.trf.xlu0
        %v8226 = vpop.trf.xlu0
        %v8227 = vpop.trf.xlu0
        %v8228 = vpop.trf.xlu0
        %v8229 = vpop.trf.xlu0
        %v8230 = vpop.trf.xlu0
        %8231 = vxpose.xlu0.b32.start [1/16] %v8005, 128
        %8232 = vxpose.xlu0.b32.cont [2/16] %v8006, 128
        %8233 = vxpose.xlu0.b32.cont [3/16] 0.0, 128
        %8234 = vxpose.xlu0.b32.cont [4/16] 0.0, 128
        %8235 = vxpose.xlu0.b32.cont [5/16] 0.0, 128
        %8236 = vxpose.xlu0.b32.cont [6/16] 0.0, 128
        %8237 = vxpose.xlu0.b32.cont [7/16] 0.0, 128
        %8238 = vxpose.xlu0.b32.cont [8/16] 0.0, 128
        %8239 = vxpose.xlu0.b32.cont [9/16] 0.0, 128
        %8240 = vxpose.xlu0.b32.cont [10/16] 0.0, 128
        %8241 = vxpose.xlu0.b32.cont [11/16] 0.0, 128
        %8242 = vxpose.xlu0.b32.cont [12/16] 0.0, 128
        %8243 = vxpose.xlu0.b32.cont [13/16] 0.0, 128
        %8244 = vxpose.xlu0.b32.cont [14/16] 0.0, 128
        %8245 = vxpose.xlu0.b32.cont [15/16] 0.0, 128
        %8246 = vxpose.xlu0.b32.end [16/16] 0.0, 128
        %v8247 = vpop.trf.xlu0
        %v8248 = vpop.trf.xlu0
        %v8249 = vpop.trf.xlu0
        %v8250 = vpop.trf.xlu0
        %v8251 = vpop.trf.xlu0
        %v8252 = vpop.trf.xlu0
        %v8253 = vpop.trf.xlu0
        %v8254 = vpop.trf.xlu0
        %v8255 = vpop.trf.xlu0
        %v8256 = vpop.trf.xlu0
        %v8257 = vpop.trf.xlu0
        %v8258 = vpop.trf.xlu0
        %v8259 = vpop.trf.xlu0
        %v8260 = vpop.trf.xlu0
        %v8261 = vpop.trf.xlu0
        %v8262 = vpop.trf.xlu0
        %v8263 = vpack.c.bf16 %v8023, %v8023
        %v8264 = vpack.c.bf16 %v8055, %v8055
        %v8265 = vpack.c.bf16 %v8087, %v8087
        %v8266 = vpack.c.bf16 %v8119, %v8119
        %v8267 = vpack.c.bf16 %v8151, %v8151
        %v8268 = vpack.c.bf16 %v8183, %v8183
        %v8269 = vpack.c.bf16 %v8215, %v8215
        %v8270 = vpack.c.bf16 %v8247, %v8247
        %s8271 = scalar_lea.vmem %s616, 8 [#allocation8]
        %v8272 = vld [vmem:[%s8271] sm:$0xff]
        %v8274 = vsel %vm1851, %v7671, 0
        %v8277 = vsel %vm1851, %v7967, 0
        %8279 = vmatprep.subr.bf16.mxu0 0
        %8280 = vmatpush1.bf16.xpose.msra.mxu0 %v8277
        %8281 = vmatprep.subr.bf16.mxu0 0
        %8282 = vmatpush1.bf16.xpose.msra.mxu0 0
        %8283 = vmatprep.subr.bf16.mxu0 0
        %8284 = vmatpush1.bf16.xpose.msra.mxu0 0
        %8285 = vmatprep.subr.bf16.mxu0 0
        %8286 = vmatpush1.bf16.xpose.msra.mxu0 0
        %8287 = vmatprep.subr.bf16.mxu0 0
        %8288 = vmatpush1.bf16.xpose.msra.mxu0 0
        %8289 = vmatprep.subr.bf16.mxu0 0
        %8290 = vmatpush1.bf16.xpose.msra.mxu0 0
        %8291 = vmatprep.subr.bf16.mxu0 0
        %8292 = vmatpush1.bf16.xpose.msra.mxu0 0
        %8293 = vmatprep.subr.bf16.mxu0 0
        %8294 = vmatpush1.bf16.xpose.msra.mxu0 0
        %8295 = vmatprep.subr.bf16.mxu0 0
        %8296 = vmatpush1.bf16.xpose.msra.mxu0 0
        %8297 = vmatprep.subr.bf16.mxu0 0
        %8298 = vmatpush1.bf16.xpose.msra.mxu0 0
        %8299 = vmatprep.subr.bf16.mxu0 0
        %8300 = vmatpush1.bf16.xpose.msra.mxu0 0
        %8301 = vmatprep.subr.bf16.mxu0 0
        %8302 = vmatpush1.bf16.xpose.msra.mxu0 0
        %8303 = vmatprep.subr.bf16.mxu0 0
        %8304 = vmatpush1.bf16.xpose.msra.mxu0 0
        %8305 = vmatprep.subr.bf16.mxu0 0
        %8306 = vmatpush1.bf16.xpose.msra.mxu0 0
        %8307 = vmatprep.subr.bf16.mxu0 0
        %8308 = vmatpush1.bf16.xpose.msra.mxu0 0
        %8309 = vmatprep.subr.bf16.mxu0 0
        %8310 = vmatpush1.bf16.xpose.msra.mxu0 0
        %8311 = vmatprep.mubr.bf16.mxu0 0
        %8312 = vmatmul.mubr.bf16.gmra.mrb[0].mxu0 %v8274
        %v8313 = vpop.f32.mrb[0].mxu0
        %v8314 = vadd.f32 %v8272, %v8313
        %v8315 = vpop.f32.mrb[0].mxu0
        %v8316 = vpop.f32.mrb[0].mxu0
        %v8317 = vpop.f32.mrb[0].mxu0
        %8318 = vdwg.mxu0
        %v8320 = vsel %vm1851, %v7672, 0
        %v8323 = vsel %vm1851, %v7968, 0
        %8325 = vmatprep.subr.bf16.mxu0 0
        %8326 = vmatpush1.bf16.xpose.msra.mxu0 %v8323
        %8327 = vmatprep.subr.bf16.mxu0 0
        %8328 = vmatpush1.bf16.xpose.msra.mxu0 0
        %8329 = vmatprep.subr.bf16.mxu0 0
        %8330 = vmatpush1.bf16.xpose.msra.mxu0 0
        %8331 = vmatprep.subr.bf16.mxu0 0
        %8332 = vmatpush1.bf16.xpose.msra.mxu0 0
        %8333 = vmatprep.subr.bf16.mxu0 0
        %8334 = vmatpush1.bf16.xpose.msra.mxu0 0
        %8335 = vmatprep.subr.bf16.mxu0 0
        %8336 = vmatpush1.bf16.xpose.msra.mxu0 0
        %8337 = vmatprep.subr.bf16.mxu0 0
        %8338 = vmatpush1.bf16.xpose.msra.mxu0 0
        %8339 = vmatprep.subr.bf16.mxu0 0
        %8340 = vmatpush1.bf16.xpose.msra.mxu0 0
        %8341 = vmatprep.subr.bf16.mxu0 0
        %8342 = vmatpush1.bf16.xpose.msra.mxu0 0
        %8343 = vmatprep.subr.bf16.mxu0 0
        %8344 = vmatpush1.bf16.xpose.msra.mxu0 0
        %8345 = vmatprep.subr.bf16.mxu0 0
        %8346 = vmatpush1.bf16.xpose.msra.mxu0 0
        %8347 = vmatprep.subr.bf16.mxu0 0
        %8348 = vmatpush1.bf16.xpose.msra.mxu0 0
        %8349 = vmatprep.subr.bf16.mxu0 0
        %8350 = vmatpush1.bf16.xpose.msra.mxu0 0
        %8351 = vmatprep.subr.bf16.mxu0 0
        %8352 = vmatpush1.bf16.xpose.msra.mxu0 0
        %8353 = vmatprep.subr.bf16.mxu0 0
        %8354 = vmatpush1.bf16.xpose.msra.mxu0 0
        %8355 = vmatprep.subr.bf16.mxu0 0
        %8356 = vmatpush1.bf16.xpose.msra.mxu0 0
        %8357 = vmatprep.mubr.bf16.mxu0 0
        %8358 = vmatmul.mubr.bf16.gmra.mrb[0].mxu0 %v8320
        %v8359 = vpop.f32.mrb[0].mxu0
        %v8360 = vadd.f32 %v8272, %v8359
        %v8361 = vpop.f32.mrb[0].mxu0
        %v8362 = vpop.f32.mrb[0].mxu0
        %v8363 = vpop.f32.mrb[0].mxu0
        %8364 = vdwg.mxu0
        %v8366 = vsel %vm1851, %v7673, 0
        %v8369 = vsel %vm1851, %v7969, 0
        %8371 = vmatprep.subr.bf16.mxu0 0
        %8372 = vmatpush1.bf16.xpose.msra.mxu0 %v8369
        %8373 = vmatprep.subr.bf16.mxu0 0
        %8374 = vmatpush1.bf16.xpose.msra.mxu0 0
        %8375 = vmatprep.subr.bf16.mxu0 0
        %8376 = vmatpush1.bf16.xpose.msra.mxu0 0
        %8377 = vmatprep.subr.bf16.mxu0 0
        %8378 = vmatpush1.bf16.xpose.msra.mxu0 0
        %8379 = vmatprep.subr.bf16.mxu0 0
        %8380 = vmatpush1.bf16.xpose.msra.mxu0 0
        %8381 = vmatprep.subr.bf16.mxu0 0
        %8382 = vmatpush1.bf16.xpose.msra.mxu0 0
        %8383 = vmatprep.subr.bf16.mxu0 0
        %8384 = vmatpush1.bf16.xpose.msra.mxu0 0
        %8385 = vmatprep.subr.bf16.mxu0 0
        %8386 = vmatpush1.bf16.xpose.msra.mxu0 0
        %8387 = vmatprep.subr.bf16.mxu0 0
        %8388 = vmatpush1.bf16.xpose.msra.mxu0 0
        %8389 = vmatprep.subr.bf16.mxu0 0
        %8390 = vmatpush1.bf16.xpose.msra.mxu0 0
        %8391 = vmatprep.subr.bf16.mxu0 0
        %8392 = vmatpush1.bf16.xpose.msra.mxu0 0
        %8393 = vmatprep.subr.bf16.mxu0 0
        %8394 = vmatpush1.bf16.xpose.msra.mxu0 0
        %8395 = vmatprep.subr.bf16.mxu0 0
        %8396 = vmatpush1.bf16.xpose.msra.mxu0 0
        %8397 = vmatprep.subr.bf16.mxu0 0
        %8398 = vmatpush1.bf16.xpose.msra.mxu0 0
        %8399 = vmatprep.subr.bf16.mxu0 0
        %8400 = vmatpush1.bf16.xpose.msra.mxu0 0
        %8401 = vmatprep.subr.bf16.mxu0 0
        %8402 = vmatpush1.bf16.xpose.msra.mxu0 0
        %8403 = vmatprep.mubr.bf16.mxu0 0
        %8404 = vmatmul.mubr.bf16.gmra.mrb[0].mxu0 %v8366
        %v8405 = vpop.f32.mrb[0].mxu0
        %v8406 = vadd.f32 %v8272, %v8405
        %v8407 = vpop.f32.mrb[0].mxu0
        %v8408 = vpop.f32.mrb[0].mxu0
        %v8409 = vpop.f32.mrb[0].mxu0
        %8410 = vdwg.mxu0
        %v8412 = vsel %vm1851, %v7674, 0
        %v8415 = vsel %vm1851, %v7970, 0
        %8417 = vmatprep.subr.bf16.mxu0 0
        %8418 = vmatpush1.bf16.xpose.msra.mxu0 %v8415
        %8419 = vmatprep.subr.bf16.mxu0 0
        %8420 = vmatpush1.bf16.xpose.msra.mxu0 0
        %8421 = vmatprep.subr.bf16.mxu0 0
        %8422 = vmatpush1.bf16.xpose.msra.mxu0 0
        %8423 = vmatprep.subr.bf16.mxu0 0
        %8424 = vmatpush1.bf16.xpose.msra.mxu0 0
        %8425 = vmatprep.subr.bf16.mxu0 0
        %8426 = vmatpush1.bf16.xpose.msra.mxu0 0
        %8427 = vmatprep.subr.bf16.mxu0 0
        %8428 = vmatpush1.bf16.xpose.msra.mxu0 0
        %8429 = vmatprep.subr.bf16.mxu0 0
        %8430 = vmatpush1.bf16.xpose.msra.mxu0 0
        %8431 = vmatprep.subr.bf16.mxu0 0
        %8432 = vmatpush1.bf16.xpose.msra.mxu0 0
        %8433 = vmatprep.subr.bf16.mxu0 0
        %8434 = vmatpush1.bf16.xpose.msra.mxu0 0
        %8435 = vmatprep.subr.bf16.mxu0 0
        %8436 = vmatpush1.bf16.xpose.msra.mxu0 0
        %8437 = vmatprep.subr.bf16.mxu0 0
        %8438 = vmatpush1.bf16.xpose.msra.mxu0 0
        %8439 = vmatprep.subr.bf16.mxu0 0
        %8440 = vmatpush1.bf16.xpose.msra.mxu0 0
        %8441 = vmatprep.subr.bf16.mxu0 0
        %8442 = vmatpush1.bf16.xpose.msra.mxu0 0
        %8443 = vmatprep.subr.bf16.mxu0 0
        %8444 = vmatpush1.bf16.xpose.msra.mxu0 0
        %8445 = vmatprep.subr.bf16.mxu0 0
        %8446 = vmatpush1.bf16.xpose.msra.mxu0 0
        %8447 = vmatprep.subr.bf16.mxu0 0
        %8448 = vmatpush1.bf16.xpose.msra.mxu0 0
        %8449 = vmatprep.mubr.bf16.mxu0 0
        %8450 = vmatmul.mubr.bf16.gmra.mrb[0].mxu0 %v8412
        %v8451 = vpop.f32.mrb[0].mxu0
        %v8452 = vadd.f32 %v8272, %v8451
        %v8453 = vpop.f32.mrb[0].mxu0
        %v8454 = vpop.f32.mrb[0].mxu0
        %v8455 = vpop.f32.mrb[0].mxu0
        %8456 = vdwg.mxu0
        %v8458 = vsel %vm1851, %v7675, 0
        %v8461 = vsel %vm1851, %v7971, 0
        %8463 = vmatprep.subr.bf16.mxu0 0
        %8464 = vmatpush1.bf16.xpose.msra.mxu0 %v8461
        %8465 = vmatprep.subr.bf16.mxu0 0
        %8466 = vmatpush1.bf16.xpose.msra.mxu0 0
        %8467 = vmatprep.subr.bf16.mxu0 0
        %8468 = vmatpush1.bf16.xpose.msra.mxu0 0
        %8469 = vmatprep.subr.bf16.mxu0 0
        %8470 = vmatpush1.bf16.xpose.msra.mxu0 0
        %8471 = vmatprep.subr.bf16.mxu0 0
        %8472 = vmatpush1.bf16.xpose.msra.mxu0 0
        %8473 = vmatprep.subr.bf16.mxu0 0
        %8474 = vmatpush1.bf16.xpose.msra.mxu0 0
        %8475 = vmatprep.subr.bf16.mxu0 0
        %8476 = vmatpush1.bf16.xpose.msra.mxu0 0
        %8477 = vmatprep.subr.bf16.mxu0 0
        %8478 = vmatpush1.bf16.xpose.msra.mxu0 0
        %8479 = vmatprep.subr.bf16.mxu0 0
        %8480 = vmatpush1.bf16.xpose.msra.mxu0 0
        %8481 = vmatprep.subr.bf16.mxu0 0
        %8482 = vmatpush1.bf16.xpose.msra.mxu0 0
        %8483 = vmatprep.subr.bf16.mxu0 0
        %8484 = vmatpush1.bf16.xpose.msra.mxu0 0
        %8485 = vmatprep.subr.bf16.mxu0 0
        %8486 = vmatpush1.bf16.xpose.msra.mxu0 0
        %8487 = vmatprep.subr.bf16.mxu0 0
        %8488 = vmatpush1.bf16.xpose.msra.mxu0 0
        %8489 = vmatprep.subr.bf16.mxu0 0
        %8490 = vmatpush1.bf16.xpose.msra.mxu0 0
        %8491 = vmatprep.subr.bf16.mxu0 0
        %8492 = vmatpush1.bf16.xpose.msra.mxu0 0
        %8493 = vmatprep.subr.bf16.mxu0 0
        %8494 = vmatpush1.bf16.xpose.msra.mxu0 0
        %8495 = vmatprep.mubr.bf16.mxu0 0
        %8496 = vmatmul.mubr.bf16.gmra.mrb[0].mxu0 %v8458
        %v8497 = vpop.f32.mrb[0].mxu0
        %v8498 = vadd.f32 %v8272, %v8497
        %v8499 = vpop.f32.mrb[0].mxu0
        %v8500 = vpop.f32.mrb[0].mxu0
        %v8501 = vpop.f32.mrb[0].mxu0
        %8502 = vdwg.mxu0
        %v8504 = vsel %vm1851, %v7676, 0
        %v8507 = vsel %vm1851, %v7972, 0
        %8509 = vmatprep.subr.bf16.mxu0 0
        %8510 = vmatpush1.bf16.xpose.msra.mxu0 %v8507
        %8511 = vmatprep.subr.bf16.mxu0 0
        %8512 = vmatpush1.bf16.xpose.msra.mxu0 0
        %8513 = vmatprep.subr.bf16.mxu0 0
        %8514 = vmatpush1.bf16.xpose.msra.mxu0 0
        %8515 = vmatprep.subr.bf16.mxu0 0
        %8516 = vmatpush1.bf16.xpose.msra.mxu0 0
        %8517 = vmatprep.subr.bf16.mxu0 0
        %8518 = vmatpush1.bf16.xpose.msra.mxu0 0
        %8519 = vmatprep.subr.bf16.mxu0 0
        %8520 = vmatpush1.bf16.xpose.msra.mxu0 0
        %8521 = vmatprep.subr.bf16.mxu0 0
        %8522 = vmatpush1.bf16.xpose.msra.mxu0 0
        %8523 = vmatprep.subr.bf16.mxu0 0
        %8524 = vmatpush1.bf16.xpose.msra.mxu0 0
        %8525 = vmatprep.subr.bf16.mxu0 0
        %8526 = vmatpush1.bf16.xpose.msra.mxu0 0
        %8527 = vmatprep.subr.bf16.mxu0 0
        %8528 = vmatpush1.bf16.xpose.msra.mxu0 0
        %8529 = vmatprep.subr.bf16.mxu0 0
        %8530 = vmatpush1.bf16.xpose.msra.mxu0 0
        %8531 = vmatprep.subr.bf16.mxu0 0
        %8532 = vmatpush1.bf16.xpose.msra.mxu0 0
        %8533 = vmatprep.subr.bf16.mxu0 0
        %8534 = vmatpush1.bf16.xpose.msra.mxu0 0
        %8535 = vmatprep.subr.bf16.mxu0 0
        %8536 = vmatpush1.bf16.xpose.msra.mxu0 0
        %8537 = vmatprep.subr.bf16.mxu0 0
        %8538 = vmatpush1.bf16.xpose.msra.mxu0 0
        %8539 = vmatprep.subr.bf16.mxu0 0
        %8540 = vmatpush1.bf16.xpose.msra.mxu0 0
        %8541 = vmatprep.mubr.bf16.mxu0 0
        %8542 = vmatmul.mubr.bf16.gmra.mrb[0].mxu0 %v8504
        %v8543 = vpop.f32.mrb[0].mxu0
        %v8544 = vadd.f32 %v8272, %v8543
        %v8545 = vpop.f32.mrb[0].mxu0
        %v8546 = vpop.f32.mrb[0].mxu0
        %v8547 = vpop.f32.mrb[0].mxu0
        %8548 = vdwg.mxu0
        %v8550 = vsel %vm1851, %v7677, 0
        %v8553 = vsel %vm1851, %v7973, 0
        %8555 = vmatprep.subr.bf16.mxu0 0
        %8556 = vmatpush1.bf16.xpose.msra.mxu0 %v8553
        %8557 = vmatprep.subr.bf16.mxu0 0
        %8558 = vmatpush1.bf16.xpose.msra.mxu0 0
        %8559 = vmatprep.subr.bf16.mxu0 0
        %8560 = vmatpush1.bf16.xpose.msra.mxu0 0
        %8561 = vmatprep.subr.bf16.mxu0 0
        %8562 = vmatpush1.bf16.xpose.msra.mxu0 0
        %8563 = vmatprep.subr.bf16.mxu0 0
        %8564 = vmatpush1.bf16.xpose.msra.mxu0 0
        %8565 = vmatprep.subr.bf16.mxu0 0
        %8566 = vmatpush1.bf16.xpose.msra.mxu0 0
        %8567 = vmatprep.subr.bf16.mxu0 0
        %8568 = vmatpush1.bf16.xpose.msra.mxu0 0
        %8569 = vmatprep.subr.bf16.mxu0 0
        %8570 = vmatpush1.bf16.xpose.msra.mxu0 0
        %8571 = vmatprep.subr.bf16.mxu0 0
        %8572 = vmatpush1.bf16.xpose.msra.mxu0 0
        %8573 = vmatprep.subr.bf16.mxu0 0
        %8574 = vmatpush1.bf16.xpose.msra.mxu0 0
        %8575 = vmatprep.subr.bf16.mxu0 0
        %8576 = vmatpush1.bf16.xpose.msra.mxu0 0
        %8577 = vmatprep.subr.bf16.mxu0 0
        %8578 = vmatpush1.bf16.xpose.msra.mxu0 0
        %8579 = vmatprep.subr.bf16.mxu0 0
        %8580 = vmatpush1.bf16.xpose.msra.mxu0 0
        %8581 = vmatprep.subr.bf16.mxu0 0
        %8582 = vmatpush1.bf16.xpose.msra.mxu0 0
        %8583 = vmatprep.subr.bf16.mxu0 0
        %8584 = vmatpush1.bf16.xpose.msra.mxu0 0
        %8585 = vmatprep.subr.bf16.mxu0 0
        %8586 = vmatpush1.bf16.xpose.msra.mxu0 0
        %8587 = vmatprep.mubr.bf16.mxu0 0
        %8588 = vmatmul.mubr.bf16.gmra.mrb[0].mxu0 %v8550
        %v8589 = vpop.f32.mrb[0].mxu0
        %v8590 = vadd.f32 %v8272, %v8589
        %v8591 = vpop.f32.mrb[0].mxu0
        %v8592 = vpop.f32.mrb[0].mxu0
        %v8593 = vpop.f32.mrb[0].mxu0
        %8594 = vdwg.mxu0
        %v8596 = vsel %vm1851, %v7678, 0
        %v8599 = vsel %vm1851, %v7974, 0
        %8601 = vmatprep.subr.bf16.mxu0 0
        %8602 = vmatpush1.bf16.xpose.msra.mxu0 %v8599
        %8603 = vmatprep.subr.bf16.mxu0 0
        %8604 = vmatpush1.bf16.xpose.msra.mxu0 0
        %8605 = vmatprep.subr.bf16.mxu0 0
        %8606 = vmatpush1.bf16.xpose.msra.mxu0 0
        %8607 = vmatprep.subr.bf16.mxu0 0
        %8608 = vmatpush1.bf16.xpose.msra.mxu0 0
        %8609 = vmatprep.subr.bf16.mxu0 0
        %8610 = vmatpush1.bf16.xpose.msra.mxu0 0
        %8611 = vmatprep.subr.bf16.mxu0 0
        %8612 = vmatpush1.bf16.xpose.msra.mxu0 0
        %8613 = vmatprep.subr.bf16.mxu0 0
        %8614 = vmatpush1.bf16.xpose.msra.mxu0 0
        %8615 = vmatprep.subr.bf16.mxu0 0
        %8616 = vmatpush1.bf16.xpose.msra.mxu0 0
        %8617 = vmatprep.subr.bf16.mxu0 0
        %8618 = vmatpush1.bf16.xpose.msra.mxu0 0
        %8619 = vmatprep.subr.bf16.mxu0 0
        %8620 = vmatpush1.bf16.xpose.msra.mxu0 0
        %8621 = vmatprep.subr.bf16.mxu0 0
        %8622 = vmatpush1.bf16.xpose.msra.mxu0 0
        %8623 = vmatprep.subr.bf16.mxu0 0
        %8624 = vmatpush1.bf16.xpose.msra.mxu0 0
        %8625 = vmatprep.subr.bf16.mxu0 0
        %8626 = vmatpush1.bf16.xpose.msra.mxu0 0
        %8627 = vmatprep.subr.bf16.mxu0 0
        %8628 = vmatpush1.bf16.xpose.msra.mxu0 0
        %8629 = vmatprep.subr.bf16.mxu0 0
        %8630 = vmatpush1.bf16.xpose.msra.mxu0 0
        %8631 = vmatprep.subr.bf16.mxu0 0
        %8632 = vmatpush1.bf16.xpose.msra.mxu0 0
        %8633 = vmatprep.mubr.bf16.mxu0 0
        %8634 = vmatmul.mubr.bf16.gmra.mrb[0].mxu0 %v8596
        %v8635 = vpop.f32.mrb[0].mxu0
        %v8636 = vadd.f32 %v8272, %v8635
        %v8637 = vpop.f32.mrb[0].mxu0
        %v8638 = vpop.f32.mrb[0].mxu0
        %v8639 = vpop.f32.mrb[0].mxu0
        %8640 = vdwg.mxu0
        %v8641 = vsel %vm2220, %v8314, -inf
        %8642 = vmax.xlane.f32.xlu0 %v8641
        %v8643 = vpop.xlane.xlu0 %8642
        %v8644 = vsel %vm2220, %v8360, -inf
        %8645 = vmax.xlane.f32.xlu0 %v8644
        %v8646 = vpop.xlane.xlu0 %8645
        %v8647 = vsel %vm2220, %v8406, -inf
        %8648 = vmax.xlane.f32.xlu0 %v8647
        %v8649 = vpop.xlane.xlu0 %8648
        %v8650 = vsel %vm2220, %v8452, -inf
        %8651 = vmax.xlane.f32.xlu0 %v8650
        %v8652 = vpop.xlane.xlu0 %8651
        %v8653 = vsel %vm2220, %v8498, -inf
        %8654 = vmax.xlane.f32.xlu0 %v8653
        %v8655 = vpop.xlane.xlu0 %8654
        %v8656 = vsel %vm2220, %v8544, -inf
        %8657 = vmax.xlane.f32.xlu0 %v8656
        %v8658 = vpop.xlane.xlu0 %8657
        %v8659 = vsel %vm2220, %v8590, -inf
        %8660 = vmax.xlane.f32.xlu0 %v8659
        %v8661 = vpop.xlane.xlu0 %8660
        %v8662 = vsel %vm2220, %v8636, -inf
        %8663 = vmax.xlane.f32.xlu0 %v8662
        %v8664 = vpop.xlane.xlu0 %8663
        %v8665 = vsub.f32 %v8314, %v8643
        %v8666 = vsub.f32 %v8360, %v8646
        %v8667 = vsub.f32 %v8406, %v8649
        %v8668 = vsub.f32 %v8452, %v8652
        %v8669 = vsub.f32 %v8498, %v8655
        %v8670 = vsub.f32 %v8544, %v8658
        %v8671 = vsub.f32 %v8590, %v8661
        %v8672 = vsub.f32 %v8636, %v8664
        %v8673 = vmul.f32 %v8665, 1.442695
        %v8674 = vpow.pop %v8673
        %v8675 = vmul.f32 %v8666, 1.442695
        %v8676 = vpow.pop %v8675
        %v8677 = vmul.f32 %v8667, 1.442695
        %v8678 = vpow.pop %v8677
        %v8679 = vmul.f32 %v8668, 1.442695
        %v8680 = vpow.pop %v8679
        %v8681 = vmul.f32 %v8669, 1.442695
        %v8682 = vpow.pop %v8681
        %v8683 = vmul.f32 %v8670, 1.442695
        %v8684 = vpow.pop %v8683
        %v8685 = vmul.f32 %v8671, 1.442695
        %v8686 = vpow.pop %v8685
        %v8687 = vmul.f32 %v8672, 1.442695
        %v8688 = vpow.pop %v8687
        %v8689 = vsel %vm2220, %v8674, 0.0
        %8690 = vadd.xlane.f32.xlu0 %v8689
        %v8691 = vpop.xlane.xlu0 %8690
        %v8692 = vsel %vm2220, %v8676, 0.0
        %8693 = vadd.xlane.f32.xlu0 %v8692
        %v8694 = vpop.xlane.xlu0 %8693
        %v8695 = vsel %vm2220, %v8678, 0.0
        %8696 = vadd.xlane.f32.xlu0 %v8695
        %v8697 = vpop.xlane.xlu0 %8696
        %v8698 = vsel %vm2220, %v8680, 0.0
        %8699 = vadd.xlane.f32.xlu0 %v8698
        %v8700 = vpop.xlane.xlu0 %8699
        %v8701 = vsel %vm2220, %v8682, 0.0
        %8702 = vadd.xlane.f32.xlu0 %v8701
        %v8703 = vpop.xlane.xlu0 %8702
        %v8704 = vsel %vm2220, %v8684, 0.0
        %8705 = vadd.xlane.f32.xlu0 %v8704
        %v8706 = vpop.xlane.xlu0 %8705
        %v8707 = vsel %vm2220, %v8686, 0.0
        %8708 = vadd.xlane.f32.xlu0 %v8707
        %v8709 = vpop.xlane.xlu0 %8708
        %v8710 = vsel %vm2220, %v8688, 0.0
        %8711 = vadd.xlane.f32.xlu0 %v8710
        %v8712 = vpop.xlane.xlu0 %8711
        %v8713 = vrcp.pop %v8691
        %v8714 = vrcp.pop %v8694
        %v8715 = vrcp.pop %v8697
        %v8716 = vrcp.pop %v8700
        %v8717 = vrcp.pop %v8703
        %v8718 = vrcp.pop %v8706
        %v8719 = vrcp.pop %v8709
        %v8720 = vrcp.pop %v8712
        %v8721 = vmul.f32 %v8674, %v8713
        %v8722 = vmul.f32 %v8676, %v8714
        %v8723 = vmul.f32 %v8678, %v8715
        %v8724 = vmul.f32 %v8680, %v8716
        %v8725 = vmul.f32 %v8682, %v8717
        %v8726 = vmul.f32 %v8684, %v8718
        %v8727 = vmul.f32 %v8686, %v8719
        %v8728 = vmul.f32 %v8688, %v8720
        %v8729 = vpack.c.bf16 %v8721, %v8721
        %v8730 = vpack.c.bf16 %v8722, %v8722
        %v8731 = vpack.c.bf16 %v8723, %v8723
        %v8732 = vpack.c.bf16 %v8724, %v8724
        %v8733 = vpack.c.bf16 %v8725, %v8725
        %v8734 = vpack.c.bf16 %v8726, %v8726
        %v8735 = vpack.c.bf16 %v8727, %v8727
        %v8736 = vpack.c.bf16 %v8728, %v8728
        %v8738 = vsel %vm2220, %v8729, 0
        %v8741 = vsel %vm2320, %v8263, 0
        %8743 = vmatprep.subr.bf16.mxu0 0
        %8744 = vmatpush1.bf16.msra.mxu0 %v8741
        %8745 = vmatprep.subr.bf16.mxu0 0
        %8746 = vmatpush1.bf16.msra.mxu0 0
        %8747 = vmatprep.subr.bf16.mxu0 0
        %8748 = vmatpush1.bf16.msra.mxu0 0
        %8749 = vmatprep.subr.bf16.mxu0 0
        %8750 = vmatpush1.bf16.msra.mxu0 0
        %8751 = vmatprep.subr.bf16.mxu0 0
        %8752 = vmatpush1.bf16.msra.mxu0 0
        %8753 = vmatprep.subr.bf16.mxu0 0
        %8754 = vmatpush1.bf16.msra.mxu0 0
        %8755 = vmatprep.subr.bf16.mxu0 0
        %8756 = vmatpush1.bf16.msra.mxu0 0
        %8757 = vmatprep.subr.bf16.mxu0 0
        %8758 = vmatpush1.bf16.msra.mxu0 0
        %8759 = vmatprep.subr.bf16.mxu0 0
        %8760 = vmatpush1.bf16.msra.mxu0 0
        %8761 = vmatprep.subr.bf16.mxu0 0
        %8762 = vmatpush1.bf16.msra.mxu0 0
        %8763 = vmatprep.subr.bf16.mxu0 0
        %8764 = vmatpush1.bf16.msra.mxu0 0
        %8765 = vmatprep.subr.bf16.mxu0 0
        %8766 = vmatpush1.bf16.msra.mxu0 0
        %8767 = vmatprep.subr.bf16.mxu0 0
        %8768 = vmatpush1.bf16.msra.mxu0 0
        %8769 = vmatprep.subr.bf16.mxu0 0
        %8770 = vmatpush1.bf16.msra.mxu0 0
        %8771 = vmatprep.subr.bf16.mxu0 0
        %8772 = vmatpush1.bf16.msra.mxu0 0
        %8773 = vmatprep.subr.bf16.mxu0 0
        %8774 = vmatpush1.bf16.msra.mxu0 0
        %8775 = vmatprep.mubr.bf16.mxu0 0
        %8776 = vmatmul.mubr.bf16.gmra.mrb[0].mxu0 %v8738
        %v8777 = vpop.f32.mrb[0].mxu0
        %v8778 = vadd.f32 0.0, %v8777
        %v8779 = vpop.f32.mrb[0].mxu0
        %v8780 = vpop.f32.mrb[0].mxu0
        %v8781 = vpop.f32.mrb[0].mxu0
        %8782 = vdwg.mxu0
        %v8784 = vsel %vm2220, %v8730, 0
        %v8787 = vsel %vm2320, %v8264, 0
        %8789 = vmatprep.subr.bf16.mxu0 0
        %8790 = vmatpush1.bf16.msra.mxu0 %v8787
        %8791 = vmatprep.subr.bf16.mxu0 0
        %8792 = vmatpush1.bf16.msra.mxu0 0
        %8793 = vmatprep.subr.bf16.mxu0 0
        %8794 = vmatpush1.bf16.msra.mxu0 0
        %8795 = vmatprep.subr.bf16.mxu0 0
        %8796 = vmatpush1.bf16.msra.mxu0 0
        %8797 = vmatprep.subr.bf16.mxu0 0
        %8798 = vmatpush1.bf16.msra.mxu0 0
        %8799 = vmatprep.subr.bf16.mxu0 0
        %8800 = vmatpush1.bf16.msra.mxu0 0
        %8801 = vmatprep.subr.bf16.mxu0 0
        %8802 = vmatpush1.bf16.msra.mxu0 0
        %8803 = vmatprep.subr.bf16.mxu0 0
        %8804 = vmatpush1.bf16.msra.mxu0 0
        %8805 = vmatprep.subr.bf16.mxu0 0
        %8806 = vmatpush1.bf16.msra.mxu0 0
        %8807 = vmatprep.subr.bf16.mxu0 0
        %8808 = vmatpush1.bf16.msra.mxu0 0
        %8809 = vmatprep.subr.bf16.mxu0 0
        %8810 = vmatpush1.bf16.msra.mxu0 0
        %8811 = vmatprep.subr.bf16.mxu0 0
        %8812 = vmatpush1.bf16.msra.mxu0 0
        %8813 = vmatprep.subr.bf16.mxu0 0
        %8814 = vmatpush1.bf16.msra.mxu0 0
        %8815 = vmatprep.subr.bf16.mxu0 0
        %8816 = vmatpush1.bf16.msra.mxu0 0
        %8817 = vmatprep.subr.bf16.mxu0 0
        %8818 = vmatpush1.bf16.msra.mxu0 0
        %8819 = vmatprep.subr.bf16.mxu0 0
        %8820 = vmatpush1.bf16.msra.mxu0 0
        %8821 = vmatprep.mubr.bf16.mxu0 0
        %8822 = vmatmul.mubr.bf16.gmra.mrb[0].mxu0 %v8784
        %v8823 = vpop.f32.mrb[0].mxu0
        %v8824 = vadd.f32 0.0, %v8823
        %v8825 = vpop.f32.mrb[0].mxu0
        %v8826 = vpop.f32.mrb[0].mxu0
        %v8827 = vpop.f32.mrb[0].mxu0
        %8828 = vdwg.mxu0
        %v8830 = vsel %vm2220, %v8731, 0
        %v8833 = vsel %vm2320, %v8265, 0
        %8835 = vmatprep.subr.bf16.mxu0 0
        %8836 = vmatpush1.bf16.msra.mxu0 %v8833
        %8837 = vmatprep.subr.bf16.mxu0 0
        %8838 = vmatpush1.bf16.msra.mxu0 0
        %8839 = vmatprep.subr.bf16.mxu0 0
        %8840 = vmatpush1.bf16.msra.mxu0 0
        %8841 = vmatprep.subr.bf16.mxu0 0
        %8842 = vmatpush1.bf16.msra.mxu0 0
        %8843 = vmatprep.subr.bf16.mxu0 0
        %8844 = vmatpush1.bf16.msra.mxu0 0
        %8845 = vmatprep.subr.bf16.mxu0 0
        %8846 = vmatpush1.bf16.msra.mxu0 0
        %8847 = vmatprep.subr.bf16.mxu0 0
        %8848 = vmatpush1.bf16.msra.mxu0 0
        %8849 = vmatprep.subr.bf16.mxu0 0
        %8850 = vmatpush1.bf16.msra.mxu0 0
        %8851 = vmatprep.subr.bf16.mxu0 0
        %8852 = vmatpush1.bf16.msra.mxu0 0
        %8853 = vmatprep.subr.bf16.mxu0 0
        %8854 = vmatpush1.bf16.msra.mxu0 0
        %8855 = vmatprep.subr.bf16.mxu0 0
        %8856 = vmatpush1.bf16.msra.mxu0 0
        %8857 = vmatprep.subr.bf16.mxu0 0
        %8858 = vmatpush1.bf16.msra.mxu0 0
        %8859 = vmatprep.subr.bf16.mxu0 0
        %8860 = vmatpush1.bf16.msra.mxu0 0
        %8861 = vmatprep.subr.bf16.mxu0 0
        %8862 = vmatpush1.bf16.msra.mxu0 0
        %8863 = vmatprep.subr.bf16.mxu0 0
        %8864 = vmatpush1.bf16.msra.mxu0 0
        %8865 = vmatprep.subr.bf16.mxu0 0
        %8866 = vmatpush1.bf16.msra.mxu0 0
        %8867 = vmatprep.mubr.bf16.mxu0 0
        %8868 = vmatmul.mubr.bf16.gmra.mrb[0].mxu0 %v8830
        %v8869 = vpop.f32.mrb[0].mxu0
        %v8870 = vadd.f32 0.0, %v8869
        %v8871 = vpop.f32.mrb[0].mxu0
        %v8872 = vpop.f32.mrb[0].mxu0
        %v8873 = vpop.f32.mrb[0].mxu0
        %8874 = vdwg.mxu0
        %v8876 = vsel %vm2220, %v8732, 0
        %v8879 = vsel %vm2320, %v8266, 0
        %8881 = vmatprep.subr.bf16.mxu0 0
        %8882 = vmatpush1.bf16.msra.mxu0 %v8879
        %8883 = vmatprep.subr.bf16.mxu0 0
        %8884 = vmatpush1.bf16.msra.mxu0 0
        %8885 = vmatprep.subr.bf16.mxu0 0
        %8886 = vmatpush1.bf16.msra.mxu0 0
        %8887 = vmatprep.subr.bf16.mxu0 0
        %8888 = vmatpush1.bf16.msra.mxu0 0
        %8889 = vmatprep.subr.bf16.mxu0 0
        %8890 = vmatpush1.bf16.msra.mxu0 0
        %8891 = vmatprep.subr.bf16.mxu0 0
        %8892 = vmatpush1.bf16.msra.mxu0 0
        %8893 = vmatprep.subr.bf16.mxu0 0
        %8894 = vmatpush1.bf16.msra.mxu0 0
        %8895 = vmatprep.subr.bf16.mxu0 0
        %8896 = vmatpush1.bf16.msra.mxu0 0
        %8897 = vmatprep.subr.bf16.mxu0 0
        %8898 = vmatpush1.bf16.msra.mxu0 0
        %8899 = vmatprep.subr.bf16.mxu0 0
        %8900 = vmatpush1.bf16.msra.mxu0 0
        %8901 = vmatprep.subr.bf16.mxu0 0
        %8902 = vmatpush1.bf16.msra.mxu0 0
        %8903 = vmatprep.subr.bf16.mxu0 0
        %8904 = vmatpush1.bf16.msra.mxu0 0
        %8905 = vmatprep.subr.bf16.mxu0 0
        %8906 = vmatpush1.bf16.msra.mxu0 0
        %8907 = vmatprep.subr.bf16.mxu0 0
        %8908 = vmatpush1.bf16.msra.mxu0 0
        %8909 = vmatprep.subr.bf16.mxu0 0
        %8910 = vmatpush1.bf16.msra.mxu0 0
        %8911 = vmatprep.subr.bf16.mxu0 0
        %8912 = vmatpush1.bf16.msra.mxu0 0
        %8913 = vmatprep.mubr.bf16.mxu0 0
        %8914 = vmatmul.mubr.bf16.gmra.mrb[0].mxu0 %v8876
        %v8915 = vpop.f32.mrb[0].mxu0
        %v8916 = vadd.f32 0.0, %v8915
        %v8917 = vpop.f32.mrb[0].mxu0
        %v8918 = vpop.f32.mrb[0].mxu0
        %v8919 = vpop.f32.mrb[0].mxu0
        %8920 = vdwg.mxu0
        %v8922 = vsel %vm2220, %v8733, 0
        %v8925 = vsel %vm2320, %v8267, 0
        %8927 = vmatprep.subr.bf16.mxu0 0
        %8928 = vmatpush1.bf16.msra.mxu0 %v8925
        %8929 = vmatprep.subr.bf16.mxu0 0
        %8930 = vmatpush1.bf16.msra.mxu0 0
        %8931 = vmatprep.subr.bf16.mxu0 0
        %8932 = vmatpush1.bf16.msra.mxu0 0
        %8933 = vmatprep.subr.bf16.mxu0 0
        %8934 = vmatpush1.bf16.msra.mxu0 0
        %8935 = vmatprep.subr.bf16.mxu0 0
        %8936 = vmatpush1.bf16.msra.mxu0 0
        %8937 = vmatprep.subr.bf16.mxu0 0
        %8938 = vmatpush1.bf16.msra.mxu0 0
        %8939 = vmatprep.subr.bf16.mxu0 0
        %8940 = vmatpush1.bf16.msra.mxu0 0
        %8941 = vmatprep.subr.bf16.mxu0 0
        %8942 = vmatpush1.bf16.msra.mxu0 0
        %8943 = vmatprep.subr.bf16.mxu0 0
        %8944 = vmatpush1.bf16.msra.mxu0 0
        %8945 = vmatprep.subr.bf16.mxu0 0
        %8946 = vmatpush1.bf16.msra.mxu0 0
        %8947 = vmatprep.subr.bf16.mxu0 0
        %8948 = vmatpush1.bf16.msra.mxu0 0
        %8949 = vmatprep.subr.bf16.mxu0 0
        %8950 = vmatpush1.bf16.msra.mxu0 0
        %8951 = vmatprep.subr.bf16.mxu0 0
        %8952 = vmatpush1.bf16.msra.mxu0 0
        %8953 = vmatprep.subr.bf16.mxu0 0
        %8954 = vmatpush1.bf16.msra.mxu0 0
        %8955 = vmatprep.subr.bf16.mxu0 0
        %8956 = vmatpush1.bf16.msra.mxu0 0
        %8957 = vmatprep.subr.bf16.mxu0 0
        %8958 = vmatpush1.bf16.msra.mxu0 0
        %8959 = vmatprep.mubr.bf16.mxu0 0
        %8960 = vmatmul.mubr.bf16.gmra.mrb[0].mxu0 %v8922
        %v8961 = vpop.f32.mrb[0].mxu0
        %v8962 = vadd.f32 0.0, %v8961
        %v8963 = vpop.f32.mrb[0].mxu0
        %v8964 = vpop.f32.mrb[0].mxu0
        %v8965 = vpop.f32.mrb[0].mxu0
        %8966 = vdwg.mxu0
        %v8968 = vsel %vm2220, %v8734, 0
        %v8971 = vsel %vm2320, %v8268, 0
        %8973 = vmatprep.subr.bf16.mxu0 0
        %8974 = vmatpush1.bf16.msra.mxu0 %v8971
        %8975 = vmatprep.subr.bf16.mxu0 0
        %8976 = vmatpush1.bf16.msra.mxu0 0
        %8977 = vmatprep.subr.bf16.mxu0 0
        %8978 = vmatpush1.bf16.msra.mxu0 0
        %8979 = vmatprep.subr.bf16.mxu0 0
        %8980 = vmatpush1.bf16.msra.mxu0 0
        %8981 = vmatprep.subr.bf16.mxu0 0
        %8982 = vmatpush1.bf16.msra.mxu0 0
        %8983 = vmatprep.subr.bf16.mxu0 0
        %8984 = vmatpush1.bf16.msra.mxu0 0
        %8985 = vmatprep.subr.bf16.mxu0 0
        %8986 = vmatpush1.bf16.msra.mxu0 0
        %8987 = vmatprep.subr.bf16.mxu0 0
        %8988 = vmatpush1.bf16.msra.mxu0 0
        %8989 = vmatprep.subr.bf16.mxu0 0
        %8990 = vmatpush1.bf16.msra.mxu0 0
        %8991 = vmatprep.subr.bf16.mxu0 0
        %8992 = vmatpush1.bf16.msra.mxu0 0
        %8993 = vmatprep.subr.bf16.mxu0 0
        %8994 = vmatpush1.bf16.msra.mxu0 0
        %8995 = vmatprep.subr.bf16.mxu0 0
        %8996 = vmatpush1.bf16.msra.mxu0 0
        %8997 = vmatprep.subr.bf16.mxu0 0
        %8998 = vmatpush1.bf16.msra.mxu0 0
        %8999 = vmatprep.subr.bf16.mxu0 0
        %9000 = vmatpush1.bf16.msra.mxu0 0
        %9001 = vmatprep.subr.bf16.mxu0 0
        %9002 = vmatpush1.bf16.msra.mxu0 0
        %9003 = vmatprep.subr.bf16.mxu0 0
        %9004 = vmatpush1.bf16.msra.mxu0 0
        %9005 = vmatprep.mubr.bf16.mxu0 0
        %9006 = vmatmul.mubr.bf16.gmra.mrb[0].mxu0 %v8968
        %v9007 = vpop.f32.mrb[0].mxu0
        %v9008 = vadd.f32 0.0, %v9007
        %v9009 = vpop.f32.mrb[0].mxu0
        %v9010 = vpop.f32.mrb[0].mxu0
        %v9011 = vpop.f32.mrb[0].mxu0
        %9012 = vdwg.mxu0
        %v9014 = vsel %vm2220, %v8735, 0
        %v9017 = vsel %vm2320, %v8269, 0
        %9019 = vmatprep.subr.bf16.mxu0 0
        %9020 = vmatpush1.bf16.msra.mxu0 %v9017
        %9021 = vmatprep.subr.bf16.mxu0 0
        %9022 = vmatpush1.bf16.msra.mxu0 0
        %9023 = vmatprep.subr.bf16.mxu0 0
        %9024 = vmatpush1.bf16.msra.mxu0 0
        %9025 = vmatprep.subr.bf16.mxu0 0
        %9026 = vmatpush1.bf16.msra.mxu0 0
        %9027 = vmatprep.subr.bf16.mxu0 0
        %9028 = vmatpush1.bf16.msra.mxu0 0
        %9029 = vmatprep.subr.bf16.mxu0 0
        %9030 = vmatpush1.bf16.msra.mxu0 0
        %9031 = vmatprep.subr.bf16.mxu0 0
        %9032 = vmatpush1.bf16.msra.mxu0 0
        %9033 = vmatprep.subr.bf16.mxu0 0
        %9034 = vmatpush1.bf16.msra.mxu0 0
        %9035 = vmatprep.subr.bf16.mxu0 0
        %9036 = vmatpush1.bf16.msra.mxu0 0
        %9037 = vmatprep.subr.bf16.mxu0 0
        %9038 = vmatpush1.bf16.msra.mxu0 0
        %9039 = vmatprep.subr.bf16.mxu0 0
        %9040 = vmatpush1.bf16.msra.mxu0 0
        %9041 = vmatprep.subr.bf16.mxu0 0
        %9042 = vmatpush1.bf16.msra.mxu0 0
        %9043 = vmatprep.subr.bf16.mxu0 0
        %9044 = vmatpush1.bf16.msra.mxu0 0
        %9045 = vmatprep.subr.bf16.mxu0 0
        %9046 = vmatpush1.bf16.msra.mxu0 0
        %9047 = vmatprep.subr.bf16.mxu0 0
        %9048 = vmatpush1.bf16.msra.mxu0 0
        %9049 = vmatprep.subr.bf16.mxu0 0
        %9050 = vmatpush1.bf16.msra.mxu0 0
        %9051 = vmatprep.mubr.bf16.mxu0 0
        %9052 = vmatmul.mubr.bf16.gmra.mrb[0].mxu0 %v9014
        %v9053 = vpop.f32.mrb[0].mxu0
        %v9054 = vadd.f32 0.0, %v9053
        %v9055 = vpop.f32.mrb[0].mxu0
        %v9056 = vpop.f32.mrb[0].mxu0
        %v9057 = vpop.f32.mrb[0].mxu0
        %9058 = vdwg.mxu0
        %v9060 = vsel %vm2220, %v8736, 0
        %v9063 = vsel %vm2320, %v8270, 0
        %9065 = vmatprep.subr.bf16.mxu0 0
        %9066 = vmatpush1.bf16.msra.mxu0 %v9063
        %9067 = vmatprep.subr.bf16.mxu0 0
        %9068 = vmatpush1.bf16.msra.mxu0 0
        %9069 = vmatprep.subr.bf16.mxu0 0
        %9070 = vmatpush1.bf16.msra.mxu0 0
        %9071 = vmatprep.subr.bf16.mxu0 0
        %9072 = vmatpush1.bf16.msra.mxu0 0
        %9073 = vmatprep.subr.bf16.mxu0 0
        %9074 = vmatpush1.bf16.msra.mxu0 0
        %9075 = vmatprep.subr.bf16.mxu0 0
        %9076 = vmatpush1.bf16.msra.mxu0 0
        %9077 = vmatprep.subr.bf16.mxu0 0
        %9078 = vmatpush1.bf16.msra.mxu0 0
        %9079 = vmatprep.subr.bf16.mxu0 0
        %9080 = vmatpush1.bf16.msra.mxu0 0
        %9081 = vmatprep.subr.bf16.mxu0 0
        %9082 = vmatpush1.bf16.msra.mxu0 0
        %9083 = vmatprep.subr.bf16.mxu0 0
        %9084 = vmatpush1.bf16.msra.mxu0 0
        %9085 = vmatprep.subr.bf16.mxu0 0
        %9086 = vmatpush1.bf16.msra.mxu0 0
        %9087 = vmatprep.subr.bf16.mxu0 0
        %9088 = vmatpush1.bf16.msra.mxu0 0
        %9089 = vmatprep.subr.bf16.mxu0 0
        %9090 = vmatpush1.bf16.msra.mxu0 0
        %9091 = vmatprep.subr.bf16.mxu0 0
        %9092 = vmatpush1.bf16.msra.mxu0 0
        %9093 = vmatprep.subr.bf16.mxu0 0
        %9094 = vmatpush1.bf16.msra.mxu0 0
        %9095 = vmatprep.subr.bf16.mxu0 0
        %9096 = vmatpush1.bf16.msra.mxu0 0
        %9097 = vmatprep.mubr.bf16.mxu0 0
        %9098 = vmatmul.mubr.bf16.gmra.mrb[0].mxu0 %v9060
        %v9099 = vpop.f32.mrb[0].mxu0
        %v9100 = vadd.f32 0.0, %v9099
        %v9101 = vpop.f32.mrb[0].mxu0
        %v9102 = vpop.f32.mrb[0].mxu0
        %v9103 = vpop.f32.mrb[0].mxu0
        %9104 = vdwg.mxu0
        %9105 = vxpose.xlu0.b32.start [1/16] %v8778, 128
        %9106 = vxpose.xlu0.b32.cont [2/16] 0.0, 128
        %9107 = vxpose.xlu0.b32.cont [3/16] 0.0, 128
        %9108 = vxpose.xlu0.b32.cont [4/16] 0.0, 128
        %9109 = vxpose.xlu0.b32.cont [5/16] 0.0, 128
        %9110 = vxpose.xlu0.b32.cont [6/16] 0.0, 128
        %9111 = vxpose.xlu0.b32.cont [7/16] 0.0, 128
        %9112 = vxpose.xlu0.b32.cont [8/16] 0.0, 128
        %9113 = vxpose.xlu0.b32.cont [9/16] 0.0, 128
        %9114 = vxpose.xlu0.b32.cont [10/16] 0.0, 128
        %9115 = vxpose.xlu0.b32.cont [11/16] 0.0, 128
        %9116 = vxpose.xlu0.b32.cont [12/16] 0.0, 128
        %9117 = vxpose.xlu0.b32.cont [13/16] 0.0, 128
        %9118 = vxpose.xlu0.b32.cont [14/16] 0.0, 128
        %9119 = vxpose.xlu0.b32.cont [15/16] 0.0, 128
        %9120 = vxpose.xlu0.b32.end [16/16] 0.0, 128
        %v9121 = vpop.trf.xlu0
        %v9122 = vpop.trf.xlu0
        %v9123 = vpop.trf.xlu0
        %v9124 = vpop.trf.xlu0
        %v9125 = vpop.trf.xlu0
        %v9126 = vpop.trf.xlu0
        %v9127 = vpop.trf.xlu0
        %v9128 = vpop.trf.xlu0
        %v9129 = vpop.trf.xlu0
        %v9130 = vpop.trf.xlu0
        %v9131 = vpop.trf.xlu0
        %v9132 = vpop.trf.xlu0
        %v9133 = vpop.trf.xlu0
        %v9134 = vpop.trf.xlu0
        %v9135 = vpop.trf.xlu0
        %v9136 = vpop.trf.xlu0
        %9137 = vxpose.xlu0.b32.start [1/16] %v8824, 128
        %9138 = vxpose.xlu0.b32.cont [2/16] 0.0, 128
        %9139 = vxpose.xlu0.b32.cont [3/16] 0.0, 128
        %9140 = vxpose.xlu0.b32.cont [4/16] 0.0, 128
        %9141 = vxpose.xlu0.b32.cont [5/16] 0.0, 128
        %9142 = vxpose.xlu0.b32.cont [6/16] 0.0, 128
        %9143 = vxpose.xlu0.b32.cont [7/16] 0.0, 128
        %9144 = vxpose.xlu0.b32.cont [8/16] 0.0, 128
        %9145 = vxpose.xlu0.b32.cont [9/16] 0.0, 128
        %9146 = vxpose.xlu0.b32.cont [10/16] 0.0, 128
        %9147 = vxpose.xlu0.b32.cont [11/16] 0.0, 128
        %9148 = vxpose.xlu0.b32.cont [12/16] 0.0, 128
        %9149 = vxpose.xlu0.b32.cont [13/16] 0.0, 128
        %9150 = vxpose.xlu0.b32.cont [14/16] 0.0, 128
        %9151 = vxpose.xlu0.b32.cont [15/16] 0.0, 128
        %9152 = vxpose.xlu0.b32.end [16/16] 0.0, 128
        %v9153 = vpop.trf.xlu0
        %v9154 = vpop.trf.xlu0
        %v9155 = vpop.trf.xlu0
        %v9156 = vpop.trf.xlu0
        %v9157 = vpop.trf.xlu0
        %v9158 = vpop.trf.xlu0
        %v9159 = vpop.trf.xlu0
        %v9160 = vpop.trf.xlu0
        %v9161 = vpop.trf.xlu0
        %v9162 = vpop.trf.xlu0
        %v9163 = vpop.trf.xlu0
        %v9164 = vpop.trf.xlu0
        %v9165 = vpop.trf.xlu0
        %v9166 = vpop.trf.xlu0
        %v9167 = vpop.trf.xlu0
        %v9168 = vpop.trf.xlu0
        %9169 = vxpose.xlu0.b32.start [1/16] %v8870, 128
        %9170 = vxpose.xlu0.b32.cont [2/16] 0.0, 128
        %9171 = vxpose.xlu0.b32.cont [3/16] 0.0, 128
        %9172 = vxpose.xlu0.b32.cont [4/16] 0.0, 128
        %9173 = vxpose.xlu0.b32.cont [5/16] 0.0, 128
        %9174 = vxpose.xlu0.b32.cont [6/16] 0.0, 128
        %9175 = vxpose.xlu0.b32.cont [7/16] 0.0, 128
        %9176 = vxpose.xlu0.b32.cont [8/16] 0.0, 128
        %9177 = vxpose.xlu0.b32.cont [9/16] 0.0, 128
        %9178 = vxpose.xlu0.b32.cont [10/16] 0.0, 128
        %9179 = vxpose.xlu0.b32.cont [11/16] 0.0, 128
        %9180 = vxpose.xlu0.b32.cont [12/16] 0.0, 128
        %9181 = vxpose.xlu0.b32.cont [13/16] 0.0, 128
        %9182 = vxpose.xlu0.b32.cont [14/16] 0.0, 128
        %9183 = vxpose.xlu0.b32.cont [15/16] 0.0, 128
        %9184 = vxpose.xlu0.b32.end [16/16] 0.0, 128
        %v9185 = vpop.trf.xlu0
        %v9186 = vpop.trf.xlu0
        %v9187 = vpop.trf.xlu0
        %v9188 = vpop.trf.xlu0
        %v9189 = vpop.trf.xlu0
        %v9190 = vpop.trf.xlu0
        %v9191 = vpop.trf.xlu0
        %v9192 = vpop.trf.xlu0
        %v9193 = vpop.trf.xlu0
        %v9194 = vpop.trf.xlu0
        %v9195 = vpop.trf.xlu0
        %v9196 = vpop.trf.xlu0
        %v9197 = vpop.trf.xlu0
        %v9198 = vpop.trf.xlu0
        %v9199 = vpop.trf.xlu0
        %v9200 = vpop.trf.xlu0
        %9201 = vxpose.xlu0.b32.start [1/16] %v8916, 128
        %9202 = vxpose.xlu0.b32.cont [2/16] 0.0, 128
        %9203 = vxpose.xlu0.b32.cont [3/16] 0.0, 128
        %9204 = vxpose.xlu0.b32.cont [4/16] 0.0, 128
        %9205 = vxpose.xlu0.b32.cont [5/16] 0.0, 128
        %9206 = vxpose.xlu0.b32.cont [6/16] 0.0, 128
        %9207 = vxpose.xlu0.b32.cont [7/16] 0.0, 128
        %9208 = vxpose.xlu0.b32.cont [8/16] 0.0, 128
        %9209 = vxpose.xlu0.b32.cont [9/16] 0.0, 128
        %9210 = vxpose.xlu0.b32.cont [10/16] 0.0, 128
        %9211 = vxpose.xlu0.b32.cont [11/16] 0.0, 128
        %9212 = vxpose.xlu0.b32.cont [12/16] 0.0, 128
        %9213 = vxpose.xlu0.b32.cont [13/16] 0.0, 128
        %9214 = vxpose.xlu0.b32.cont [14/16] 0.0, 128
        %9215 = vxpose.xlu0.b32.cont [15/16] 0.0, 128
        %9216 = vxpose.xlu0.b32.end [16/16] 0.0, 128
        %v9217 = vpop.trf.xlu0
        %v9218 = vpop.trf.xlu0
        %v9219 = vpop.trf.xlu0
        %v9220 = vpop.trf.xlu0
        %v9221 = vpop.trf.xlu0
        %v9222 = vpop.trf.xlu0
        %v9223 = vpop.trf.xlu0
        %v9224 = vpop.trf.xlu0
        %v9225 = vpop.trf.xlu0
        %v9226 = vpop.trf.xlu0
        %v9227 = vpop.trf.xlu0
        %v9228 = vpop.trf.xlu0
        %v9229 = vpop.trf.xlu0
        %v9230 = vpop.trf.xlu0
        %v9231 = vpop.trf.xlu0
        %v9232 = vpop.trf.xlu0
        %9233 = vxpose.xlu0.b32.start [1/16] %v8962, 128
        %9234 = vxpose.xlu0.b32.cont [2/16] 0.0, 128
        %9235 = vxpose.xlu0.b32.cont [3/16] 0.0, 128
        %9236 = vxpose.xlu0.b32.cont [4/16] 0.0, 128
        %9237 = vxpose.xlu0.b32.cont [5/16] 0.0, 128
        %9238 = vxpose.xlu0.b32.cont [6/16] 0.0, 128
        %9239 = vxpose.xlu0.b32.cont [7/16] 0.0, 128
        %9240 = vxpose.xlu0.b32.cont [8/16] 0.0, 128
        %9241 = vxpose.xlu0.b32.cont [9/16] 0.0, 128
        %9242 = vxpose.xlu0.b32.cont [10/16] 0.0, 128
        %9243 = vxpose.xlu0.b32.cont [11/16] 0.0, 128
        %9244 = vxpose.xlu0.b32.cont [12/16] 0.0, 128
        %9245 = vxpose.xlu0.b32.cont [13/16] 0.0, 128
        %9246 = vxpose.xlu0.b32.cont [14/16] 0.0, 128
        %9247 = vxpose.xlu0.b32.cont [15/16] 0.0, 128
        %9248 = vxpose.xlu0.b32.end [16/16] 0.0, 128
        %v9249 = vpop.trf.xlu0
        %v9250 = vpop.trf.xlu0
        %v9251 = vpop.trf.xlu0
        %v9252 = vpop.trf.xlu0
        %v9253 = vpop.trf.xlu0
        %v9254 = vpop.trf.xlu0
        %v9255 = vpop.trf.xlu0
        %v9256 = vpop.trf.xlu0
        %v9257 = vpop.trf.xlu0
        %v9258 = vpop.trf.xlu0
        %v9259 = vpop.trf.xlu0
        %v9260 = vpop.trf.xlu0
        %v9261 = vpop.trf.xlu0
        %v9262 = vpop.trf.xlu0
        %v9263 = vpop.trf.xlu0
        %v9264 = vpop.trf.xlu0
        %9265 = vxpose.xlu0.b32.start [1/16] %v9008, 128
        %9266 = vxpose.xlu0.b32.cont [2/16] 0.0, 128
        %9267 = vxpose.xlu0.b32.cont [3/16] 0.0, 128
        %9268 = vxpose.xlu0.b32.cont [4/16] 0.0, 128
        %9269 = vxpose.xlu0.b32.cont [5/16] 0.0, 128
        %9270 = vxpose.xlu0.b32.cont [6/16] 0.0, 128
        %9271 = vxpose.xlu0.b32.cont [7/16] 0.0, 128
        %9272 = vxpose.xlu0.b32.cont [8/16] 0.0, 128
        %9273 = vxpose.xlu0.b32.cont [9/16] 0.0, 128
        %9274 = vxpose.xlu0.b32.cont [10/16] 0.0, 128
        %9275 = vxpose.xlu0.b32.cont [11/16] 0.0, 128
        %9276 = vxpose.xlu0.b32.cont [12/16] 0.0, 128
        %9277 = vxpose.xlu0.b32.cont [13/16] 0.0, 128
        %9278 = vxpose.xlu0.b32.cont [14/16] 0.0, 128
        %9279 = vxpose.xlu0.b32.cont [15/16] 0.0, 128
        %9280 = vxpose.xlu0.b32.end [16/16] 0.0, 128
        %v9281 = vpop.trf.xlu0
        %v9282 = vpop.trf.xlu0
        %v9283 = vpop.trf.xlu0
        %v9284 = vpop.trf.xlu0
        %v9285 = vpop.trf.xlu0
        %v9286 = vpop.trf.xlu0
        %v9287 = vpop.trf.xlu0
        %v9288 = vpop.trf.xlu0
        %v9289 = vpop.trf.xlu0
        %v9290 = vpop.trf.xlu0
        %v9291 = vpop.trf.xlu0
        %v9292 = vpop.trf.xlu0
        %v9293 = vpop.trf.xlu0
        %v9294 = vpop.trf.xlu0
        %v9295 = vpop.trf.xlu0
        %v9296 = vpop.trf.xlu0
        %9297 = vxpose.xlu0.b32.start [1/16] %v9054, 128
        %9298 = vxpose.xlu0.b32.cont [2/16] 0.0, 128
        %9299 = vxpose.xlu0.b32.cont [3/16] 0.0, 128
        %9300 = vxpose.xlu0.b32.cont [4/16] 0.0, 128
        %9301 = vxpose.xlu0.b32.cont [5/16] 0.0, 128
        %9302 = vxpose.xlu0.b32.cont [6/16] 0.0, 128
        %9303 = vxpose.xlu0.b32.cont [7/16] 0.0, 128
        %9304 = vxpose.xlu0.b32.cont [8/16] 0.0, 128
        %9305 = vxpose.xlu0.b32.cont [9/16] 0.0, 128
        %9306 = vxpose.xlu0.b32.cont [10/16] 0.0, 128
        %9307 = vxpose.xlu0.b32.cont [11/16] 0.0, 128
        %9308 = vxpose.xlu0.b32.cont [12/16] 0.0, 128
        %9309 = vxpose.xlu0.b32.cont [13/16] 0.0, 128
        %9310 = vxpose.xlu0.b32.cont [14/16] 0.0, 128
        %9311 = vxpose.xlu0.b32.cont [15/16] 0.0, 128
        %9312 = vxpose.xlu0.b32.end [16/16] 0.0, 128
        %v9313 = vpop.trf.xlu0
        %v9314 = vpop.trf.xlu0
        %v9315 = vpop.trf.xlu0
        %v9316 = vpop.trf.xlu0
        %v9317 = vpop.trf.xlu0
        %v9318 = vpop.trf.xlu0
        %v9319 = vpop.trf.xlu0
        %v9320 = vpop.trf.xlu0
        %v9321 = vpop.trf.xlu0
        %v9322 = vpop.trf.xlu0
        %v9323 = vpop.trf.xlu0
        %v9324 = vpop.trf.xlu0
        %v9325 = vpop.trf.xlu0
        %v9326 = vpop.trf.xlu0
        %v9327 = vpop.trf.xlu0
        %v9328 = vpop.trf.xlu0
        %9329 = vxpose.xlu0.b32.start [1/16] %v9100, 128
        %9330 = vxpose.xlu0.b32.cont [2/16] 0.0, 128
        %9331 = vxpose.xlu0.b32.cont [3/16] 0.0, 128
        %9332 = vxpose.xlu0.b32.cont [4/16] 0.0, 128
        %9333 = vxpose.xlu0.b32.cont [5/16] 0.0, 128
        %9334 = vxpose.xlu0.b32.cont [6/16] 0.0, 128
        %9335 = vxpose.xlu0.b32.cont [7/16] 0.0, 128
        %9336 = vxpose.xlu0.b32.cont [8/16] 0.0, 128
        %9337 = vxpose.xlu0.b32.cont [9/16] 0.0, 128
        %9338 = vxpose.xlu0.b32.cont [10/16] 0.0, 128
        %9339 = vxpose.xlu0.b32.cont [11/16] 0.0, 128
        %9340 = vxpose.xlu0.b32.cont [12/16] 0.0, 128
        %9341 = vxpose.xlu0.b32.cont [13/16] 0.0, 128
        %9342 = vxpose.xlu0.b32.cont [14/16] 0.0, 128
        %9343 = vxpose.xlu0.b32.cont [15/16] 0.0, 128
        %9344 = vxpose.xlu0.b32.end [16/16] 0.0, 128
        %v9345 = vpop.trf.xlu0
        %v9346 = vpop.trf.xlu0
        %v9347 = vpop.trf.xlu0
        %v9348 = vpop.trf.xlu0
        %v9349 = vpop.trf.xlu0
        %v9350 = vpop.trf.xlu0
        %v9351 = vpop.trf.xlu0
        %v9352 = vpop.trf.xlu0
        %v9353 = vpop.trf.xlu0
        %v9354 = vpop.trf.xlu0
        %v9355 = vpop.trf.xlu0
        %v9356 = vpop.trf.xlu0
        %v9357 = vpop.trf.xlu0
        %v9358 = vpop.trf.xlu0
        %v9359 = vpop.trf.xlu0
        %v9360 = vpop.trf.xlu0
        %9361 = vxpose.xlu0.b32.start [1/16] %v9121, 128
        %9362 = vxpose.xlu0.b32.cont [2/16] %v9122, 128
        %9363 = vxpose.xlu0.b32.cont [3/16] %v9153, 128
        %9364 = vxpose.xlu0.b32.cont [4/16] %v9154, 128
        %9365 = vxpose.xlu0.b32.cont [5/16] %v9185, 128
        %9366 = vxpose.xlu0.b32.cont [6/16] %v9186, 128
        %9367 = vxpose.xlu0.b32.cont [7/16] %v9217, 128
        %9368 = vxpose.xlu0.b32.cont [8/16] %v9218, 128
        %9369 = vxpose.xlu0.b32.cont [9/16] %v9249, 128
        %9370 = vxpose.xlu0.b32.cont [10/16] %v9250, 128
        %9371 = vxpose.xlu0.b32.cont [11/16] %v9281, 128
        %9372 = vxpose.xlu0.b32.cont [12/16] %v9282, 128
        %9373 = vxpose.xlu0.b32.cont [13/16] %v9313, 128
        %9374 = vxpose.xlu0.b32.cont [14/16] %v9314, 128
        %9375 = vxpose.xlu0.b32.cont [15/16] %v9345, 128
        %9376 = vxpose.xlu0.b32.end [16/16] %v9346, 128
        %v9377 = vpop.trf.xlu0
        %v9378 = vpop.trf.xlu0
        %v9379 = vpop.trf.xlu0
        %v9380 = vpop.trf.xlu0
        %v9381 = vpop.trf.xlu0
        %v9382 = vpop.trf.xlu0
        %v9383 = vpop.trf.xlu0
        %v9384 = vpop.trf.xlu0
        %v9385 = vpop.trf.xlu0
        %v9386 = vpop.trf.xlu0
        %v9387 = vpop.trf.xlu0
        %v9388 = vpop.trf.xlu0
        %v9389 = vpop.trf.xlu0
        %v9390 = vpop.trf.xlu0
        %v9391 = vpop.trf.xlu0
        %v9392 = vpop.trf.xlu0
        %v9393 = vpack.c.bf16 %v9377, %v7367
        %v9394 = vld [vmem:[#allocation16] sm:$0xf]
        %v9395 = vld [vmem:[#allocation16 + $0x4] sm:$0xf]
        %v9396 = vld [vmem:[#allocation16 + $0x8] sm:$0xf]
        %v9397 = vld [vmem:[#allocation16 + $0xc] sm:$0xf]
        %v9398 = vld [vmem:[#allocation16 + $0x10] sm:$0xf]
        %v9399 = vld [vmem:[#allocation16 + $0x14] sm:$0xf]
        %v9400 = vld [vmem:[#allocation16 + $0x18] sm:$0xf]
        %v9401 = vld [vmem:[#allocation16 + $0x1c] sm:$0xf]
        %v9402 = vld [vmem:[#allocation16 + $0x20] sm:$0xf]
        %v9403 = vld [vmem:[#allocation16 + $0x24] sm:$0xf]
        %v9404 = vld [vmem:[#allocation16 + $0x28] sm:$0xf]
        %v9405 = vld [vmem:[#allocation16 + $0x2c] sm:$0xf]
        %v9406 = vld [vmem:[#allocation16 + $0x30] sm:$0xf]
        %v9407 = vld [vmem:[#allocation16 + $0x34] sm:$0xf]
        %v9408 = vld [vmem:[#allocation16 + $0x38] sm:$0xf]
        %v9409 = vld [vmem:[#allocation16 + $0x3c] sm:$0xf]
        %v9426 = vunpack.c.l.b16 %v9394
        %v9427 = vunpack.c.l.b16 %v9395
        %v9428 = vunpack.c.l.b16 %v9396
        %v9429 = vunpack.c.l.b16 %v9397
        %v9430 = vunpack.c.l.b16 %v9398
        %v9431 = vunpack.c.l.b16 %v9399
        %v9432 = vunpack.c.l.b16 %v9400
        %v9433 = vunpack.c.l.b16 %v9401
        %v9434 = vunpack.c.l.b16 %v9402
        %v9435 = vunpack.c.l.b16 %v9403
        %v9436 = vunpack.c.l.b16 %v9404
        %v9437 = vunpack.c.l.b16 %v9405
        %v9438 = vunpack.c.l.b16 %v9406
        %v9439 = vunpack.c.l.b16 %v9407
        %v9440 = vunpack.c.l.b16 %v9408
        %v9441 = vunpack.c.l.b16 %v9409
        %v9442 = vpack.c.b16 %v9427, %v9426
        %v9443 = vpack.c.b16 %v9429, %v9428
        %v9444 = vpack.c.b16 %v9431, %v9430
        %v9445 = vpack.c.b16 %v9433, %v9432
        %v9446 = vpack.c.b16 %v9435, %v9434
        %v9447 = vpack.c.b16 %v9437, %v9436
        %v9448 = vpack.c.b16 %v9439, %v9438
        %v9449 = vpack.c.b16 %v9441, %v9440
        %9458 = vmatprep.subr.bf16.mxu0 0
        %9459 = vmatpush1.bf16.msra.mxu0 %v9442
        %9460 = vmatprep.subr.bf16.mxu0 0
        %9461 = vmatpush1.bf16.msra.mxu0 %v9443
        %9462 = vmatprep.subr.bf16.mxu0 0
        %9463 = vmatpush1.bf16.msra.mxu0 %v9444
        %9464 = vmatprep.subr.bf16.mxu0 0
        %9465 = vmatpush1.bf16.msra.mxu0 %v9445
        %9466 = vmatprep.subr.bf16.mxu0 0
        %9467 = vmatpush1.bf16.msra.mxu0 %v9446
        %9468 = vmatprep.subr.bf16.mxu0 0
        %9469 = vmatpush1.bf16.msra.mxu0 %v9447
        %9470 = vmatprep.subr.bf16.mxu0 0
        %9471 = vmatpush1.bf16.msra.mxu0 %v9448
        %9472 = vmatprep.subr.bf16.mxu0 0
        %9473 = vmatpush1.bf16.msra.mxu0 %v9449
        %9474 = vmatprep.subr.bf16.mxu0 0
        %9475 = vmatpush1.bf16.msra.mxu0 0
        %9476 = vmatprep.subr.bf16.mxu0 0
        %9477 = vmatpush1.bf16.msra.mxu0 0
        %9478 = vmatprep.subr.bf16.mxu0 0
        %9479 = vmatpush1.bf16.msra.mxu0 0
        %9480 = vmatprep.subr.bf16.mxu0 0
        %9481 = vmatpush1.bf16.msra.mxu0 0
        %9482 = vmatprep.subr.bf16.mxu0 0
        %9483 = vmatpush1.bf16.msra.mxu0 0
        %9484 = vmatprep.subr.bf16.mxu0 0
        %9485 = vmatpush1.bf16.msra.mxu0 0
        %9486 = vmatprep.subr.bf16.mxu0 0
        %9487 = vmatpush1.bf16.msra.mxu0 0
        %9488 = vmatprep.subr.bf16.mxu0 0
        %9489 = vmatpush1.bf16.msra.mxu0 0
        %9490 = vmatprep.mubr.bf16.mxu0 0
        %9491 = vmatmul.mubr.bf16.gmra.mrb[0].mxu0 %v9393
        %v9492 = vpop.f32.mrb[0].mxu0
        %v9493 = vadd.f32 %v5125, %v9492
        %v9494 = vpop.f32.mrb[0].mxu0
        %v9495 = vpop.f32.mrb[0].mxu0
        %v9496 = vadd.f32 %v5126, %v9495
        %v9497 = vpop.f32.mrb[0].mxu0
        %9498 = vdwg.mxu0
        %v9499 = vld [vmem:[%s13 + $0x2] sm:$0x1]
        %v9500 = vld [vmem:[%s13 + $0x3] sm:$0x1]
        %9501 = vadd.xlane.f32.xlu0 %v9493
        %v9502 = vpop.xlane.xlu0 %9501
        %9503 = vadd.xlane.f32.xlu0 %v9496
        %v9504 = vpop.xlane.xlu0 %9503
        %v9505 = vmul.f32 %v9502, %v5096
        %v9506 = vmul.f32 %v9504, %v5096
        %v9507 = vsub.f32 %v9493, %v9505
        %v9508 = vsub.f32 %v9496, %v9506
        %v9509 = vmul.f32 %v9507, %v9507
        %v9510 = vmul.f32 %v9508, %v9508
        %9511 = vadd.xlane.f32.xlu0 %v9509
        %v9512 = vpop.xlane.xlu0 %9511
        %9513 = vadd.xlane.f32.xlu0 %v9510
        %v9514 = vpop.xlane.xlu0 %9513
        %v9515 = vmul.f32 %v9512, %v5096
        %v9516 = vmul.f32 %v9514, %v5096
        %v9517 = vadd.f32 %v9515, 1e-06
        %v9518 = vadd.f32 %v9516, 1e-06
        %v9519 = vrsqrt.pop %v9517
        %v9520 = vrsqrt.pop %v9518
        %v9521 = vmul.f32 %v9507, %v9519
        %v9522 = vmul.f32 %v9508, %v9520
        %v9523 = vlaneseq
        %v9524 = vshrl.u32 %v9523, 7
        %v9525 = vsub.s32 0, %v9524
        %v9526 = vrot.slane %v9499, %v9525
        %v9527 = vmul.f32 %v9521, %v9526
        %v9528 = vmul.f32 %v9522, %v9526
        %v9529 = vlaneseq
        %v9530 = vshrl.u32 %v9529, 7
        %v9531 = vsub.s32 0, %v9530
        %v9532 = vrot.slane %v9500, %v9531
        %v9533 = vadd.f32 %v9527, %v9532
        %v9534 = vadd.f32 %v9528, %v9532
        %v9535 = vpack.c.bf16 %v9534, %v9533
        %v9536 = vld [vmem:[#allocation17] sm:$0xff]
        %v9537 = vld [vmem:[#allocation17 + $0x8] sm:$0xff]
        %v9538 = vld [vmem:[#allocation17 + $0x10] sm:$0xff]
        %v9539 = vld [vmem:[#allocation17 + $0x18] sm:$0xff]
        %v9540 = vld [vmem:[#allocation17 + $0x20] sm:$0xff]
        %v9541 = vld [vmem:[#allocation17 + $0x28] sm:$0xff]
        %v9542 = vld [vmem:[#allocation17 + $0x30] sm:$0xff]
        %v9543 = vld [vmem:[#allocation17 + $0x38] sm:$0xff]
        %v9544 = vld [vmem:[#allocation17 + $0x40] sm:$0xff]
        %v9545 = vld [vmem:[#allocation17 + $0x48] sm:$0xff]
        %v9546 = vld [vmem:[#allocation17 + $0x50] sm:$0xff]
        %v9547 = vld [vmem:[#allocation17 + $0x58] sm:$0xff]
        %v9548 = vld [vmem:[#allocation17 + $0x60] sm:$0xff]
        %v9549 = vld [vmem:[#allocation17 + $0x68] sm:$0xff]
        %v9550 = vld [vmem:[#allocation17 + $0x70] sm:$0xff]
        %v9551 = vld [vmem:[#allocation17 + $0x78] sm:$0xff]
        %v9552 = vld [vmem:[%s11] sm:$0x3]
        %v9554 = vlaneseq
        %v9555 = vshrl.u32 %v9554, 7
        %v9556 = vsub.s32 0, %v9555
        %v9557 = vrot.slane %v9552, %v9556
        %v9558 = vlaneseq
        %v9559 = vshrl.u32 %v9558, 7
        %v9560 = vsub.s32 1, %v9559
        %v9561 = vrot.slane %v9552, %v9560
        %v9580 = vunpack.c.l.b16 %v9536
        %v9581 = vunpack.c.h.b16 %v9536
        %v9582 = vunpack.c.l.b16 %v9537
        %v9583 = vunpack.c.h.b16 %v9537
        %v9584 = vunpack.c.l.b16 %v9538
        %v9585 = vunpack.c.h.b16 %v9538
        %v9586 = vunpack.c.l.b16 %v9539
        %v9587 = vunpack.c.h.b16 %v9539
        %v9588 = vunpack.c.l.b16 %v9540
        %v9589 = vunpack.c.h.b16 %v9540
        %v9590 = vunpack.c.l.b16 %v9541
        %v9591 = vunpack.c.h.b16 %v9541
        %v9592 = vunpack.c.l.b16 %v9542
        %v9593 = vunpack.c.h.b16 %v9542
        %v9594 = vunpack.c.l.b16 %v9543
        %v9595 = vunpack.c.h.b16 %v9543
        %v9596 = vunpack.c.l.b16 %v9544
        %v9597 = vunpack.c.h.b16 %v9544
        %v9598 = vunpack.c.l.b16 %v9545
        %v9599 = vunpack.c.h.b16 %v9545
        %v9600 = vunpack.c.l.b16 %v9546
        %v9601 = vunpack.c.h.b16 %v9546
        %v9602 = vunpack.c.l.b16 %v9547
        %v9603 = vunpack.c.h.b16 %v9547
        %v9604 = vunpack.c.l.b16 %v9548
        %v9605 = vunpack.c.h.b16 %v9548
        %v9606 = vunpack.c.l.b16 %v9549
        %v9607 = vunpack.c.h.b16 %v9549
        %v9608 = vunpack.c.l.b16 %v9550
        %v9609 = vunpack.c.h.b16 %v9550
        %v9610 = vunpack.c.l.b16 %v9551
        %v9611 = vunpack.c.h.b16 %v9551
        %v9612 = vpack.c.b16 %v9582, %v9580
        %v9613 = vpack.c.b16 %v9583, %v9581
        %v9614 = vpack.c.b16 %v9586, %v9584
        %v9615 = vpack.c.b16 %v9587, %v9585
        %v9616 = vpack.c.b16 %v9590, %v9588
        %v9617 = vpack.c.b16 %v9591, %v9589
        %v9618 = vpack.c.b16 %v9594, %v9592
        %v9619 = vpack.c.b16 %v9595, %v9593
        %v9620 = vpack.c.b16 %v9598, %v9596
        %v9621 = vpack.c.b16 %v9599, %v9597
        %v9622 = vpack.c.b16 %v9602, %v9600
        %v9623 = vpack.c.b16 %v9603, %v9601
        %v9624 = vpack.c.b16 %v9606, %v9604
        %v9625 = vpack.c.b16 %v9607, %v9605
        %v9626 = vpack.c.b16 %v9610, %v9608
        %v9627 = vpack.c.b16 %v9611, %v9609
        %9644 = vmatprep.subr.bf16.mxu0 %v9613
        %9645 = vmatpush1.bf16.msra.mxu0 %v9612
        %9646 = vmatprep.subr.bf16.mxu0 %v9615
        %9647 = vmatpush1.bf16.msra.mxu0 %v9614
        %9648 = vmatprep.subr.bf16.mxu0 %v9617
        %9649 = vmatpush1.bf16.msra.mxu0 %v9616
        %9650 = vmatprep.subr.bf16.mxu0 %v9619
        %9651 = vmatpush1.bf16.msra.mxu0 %v9618
        %9652 = vmatprep.subr.bf16.mxu0 %v9621
        %9653 = vmatpush1.bf16.msra.mxu0 %v9620
        %9654 = vmatprep.subr.bf16.mxu0 %v9623
        %9655 = vmatpush1.bf16.msra.mxu0 %v9622
        %9656 = vmatprep.subr.bf16.mxu0 %v9625
        %9657 = vmatpush1.bf16.msra.mxu0 %v9624
        %9658 = vmatprep.subr.bf16.mxu0 %v9627
        %9659 = vmatpush1.bf16.msra.mxu0 %v9626
        %9660 = vmatprep.subr.bf16.mxu0 0
        %9661 = vmatpush1.bf16.msra.mxu0 0
        %9662 = vmatprep.subr.bf16.mxu0 0
        %9663 = vmatpush1.bf16.msra.mxu0 0
        %9664 = vmatprep.subr.bf16.mxu0 0
        %9665 = vmatpush1.bf16.msra.mxu0 0
        %9666 = vmatprep.subr.bf16.mxu0 0
        %9667 = vmatpush1.bf16.msra.mxu0 0
        %9668 = vmatprep.subr.bf16.mxu0 0
        %9669 = vmatpush1.bf16.msra.mxu0 0
        %9670 = vmatprep.subr.bf16.mxu0 0
        %9671 = vmatpush1.bf16.msra.mxu0 0
        %9672 = vmatprep.subr.bf16.mxu0 0
        %9673 = vmatpush1.bf16.msra.mxu0 0
        %9674 = vmatprep.subr.bf16.mxu0 0
        %9675 = vmatpush1.bf16.msra.mxu0 0
        %9676 = vmatprep.mubr.bf16.mxu0 0
        %9677 = vmatmul.mubr.bf16.gmra.mrb[0].mxu0 %v9535
        %v9678 = vpop.f32.mrb[0].mxu0
        %v9679 = vadd.f32 %v9557, %v9678
        %v9680 = vpop.f32.mrb[0].mxu0
        %v9681 = vadd.f32 %v9561, %v9680
        %v9682 = vpop.f32.mrb[0].mxu0
        %v9683 = vadd.f32 %v9557, %v9682
        %v9684 = vpop.f32.mrb[0].mxu0
        %v9685 = vadd.f32 %v9561, %v9684
        %9686 = vdwg.mxu0
        %v9687 = vmax.f32 %v9679, 0.0
        %v9688 = vmax.f32 %v9681, 0.0
        %v9689 = vmax.f32 %v9683, 0.0
        %v9690 = vmax.f32 %v9685, 0.0
        %v9691 = vpack.c.bf16 %v9689, %v9687
        %v9692 = vpack.c.bf16 %v9690, %v9688
        %v9693 = vld [vmem:[#allocation19] sm:$0xf]
        %v9694 = vld [vmem:[#allocation19 + $0x4] sm:$0xf]
        %v9695 = vld [vmem:[#allocation19 + $0x8] sm:$0xf]
        %v9696 = vld [vmem:[#allocation19 + $0xc] sm:$0xf]
        %v9697 = vld [vmem:[#allocation19 + $0x10] sm:$0xf]
        %v9698 = vld [vmem:[#allocation19 + $0x14] sm:$0xf]
        %v9699 = vld [vmem:[#allocation19 + $0x18] sm:$0xf]
        %v9700 = vld [vmem:[#allocation19 + $0x1c] sm:$0xf]
        %v9701 = vld [vmem:[#allocation19 + $0x20] sm:$0xf]
        %v9702 = vld [vmem:[#allocation19 + $0x24] sm:$0xf]
        %v9703 = vld [vmem:[#allocation19 + $0x28] sm:$0xf]
        %v9704 = vld [vmem:[#allocation19 + $0x2c] sm:$0xf]
        %v9705 = vld [vmem:[#allocation19 + $0x30] sm:$0xf]
        %v9706 = vld [vmem:[#allocation19 + $0x34] sm:$0xf]
        %v9707 = vld [vmem:[#allocation19 + $0x38] sm:$0xf]
        %v9708 = vld [vmem:[#allocation19 + $0x3c] sm:$0xf]
        %v9709 = vld [vmem:[#allocation19 + $0x40] sm:$0xf]
        %v9710 = vld [vmem:[#allocation19 + $0x44] sm:$0xf]
        %v9711 = vld [vmem:[#allocation19 + $0x48] sm:$0xf]
        %v9712 = vld [vmem:[#allocation19 + $0x4c] sm:$0xf]
        %v9713 = vld [vmem:[#allocation19 + $0x50] sm:$0xf]
        %v9714 = vld [vmem:[#allocation19 + $0x54] sm:$0xf]
        %v9715 = vld [vmem:[#allocation19 + $0x58] sm:$0xf]
        %v9716 = vld [vmem:[#allocation19 + $0x5c] sm:$0xf]
        %v9717 = vld [vmem:[#allocation19 + $0x60] sm:$0xf]
        %v9718 = vld [vmem:[#allocation19 + $0x64] sm:$0xf]
        %v9719 = vld [vmem:[#allocation19 + $0x68] sm:$0xf]
        %v9720 = vld [vmem:[#allocation19 + $0x6c] sm:$0xf]
        %v9721 = vld [vmem:[#allocation19 + $0x70] sm:$0xf]
        %v9722 = vld [vmem:[#allocation19 + $0x74] sm:$0xf]
        %v9723 = vld [vmem:[#allocation19 + $0x78] sm:$0xf]
        %v9724 = vld [vmem:[#allocation19 + $0x7c] sm:$0xf]
        %v9725 = vld [vmem:[%s12] sm:$0x1]
        %v9727 = vlaneseq
        %v9728 = vshrl.u32 %v9727, 7
        %v9729 = vsub.s32 0, %v9728
        %v9730 = vrot.slane %v9725, %v9729
        %v9764 = vunpack.c.l.b16 %v9693
        %v9765 = vunpack.c.l.b16 %v9694
        %v9766 = vunpack.c.l.b16 %v9695
        %v9767 = vunpack.c.l.b16 %v9696
        %v9768 = vunpack.c.l.b16 %v9697
        %v9769 = vunpack.c.l.b16 %v9698
        %v9770 = vunpack.c.l.b16 %v9699
        %v9771 = vunpack.c.l.b16 %v9700
        %v9772 = vunpack.c.l.b16 %v9701
        %v9773 = vunpack.c.l.b16 %v9702
        %v9774 = vunpack.c.l.b16 %v9703
        %v9775 = vunpack.c.l.b16 %v9704
        %v9776 = vunpack.c.l.b16 %v9705
        %v9777 = vunpack.c.l.b16 %v9706
        %v9778 = vunpack.c.l.b16 %v9707
        %v9779 = vunpack.c.l.b16 %v9708
        %v9780 = vunpack.c.l.b16 %v9709
        %v9781 = vunpack.c.l.b16 %v9710
        %v9782 = vunpack.c.l.b16 %v9711
        %v9783 = vunpack.c.l.b16 %v9712
        %v9784 = vunpack.c.l.b16 %v9713
        %v9785 = vunpack.c.l.b16 %v9714
        %v9786 = vunpack.c.l.b16 %v9715
        %v9787 = vunpack.c.l.b16 %v9716
        %v9788 = vunpack.c.l.b16 %v9717
        %v9789 = vunpack.c.l.b16 %v9718
        %v9790 = vunpack.c.l.b16 %v9719
        %v9791 = vunpack.c.l.b16 %v9720
        %v9792 = vunpack.c.l.b16 %v9721
        %v9793 = vunpack.c.l.b16 %v9722
        %v9794 = vunpack.c.l.b16 %v9723
        %v9795 = vunpack.c.l.b16 %v9724
        %v9796 = vpack.c.b16 %v9765, %v9764
        %v9797 = vpack.c.b16 %v9767, %v9766
        %v9798 = vpack.c.b16 %v9769, %v9768
        %v9799 = vpack.c.b16 %v9771, %v9770
        %v9800 = vpack.c.b16 %v9773, %v9772
        %v9801 = vpack.c.b16 %v9775, %v9774
        %v9802 = vpack.c.b16 %v9777, %v9776
        %v9803 = vpack.c.b16 %v9779, %v9778
        %v9804 = vpack.c.b16 %v9781, %v9780
        %v9805 = vpack.c.b16 %v9783, %v9782
        %v9806 = vpack.c.b16 %v9785, %v9784
        %v9807 = vpack.c.b16 %v9787, %v9786
        %v9808 = vpack.c.b16 %v9789, %v9788
        %v9809 = vpack.c.b16 %v9791, %v9790
        %v9810 = vpack.c.b16 %v9793, %v9792
        %v9811 = vpack.c.b16 %v9795, %v9794
        %9828 = vmatprep.subr.bf16.mxu0 0
        %9829 = vmatpush1.bf16.msra.mxu0 %v9796
        %9830 = vmatprep.subr.bf16.mxu0 0
        %9831 = vmatpush1.bf16.msra.mxu0 %v9797
        %9832 = vmatprep.subr.bf16.mxu0 0
        %9833 = vmatpush1.bf16.msra.mxu0 %v9798
        %9834 = vmatprep.subr.bf16.mxu0 0
        %9835 = vmatpush1.bf16.msra.mxu0 %v9799
        %9836 = vmatprep.subr.bf16.mxu0 0
        %9837 = vmatpush1.bf16.msra.mxu0 %v9800
        %9838 = vmatprep.subr.bf16.mxu0 0
        %9839 = vmatpush1.bf16.msra.mxu0 %v9801
        %9840 = vmatprep.subr.bf16.mxu0 0
        %9841 = vmatpush1.bf16.msra.mxu0 %v9802
        %9842 = vmatprep.subr.bf16.mxu0 0
        %9843 = vmatpush1.bf16.msra.mxu0 %v9803
        %9844 = vmatprep.subr.bf16.mxu0 0
        %9845 = vmatpush1.bf16.msra.mxu0 %v9804
        %9846 = vmatprep.subr.bf16.mxu0 0
        %9847 = vmatpush1.bf16.msra.mxu0 %v9805
        %9848 = vmatprep.subr.bf16.mxu0 0
        %9849 = vmatpush1.bf16.msra.mxu0 %v9806
        %9850 = vmatprep.subr.bf16.mxu0 0
        %9851 = vmatpush1.bf16.msra.mxu0 %v9807
        %9852 = vmatprep.subr.bf16.mxu0 0
        %9853 = vmatpush1.bf16.msra.mxu0 %v9808
        %9854 = vmatprep.subr.bf16.mxu0 0
        %9855 = vmatpush1.bf16.msra.mxu0 %v9809
        %9856 = vmatprep.subr.bf16.mxu0 0
        %9857 = vmatpush1.bf16.msra.mxu0 %v9810
        %9858 = vmatprep.subr.bf16.mxu0 0
        %9859 = vmatpush1.bf16.msra.mxu0 %v9811
        %9860 = vmatprep.mubr.bf16.mxu0 %v9692
        %9861 = vmatmul.mubr.bf16.gmra.mrb[0].mxu0 %v9691
        %v9862 = vpop.f32.mrb[0].mxu0
        %v9863 = vadd.f32 %v9730, %v9862
        %v9864 = vpop.f32.mrb[0].mxu0
        %v9865 = vpop.f32.mrb[0].mxu0
        %v9866 = vadd.f32 %v9730, %v9865
        %v9867 = vpop.f32.mrb[0].mxu0
        %9868 = vdwg.mxu0
        %v9869 = vadd.f32 %v9863, %v9533
        %v9870 = vadd.f32 %v9866, %v9534
        %v9871 = vld [vmem:[%s13 + $0x4] sm:$0x1]
        %v9872 = vld [vmem:[%s13 + $0x5] sm:$0x1]
        %9873 = vadd.xlane.f32.xlu0 %v9869
        %v9874 = vpop.xlane.xlu0 %9873
        %9875 = vadd.xlane.f32.xlu0 %v9870
        %v9876 = vpop.xlane.xlu0 %9875
        %v9877 = vmul.f32 %v9874, %v5096
        %v9878 = vmul.f32 %v9876, %v5096
        %v9879 = vsub.f32 %v9869, %v9877
        %v9880 = vsub.f32 %v9870, %v9878
        %v9881 = vmul.f32 %v9879, %v9879
        %v9882 = vmul.f32 %v9880, %v9880
        %9883 = vadd.xlane.f32.xlu0 %v9881
        %v9884 = vpop.xlane.xlu0 %9883
        %9885 = vadd.xlane.f32.xlu0 %v9882
        %v9886 = vpop.xlane.xlu0 %9885
        %v9887 = vmul.f32 %v9884, %v5096
        %v9888 = vmul.f32 %v9886, %v5096
        %v9889 = vadd.f32 %v9887, 1e-06
        %v9890 = vadd.f32 %v9888, 1e-06
        %v9891 = vrsqrt.pop %v9889
        %v9892 = vrsqrt.pop %v9890
        %v9893 = vmul.f32 %v9879, %v9891
        %v9894 = vmul.f32 %v9880, %v9892
        %v9895 = vlaneseq
        %v9896 = vshrl.u32 %v9895, 7
        %v9897 = vsub.s32 0, %v9896
        %v9898 = vrot.slane %v9871, %v9897
        %v9899 = vmul.f32 %v9893, %v9898
        %v9900 = vmul.f32 %v9894, %v9898
        %v9901 = vlaneseq
        %v9902 = vshrl.u32 %v9901, 7
        %v9903 = vsub.s32 0, %v9902
        %v9904 = vrot.slane %v9872, %v9903
        %v9905 = vadd.f32 %v9899, %v9904
        %v9906 = vadd.f32 %v9900, %v9904
        %9907 = vst [vmem:[%s703] sm:$0xff] %v9905
        %9908 = vst [vmem:[%s703 + $0x8] sm:$0xff] %v9906
        %s9909 = sand.u32 %s362, 1
        %s9910 = scalar_lea.sflag [#allocation4], %s9909
        %s9911 = sand.u32 %s362, 1
        %s9912 = smul.addr %s9911, 16
        %s9913 = scalar_lea.vmem [#allocation20], %s9912
        // Predicated region
        $region121: #{tpu_custom_call.1} parent=75 // pred_check
          %p9914 = pneg %p372
        $region122: #{tpu_custom_call.1} parent=75 // pred_check_branch
          %9916 = sbr.rel (%p9914) target = $region124
        $region123: #{tpu_custom_call.1} parent=75 // pred_region
          %s9917 = smul.u32 2, %s40
          %s9919 = ssub.s32 256, 256
          %9920 = vsyncadd %s9910, %s9919
          %s9921 = smul.addr %s9917, 128
          %s9922 = scalar_lea.hbm %s14, %s9921
          %s9923 = sshll.u32 %s9913, 4
          %s9924 = int_to_ptr.vmem [resolvable:$true] %s9923
          %9929 = dma.vmem_to_hbm [thread:$0]  %s9924, 256, %s9922, %s9910, 128, 128, 8
        $region124: #{tpu_custom_call.1} parent=75 // pred_fallthru
          _
      $region76: #{tpu_custom_call.1} parent=5 // pred_fallthru
        _
      %p9930 = scmp.le.s32.totalorder 2, %s35
      // Predicated region
      $region125: #{tpu_custom_call.1} parent=5 // pred_check
        %p9931 = pneg %p9930
      $region126: #{tpu_custom_call.1} parent=5 // pred_check_branch
        %9933 = sbr.rel (%p9931) target = $region128
      $region127: #{tpu_custom_call.1} parent=5 // pred_region
        %s9934 = ssub.s32 %s35, 2
        // Predicated region
        $region129: #{tpu_custom_call.1} parent=127 // pred_check
          %p9935 = pneg %p378
        $region130: #{tpu_custom_call.1} parent=127 // pred_check_branch
          %9937 = sbr.rel (%p9935) target = $region132
        $region131: #{tpu_custom_call.1} parent=127 // pred_region
          %s9938 = sand.u32 %s363, 1
          %s9939 = scalar_lea.sflag [#allocation4], %s9938
          %s9940 = sand.u32 %s363, 1
          %s9941 = smul.addr %s9940, 16
          %s9942 = scalar_lea.vmem [#allocation20], %s9941
          %9943 = dma.done %s9939, 256
        $region132: #{tpu_custom_call.1} parent=127 // pred_fallthru
          _
      $region128: #{tpu_custom_call.1} parent=5 // pred_fallthru
        _
    $region6: #{tpu_custom_call.1} parent=1 // loop_footer
      %s39 = sadd.s32 1, %s35
    $region7: #{tpu_custom_call.1} parent=1 // loop_footer_branch
      %34 = sbr.rel target = $region3
    $region8: #{tpu_custom_call.1} parent=1 // loop_exit
      _
    %9944 = vsyncpa [#allocation3], 1
    %s9945 = scalar_lea.sflag [#allocation3], 1
    %9946 = vsyncpa %s9945, 1
    %9947 = vsyncpa [#allocation6], 1
    %s9948 = scalar_lea.sflag [#allocation6], 1
    %9949 = vsyncpa %s9948, 1
    %9950 = vsyncpa [#allocation9], 1
    %s9951 = scalar_lea.sflag [#allocation9], 1
    %9952 = vsyncpa %s9951, 1
    %9953 = vsyncpa [#allocation12], 1
    %9954 = vsyncpa [#allocation15], 1
    %9955 = vsyncpa [#allocation18], 1
    %9956 = vsyncpa [#allocation4], 1
    %s9957 = scalar_lea.sflag [#allocation4], 1
    %9958 = vsyncpa %s9957, 1

</llo_original>
